<compile_context>
chip_gen: v7x
topology: tpu7x:2x2x1
jax: 0.10.0
libtpu: 0.0.40
codegen_flags: <defaults>
</compile_context>

<pallas_src>
import math

import jax
import jax.numpy as jnp
from jax.experimental import pallas as pl
from jax.experimental.pallas import tpu as pltpu

FEATS = 32


# -----------------------------------------------------------------------------
# In-kernel helpers (operate on VMEM values)
# -----------------------------------------------------------------------------
def _pad_hw1(x):
    """Zero-pad a (H, W, C) value by 1 on each spatial side (VMEM-only)."""
    H, W, C = x.shape
    zr = jnp.zeros((1, W, C), x.dtype)
    x = jnp.concatenate([zr, x, zr], axis=0)          # (H+2, W, C)
    zc = jnp.zeros((H + 2, 1, C), x.dtype)
    return jnp.concatenate([zc, x, zc], axis=1)       # (H+2, W+2, C)


def _im2col3x3(x):
    """(H, W, C) -> (H*W, 9*C) patch matrix for a 3x3 / stride-1 / SAME conv.

    Tap order is (ky, kx, cin), matching the wrapper's weight fold."""
    H, W, C = x.shape
    xp = _pad_hw1(x)
    taps = [xp[ky:ky + H, kx:kx + W, :] for ky in range(3) for kx in range(3)]
    return jnp.concatenate(taps, axis=-1).reshape(H * W, 9 * C)


# -----------------------------------------------------------------------------
# Fused kernel: 7 convs (shared im2col) + 8 enhancement steps, one image/step
# -----------------------------------------------------------------------------
def _dark_fused_kernel(x_hwc_ref, x_cm_ref,
                       w1, w27, w36, w45, w5b, w6b, w7b,
                       b1, b2, b3, b4, b5, b6, b7,
                       e1_ref, e2_ref, xr_ref):
    H, W, _ = x_hwc_ref.shape
    HW = H * W
    F = FEATS
    relu = lambda v: jnp.maximum(v, 0.0)

    def mm(act_bf16_hwc, w_ref):
        # One im2col build + one MXU matmul (bf16 operands, f32 accumulation).
        return jnp.dot(_im2col3x3(act_bf16_hwc), w_ref[...],
                       preferred_element_type=jnp.float32)

    def to_hwc(a_f32):
        # (HW, 32) f32 activation -> (H, W, 32) bf16 (cast before the reshape
        # so the relayout copy is half the bytes).
        return a_f32.astype(jnp.bfloat16).reshape(H, W, F)

    # conv1 -- pad 3 input channels to 8 in VMEM (w1 is zero-padded to match).
    x0 = x_hwc_ref[...].astype(jnp.bfloat16)                       # (H, W, 3)
    x0 = jnp.concatenate([x0, jnp.zeros((H, W, 5), jnp.bfloat16)], axis=-1)
    x1 = relu(mm(x0, w1) + b1[...])                                # (HW, 32) f32

    # Shared im2col: each activation is patch-built exactly once and multiplied
    # against the Cout-concatenated weights of every conv that consumes it.
    o = mm(to_hwc(x1), w27)                                        # conv2 | conv7a
    x2 = relu(o[:, :F] + b2[...])
    p7 = o[:, F:]                                                  # (HW, 24) partial

    o = mm(to_hwc(x2), w36)                                        # conv3 | conv6a
    x3 = relu(o[:, :F] + b3[...])
    p6 = o[:, F:]                                                  # (HW, 32) partial

    o = mm(to_hwc(x3), w45)                                        # conv4 | conv5a
    x4 = relu(o[:, :F] + b4[...])
    p5 = o[:, F:]                                                  # (HW, 32) partial

    x5 = relu(p5 + mm(to_hwc(x4), w5b) + b5[...])                  # conv5(cat[x3,x4])
    x6 = relu(p6 + mm(to_hwc(x5), w6b) + b6[...])                  # conv6(cat[x2,x5])
    x_r = jnp.tanh(p7 + mm(to_hwc(x6), w7b) + b7[...])             # conv7(cat[x1,x6])

    # Channel-major (lane-dense) layout for the enhancement and all outputs:
    # one small (HW,24)->(24,HW) transpose, then every store / VPU op has the
    # spatial dim on the lanes.
    xr_cm = x_r.T                                                  # (24, HW)
    xr_ref[...] = xr_cm

    # 8-step curve enhancement on the ORIGINAL f32 input, channel-major.
    x = x_cm_ref[...]                                              # (3, HW) f32
    for i in range(4):
        r = xr_cm[3 * i:3 * i + 3, :]
        x = x + r * (x * x - x)
    e1_ref[...] = x                                                # enhance_image_1
    for i in range(4, 8):
        r = xr_cm[3 * i:3 * i + 3, :]
        x = x + r * (x * x - x)
    e2_ref[...] = x                                                # enhance_image


# -----------------------------------------------------------------------------
# Wrapper: weight folding + pallas_call
# -----------------------------------------------------------------------------
def _fold_w(w):
    """HWIO (3,3,Cin,Cout) f32 -> im2col-folded (9*Cin, Cout) bf16."""
    _, _, cin, cout = w.shape
    return w.reshape(9 * cin, cout).astype(jnp.bfloat16)


def dark_model_forward(x_nchw, params):
    x_nchw = x_nchw.astype(jnp.float32)
    N, _, H, W = x_nchw.shape
    HW = H * W

    # Two cheap input views (3 + 3 channels, less HBM than the old 8-ch pad):
    #   NHWC (N,H,W,3) feeds conv1's im2col; NC(HW) (N,3,HW) feeds the
    #   channel-major enhancement directly (free reshape of the NCHW input).
    x_hwc = jnp.transpose(x_nchw, (0, 2, 3, 1))
    x_cm = x_nchw.reshape(N, 3, HW)

    w1, b1 = params["c1"]
    w1f = _fold_w(jnp.pad(w1, ((0, 0), (0, 0), (0, 5), (0, 0))))   # Cin 3 -> 8

    def fold(name):
        w, b = params[name]
        return _fold_w(w), b.reshape(1, -1)

    def fold_split(name):
        w, b = params[name]
        return (_fold_w(w[:, :, :FEATS, :]), _fold_w(w[:, :, FEATS:, :]),
                b.reshape(1, -1))

    w2f, b2f = fold("c2")
    w3f, b3f = fold("c3")
    w4f, b4f = fold("c4")
    w5a, w5b, b5f = fold_split("c5")
    w6a, w6b, b6f = fold_split("c6")
    w7a, w7b, b7f = fold_split("c7")

    # Cout-concatenate convs that share an im2col operand (x1, x2, x3).
    w27 = jnp.concatenate([w2f, w7a], axis=1)    # (288, 56)
    w36 = jnp.concatenate([w3f, w6a], axis=1)    # (288, 64)
    w45 = jnp.concatenate([w4f, w5a], axis=1)    # (288, 64)

    args = (x_hwc, x_cm,
            w1f, w27, w36, w45, w5b, w6b, w7b,
            b1.reshape(1, -1), b2f, b3f, b4f, b5f, b6f, b7f)

    def resident(a):
        # Whole array, same block every grid step -> stays resident in VMEM.
        return pl.BlockSpec(a.shape, lambda n: (0, 0))

    in_specs = [
        pl.BlockSpec((pl.Squeezed(), H, W, 3), lambda n: (n, 0, 0, 0)),
        pl.BlockSpec((pl.Squeezed(), 3, HW), lambda n: (n, 0, 0)),
    ] + [resident(a) for a in args[2:]]

    # Channel-major outputs: last dim is H*W (lane-dense stores); the wrapper
    # only reshapes back to NCHW (no transposes).
    out_shapes = (jax.ShapeDtypeStruct((N, 3, HW), jnp.float32),
                  jax.ShapeDtypeStruct((N, 3, HW), jnp.float32),
                  jax.ShapeDtypeStruct((N, 24, HW), jnp.float32))
    out_specs = [pl.BlockSpec((pl.Squeezed(), 3, HW), lambda n: (n, 0, 0)),
                 pl.BlockSpec((pl.Squeezed(), 3, HW), lambda n: (n, 0, 0)),
                 pl.BlockSpec((pl.Squeezed(), 24, HW), lambda n: (n, 0, 0))]

    # Per-image working set: ~3x bf16 patch matrix (build temporaries) plus
    # ~320 f32 channels of live activations/partials per pixel.  Set an
    # explicit scoped-VMEM limit so v5e's 16 MiB default is not the binding
    # constraint; cap below v7x's 64 MiB physical VMEM.
    est = HW * (3 * 288 * 2 + 320 * 4) + (4 << 20)
    vmem_limit = int(min(max(est, 32 << 20), 48 << 20))

    e1, e2, xr = pl.pallas_call(
        _dark_fused_kernel,
        out_shape=out_shapes,
        grid=(N,),
        in_specs=in_specs,
        out_specs=out_specs,
        compiler_params=pltpu.CompilerParams(
            dimension_semantics=("parallel",),
            vmem_limit_bytes=vmem_limit),
    )(*args)

    return (e1.reshape(N, 3, H, W),
            e2.reshape(N, 3, H, W),
            xr.reshape(N, 24, H, W))


# -----------------------------------------------------------------------------
# Pure-JAX f32 reference (for correctness check only)
# -----------------------------------------------------------------------------
def dark_model_reference(x_nchw, params):
    x = jnp.transpose(x_nchw, (0, 2, 3, 1)).astype(jnp.float32)
    dn = ("NHWC", "HWIO", "NHWC")

    def conv(v, w, b, act):
        y = jax.lax.conv_general_dilated(
            v, w, (1, 1), "SAME", dimension_numbers=dn,
            precision=jax.lax.Precision.HIGHEST) + b
        return jnp.maximum(y, 0.0) if act == "relu" else jnp.tanh(y)

    x1 = conv(x, *params["c1"], "relu")
    x2 = conv(x1, *params["c2"], "relu")
    x3 = conv(x2, *params["c3"], "relu")
    x4 = conv(x3, *params["c4"], "relu")
    x5 = conv(jnp.concatenate([x3, x4], -1), *params["c5"], "relu")
    x6 = conv(jnp.concatenate([x2, x5], -1), *params["c6"], "relu")
    x_r = conv(jnp.concatenate([x1, x6], -1), *params["c7"], "tanh")

    xx = x
    for i in range(4):
        r = x_r[..., 3 * i:3 * i + 3]
        xx = xx + r * (xx * xx - xx)
    e1 = xx
    for i in range(4, 8):
        r = x_r[..., 3 * i:3 * i + 3]
        xx = xx + r * (xx * xx - xx)
    to_nchw = lambda a: jnp.transpose(a, (0, 3, 1, 2))
    return to_nchw(e1), to_nchw(xx), to_nchw(x_r)


# -----------------------------------------------------------------------------
# Deterministic parameter init (same shapes as the nn.Conv2d layers; HWIO)
# -----------------------------------------------------------------------------
def init_params(key):
    layer_defs = [
        ("c1", 3, FEATS), ("c2", FEATS, FEATS), ("c3", FEATS, FEATS),
        ("c4", FEATS, FEATS), ("c5", FEATS * 2, FEATS),
        ("c6", FEATS * 2, FEATS), ("c7", FEATS * 2, 24),
    ]
    params = {}
    for name, cin, cout in layer_defs:
        key, kw, kb = jax.random.split(key, 3)
        bound = 1.0 / math.sqrt(cin * 3 * 3)           # PyTorch conv default
        w = jax.random.uniform(kw, (3, 3, cin, cout), jnp.float32,
                               minval=-bound, maxval=bound)
        b = jax.random.uniform(kb, (cout,), jnp.float32,
                               minval=-bound, maxval=bound)
        params[name] = (w, b)
    return params


if __name__ == "__main__":
    key = jax.random.PRNGKey(0)
    kx, kp = jax.random.split(key)
    # PyTorch-style NCHW input: batch=2, channels=3, spatial=16x16
    x = jax.random.uniform(kx, (2, 3, 16, 16), jnp.float32)
    params = init_params(kp)

    fwd = jax.jit(lambda inp: dark_model_forward(inp, params))
    enhance_image_1, enhance_image, r = fwd(x)
    jax.block_until_ready((enhance_image_1, enhance_image, r))

    assert enhance_image_1.shape == (2, 3, 16, 16)
    assert enhance_image.shape == (2, 3, 16, 16)
    assert r.shape == (2, 24, 16, 16)

    # Sanity-check against the pure-JAX f32 reference (bf16 matmul operands in
    # the kernel introduce a small, bounded drift).
    ref = jax.jit(lambda inp: dark_model_reference(inp, params))(x)
    jax.block_until_ready(ref)
    re1, re2, rr = ref
    err = max(float(jnp.max(jnp.abs(enhance_image_1 - re1))),
              float(jnp.max(jnp.abs(enhance_image - re2))),
              float(jnp.max(jnp.abs(r - rr))))
    assert err < 1e-1, f"max abs error vs f32 reference too large: {err}"

    print("KERNEL_OK")
</pallas_src>

<mosaic_0001>
module attributes {stable_mosaic.version = 11 : i64} {
  func.func @_dark_fused_kernel(%arg0: i32, %arg1: memref<1x16x16x3xf32, #tpu.memory_space<vmem>>, %arg2: memref<1x3x256xf32, #tpu.memory_space<vmem>>, %arg3: memref<72x32xbf16, #tpu.memory_space<vmem>>, %arg4: memref<288x56xbf16, #tpu.memory_space<vmem>>, %arg5: memref<288x64xbf16, #tpu.memory_space<vmem>>, %arg6: memref<288x64xbf16, #tpu.memory_space<vmem>>, %arg7: memref<288x32xbf16, #tpu.memory_space<vmem>>, %arg8: memref<288x32xbf16, #tpu.memory_space<vmem>>, %arg9: memref<288x24xbf16, #tpu.memory_space<vmem>>, %arg10: memref<1x32xf32, #tpu.memory_space<vmem>>, %arg11: memref<1x32xf32, #tpu.memory_space<vmem>>, %arg12: memref<1x32xf32, #tpu.memory_space<vmem>>, %arg13: memref<1x32xf32, #tpu.memory_space<vmem>>, %arg14: memref<1x32xf32, #tpu.memory_space<vmem>>, %arg15: memref<1x32xf32, #tpu.memory_space<vmem>>, %arg16: memref<1x24xf32, #tpu.memory_space<vmem>>, %arg17: memref<1x3x256xf32, #tpu.memory_space<vmem>>, %arg18: memref<1x3x256xf32, #tpu.memory_space<vmem>>, %arg19: memref<1x24x256xf32, #tpu.memory_space<vmem>>) attributes {dimension_semantics = [#tpu.dimension_semantics<parallel>], iteration_bounds = array<i64: 2>, scalar_prefetch = 0 : i64, scratch_operands = 0 : i64, tpu.core_type = #tpu.core_type<tc>, window_params = [{transform_indices = @transform_0, window_bounds = array<i64: 1, 16, 16, 3>}, {transform_indices = @transform_1, window_bounds = array<i64: 1, 3, 256>}, {pipeline_mode = #tpu.pipeline_mode<synchronous>, transform_indices = @transform_2, window_bounds = array<i64: 72, 32>}, {pipeline_mode = #tpu.pipeline_mode<synchronous>, transform_indices = @transform_3, window_bounds = array<i64: 288, 56>}, {pipeline_mode = #tpu.pipeline_mode<synchronous>, transform_indices = @transform_4, window_bounds = array<i64: 288, 64>}, {pipeline_mode = #tpu.pipeline_mode<synchronous>, transform_indices = @transform_5, window_bounds = array<i64: 288, 64>}, {pipeline_mode = #tpu.pipeline_mode<synchronous>, transform_indices = @transform_6, window_bounds = array<i64: 288, 32>}, {pipeline_mode = #tpu.pipeline_mode<synchronous>, transform_indices = @transform_7, window_bounds = array<i64: 288, 32>}, {pipeline_mode = #tpu.pipeline_mode<synchronous>, transform_indices = @transform_8, window_bounds = array<i64: 288, 24>}, {pipeline_mode = #tpu.pipeline_mode<synchronous>, transform_indices = @transform_9, window_bounds = array<i64: 1, 32>}, {pipeline_mode = #tpu.pipeline_mode<synchronous>, transform_indices = @transform_10, window_bounds = array<i64: 1, 32>}, {pipeline_mode = #tpu.pipeline_mode<synchronous>, transform_indices = @transform_11, window_bounds = array<i64: 1, 32>}, {pipeline_mode = #tpu.pipeline_mode<synchronous>, transform_indices = @transform_12, window_bounds = array<i64: 1, 32>}, {pipeline_mode = #tpu.pipeline_mode<synchronous>, transform_indices = @transform_13, window_bounds = array<i64: 1, 32>}, {pipeline_mode = #tpu.pipeline_mode<synchronous>, transform_indices = @transform_14, window_bounds = array<i64: 1, 32>}, {pipeline_mode = #tpu.pipeline_mode<synchronous>, transform_indices = @transform_15, window_bounds = array<i64: 1, 24>}, {transform_indices = @transform_16, window_bounds = array<i64: 1, 3, 256>}, {transform_indices = @transform_17, window_bounds = array<i64: 1, 3, 256>}, {transform_indices = @transform_18, window_bounds = array<i64: 1, 24, 256>}]} {
    %c0 = arith.constant 0 : index
    %c0_0 = arith.constant 0 : index
    %c0_1 = arith.constant 0 : index
    %c0_2 = arith.constant 0 : index
    %0 = vector.load %arg1[%c0, %c0_0, %c0_1, %c0_2] : memref<1x16x16x3xf32, #tpu.memory_space<vmem>>, vector<1x16x16x3xf32>
    %1 = vector.shape_cast %0 : vector<1x16x16x3xf32> to vector<16x16x3xf32>
    %2 = arith.truncf %1 : vector<16x16x3xf32> to vector<16x16x3xbf16>
    %cst = arith.constant 0.000000e+00 : bf16
    %3 = vector.broadcast %cst : bf16 to vector<16x16x5xbf16>
    %4 = tpu.concatenate %2, %3 in 2 : vector<16x16x3xbf16>, vector<16x16x5xbf16> -> vector<16x16x8xbf16>
    %cst_3 = arith.constant 0.000000e+00 : bf16
    %5 = vector.broadcast %cst_3 : bf16 to vector<1x16x8xbf16>
    %6 = tpu.concatenate %5, %4, %5 in 0 : vector<1x16x8xbf16>, vector<16x16x8xbf16>, vector<1x16x8xbf16> -> vector<18x16x8xbf16>
    %cst_4 = arith.constant 0.000000e+00 : bf16
    %7 = vector.broadcast %cst_4 : bf16 to vector<18x1x8xbf16>
    %8 = tpu.concatenate %7, %6, %7 in 1 : vector<18x1x8xbf16>, vector<18x16x8xbf16>, vector<18x1x8xbf16> -> vector<18x18x8xbf16>
    %9 = vector.extract_strided_slice %8 {offsets = [0, 0, 0], sizes = [16, 16, 8], strides = [1, 1, 1]} : vector<18x18x8xbf16> to vector<16x16x8xbf16>
    %10 = vector.extract_strided_slice %8 {offsets = [0, 1, 0], sizes = [16, 16, 8], strides = [1, 1, 1]} : vector<18x18x8xbf16> to vector<16x16x8xbf16>
    %11 = vector.extract_strided_slice %8 {offsets = [0, 2, 0], sizes = [16, 16, 8], strides = [1, 1, 1]} : vector<18x18x8xbf16> to vector<16x16x8xbf16>
    %12 = vector.extract_strided_slice %8 {offsets = [1, 0, 0], sizes = [16, 16, 8], strides = [1, 1, 1]} : vector<18x18x8xbf16> to vector<16x16x8xbf16>
    %13 = vector.extract_strided_slice %8 {offsets = [1, 1, 0], sizes = [16, 16, 8], strides = [1, 1, 1]} : vector<18x18x8xbf16> to vector<16x16x8xbf16>
    %14 = vector.extract_strided_slice %8 {offsets = [1, 2, 0], sizes = [16, 16, 8], strides = [1, 1, 1]} : vector<18x18x8xbf16> to vector<16x16x8xbf16>
    %15 = vector.extract_strided_slice %8 {offsets = [2, 0, 0], sizes = [16, 16, 8], strides = [1, 1, 1]} : vector<18x18x8xbf16> to vector<16x16x8xbf16>
    %16 = vector.extract_strided_slice %8 {offsets = [2, 1, 0], sizes = [16, 16, 8], strides = [1, 1, 1]} : vector<18x18x8xbf16> to vector<16x16x8xbf16>
    %17 = vector.extract_strided_slice %8 {offsets = [2, 2, 0], sizes = [16, 16, 8], strides = [1, 1, 1]} : vector<18x18x8xbf16> to vector<16x16x8xbf16>
    %18 = tpu.concatenate %9, %10, %11, %12, %13, %14, %15, %16, %17 in 2 : vector<16x16x8xbf16>, vector<16x16x8xbf16>, vector<16x16x8xbf16>, vector<16x16x8xbf16>, vector<16x16x8xbf16>, vector<16x16x8xbf16>, vector<16x16x8xbf16>, vector<16x16x8xbf16>, vector<16x16x8xbf16> -> vector<16x16x72xbf16>
    %19 = vector.shape_cast %18 : vector<16x16x72xbf16> to vector<256x72xbf16>
    %c0_5 = arith.constant 0 : index
    %c0_6 = arith.constant 0 : index
    %20 = vector.load %arg3[%c0_5, %c0_6] : memref<72x32xbf16, #tpu.memory_space<vmem>>, vector<72x32xbf16>
    %cst_7 = arith.constant dense<0.000000e+00> : vector<256x32xf32>
    %21 = tpu.matmul %19, %20, %cst_7 {dimension_numbers = #tpu.dot_dimension_numbers<[1], [0], [0], [1], [0, 0, 1, 1], [], []>} : vector<256x72xbf16>, vector<72x32xbf16>, vector<256x32xf32> -> vector<256x32xf32>
    %c0_8 = arith.constant 0 : index
    %c0_9 = arith.constant 0 : index
    %22 = vector.load %arg10[%c0_8, %c0_9] : memref<1x32xf32, #tpu.memory_space<vmem>>, vector<1x32xf32>
    %23 = vector.broadcast %22 : vector<1x32xf32> to vector<256x32xf32>
    %24 = arith.addf %21, %23 : vector<256x32xf32>
    %cst_10 = arith.constant 0.000000e+00 : f32
    %25 = vector.broadcast %cst_10 : f32 to vector<256x32xf32>
    %26 = arith.maximumf %24, %25 : vector<256x32xf32>
    %27 = arith.truncf %26 : vector<256x32xf32> to vector<256x32xbf16>
    %28 = vector.shape_cast %27 : vector<256x32xbf16> to vector<16x16x32xbf16>
    %cst_11 = arith.constant 0.000000e+00 : bf16
    %29 = vector.broadcast %cst_11 : bf16 to vector<1x16x32xbf16>
    %30 = tpu.concatenate %29, %28, %29 in 0 : vector<1x16x32xbf16>, vector<16x16x32xbf16>, vector<1x16x32xbf16> -> vector<18x16x32xbf16>
    %cst_12 = arith.constant 0.000000e+00 : bf16
    %31 = vector.broadcast %cst_12 : bf16 to vector<18x1x32xbf16>
    %32 = tpu.concatenate %31, %30, %31 in 1 : vector<18x1x32xbf16>, vector<18x16x32xbf16>, vector<18x1x32xbf16> -> vector<18x18x32xbf16>
    %33 = vector.extract_strided_slice %32 {offsets = [0, 0, 0], sizes = [16, 16, 32], strides = [1, 1, 1]} : vector<18x18x32xbf16> to vector<16x16x32xbf16>
    %34 = vector.extract_strided_slice %32 {offsets = [0, 1, 0], sizes = [16, 16, 32], strides = [1, 1, 1]} : vector<18x18x32xbf16> to vector<16x16x32xbf16>
    %35 = vector.extract_strided_slice %32 {offsets = [0, 2, 0], sizes = [16, 16, 32], strides = [1, 1, 1]} : vector<18x18x32xbf16> to vector<16x16x32xbf16>
    %36 = vector.extract_strided_slice %32 {offsets = [1, 0, 0], sizes = [16, 16, 32], strides = [1, 1, 1]} : vector<18x18x32xbf16> to vector<16x16x32xbf16>
    %37 = vector.extract_strided_slice %32 {offsets = [1, 1, 0], sizes = [16, 16, 32], strides = [1, 1, 1]} : vector<18x18x32xbf16> to vector<16x16x32xbf16>
    %38 = vector.extract_strided_slice %32 {offsets = [1, 2, 0], sizes = [16, 16, 32], strides = [1, 1, 1]} : vector<18x18x32xbf16> to vector<16x16x32xbf16>
    %39 = vector.extract_strided_slice %32 {offsets = [2, 0, 0], sizes = [16, 16, 32], strides = [1, 1, 1]} : vector<18x18x32xbf16> to vector<16x16x32xbf16>
    %40 = vector.extract_strided_slice %32 {offsets = [2, 1, 0], sizes = [16, 16, 32], strides = [1, 1, 1]} : vector<18x18x32xbf16> to vector<16x16x32xbf16>
    %41 = vector.extract_strided_slice %32 {offsets = [2, 2, 0], sizes = [16, 16, 32], strides = [1, 1, 1]} : vector<18x18x32xbf16> to vector<16x16x32xbf16>
    %42 = tpu.concatenate %33, %34, %35, %36, %37, %38, %39, %40, %41 in 2 : vector<16x16x32xbf16>, vector<16x16x32xbf16>, vector<16x16x32xbf16>, vector<16x16x32xbf16>, vector<16x16x32xbf16>, vector<16x16x32xbf16>, vector<16x16x32xbf16>, vector<16x16x32xbf16>, vector<16x16x32xbf16> -> vector<16x16x288xbf16>
    %43 = vector.shape_cast %42 : vector<16x16x288xbf16> to vector<256x288xbf16>
    %c0_13 = arith.constant 0 : index
    %c0_14 = arith.constant 0 : index
    %44 = vector.load %arg4[%c0_13, %c0_14] : memref<288x56xbf16, #tpu.memory_space<vmem>>, vector<288x56xbf16>
    %cst_15 = arith.constant dense<0.000000e+00> : vector<256x56xf32>
    %45 = tpu.matmul %43, %44, %cst_15 {dimension_numbers = #tpu.dot_dimension_numbers<[1], [0], [0], [1], [0, 0, 1, 1], [], []>} : vector<256x288xbf16>, vector<288x56xbf16>, vector<256x56xf32> -> vector<256x56xf32>
    %46 = vector.extract_strided_slice %45 {offsets = [0, 0], sizes = [256, 32], strides = [1, 1]} : vector<256x56xf32> to vector<256x32xf32>
    %c0_16 = arith.constant 0 : index
    %c0_17 = arith.constant 0 : index
    %47 = vector.load %arg11[%c0_16, %c0_17] : memref<1x32xf32, #tpu.memory_space<vmem>>, vector<1x32xf32>
    %48 = vector.broadcast %47 : vector<1x32xf32> to vector<256x32xf32>
    %49 = arith.addf %46, %48 : vector<256x32xf32>
    %cst_18 = arith.constant 0.000000e+00 : f32
    %50 = vector.broadcast %cst_18 : f32 to vector<256x32xf32>
    %51 = arith.maximumf %49, %50 : vector<256x32xf32>
    %52 = vector.extract_strided_slice %45 {offsets = [0, 32], sizes = [256, 24], strides = [1, 1]} : vector<256x56xf32> to vector<256x24xf32>
    %53 = arith.truncf %51 : vector<256x32xf32> to vector<256x32xbf16>
    %54 = vector.shape_cast %53 : vector<256x32xbf16> to vector<16x16x32xbf16>
    %cst_19 = arith.constant 0.000000e+00 : bf16
    %55 = vector.broadcast %cst_19 : bf16 to vector<1x16x32xbf16>
    %56 = tpu.concatenate %55, %54, %55 in 0 : vector<1x16x32xbf16>, vector<16x16x32xbf16>, vector<1x16x32xbf16> -> vector<18x16x32xbf16>
    %cst_20 = arith.constant 0.000000e+00 : bf16
    %57 = vector.broadcast %cst_20 : bf16 to vector<18x1x32xbf16>
    %58 = tpu.concatenate %57, %56, %57 in 1 : vector<18x1x32xbf16>, vector<18x16x32xbf16>, vector<18x1x32xbf16> -> vector<18x18x32xbf16>
    %59 = vector.extract_strided_slice %58 {offsets = [0, 0, 0], sizes = [16, 16, 32], strides = [1, 1, 1]} : vector<18x18x32xbf16> to vector<16x16x32xbf16>
    %60 = vector.extract_strided_slice %58 {offsets = [0, 1, 0], sizes = [16, 16, 32], strides = [1, 1, 1]} : vector<18x18x32xbf16> to vector<16x16x32xbf16>
    %61 = vector.extract_strided_slice %58 {offsets = [0, 2, 0], sizes = [16, 16, 32], strides = [1, 1, 1]} : vector<18x18x32xbf16> to vector<16x16x32xbf16>
    %62 = vector.extract_strided_slice %58 {offsets = [1, 0, 0], sizes = [16, 16, 32], strides = [1, 1, 1]} : vector<18x18x32xbf16> to vector<16x16x32xbf16>
    %63 = vector.extract_strided_slice %58 {offsets = [1, 1, 0], sizes = [16, 16, 32], strides = [1, 1, 1]} : vector<18x18x32xbf16> to vector<16x16x32xbf16>
    %64 = vector.extract_strided_slice %58 {offsets = [1, 2, 0], sizes = [16, 16, 32], strides = [1, 1, 1]} : vector<18x18x32xbf16> to vector<16x16x32xbf16>
    %65 = vector.extract_strided_slice %58 {offsets = [2, 0, 0], sizes = [16, 16, 32], strides = [1, 1, 1]} : vector<18x18x32xbf16> to vector<16x16x32xbf16>
    %66 = vector.extract_strided_slice %58 {offsets = [2, 1, 0], sizes = [16, 16, 32], strides = [1, 1, 1]} : vector<18x18x32xbf16> to vector<16x16x32xbf16>
    %67 = vector.extract_strided_slice %58 {offsets = [2, 2, 0], sizes = [16, 16, 32], strides = [1, 1, 1]} : vector<18x18x32xbf16> to vector<16x16x32xbf16>
    %68 = tpu.concatenate %59, %60, %61, %62, %63, %64, %65, %66, %67 in 2 : vector<16x16x32xbf16>, vector<16x16x32xbf16>, vector<16x16x32xbf16>, vector<16x16x32xbf16>, vector<16x16x32xbf16>, vector<16x16x32xbf16>, vector<16x16x32xbf16>, vector<16x16x32xbf16>, vector<16x16x32xbf16> -> vector<16x16x288xbf16>
    %69 = vector.shape_cast %68 : vector<16x16x288xbf16> to vector<256x288xbf16>
    %c0_21 = arith.constant 0 : index
    %c0_22 = arith.constant 0 : index
    %70 = vector.load %arg5[%c0_21, %c0_22] : memref<288x64xbf16, #tpu.memory_space<vmem>>, vector<288x64xbf16>
    %cst_23 = arith.constant dense<0.000000e+00> : vector<256x64xf32>
    %71 = tpu.matmul %69, %70, %cst_23 {dimension_numbers = #tpu.dot_dimension_numbers<[1], [0], [0], [1], [0, 0, 1, 1], [], []>} : vector<256x288xbf16>, vector<288x64xbf16>, vector<256x64xf32> -> vector<256x64xf32>
    %72 = vector.extract_strided_slice %71 {offsets = [0, 0], sizes = [256, 32], strides = [1, 1]} : vector<256x64xf32> to vector<256x32xf32>
    %c0_24 = arith.constant 0 : index
    %c0_25 = arith.constant 0 : index
    %73 = vector.load %arg12[%c0_24, %c0_25] : memref<1x32xf32, #tpu.memory_space<vmem>>, vector<1x32xf32>
    %74 = vector.broadcast %73 : vector<1x32xf32> to vector<256x32xf32>
    %75 = arith.addf %72, %74 : vector<256x32xf32>
    %cst_26 = arith.constant 0.000000e+00 : f32
    %76 = vector.broadcast %cst_26 : f32 to vector<256x32xf32>
    %77 = arith.maximumf %75, %76 : vector<256x32xf32>
    %78 = vector.extract_strided_slice %71 {offsets = [0, 32], sizes = [256, 32], strides = [1, 1]} : vector<256x64xf32> to vector<256x32xf32>
    %79 = arith.truncf %77 : vector<256x32xf32> to vector<256x32xbf16>
    %80 = vector.shape_cast %79 : vector<256x32xbf16> to vector<16x16x32xbf16>
    %cst_27 = arith.constant 0.000000e+00 : bf16
    %81 = vector.broadcast %cst_27 : bf16 to vector<1x16x32xbf16>
    %82 = tpu.concatenate %81, %80, %81 in 0 : vector<1x16x32xbf16>, vector<16x16x32xbf16>, vector<1x16x32xbf16> -> vector<18x16x32xbf16>
    %cst_28 = arith.constant 0.000000e+00 : bf16
    %83 = vector.broadcast %cst_28 : bf16 to vector<18x1x32xbf16>
    %84 = tpu.concatenate %83, %82, %83 in 1 : vector<18x1x32xbf16>, vector<18x16x32xbf16>, vector<18x1x32xbf16> -> vector<18x18x32xbf16>
    %85 = vector.extract_strided_slice %84 {offsets = [0, 0, 0], sizes = [16, 16, 32], strides = [1, 1, 1]} : vector<18x18x32xbf16> to vector<16x16x32xbf16>
    %86 = vector.extract_strided_slice %84 {offsets = [0, 1, 0], sizes = [16, 16, 32], strides = [1, 1, 1]} : vector<18x18x32xbf16> to vector<16x16x32xbf16>
    %87 = vector.extract_strided_slice %84 {offsets = [0, 2, 0], sizes = [16, 16, 32], strides = [1, 1, 1]} : vector<18x18x32xbf16> to vector<16x16x32xbf16>
    %88 = vector.extract_strided_slice %84 {offsets = [1, 0, 0], sizes = [16, 16, 32], strides = [1, 1, 1]} : vector<18x18x32xbf16> to vector<16x16x32xbf16>
    %89 = vector.extract_strided_slice %84 {offsets = [1, 1, 0], sizes = [16, 16, 32], strides = [1, 1, 1]} : vector<18x18x32xbf16> to vector<16x16x32xbf16>
    %90 = vector.extract_strided_slice %84 {offsets = [1, 2, 0], sizes = [16, 16, 32], strides = [1, 1, 1]} : vector<18x18x32xbf16> to vector<16x16x32xbf16>
    %91 = vector.extract_strided_slice %84 {offsets = [2, 0, 0], sizes = [16, 16, 32], strides = [1, 1, 1]} : vector<18x18x32xbf16> to vector<16x16x32xbf16>
    %92 = vector.extract_strided_slice %84 {offsets = [2, 1, 0], sizes = [16, 16, 32], strides = [1, 1, 1]} : vector<18x18x32xbf16> to vector<16x16x32xbf16>
    %93 = vector.extract_strided_slice %84 {offsets = [2, 2, 0], sizes = [16, 16, 32], strides = [1, 1, 1]} : vector<18x18x32xbf16> to vector<16x16x32xbf16>
    %94 = tpu.concatenate %85, %86, %87, %88, %89, %90, %91, %92, %93 in 2 : vector<16x16x32xbf16>, vector<16x16x32xbf16>, vector<16x16x32xbf16>, vector<16x16x32xbf16>, vector<16x16x32xbf16>, vector<16x16x32xbf16>, vector<16x16x32xbf16>, vector<16x16x32xbf16>, vector<16x16x32xbf16> -> vector<16x16x288xbf16>
    %95 = vector.shape_cast %94 : vector<16x16x288xbf16> to vector<256x288xbf16>
    %c0_29 = arith.constant 0 : index
    %c0_30 = arith.constant 0 : index
    %96 = vector.load %arg6[%c0_29, %c0_30] : memref<288x64xbf16, #tpu.memory_space<vmem>>, vector<288x64xbf16>
    %cst_31 = arith.constant dense<0.000000e+00> : vector<256x64xf32>
    %97 = tpu.matmul %95, %96, %cst_31 {dimension_numbers = #tpu.dot_dimension_numbers<[1], [0], [0], [1], [0, 0, 1, 1], [], []>} : vector<256x288xbf16>, vector<288x64xbf16>, vector<256x64xf32> -> vector<256x64xf32>
    %98 = vector.extract_strided_slice %97 {offsets = [0, 0], sizes = [256, 32], strides = [1, 1]} : vector<256x64xf32> to vector<256x32xf32>
    %c0_32 = arith.constant 0 : index
    %c0_33 = arith.constant 0 : index
    %99 = vector.load %arg13[%c0_32, %c0_33] : memref<1x32xf32, #tpu.memory_space<vmem>>, vector<1x32xf32>
    %100 = vector.broadcast %99 : vector<1x32xf32> to vector<256x32xf32>
    %101 = arith.addf %98, %100 : vector<256x32xf32>
    %cst_34 = arith.constant 0.000000e+00 : f32
    %102 = vector.broadcast %cst_34 : f32 to vector<256x32xf32>
    %103 = arith.maximumf %101, %102 : vector<256x32xf32>
    %104 = vector.extract_strided_slice %97 {offsets = [0, 32], sizes = [256, 32], strides = [1, 1]} : vector<256x64xf32> to vector<256x32xf32>
    %105 = arith.truncf %103 : vector<256x32xf32> to vector<256x32xbf16>
    %106 = vector.shape_cast %105 : vector<256x32xbf16> to vector<16x16x32xbf16>
    %cst_35 = arith.constant 0.000000e+00 : bf16
    %107 = vector.broadcast %cst_35 : bf16 to vector<1x16x32xbf16>
    %108 = tpu.concatenate %107, %106, %107 in 0 : vector<1x16x32xbf16>, vector<16x16x32xbf16>, vector<1x16x32xbf16> -> vector<18x16x32xbf16>
    %cst_36 = arith.constant 0.000000e+00 : bf16
    %109 = vector.broadcast %cst_36 : bf16 to vector<18x1x32xbf16>
    %110 = tpu.concatenate %109, %108, %109 in 1 : vector<18x1x32xbf16>, vector<18x16x32xbf16>, vector<18x1x32xbf16> -> vector<18x18x32xbf16>
    %111 = vector.extract_strided_slice %110 {offsets = [0, 0, 0], sizes = [16, 16, 32], strides = [1, 1, 1]} : vector<18x18x32xbf16> to vector<16x16x32xbf16>
    %112 = vector.extract_strided_slice %110 {offsets = [0, 1, 0], sizes = [16, 16, 32], strides = [1, 1, 1]} : vector<18x18x32xbf16> to vector<16x16x32xbf16>
    %113 = vector.extract_strided_slice %110 {offsets = [0, 2, 0], sizes = [16, 16, 32], strides = [1, 1, 1]} : vector<18x18x32xbf16> to vector<16x16x32xbf16>
    %114 = vector.extract_strided_slice %110 {offsets = [1, 0, 0], sizes = [16, 16, 32], strides = [1, 1, 1]} : vector<18x18x32xbf16> to vector<16x16x32xbf16>
    %115 = vector.extract_strided_slice %110 {offsets = [1, 1, 0], sizes = [16, 16, 32], strides = [1, 1, 1]} : vector<18x18x32xbf16> to vector<16x16x32xbf16>
    %116 = vector.extract_strided_slice %110 {offsets = [1, 2, 0], sizes = [16, 16, 32], strides = [1, 1, 1]} : vector<18x18x32xbf16> to vector<16x16x32xbf16>
    %117 = vector.extract_strided_slice %110 {offsets = [2, 0, 0], sizes = [16, 16, 32], strides = [1, 1, 1]} : vector<18x18x32xbf16> to vector<16x16x32xbf16>
    %118 = vector.extract_strided_slice %110 {offsets = [2, 1, 0], sizes = [16, 16, 32], strides = [1, 1, 1]} : vector<18x18x32xbf16> to vector<16x16x32xbf16>
    %119 = vector.extract_strided_slice %110 {offsets = [2, 2, 0], sizes = [16, 16, 32], strides = [1, 1, 1]} : vector<18x18x32xbf16> to vector<16x16x32xbf16>
    %120 = tpu.concatenate %111, %112, %113, %114, %115, %116, %117, %118, %119 in 2 : vector<16x16x32xbf16>, vector<16x16x32xbf16>, vector<16x16x32xbf16>, vector<16x16x32xbf16>, vector<16x16x32xbf16>, vector<16x16x32xbf16>, vector<16x16x32xbf16>, vector<16x16x32xbf16>, vector<16x16x32xbf16> -> vector<16x16x288xbf16>
    %121 = vector.shape_cast %120 : vector<16x16x288xbf16> to vector<256x288xbf16>
    %c0_37 = arith.constant 0 : index
    %c0_38 = arith.constant 0 : index
    %122 = vector.load %arg7[%c0_37, %c0_38] : memref<288x32xbf16, #tpu.memory_space<vmem>>, vector<288x32xbf16>
    %cst_39 = arith.constant dense<0.000000e+00> : vector<256x32xf32>
    %123 = tpu.matmul %121, %122, %cst_39 {dimension_numbers = #tpu.dot_dimension_numbers<[1], [0], [0], [1], [0, 0, 1, 1], [], []>} : vector<256x288xbf16>, vector<288x32xbf16>, vector<256x32xf32> -> vector<256x32xf32>
    %124 = arith.addf %104, %123 : vector<256x32xf32>
    %c0_40 = arith.constant 0 : index
    %c0_41 = arith.constant 0 : index
    %125 = vector.load %arg14[%c0_40, %c0_41] : memref<1x32xf32, #tpu.memory_space<vmem>>, vector<1x32xf32>
    %126 = vector.broadcast %125 : vector<1x32xf32> to vector<256x32xf32>
    %127 = arith.addf %124, %126 : vector<256x32xf32>
    %cst_42 = arith.constant 0.000000e+00 : f32
    %128 = vector.broadcast %cst_42 : f32 to vector<256x32xf32>
    %129 = arith.maximumf %127, %128 : vector<256x32xf32>
    %130 = arith.truncf %129 : vector<256x32xf32> to vector<256x32xbf16>
    %131 = vector.shape_cast %130 : vector<256x32xbf16> to vector<16x16x32xbf16>
    %cst_43 = arith.constant 0.000000e+00 : bf16
    %132 = vector.broadcast %cst_43 : bf16 to vector<1x16x32xbf16>
    %133 = tpu.concatenate %132, %131, %132 in 0 : vector<1x16x32xbf16>, vector<16x16x32xbf16>, vector<1x16x32xbf16> -> vector<18x16x32xbf16>
    %cst_44 = arith.constant 0.000000e+00 : bf16
    %134 = vector.broadcast %cst_44 : bf16 to vector<18x1x32xbf16>
    %135 = tpu.concatenate %134, %133, %134 in 1 : vector<18x1x32xbf16>, vector<18x16x32xbf16>, vector<18x1x32xbf16> -> vector<18x18x32xbf16>
    %136 = vector.extract_strided_slice %135 {offsets = [0, 0, 0], sizes = [16, 16, 32], strides = [1, 1, 1]} : vector<18x18x32xbf16> to vector<16x16x32xbf16>
    %137 = vector.extract_strided_slice %135 {offsets = [0, 1, 0], sizes = [16, 16, 32], strides = [1, 1, 1]} : vector<18x18x32xbf16> to vector<16x16x32xbf16>
    %138 = vector.extract_strided_slice %135 {offsets = [0, 2, 0], sizes = [16, 16, 32], strides = [1, 1, 1]} : vector<18x18x32xbf16> to vector<16x16x32xbf16>
    %139 = vector.extract_strided_slice %135 {offsets = [1, 0, 0], sizes = [16, 16, 32], strides = [1, 1, 1]} : vector<18x18x32xbf16> to vector<16x16x32xbf16>
    %140 = vector.extract_strided_slice %135 {offsets = [1, 1, 0], sizes = [16, 16, 32], strides = [1, 1, 1]} : vector<18x18x32xbf16> to vector<16x16x32xbf16>
    %141 = vector.extract_strided_slice %135 {offsets = [1, 2, 0], sizes = [16, 16, 32], strides = [1, 1, 1]} : vector<18x18x32xbf16> to vector<16x16x32xbf16>
    %142 = vector.extract_strided_slice %135 {offsets = [2, 0, 0], sizes = [16, 16, 32], strides = [1, 1, 1]} : vector<18x18x32xbf16> to vector<16x16x32xbf16>
    %143 = vector.extract_strided_slice %135 {offsets = [2, 1, 0], sizes = [16, 16, 32], strides = [1, 1, 1]} : vector<18x18x32xbf16> to vector<16x16x32xbf16>
    %144 = vector.extract_strided_slice %135 {offsets = [2, 2, 0], sizes = [16, 16, 32], strides = [1, 1, 1]} : vector<18x18x32xbf16> to vector<16x16x32xbf16>
    %145 = tpu.concatenate %136, %137, %138, %139, %140, %141, %142, %143, %144 in 2 : vector<16x16x32xbf16>, vector<16x16x32xbf16>, vector<16x16x32xbf16>, vector<16x16x32xbf16>, vector<16x16x32xbf16>, vector<16x16x32xbf16>, vector<16x16x32xbf16>, vector<16x16x32xbf16>, vector<16x16x32xbf16> -> vector<16x16x288xbf16>
    %146 = vector.shape_cast %145 : vector<16x16x288xbf16> to vector<256x288xbf16>
    %c0_45 = arith.constant 0 : index
    %c0_46 = arith.constant 0 : index
    %147 = vector.load %arg8[%c0_45, %c0_46] : memref<288x32xbf16, #tpu.memory_space<vmem>>, vector<288x32xbf16>
    %cst_47 = arith.constant dense<0.000000e+00> : vector<256x32xf32>
    %148 = tpu.matmul %146, %147, %cst_47 {dimension_numbers = #tpu.dot_dimension_numbers<[1], [0], [0], [1], [0, 0, 1, 1], [], []>} : vector<256x288xbf16>, vector<288x32xbf16>, vector<256x32xf32> -> vector<256x32xf32>
    %149 = arith.addf %78, %148 : vector<256x32xf32>
    %c0_48 = arith.constant 0 : index
    %c0_49 = arith.constant 0 : index
    %150 = vector.load %arg15[%c0_48, %c0_49] : memref<1x32xf32, #tpu.memory_space<vmem>>, vector<1x32xf32>
    %151 = vector.broadcast %150 : vector<1x32xf32> to vector<256x32xf32>
    %152 = arith.addf %149, %151 : vector<256x32xf32>
    %cst_50 = arith.constant 0.000000e+00 : f32
    %153 = vector.broadcast %cst_50 : f32 to vector<256x32xf32>
    %154 = arith.maximumf %152, %153 : vector<256x32xf32>
    %155 = arith.truncf %154 : vector<256x32xf32> to vector<256x32xbf16>
    %156 = vector.shape_cast %155 : vector<256x32xbf16> to vector<16x16x32xbf16>
    %cst_51 = arith.constant 0.000000e+00 : bf16
    %157 = vector.broadcast %cst_51 : bf16 to vector<1x16x32xbf16>
    %158 = tpu.concatenate %157, %156, %157 in 0 : vector<1x16x32xbf16>, vector<16x16x32xbf16>, vector<1x16x32xbf16> -> vector<18x16x32xbf16>
    %cst_52 = arith.constant 0.000000e+00 : bf16
    %159 = vector.broadcast %cst_52 : bf16 to vector<18x1x32xbf16>
    %160 = tpu.concatenate %159, %158, %159 in 1 : vector<18x1x32xbf16>, vector<18x16x32xbf16>, vector<18x1x32xbf16> -> vector<18x18x32xbf16>
    %161 = vector.extract_strided_slice %160 {offsets = [0, 0, 0], sizes = [16, 16, 32], strides = [1, 1, 1]} : vector<18x18x32xbf16> to vector<16x16x32xbf16>
    %162 = vector.extract_strided_slice %160 {offsets = [0, 1, 0], sizes = [16, 16, 32], strides = [1, 1, 1]} : vector<18x18x32xbf16> to vector<16x16x32xbf16>
    %163 = vector.extract_strided_slice %160 {offsets = [0, 2, 0], sizes = [16, 16, 32], strides = [1, 1, 1]} : vector<18x18x32xbf16> to vector<16x16x32xbf16>
    %164 = vector.extract_strided_slice %160 {offsets = [1, 0, 0], sizes = [16, 16, 32], strides = [1, 1, 1]} : vector<18x18x32xbf16> to vector<16x16x32xbf16>
    %165 = vector.extract_strided_slice %160 {offsets = [1, 1, 0], sizes = [16, 16, 32], strides = [1, 1, 1]} : vector<18x18x32xbf16> to vector<16x16x32xbf16>
    %166 = vector.extract_strided_slice %160 {offsets = [1, 2, 0], sizes = [16, 16, 32], strides = [1, 1, 1]} : vector<18x18x32xbf16> to vector<16x16x32xbf16>
    %167 = vector.extract_strided_slice %160 {offsets = [2, 0, 0], sizes = [16, 16, 32], strides = [1, 1, 1]} : vector<18x18x32xbf16> to vector<16x16x32xbf16>
    %168 = vector.extract_strided_slice %160 {offsets = [2, 1, 0], sizes = [16, 16, 32], strides = [1, 1, 1]} : vector<18x18x32xbf16> to vector<16x16x32xbf16>
    %169 = vector.extract_strided_slice %160 {offsets = [2, 2, 0], sizes = [16, 16, 32], strides = [1, 1, 1]} : vector<18x18x32xbf16> to vector<16x16x32xbf16>
    %170 = tpu.concatenate %161, %162, %163, %164, %165, %166, %167, %168, %169 in 2 : vector<16x16x32xbf16>, vector<16x16x32xbf16>, vector<16x16x32xbf16>, vector<16x16x32xbf16>, vector<16x16x32xbf16>, vector<16x16x32xbf16>, vector<16x16x32xbf16>, vector<16x16x32xbf16>, vector<16x16x32xbf16> -> vector<16x16x288xbf16>
    %171 = vector.shape_cast %170 : vector<16x16x288xbf16> to vector<256x288xbf16>
    %c0_53 = arith.constant 0 : index
    %c0_54 = arith.constant 0 : index
    %172 = vector.load %arg9[%c0_53, %c0_54] : memref<288x24xbf16, #tpu.memory_space<vmem>>, vector<288x24xbf16>
    %cst_55 = arith.constant dense<0.000000e+00> : vector<256x24xf32>
    %173 = tpu.matmul %171, %172, %cst_55 {dimension_numbers = #tpu.dot_dimension_numbers<[1], [0], [0], [1], [0, 0, 1, 1], [], []>} : vector<256x288xbf16>, vector<288x24xbf16>, vector<256x24xf32> -> vector<256x24xf32>
    %174 = arith.addf %52, %173 : vector<256x24xf32>
    %c0_56 = arith.constant 0 : index
    %c0_57 = arith.constant 0 : index
    %175 = vector.load %arg16[%c0_56, %c0_57] : memref<1x24xf32, #tpu.memory_space<vmem>>, vector<1x24xf32>
    %176 = vector.broadcast %175 : vector<1x24xf32> to vector<256x24xf32>
    %177 = arith.addf %174, %176 : vector<256x24xf32>
    %178 = math.tanh %177 : vector<256x24xf32>
    %179 = tpu.transpose %178, [1, 0] : vector<256x24xf32> -> vector<24x256xf32>
    %c0_58 = arith.constant 0 : index
    %c0_59 = arith.constant 0 : index
    %c0_60 = arith.constant 0 : index
    %180 = vector.load %arg19[%c0_58, %c0_59, %c0_60] : memref<1x24x256xf32, #tpu.memory_space<vmem>>, vector<1x24x256xf32>
    %181 = vector.shape_cast %180 : vector<1x24x256xf32> to vector<24x256xf32>
    %182 = vector.shape_cast %179 : vector<24x256xf32> to vector<1x24x256xf32>
    tpu.vector_store %arg19[%c0_58, %c0_59, %c0_60], %182 {strides = array<i32>} : memref<1x24x256xf32, #tpu.memory_space<vmem>>, vector<1x24x256xf32>,
    %c0_61 = arith.constant 0 : index
    %c0_62 = arith.constant 0 : index
    %c0_63 = arith.constant 0 : index
    %183 = vector.load %arg2[%c0_61, %c0_62, %c0_63] : memref<1x3x256xf32, #tpu.memory_space<vmem>>, vector<1x3x256xf32>
    %184 = vector.shape_cast %183 : vector<1x3x256xf32> to vector<3x256xf32>
    %185 = vector.extract_strided_slice %179 {offsets = [0, 0], sizes = [3, 256], strides = [1, 1]} : vector<24x256xf32> to vector<3x256xf32>
    %186 = arith.mulf %184, %184 : vector<3x256xf32>
    %187 = arith.subf %186, %184 : vector<3x256xf32>
    %188 = arith.mulf %185, %187 : vector<3x256xf32>
    %189 = arith.addf %184, %188 : vector<3x256xf32>
    %190 = vector.extract_strided_slice %179 {offsets = [3, 0], sizes = [3, 256], strides = [1, 1]} : vector<24x256xf32> to vector<3x256xf32>
    %191 = arith.mulf %189, %189 : vector<3x256xf32>
    %192 = arith.subf %191, %189 : vector<3x256xf32>
    %193 = arith.mulf %190, %192 : vector<3x256xf32>
    %194 = arith.addf %189, %193 : vector<3x256xf32>
    %195 = vector.extract_strided_slice %179 {offsets = [6, 0], sizes = [3, 256], strides = [1, 1]} : vector<24x256xf32> to vector<3x256xf32>
    %196 = arith.mulf %194, %194 : vector<3x256xf32>
    %197 = arith.subf %196, %194 : vector<3x256xf32>
    %198 = arith.mulf %195, %197 : vector<3x256xf32>
    %199 = arith.addf %194, %198 : vector<3x256xf32>
    %200 = vector.extract_strided_slice %179 {offsets = [9, 0], sizes = [3, 256], strides = [1, 1]} : vector<24x256xf32> to vector<3x256xf32>
    %201 = arith.mulf %199, %199 : vector<3x256xf32>
    %202 = arith.subf %201, %199 : vector<3x256xf32>
    %203 = arith.mulf %200, %202 : vector<3x256xf32>
    %204 = arith.addf %199, %203 : vector<3x256xf32>
    %c0_64 = arith.constant 0 : index
    %c0_65 = arith.constant 0 : index
    %c0_66 = arith.constant 0 : index
    %205 = vector.load %arg17[%c0_64, %c0_65, %c0_66] : memref<1x3x256xf32, #tpu.memory_space<vmem>>, vector<1x3x256xf32>
    %206 = vector.shape_cast %205 : vector<1x3x256xf32> to vector<3x256xf32>
    %207 = vector.shape_cast %204 : vector<3x256xf32> to vector<1x3x256xf32>
    tpu.vector_store %arg17[%c0_64, %c0_65, %c0_66], %207 {strides = array<i32>} : memref<1x3x256xf32, #tpu.memory_space<vmem>>, vector<1x3x256xf32>,
    %208 = vector.extract_strided_slice %179 {offsets = [12, 0], sizes = [3, 256], strides = [1, 1]} : vector<24x256xf32> to vector<3x256xf32>
    %209 = arith.mulf %204, %204 : vector<3x256xf32>
    %210 = arith.subf %209, %204 : vector<3x256xf32>
    %211 = arith.mulf %208, %210 : vector<3x256xf32>
    %212 = arith.addf %204, %211 : vector<3x256xf32>
    %213 = vector.extract_strided_slice %179 {offsets = [15, 0], sizes = [3, 256], strides = [1, 1]} : vector<24x256xf32> to vector<3x256xf32>
    %214 = arith.mulf %212, %212 : vector<3x256xf32>
    %215 = arith.subf %214, %212 : vector<3x256xf32>
    %216 = arith.mulf %213, %215 : vector<3x256xf32>
    %217 = arith.addf %212, %216 : vector<3x256xf32>
    %218 = vector.extract_strided_slice %179 {offsets = [18, 0], sizes = [3, 256], strides = [1, 1]} : vector<24x256xf32> to vector<3x256xf32>
    %219 = arith.mulf %217, %217 : vector<3x256xf32>
    %220 = arith.subf %219, %217 : vector<3x256xf32>
    %221 = arith.mulf %218, %220 : vector<3x256xf32>
    %222 = arith.addf %217, %221 : vector<3x256xf32>
    %223 = vector.extract_strided_slice %179 {offsets = [21, 0], sizes = [3, 256], strides = [1, 1]} : vector<24x256xf32> to vector<3x256xf32>
    %224 = arith.mulf %222, %222 : vector<3x256xf32>
    %225 = arith.subf %224, %222 : vector<3x256xf32>
    %226 = arith.mulf %223, %225 : vector<3x256xf32>
    %227 = arith.addf %222, %226 : vector<3x256xf32>
    %c0_67 = arith.constant 0 : index
    %c0_68 = arith.constant 0 : index
    %c0_69 = arith.constant 0 : index
    %228 = vector.load %arg18[%c0_67, %c0_68, %c0_69] : memref<1x3x256xf32, #tpu.memory_space<vmem>>, vector<1x3x256xf32>
    %229 = vector.shape_cast %228 : vector<1x3x256xf32> to vector<3x256xf32>
    %230 = vector.shape_cast %227 : vector<3x256xf32> to vector<1x3x256xf32>
    tpu.vector_store %arg18[%c0_67, %c0_68, %c0_69], %230 {strides = array<i32>} : memref<1x3x256xf32, #tpu.memory_space<vmem>>, vector<1x3x256xf32>,
    return
  }
  func.func @transform_0(%arg0: i32) -> (i32, i32, i32, i32) {
    %c0_i32 = arith.constant 0 : i32
    %c0_i32_0 = arith.constant 0 : i32
    %c0_i32_1 = arith.constant 0 : i32
    %c0_i32_2 = arith.constant 0 : i32
    return %arg0, %c0_i32, %c0_i32_0, %c0_i32_1 : i32, i32, i32, i32
  }
  func.func @transform_1(%arg0: i32) -> (i32, i32, i32) {
    %c0_i32 = arith.constant 0 : i32
    %c0_i32_0 = arith.constant 0 : i32
    %c0_i32_1 = arith.constant 0 : i32
    return %arg0, %c0_i32, %c0_i32_0 : i32, i32, i32
  }
  func.func @transform_2(%arg0: i32) -> (i32, i32) {
    %c0_i32 = arith.constant 0 : i32
    %c0_i32_0 = arith.constant 0 : i32
    %c0_i32_1 = arith.constant 0 : i32
    return %c0_i32, %c0_i32_0 : i32, i32
  }
  func.func @transform_3(%arg0: i32) -> (i32, i32) {
    %c0_i32 = arith.constant 0 : i32
    %c0_i32_0 = arith.constant 0 : i32
    %c0_i32_1 = arith.constant 0 : i32
    return %c0_i32, %c0_i32_0 : i32, i32
  }
  func.func @transform_4(%arg0: i32) -> (i32, i32) {
    %c0_i32 = arith.constant 0 : i32
    %c0_i32_0 = arith.constant 0 : i32
    %c0_i32_1 = arith.constant 0 : i32
    return %c0_i32, %c0_i32_0 : i32, i32
  }
  func.func @transform_5(%arg0: i32) -> (i32, i32) {
    %c0_i32 = arith.constant 0 : i32
    %c0_i32_0 = arith.constant 0 : i32
    %c0_i32_1 = arith.constant 0 : i32
    return %c0_i32, %c0_i32_0 : i32, i32
  }
  func.func @transform_6(%arg0: i32) -> (i32, i32) {
    %c0_i32 = arith.constant 0 : i32
    %c0_i32_0 = arith.constant 0 : i32
    %c0_i32_1 = arith.constant 0 : i32
    return %c0_i32, %c0_i32_0 : i32, i32
  }
  func.func @transform_7(%arg0: i32) -> (i32, i32) {
    %c0_i32 = arith.constant 0 : i32
    %c0_i32_0 = arith.constant 0 : i32
    %c0_i32_1 = arith.constant 0 : i32
    return %c0_i32, %c0_i32_0 : i32, i32
  }
  func.func @transform_8(%arg0: i32) -> (i32, i32) {
    %c0_i32 = arith.constant 0 : i32
    %c0_i32_0 = arith.constant 0 : i32
    %c0_i32_1 = arith.constant 0 : i32
    return %c0_i32, %c0_i32_0 : i32, i32
  }
  func.func @transform_9(%arg0: i32) -> (i32, i32) {
    %c0_i32 = arith.constant 0 : i32
    %c0_i32_0 = arith.constant 0 : i32
    %c0_i32_1 = arith.constant 0 : i32
    return %c0_i32, %c0_i32_0 : i32, i32
  }
  func.func @transform_10(%arg0: i32) -> (i32, i32) {
    %c0_i32 = arith.constant 0 : i32
    %c0_i32_0 = arith.constant 0 : i32
    %c0_i32_1 = arith.constant 0 : i32
    return %c0_i32, %c0_i32_0 : i32, i32
  }
  func.func @transform_11(%arg0: i32) -> (i32, i32) {
    %c0_i32 = arith.constant 0 : i32
    %c0_i32_0 = arith.constant 0 : i32
    %c0_i32_1 = arith.constant 0 : i32
    return %c0_i32, %c0_i32_0 : i32, i32
  }
  func.func @transform_12(%arg0: i32) -> (i32, i32) {
    %c0_i32 = arith.constant 0 : i32
    %c0_i32_0 = arith.constant 0 : i32
    %c0_i32_1 = arith.constant 0 : i32
    return %c0_i32, %c0_i32_0 : i32, i32
  }
  func.func @transform_13(%arg0: i32) -> (i32, i32) {
    %c0_i32 = arith.constant 0 : i32
    %c0_i32_0 = arith.constant 0 : i32
    %c0_i32_1 = arith.constant 0 : i32
    return %c0_i32, %c0_i32_0 : i32, i32
  }
  func.func @transform_14(%arg0: i32) -> (i32, i32) {
    %c0_i32 = arith.constant 0 : i32
    %c0_i32_0 = arith.constant 0 : i32
    %c0_i32_1 = arith.constant 0 : i32
    return %c0_i32, %c0_i32_0 : i32, i32
  }
  func.func @transform_15(%arg0: i32) -> (i32, i32) {
    %c0_i32 = arith.constant 0 : i32
    %c0_i32_0 = arith.constant 0 : i32
    %c0_i32_1 = arith.constant 0 : i32
    return %c0_i32, %c0_i32_0 : i32, i32
  }
  func.func @transform_16(%arg0: i32) -> (i32, i32, i32) {
    %c0_i32 = arith.constant 0 : i32
    %c0_i32_0 = arith.constant 0 : i32
    %c0_i32_1 = arith.constant 0 : i32
    return %arg0, %c0_i32, %c0_i32_0 : i32, i32, i32
  }
  func.func @transform_17(%arg0: i32) -> (i32, i32, i32) {
    %c0_i32 = arith.constant 0 : i32
    %c0_i32_0 = arith.constant 0 : i32
    %c0_i32_1 = arith.constant 0 : i32
    return %arg0, %c0_i32, %c0_i32_0 : i32, i32, i32
  }
  func.func @transform_18(%arg0: i32) -> (i32, i32, i32) {
    %c0_i32 = arith.constant 0 : i32
    %c0_i32_0 = arith.constant 0 : i32
    %c0_i32_1 = arith.constant 0 : i32
    return %arg0, %c0_i32, %c0_i32_0 : i32, i32, i32
  }
}

</mosaic_0001>

<llo_original>
// kernel: _lambda_.1
$region0: #{_lambda_.1}
  #allocation0 [shape = 'u32[]', space=smem, size = 0x4, offset = 0x4, fixed_abs, tag = 'smem constant byte address 0x4 - core index']
  #allocation1 [shape = 'u32[144,128]{1,0:T(1,128)}', space=vmem, size = 0x12000, scoped, tag = 'internal scratch']
  %s0 = inlined_call_operand.vmem [shape: f32[2,16,16,3], index: 0, kind: input, shape index: {}]
  %s1 = inlined_call_operand.vmem [shape: f32[2,3,256], index: 1, kind: input, shape index: {}]
  %s2 = inlined_call_operand.vmem [shape: bf16[72,32], index: 2, kind: input, shape index: {}]
  %s3 = inlined_call_operand.vmem [shape: bf16[288,56], index: 3, kind: input, shape index: {}]
  %s4 = inlined_call_operand.vmem [shape: bf16[288,64], index: 4, kind: input, shape index: {}]
  %s5 = inlined_call_operand.vmem [shape: bf16[288,64], index: 5, kind: input, shape index: {}]
  %s6 = inlined_call_operand.vmem [shape: bf16[288,32], index: 6, kind: input, shape index: {}]
  %s7 = inlined_call_operand.hbm [shape: bf16[288,32], index: 7, kind: input, shape index: {}]
  %s8 = inlined_call_operand.hbm [shape: bf16[288,24], index: 8, kind: input, shape index: {}]
  %s9 = inlined_call_operand.vmem [shape: f32[1,32], index: 9, kind: input, shape index: {}]
  %s10 = inlined_call_operand.vmem [shape: f32[1,32], index: 10, kind: input, shape index: {}]
  %s11 = inlined_call_operand.vmem [shape: f32[1,32], index: 11, kind: input, shape index: {}]
  %s12 = inlined_call_operand.vmem [shape: f32[1,32], index: 12, kind: input, shape index: {}]
  %s13 = inlined_call_operand.vmem [shape: f32[1,32], index: 13, kind: input, shape index: {}]
  %s14 = inlined_call_operand.vmem [shape: f32[1,32], index: 14, kind: input, shape index: {}]
  %s15 = inlined_call_operand.vmem [shape: f32[1,24], index: 15, kind: input, shape index: {}]
  %s16 = inlined_call_operand.vmem [shape: f32[2,3,256], index: 16, kind: output, shape index: {0}]
  %s17 = inlined_call_operand.vmem [shape: f32[2,3,256], index: 17, kind: output, shape index: {1}]
  %s18 = inlined_call_operand.vmem [shape: f32[2,24,256], index: 18, kind: output, shape index: {2}]
  %19 = xla_tuple %s16, %s17, %s18
  %s20 = sld [smem:[#allocation0]]
  $region121: #{_lambda_.1} parent=0
    _
  %s22 = ssub.s32 1, %s20
  %s23 = scalar_select 0, %s22, %s20
  $region1: #{_lambda_.1} parent=0
    #allocation2 [shape = 'u8[73728]{0}', space=vmem, size = 0x12000, scoped, tag = 'input window, operand 7, single buffered']
    #allocation3 [shape = 's32[2]{0}', space=sflag, size = 0x8, scoped, tag = 'scoped memory for _lambda_.1']
    #allocation4 [shape = 'u8[73728]{0}', space=vmem, size = 0x12000, scoped, tag = 'input window, operand 8, single buffered']
    #allocation5 [shape = 's32[1]{0}', space=sflag, size = 0x4, scoped, tag = 'scoped memory for _lambda_.1']
    %24 = vsyncpa [#allocation3], 0
    %25 = vsyncpa [#allocation5], 0
    loop: start=0, step=1, limit=4
    $region2: #{_lambda_.1} parent=1 // loop_pre_header
      _
    $region3: #{_lambda_.1} parent=1 // loop_header
      %s27 = sphi 0, %s31
      %p28 = scmp.ge.s32.totalorder %s27, 4
      %s37 = sphi 0, %s39
      %s40 = sphi 0, %s37
      %s41 = sphi 0, %s40
      %s57 = sphi 0, %s41
      %s63 = sphi 0, %s65
      %s66 = sphi 0, %s63
      %s67 = sphi 0, %s66
      %s83 = sphi 0, %s67
      %s87 = sphi 0, %s87
      %s89 = sphi 0, %s87
      %s90 = sphi 0, %s89
      %s104 = sphi 0, %s90
      %s108 = sphi 0, %s108
      %s110 = sphi 0, %s108
      %s111 = sphi 0, %s110
      %s125 = sphi 0, %s111
      %s129 = sphi 0, %s129
      %s131 = sphi 0, %s129
      %s132 = sphi 0, %s131
      %s146 = sphi 0, %s132
      %s150 = sphi 0, %s150
      %s152 = sphi 0, %s150
      %s153 = sphi 0, %s152
      %s167 = sphi 0, %s153
      %s171 = sphi 0, %s171
      %s173 = sphi 0, %s171
      %s174 = sphi 0, %s173
      %s188 = sphi 0, %s174
      %s192 = sphi 0, %s192
      %s194 = sphi 0, %s192
      %s195 = sphi 0, %s194
      %s209 = sphi 0, %s195
      %s213 = sphi 0, %s213
      %s215 = sphi 0, %s213
      %s216 = sphi 0, %s215
      %s230 = sphi 0, %s216
      %s234 = sphi 0, %s234
      %s236 = sphi 0, %s234
      %s237 = sphi 0, %s236
      %s251 = sphi 0, %s237
      %s255 = sphi 0, %s255
      %s257 = sphi 0, %s255
      %s258 = sphi 0, %s257
      %s272 = sphi 0, %s258
      %s276 = sphi 0, %s276
      %s278 = sphi 0, %s276
      %s279 = sphi 0, %s278
      %s293 = sphi 0, %s279
      %s297 = sphi 0, %s297
      %s299 = sphi 0, %s297
      %s300 = sphi 0, %s299
      %s314 = sphi 0, %s300
      %s318 = sphi 0, %s318
      %s320 = sphi 0, %s318
      %s321 = sphi 0, %s320
      %s335 = sphi 0, %s321
      %s339 = sphi 0, %s339
      %s341 = sphi 0, %s339
      %s342 = sphi 0, %s341
      %s356 = sphi 0, %s342
      %s360 = sphi 0, %s360
      %s362 = sphi 0, %s360
      %s363 = sphi 0, %s362
      %s377 = sphi 0, %s363
      %s383 = sphi 0, %s385
      %s386 = sphi 0, %s383
      %s387 = sphi 0, %s386
      %s403 = sphi 0, %s387
      %s409 = sphi 0, %s411
      %s412 = sphi 0, %s409
      %s413 = sphi 0, %s412
      %s429 = sphi 0, %s413
      %s435 = sphi 0, %s437
      %s438 = sphi 0, %s435
      %s439 = sphi 0, %s438
      %s455 = sphi 0, %s439
    $region4: #{_lambda_.1} parent=1 // loop_header_branch
      %30 = sbr.rel (%p28) target = $region8
    $region5: #{_lambda_.1} parent=1 // loop_body
      %s32 = ssub.s32 %s27, 1
      %s33 = ssub.s32 %s27, 2
      %s34 = sadd.s32 %s27, 1
      %s35 = ssub.s32 %s27, %s34
      %p36 = scmp.eq.s32.totalorder %s35, 0
      %s38 = sadd.s32 %s37, 1
      %s39 = scalar_select %p36, %s37, %s38
      %p42 = pneg %p36
      %p43 = scmp.eq.s32.totalorder %s27, 1
      %p44 = por %p42, %p43
      %p45 = scmp.ne.s32.totalorder %s37, %s40
      %p46 = scmp.eq.s32.totalorder %s27, 0
      %p47 = por %p45, %p46
      %p48 = scmp.ne.s32.totalorder %s37, %s40
      %p49 = scmp.eq.s32.totalorder %s32, 1
      %p50 = por %p48, %p49
      %p51 = scmp.ne.s32.totalorder %s40, %s41
      %p52 = scmp.eq.s32.totalorder %s32, 0
      %p53 = por %p51, %p52
      %p54 = scmp.ne.s32.totalorder %s40, %s41
      %p55 = scmp.eq.s32.totalorder %s33, 1
      %p56 = por %p54, %p55
      %p58 = scmp.ne.s32.totalorder %s41, %s57
      %p59 = scmp.eq.s32.totalorder %s33, 0
      %p60 = por %p58, %p59
      %s61 = ssub.s32 %s27, %s34
      %p62 = scmp.eq.s32.totalorder %s61, 0
      %s64 = sadd.s32 %s63, 1
      %s65 = scalar_select %p62, %s63, %s64
      %p68 = pneg %p62
      %p69 = scmp.eq.s32.totalorder %s27, 1
      %p70 = por %p68, %p69
      %p71 = scmp.ne.s32.totalorder %s63, %s66
      %p72 = scmp.eq.s32.totalorder %s27, 0
      %p73 = por %p71, %p72
      %p74 = scmp.ne.s32.totalorder %s63, %s66
      %p75 = scmp.eq.s32.totalorder %s32, 1
      %p76 = por %p74, %p75
      %p77 = scmp.ne.s32.totalorder %s66, %s67
      %p78 = scmp.eq.s32.totalorder %s32, 0
      %p79 = por %p77, %p78
      %p80 = scmp.ne.s32.totalorder %s66, %s67
      %p81 = scmp.eq.s32.totalorder %s33, 1
      %p82 = por %p80, %p81
      %p84 = scmp.ne.s32.totalorder %s67, %s83
      %p85 = scmp.eq.s32.totalorder %s33, 0
      %p86 = por %p84, %p85
      %s88 = sadd.s32 %s87, 1
      %p91 = scmp.eq.s32.totalorder %s27, 1
      %p92 = scmp.ne.s32.totalorder %s87, %s89
      %p93 = scmp.eq.s32.totalorder %s27, 0
      %p94 = por %p92, %p93
      %p95 = scmp.ne.s32.totalorder %s87, %s89
      %p96 = scmp.eq.s32.totalorder %s32, 1
      %p97 = por %p95, %p96
      %p98 = scmp.ne.s32.totalorder %s89, %s90
      %p99 = scmp.eq.s32.totalorder %s32, 0
      %p100 = por %p98, %p99
      %p101 = scmp.ne.s32.totalorder %s89, %s90
      %p102 = scmp.eq.s32.totalorder %s33, 1
      %p103 = por %p101, %p102
      %p105 = scmp.ne.s32.totalorder %s90, %s104
      %p106 = scmp.eq.s32.totalorder %s33, 0
      %p107 = por %p105, %p106
      %s109 = sadd.s32 %s108, 1
      %p112 = scmp.eq.s32.totalorder %s27, 1
      %p113 = scmp.ne.s32.totalorder %s108, %s110
      %p114 = scmp.eq.s32.totalorder %s27, 0
      %p115 = por %p113, %p114
      %p116 = scmp.ne.s32.totalorder %s108, %s110
      %p117 = scmp.eq.s32.totalorder %s32, 1
      %p118 = por %p116, %p117
      %p119 = scmp.ne.s32.totalorder %s110, %s111
      %p120 = scmp.eq.s32.totalorder %s32, 0
      %p121 = por %p119, %p120
      %p122 = scmp.ne.s32.totalorder %s110, %s111
      %p123 = scmp.eq.s32.totalorder %s33, 1
      %p124 = por %p122, %p123
      %p126 = scmp.ne.s32.totalorder %s111, %s125
      %p127 = scmp.eq.s32.totalorder %s33, 0
      %p128 = por %p126, %p127
      %s130 = sadd.s32 %s129, 1
      %p133 = scmp.eq.s32.totalorder %s27, 1
      %p134 = scmp.ne.s32.totalorder %s129, %s131
      %p135 = scmp.eq.s32.totalorder %s27, 0
      %p136 = por %p134, %p135
      %p137 = scmp.ne.s32.totalorder %s129, %s131
      %p138 = scmp.eq.s32.totalorder %s32, 1
      %p139 = por %p137, %p138
      %p140 = scmp.ne.s32.totalorder %s131, %s132
      %p141 = scmp.eq.s32.totalorder %s32, 0
      %p142 = por %p140, %p141
      %p143 = scmp.ne.s32.totalorder %s131, %s132
      %p144 = scmp.eq.s32.totalorder %s33, 1
      %p145 = por %p143, %p144
      %p147 = scmp.ne.s32.totalorder %s132, %s146
      %p148 = scmp.eq.s32.totalorder %s33, 0
      %p149 = por %p147, %p148
      %s151 = sadd.s32 %s150, 1
      %p154 = scmp.eq.s32.totalorder %s27, 1
      %p155 = scmp.ne.s32.totalorder %s150, %s152
      %p156 = scmp.eq.s32.totalorder %s27, 0
      %p157 = por %p155, %p156
      %p158 = scmp.ne.s32.totalorder %s150, %s152
      %p159 = scmp.eq.s32.totalorder %s32, 1
      %p160 = por %p158, %p159
      %p161 = scmp.ne.s32.totalorder %s152, %s153
      %p162 = scmp.eq.s32.totalorder %s32, 0
      %p163 = por %p161, %p162
      %p164 = scmp.ne.s32.totalorder %s152, %s153
      %p165 = scmp.eq.s32.totalorder %s33, 1
      %p166 = por %p164, %p165
      %p168 = scmp.ne.s32.totalorder %s153, %s167
      %p169 = scmp.eq.s32.totalorder %s33, 0
      %p170 = por %p168, %p169
      %s172 = sadd.s32 %s171, 1
      %p175 = scmp.eq.s32.totalorder %s27, 1
      %p176 = scmp.ne.s32.totalorder %s171, %s173
      %p177 = scmp.eq.s32.totalorder %s27, 0
      %p178 = por %p176, %p177
      %p179 = scmp.ne.s32.totalorder %s171, %s173
      %p180 = scmp.eq.s32.totalorder %s32, 1
      %p181 = por %p179, %p180
      %p182 = scmp.ne.s32.totalorder %s173, %s174
      %p183 = scmp.eq.s32.totalorder %s32, 0
      %p184 = por %p182, %p183
      %p185 = scmp.ne.s32.totalorder %s173, %s174
      %p186 = scmp.eq.s32.totalorder %s33, 1
      %p187 = por %p185, %p186
      %p189 = scmp.ne.s32.totalorder %s174, %s188
      %p190 = scmp.eq.s32.totalorder %s33, 0
      %p191 = por %p189, %p190
      %s193 = sadd.s32 %s192, 1
      %p196 = scmp.eq.s32.totalorder %s27, 1
      %p197 = scmp.ne.s32.totalorder %s192, %s194
      %p198 = scmp.eq.s32.totalorder %s27, 0
      %p199 = por %p197, %p198
      %p200 = scmp.ne.s32.totalorder %s192, %s194
      %p201 = scmp.eq.s32.totalorder %s32, 1
      %p202 = por %p200, %p201
      %p203 = scmp.ne.s32.totalorder %s194, %s195
      %p204 = scmp.eq.s32.totalorder %s32, 0
      %p205 = por %p203, %p204
      %p206 = scmp.ne.s32.totalorder %s194, %s195
      %p207 = scmp.eq.s32.totalorder %s33, 1
      %p208 = por %p206, %p207
      %p210 = scmp.ne.s32.totalorder %s195, %s209
      %p211 = scmp.eq.s32.totalorder %s33, 0
      %p212 = por %p210, %p211
      %s214 = sadd.s32 %s213, 1
      %p217 = scmp.eq.s32.totalorder %s27, 1
      %p218 = scmp.ne.s32.totalorder %s213, %s215
      %p219 = scmp.eq.s32.totalorder %s27, 0
      %p220 = por %p218, %p219
      %p221 = scmp.ne.s32.totalorder %s213, %s215
      %p222 = scmp.eq.s32.totalorder %s32, 1
      %p223 = por %p221, %p222
      %p224 = scmp.ne.s32.totalorder %s215, %s216
      %p225 = scmp.eq.s32.totalorder %s32, 0
      %p226 = por %p224, %p225
      %p227 = scmp.ne.s32.totalorder %s215, %s216
      %p228 = scmp.eq.s32.totalorder %s33, 1
      %p229 = por %p227, %p228
      %p231 = scmp.ne.s32.totalorder %s216, %s230
      %p232 = scmp.eq.s32.totalorder %s33, 0
      %p233 = por %p231, %p232
      %s235 = sadd.s32 %s234, 1
      %p238 = scmp.eq.s32.totalorder %s27, 1
      %p239 = scmp.ne.s32.totalorder %s234, %s236
      %p240 = scmp.eq.s32.totalorder %s27, 0
      %p241 = por %p239, %p240
      %p242 = scmp.ne.s32.totalorder %s234, %s236
      %p243 = scmp.eq.s32.totalorder %s32, 1
      %p244 = por %p242, %p243
      %p245 = scmp.ne.s32.totalorder %s236, %s237
      %p246 = scmp.eq.s32.totalorder %s32, 0
      %p247 = por %p245, %p246
      %p248 = scmp.ne.s32.totalorder %s236, %s237
      %p249 = scmp.eq.s32.totalorder %s33, 1
      %p250 = por %p248, %p249
      %p252 = scmp.ne.s32.totalorder %s237, %s251
      %p253 = scmp.eq.s32.totalorder %s33, 0
      %p254 = por %p252, %p253
      %s256 = sadd.s32 %s255, 1
      %p259 = scmp.eq.s32.totalorder %s27, 1
      %p260 = scmp.ne.s32.totalorder %s255, %s257
      %p261 = scmp.eq.s32.totalorder %s27, 0
      %p262 = por %p260, %p261
      %p263 = scmp.ne.s32.totalorder %s255, %s257
      %p264 = scmp.eq.s32.totalorder %s32, 1
      %p265 = por %p263, %p264
      %p266 = scmp.ne.s32.totalorder %s257, %s258
      %p267 = scmp.eq.s32.totalorder %s32, 0
      %p268 = por %p266, %p267
      %p269 = scmp.ne.s32.totalorder %s257, %s258
      %p270 = scmp.eq.s32.totalorder %s33, 1
      %p271 = por %p269, %p270
      %p273 = scmp.ne.s32.totalorder %s258, %s272
      %p274 = scmp.eq.s32.totalorder %s33, 0
      %p275 = por %p273, %p274
      %s277 = sadd.s32 %s276, 1
      %p280 = scmp.eq.s32.totalorder %s27, 1
      %p281 = scmp.ne.s32.totalorder %s276, %s278
      %p282 = scmp.eq.s32.totalorder %s27, 0
      %p283 = por %p281, %p282
      %p284 = scmp.ne.s32.totalorder %s276, %s278
      %p285 = scmp.eq.s32.totalorder %s32, 1
      %p286 = por %p284, %p285
      %p287 = scmp.ne.s32.totalorder %s278, %s279
      %p288 = scmp.eq.s32.totalorder %s32, 0
      %p289 = por %p287, %p288
      %p290 = scmp.ne.s32.totalorder %s278, %s279
      %p291 = scmp.eq.s32.totalorder %s33, 1
      %p292 = por %p290, %p291
      %p294 = scmp.ne.s32.totalorder %s279, %s293
      %p295 = scmp.eq.s32.totalorder %s33, 0
      %p296 = por %p294, %p295
      %s298 = sadd.s32 %s297, 1
      %p301 = scmp.eq.s32.totalorder %s27, 1
      %p302 = scmp.ne.s32.totalorder %s297, %s299
      %p303 = scmp.eq.s32.totalorder %s27, 0
      %p304 = por %p302, %p303
      %p305 = scmp.ne.s32.totalorder %s297, %s299
      %p306 = scmp.eq.s32.totalorder %s32, 1
      %p307 = por %p305, %p306
      %p308 = scmp.ne.s32.totalorder %s299, %s300
      %p309 = scmp.eq.s32.totalorder %s32, 0
      %p310 = por %p308, %p309
      %p311 = scmp.ne.s32.totalorder %s299, %s300
      %p312 = scmp.eq.s32.totalorder %s33, 1
      %p313 = por %p311, %p312
      %p315 = scmp.ne.s32.totalorder %s300, %s314
      %p316 = scmp.eq.s32.totalorder %s33, 0
      %p317 = por %p315, %p316
      %s319 = sadd.s32 %s318, 1
      %p322 = scmp.eq.s32.totalorder %s27, 1
      %p323 = scmp.ne.s32.totalorder %s318, %s320
      %p324 = scmp.eq.s32.totalorder %s27, 0
      %p325 = por %p323, %p324
      %p326 = scmp.ne.s32.totalorder %s318, %s320
      %p327 = scmp.eq.s32.totalorder %s32, 1
      %p328 = por %p326, %p327
      %p329 = scmp.ne.s32.totalorder %s320, %s321
      %p330 = scmp.eq.s32.totalorder %s32, 0
      %p331 = por %p329, %p330
      %p332 = scmp.ne.s32.totalorder %s320, %s321
      %p333 = scmp.eq.s32.totalorder %s33, 1
      %p334 = por %p332, %p333
      %p336 = scmp.ne.s32.totalorder %s321, %s335
      %p337 = scmp.eq.s32.totalorder %s33, 0
      %p338 = por %p336, %p337
      %s340 = sadd.s32 %s339, 1
      %p343 = scmp.eq.s32.totalorder %s27, 1
      %p344 = scmp.ne.s32.totalorder %s339, %s341
      %p345 = scmp.eq.s32.totalorder %s27, 0
      %p346 = por %p344, %p345
      %p347 = scmp.ne.s32.totalorder %s339, %s341
      %p348 = scmp.eq.s32.totalorder %s32, 1
      %p349 = por %p347, %p348
      %p350 = scmp.ne.s32.totalorder %s341, %s342
      %p351 = scmp.eq.s32.totalorder %s32, 0
      %p352 = por %p350, %p351
      %p353 = scmp.ne.s32.totalorder %s341, %s342
      %p354 = scmp.eq.s32.totalorder %s33, 1
      %p355 = por %p353, %p354
      %p357 = scmp.ne.s32.totalorder %s342, %s356
      %p358 = scmp.eq.s32.totalorder %s33, 0
      %p359 = por %p357, %p358
      %s361 = sadd.s32 %s360, 1
      %p364 = scmp.eq.s32.totalorder %s27, 1
      %p365 = scmp.ne.s32.totalorder %s360, %s362
      %p366 = scmp.eq.s32.totalorder %s27, 0
      %p367 = por %p365, %p366
      %p368 = scmp.ne.s32.totalorder %s360, %s362
      %p369 = scmp.eq.s32.totalorder %s32, 1
      %p370 = por %p368, %p369
      %p371 = scmp.ne.s32.totalorder %s362, %s363
      %p372 = scmp.eq.s32.totalorder %s32, 0
      %p373 = por %p371, %p372
      %p374 = scmp.ne.s32.totalorder %s362, %s363
      %p375 = scmp.eq.s32.totalorder %s33, 1
      %p376 = por %p374, %p375
      %p378 = scmp.ne.s32.totalorder %s363, %s377
      %p379 = scmp.eq.s32.totalorder %s33, 0
      %p380 = por %p378, %p379
      %s381 = ssub.s32 %s27, %s34
      %p382 = scmp.eq.s32.totalorder %s381, 0
      %s384 = sadd.s32 %s383, 1
      %s385 = scalar_select %p382, %s383, %s384
      %p388 = pneg %p382
      %p389 = scmp.eq.s32.totalorder %s27, 1
      %p390 = por %p388, %p389
      %p391 = scmp.ne.s32.totalorder %s383, %s386
      %p392 = scmp.eq.s32.totalorder %s27, 0
      %p393 = por %p391, %p392
      %p394 = scmp.ne.s32.totalorder %s383, %s386
      %p395 = scmp.eq.s32.totalorder %s32, 1
      %p396 = por %p394, %p395
      %p397 = scmp.ne.s32.totalorder %s386, %s387
      %p398 = scmp.eq.s32.totalorder %s32, 0
      %p399 = por %p397, %p398
      %p400 = scmp.ne.s32.totalorder %s386, %s387
      %p401 = scmp.eq.s32.totalorder %s33, 1
      %p402 = por %p400, %p401
      %p404 = scmp.ne.s32.totalorder %s387, %s403
      %p405 = scmp.eq.s32.totalorder %s33, 0
      %p406 = por %p404, %p405
      %s407 = ssub.s32 %s27, %s34
      %p408 = scmp.eq.s32.totalorder %s407, 0
      %s410 = sadd.s32 %s409, 1
      %s411 = scalar_select %p408, %s409, %s410
      %p414 = pneg %p408
      %p415 = scmp.eq.s32.totalorder %s27, 1
      %p416 = por %p414, %p415
      %p417 = scmp.ne.s32.totalorder %s409, %s412
      %p418 = scmp.eq.s32.totalorder %s27, 0
      %p419 = por %p417, %p418
      %p420 = scmp.ne.s32.totalorder %s409, %s412
      %p421 = scmp.eq.s32.totalorder %s32, 1
      %p422 = por %p420, %p421
      %p423 = scmp.ne.s32.totalorder %s412, %s413
      %p424 = scmp.eq.s32.totalorder %s32, 0
      %p425 = por %p423, %p424
      %p426 = scmp.ne.s32.totalorder %s412, %s413
      %p427 = scmp.eq.s32.totalorder %s33, 1
      %p428 = por %p426, %p427
      %p430 = scmp.ne.s32.totalorder %s413, %s429
      %p431 = scmp.eq.s32.totalorder %s33, 0
      %p432 = por %p430, %p431
      %s433 = ssub.s32 %s27, %s34
      %p434 = scmp.eq.s32.totalorder %s433, 0
      %s436 = sadd.s32 %s435, 1
      %s437 = scalar_select %p434, %s435, %s436
      %p440 = pneg %p434
      %p441 = scmp.eq.s32.totalorder %s27, 1
      %p442 = por %p440, %p441
      %p443 = scmp.ne.s32.totalorder %s435, %s438
      %p444 = scmp.eq.s32.totalorder %s27, 0
      %p445 = por %p443, %p444
      %p446 = scmp.ne.s32.totalorder %s435, %s438
      %p447 = scmp.eq.s32.totalorder %s32, 1
      %p448 = por %p446, %p447
      %p449 = scmp.ne.s32.totalorder %s438, %s439
      %p450 = scmp.eq.s32.totalorder %s32, 0
      %p451 = por %p449, %p450
      %p452 = scmp.ne.s32.totalorder %s438, %s439
      %p453 = scmp.eq.s32.totalorder %s33, 1
      %p454 = por %p452, %p453
      %p456 = scmp.ne.s32.totalorder %s439, %s455
      %p457 = scmp.eq.s32.totalorder %s33, 0
      %p458 = por %p456, %p457
      %p459 = scmp.le.s32.totalorder 1, %s27
      %p460 = scmp.lt.s32.totalorder %s27, 3
      %p461 = pnand %p459, %p460
      %p462 = pneg %p461
      // Predicated region
      $region9: #{_lambda_.1} parent=5 // pred_check
        _
      $region10: #{_lambda_.1} parent=5 // pred_check_branch
        %464 = sbr.rel (%p461) target = $region12
      $region11: #{_lambda_.1} parent=5 // pred_region
        %s465 = ssub.s32 %s27, 1
        // Predicated region
        $region13: #{_lambda_.1} parent=11 // pred_check
          %p466 = pneg %p100
        $region14: #{_lambda_.1} parent=11 // pred_check_branch
          %468 = sbr.rel (%p466) target = $region16
        $region15: #{_lambda_.1} parent=11 // pred_region
          _
        $region16: #{_lambda_.1} parent=11 // pred_fallthru
          _
        // Predicated region
        $region17: #{_lambda_.1} parent=11 // pred_check
          %p469 = pneg %p121
        $region18: #{_lambda_.1} parent=11 // pred_check_branch
          %471 = sbr.rel (%p469) target = $region20
        $region19: #{_lambda_.1} parent=11 // pred_region
          _
        $region20: #{_lambda_.1} parent=11 // pred_fallthru
          _
        // Predicated region
        $region21: #{_lambda_.1} parent=11 // pred_check
          %p472 = pneg %p142
        $region22: #{_lambda_.1} parent=11 // pred_check_branch
          %474 = sbr.rel (%p472) target = $region24
        $region23: #{_lambda_.1} parent=11 // pred_region
          _
        $region24: #{_lambda_.1} parent=11 // pred_fallthru
          _
        // Predicated region
        $region25: #{_lambda_.1} parent=11 // pred_check
          %p475 = pneg %p163
        $region26: #{_lambda_.1} parent=11 // pred_check_branch
          %477 = sbr.rel (%p475) target = $region28
        $region27: #{_lambda_.1} parent=11 // pred_region
          _
        $region28: #{_lambda_.1} parent=11 // pred_fallthru
          _
        // Predicated region
        $region29: #{_lambda_.1} parent=11 // pred_check
          %p478 = pneg %p184
        $region30: #{_lambda_.1} parent=11 // pred_check_branch
          %480 = sbr.rel (%p478) target = $region32
        $region31: #{_lambda_.1} parent=11 // pred_region
          _
        $region32: #{_lambda_.1} parent=11 // pred_fallthru
          _
        // Predicated region
        $region33: #{_lambda_.1} parent=11 // pred_check
          %p481 = pneg %p205
        $region34: #{_lambda_.1} parent=11 // pred_check_branch
          %483 = sbr.rel (%p481) target = $region36
        $region35: #{_lambda_.1} parent=11 // pred_region
          %s485 = ssub.s32 2304, 2304
          %486 = vsyncadd [#allocation3], %s485
          %s487 = sshll.u32 [#allocation2], 4
          %s488 = int_to_ptr.vmem [resolvable:$true] %s487
          %493 = dma.hbm_to_vmem [thread:$0]  %s7, 2304, %s488, [#allocation3], 64, 64, 4
        $region36: #{_lambda_.1} parent=11 // pred_fallthru
          _
        // Predicated region
        $region37: #{_lambda_.1} parent=11 // pred_check
          %p494 = pneg %p226
        $region38: #{_lambda_.1} parent=11 // pred_check_branch
          %496 = sbr.rel (%p494) target = $region40
        $region39: #{_lambda_.1} parent=11 // pred_region
          %s498 = ssub.s32 2304, 2304
          %499 = vsyncadd [#allocation5], %s498
          %s500 = sshll.u32 [#allocation4], 4
          %s501 = int_to_ptr.vmem [resolvable:$true] %s500
          %506 = dma.hbm_to_vmem [thread:$0]  %s8, 2304, %s501, [#allocation5], 64, 64, 4
        $region40: #{_lambda_.1} parent=11 // pred_fallthru
          _
        // Predicated region
        $region41: #{_lambda_.1} parent=11 // pred_check
          %p507 = pneg %p247
        $region42: #{_lambda_.1} parent=11 // pred_check_branch
          %509 = sbr.rel (%p507) target = $region44
        $region43: #{_lambda_.1} parent=11 // pred_region
          _
        $region44: #{_lambda_.1} parent=11 // pred_fallthru
          _
        // Predicated region
        $region45: #{_lambda_.1} parent=11 // pred_check
          %p510 = pneg %p268
        $region46: #{_lambda_.1} parent=11 // pred_check_branch
          %512 = sbr.rel (%p510) target = $region48
        $region47: #{_lambda_.1} parent=11 // pred_region
          _
        $region48: #{_lambda_.1} parent=11 // pred_fallthru
          _
        // Predicated region
        $region49: #{_lambda_.1} parent=11 // pred_check
          %p513 = pneg %p289
        $region50: #{_lambda_.1} parent=11 // pred_check_branch
          %515 = sbr.rel (%p513) target = $region52
        $region51: #{_lambda_.1} parent=11 // pred_region
          _
        $region52: #{_lambda_.1} parent=11 // pred_fallthru
          _
        // Predicated region
        $region53: #{_lambda_.1} parent=11 // pred_check
          %p516 = pneg %p310
        $region54: #{_lambda_.1} parent=11 // pred_check_branch
          %518 = sbr.rel (%p516) target = $region56
        $region55: #{_lambda_.1} parent=11 // pred_region
          _
        $region56: #{_lambda_.1} parent=11 // pred_fallthru
          _
        // Predicated region
        $region57: #{_lambda_.1} parent=11 // pred_check
          %p519 = pneg %p331
        $region58: #{_lambda_.1} parent=11 // pred_check_branch
          %521 = sbr.rel (%p519) target = $region60
        $region59: #{_lambda_.1} parent=11 // pred_region
          _
        $region60: #{_lambda_.1} parent=11 // pred_fallthru
          _
        // Predicated region
        $region61: #{_lambda_.1} parent=11 // pred_check
          %p522 = pneg %p352
        $region62: #{_lambda_.1} parent=11 // pred_check_branch
          %524 = sbr.rel (%p522) target = $region64
        $region63: #{_lambda_.1} parent=11 // pred_region
          _
        $region64: #{_lambda_.1} parent=11 // pred_fallthru
          _
        // Predicated region
        $region65: #{_lambda_.1} parent=11 // pred_check
          %p525 = pneg %p373
        $region66: #{_lambda_.1} parent=11 // pred_check_branch
          %527 = sbr.rel (%p525) target = $region68
        $region67: #{_lambda_.1} parent=11 // pred_region
          _
        $region68: #{_lambda_.1} parent=11 // pred_fallthru
          _
      $region12: #{_lambda_.1} parent=5 // pred_fallthru
        _
      %p528 = scmp.lt.s32.totalorder %s27, 2
      // Predicated region
      $region69: #{_lambda_.1} parent=5 // pred_check
        %p529 = pneg %p528
      $region70: #{_lambda_.1} parent=5 // pred_check_branch
        %531 = sbr.rel (%p529) target = $region72
      $region71: #{_lambda_.1} parent=5 // pred_region
        // Predicated region
        $region73: #{_lambda_.1} parent=71 // pred_check
          %p532 = pneg %p47
        $region74: #{_lambda_.1} parent=71 // pred_check_branch
          %534 = sbr.rel (%p532) target = $region76
        $region75: #{_lambda_.1} parent=71 // pred_region
          %p535 = scmp.lt.s32.totalorder %s27, 1
          %s536 = scalar_select %p535, %s27, 1
          %s537 = smul.addr %s536, 32
          %s538 = smul.addr %s537, 8
          %s539 = scalar_lea.vmem %s0, %s538
        $region76: #{_lambda_.1} parent=71 // pred_fallthru
          _
        // Predicated region
        $region77: #{_lambda_.1} parent=71 // pred_check
          %p540 = pneg %p73
        $region78: #{_lambda_.1} parent=71 // pred_check_branch
          %542 = sbr.rel (%p540) target = $region80
        $region79: #{_lambda_.1} parent=71 // pred_region
          %p543 = scmp.lt.s32.totalorder %s27, 1
          %s544 = scalar_select %p543, %s27, 1
          %s545 = smul.addr %s544, 2
          %s546 = smul.addr %s545, 4
          %s547 = scalar_lea.vmem %s1, %s546
        $region80: #{_lambda_.1} parent=71 // pred_fallthru
          _
      $region72: #{_lambda_.1} parent=5 // pred_fallthru
        _
      %p548 = scmp.le.s32.totalorder 1, %s27
      %p549 = scmp.lt.s32.totalorder %s27, 3
      %p550 = pnand %p548, %p549
      %p551 = pneg %p550
      // Predicated region
      $region81: #{_lambda_.1} parent=5 // pred_check
        _
      $region82: #{_lambda_.1} parent=5 // pred_check_branch
        %553 = sbr.rel (%p550) target = $region84
      $region83: #{_lambda_.1} parent=5 // pred_region
        %s554 = ssub.s32 %s27, 1
        // Predicated region
        $region85: #{_lambda_.1} parent=83 // pred_check
          %p555 = pneg %p205
        $region86: #{_lambda_.1} parent=83 // pred_check_branch
          %557 = sbr.rel (%p555) target = $region88
        $region87: #{_lambda_.1} parent=83 // pred_region
          %558 = dma.done [#allocation3], 2304
        $region88: #{_lambda_.1} parent=83 // pred_fallthru
          _
        // Predicated region
        $region89: #{_lambda_.1} parent=83 // pred_check
          %p559 = pneg %p226
        $region90: #{_lambda_.1} parent=83 // pred_check_branch
          %561 = sbr.rel (%p559) target = $region92
        $region91: #{_lambda_.1} parent=83 // pred_region
          %562 = dma.done [#allocation5], 2304
        $region92: #{_lambda_.1} parent=83 // pred_fallthru
          _
        %p563 = scmp.lt.s32.totalorder %s32, 1
        %s564 = scalar_select %p563, %s32, 1
        %s565 = smul.addr %s564, 32
        %s566 = smul.addr %s565, 8
        %s567 = scalar_lea.vmem %s0, %s566
        %p568 = pneg %p53
        %p569 = pneg %p50
        %p570 = scmp.lt.s32.totalorder %s32, 1
        %s571 = scalar_select %p570, %s32, 1
        %s572 = smul.addr %s571, 2
        %s573 = smul.addr %s572, 4
        %s574 = scalar_lea.vmem %s1, %s573
        %p575 = pneg %p79
        %p576 = pneg %p76
        %p577 = pneg %p100
        %p578 = pneg %p97
        %p579 = pneg %p121
        %p580 = pneg %p118
        %p581 = pneg %p142
        %p582 = pneg %p139
        %p583 = pneg %p163
        %p584 = pneg %p160
        %p585 = pneg %p184
        %p586 = pneg %p181
        %p587 = pneg %p205
        %p588 = pneg %p202
        %p589 = pneg %p226
        %p590 = pneg %p223
        %p591 = pneg %p247
        %p592 = pneg %p244
        %p593 = pneg %p268
        %p594 = pneg %p265
        %p595 = pneg %p289
        %p596 = pneg %p286
        %p597 = pneg %p310
        %p598 = pneg %p307
        %p599 = pneg %p331
        %p600 = pneg %p328
        %p601 = pneg %p352
        %p602 = pneg %p349
        %p603 = pneg %p373
        %p604 = pneg %p370
        %p605 = pneg %p399
        %p606 = pneg %p396
        %p607 = scmp.lt.s32.totalorder %s32, 1
        %s608 = scalar_select %p607, %s32, 1
        %s609 = smul.addr %s608, 2
        %s610 = smul.addr %s609, 4
        %s611 = scalar_lea.vmem %s16, %s610
        %p612 = pneg %p425
        %p613 = pneg %p422
        %p614 = scmp.lt.s32.totalorder %s32, 1
        %s615 = scalar_select %p614, %s32, 1
        %s616 = smul.addr %s615, 2
        %s617 = smul.addr %s616, 4
        %s618 = scalar_lea.vmem %s17, %s617
        %p619 = pneg %p451
        %p620 = pneg %p448
        %p621 = scmp.lt.s32.totalorder %s32, 1
        %s622 = scalar_select %p621, %s32, 1
        %s623 = smul.addr %s622, 6
        %s624 = smul.addr %s623, 8
        %s625 = scalar_lea.vmem %s18, %s624
        %p626 = scmp.lt.s32.totalorder %s32, 1
        %s627 = scalar_select %p626, %s32, 1
        %s628 = smul.addr %s627, 32
        %s629 = smul.addr %s628, 8
        %s630 = scalar_lea.vmem %s0, %s629
        %p631 = scmp.lt.s32.totalorder %s32, 1
        %s632 = scalar_select %p631, %s32, 1
        %s633 = smul.addr %s632, 2
        %s634 = smul.addr %s633, 4
        %s635 = scalar_lea.vmem %s1, %s634
        %p636 = scmp.lt.s32.totalorder %s32, 1
        %s637 = scalar_select %p636, %s32, 1
        %s638 = smul.addr %s637, 2
        %s639 = smul.addr %s638, 4
        %s640 = scalar_lea.vmem %s16, %s639
        %p641 = scmp.lt.s32.totalorder %s32, 1
        %s642 = scalar_select %p641, %s32, 1
        %s643 = smul.addr %s642, 2
        %s644 = smul.addr %s643, 4
        %s645 = scalar_lea.vmem %s17, %s644
        %p646 = scmp.lt.s32.totalorder %s32, 1
        %s647 = scalar_select %p646, %s32, 1
        %s648 = smul.addr %s647, 6
        %s649 = smul.addr %s648, 8
        %s650 = scalar_lea.vmem %s18, %s649
        %v652 = vld [vmem:[%s630] sm:$0xff]
        %v653 = vld [vmem:[%s630 + $0x8] sm:$0xff]
        %v654 = vld [vmem:[%s630 + $0x10] sm:$0xff]
        %v655 = vld [vmem:[%s630 + $0x18] sm:$0xff]
        %v656 = vld [vmem:[%s630 + $0x20] sm:$0xff]
        %v657 = vld [vmem:[%s630 + $0x28] sm:$0xff]
        %v658 = vld [vmem:[%s630 + $0x30] sm:$0xff]
        %v659 = vld [vmem:[%s630 + $0x38] sm:$0xff]
        %v660 = vld [vmem:[%s630 + $0x40] sm:$0xff]
        %v661 = vld [vmem:[%s630 + $0x48] sm:$0xff]
        %v662 = vld [vmem:[%s630 + $0x50] sm:$0xff]
        %v663 = vld [vmem:[%s630 + $0x58] sm:$0xff]
        %v664 = vld [vmem:[%s630 + $0x60] sm:$0xff]
        %v665 = vld [vmem:[%s630 + $0x68] sm:$0xff]
        %v666 = vld [vmem:[%s630 + $0x70] sm:$0xff]
        %v667 = vld [vmem:[%s630 + $0x78] sm:$0xff]
        %v668 = vld [vmem:[%s630 + $0x80] sm:$0xff]
        %v669 = vld [vmem:[%s630 + $0x88] sm:$0xff]
        %v670 = vld [vmem:[%s630 + $0x90] sm:$0xff]
        %v671 = vld [vmem:[%s630 + $0x98] sm:$0xff]
        %v672 = vld [vmem:[%s630 + $0xa0] sm:$0xff]
        %v673 = vld [vmem:[%s630 + $0xa8] sm:$0xff]
        %v674 = vld [vmem:[%s630 + $0xb0] sm:$0xff]
        %v675 = vld [vmem:[%s630 + $0xb8] sm:$0xff]
        %v676 = vld [vmem:[%s630 + $0xc0] sm:$0xff]
        %v677 = vld [vmem:[%s630 + $0xc8] sm:$0xff]
        %v678 = vld [vmem:[%s630 + $0xd0] sm:$0xff]
        %v679 = vld [vmem:[%s630 + $0xd8] sm:$0xff]
        %v680 = vld [vmem:[%s630 + $0xe0] sm:$0xff]
        %v681 = vld [vmem:[%s630 + $0xe8] sm:$0xff]
        %v682 = vld [vmem:[%s630 + $0xf0] sm:$0xff]
        %v683 = vld [vmem:[%s630 + $0xf8] sm:$0xff]
        %v684 = vpack.c.bf16 %v653, %v652
        %v685 = vpack.c.bf16 %v655, %v654
        %v686 = vpack.c.bf16 %v657, %v656
        %v687 = vpack.c.bf16 %v659, %v658
        %v688 = vpack.c.bf16 %v661, %v660
        %v689 = vpack.c.bf16 %v663, %v662
        %v690 = vpack.c.bf16 %v665, %v664
        %v691 = vpack.c.bf16 %v667, %v666
        %v692 = vpack.c.bf16 %v669, %v668
        %v693 = vpack.c.bf16 %v671, %v670
        %v694 = vpack.c.bf16 %v673, %v672
        %v695 = vpack.c.bf16 %v675, %v674
        %v696 = vpack.c.bf16 %v677, %v676
        %v697 = vpack.c.bf16 %v679, %v678
        %v698 = vpack.c.bf16 %v681, %v680
        %v699 = vpack.c.bf16 %v683, %v682
        %vm700 = vcmask 23552
        %v703 = vsel %vm700, %v684, 0
        %v705 = vsel %vm700, %v685, 0
        %v707 = vsel %vm700, %v686, 0
        %v709 = vsel %vm700, %v687, 0
        %v711 = vsel %vm700, %v688, 0
        %v713 = vsel %vm700, %v689, 0
        %v715 = vsel %vm700, %v690, 0
        %v717 = vsel %vm700, %v691, 0
        %v719 = vsel %vm700, %v692, 0
        %v721 = vsel %vm700, %v693, 0
        %v723 = vsel %vm700, %v694, 0
        %v725 = vsel %vm700, %v695, 0
        %v727 = vsel %vm700, %v696, 0
        %v729 = vsel %vm700, %v697, 0
        %v731 = vsel %vm700, %v698, 0
        %v733 = vsel %vm700, %v699, 0
        %v734 = vshrl.u32 0, 16
        %v736 = vrot.slane %v734, 7
        %v737 = vshll.u32 0, 16
        %v739 = vor.u32 %v736, %v737
        %v740 = vshrl.u32 %v703, 16
        %v742 = vrot.slane %v740, 7
        %v743 = vshll.u32 %v703, 16
        %v745 = vor.u32 %v742, %v743
        %v746 = vshrl.u32 %v705, 16
        %v748 = vrot.slane %v746, 7
        %v749 = vshll.u32 %v705, 16
        %v751 = vor.u32 %v748, %v749
        %v752 = vshrl.u32 %v707, 16
        %v754 = vrot.slane %v752, 7
        %v755 = vshll.u32 %v707, 16
        %v757 = vor.u32 %v754, %v755
        %v758 = vshrl.u32 %v709, 16
        %v760 = vrot.slane %v758, 7
        %v761 = vshll.u32 %v709, 16
        %v763 = vor.u32 %v760, %v761
        %v764 = vshrl.u32 %v711, 16
        %v766 = vrot.slane %v764, 7
        %v767 = vshll.u32 %v711, 16
        %v769 = vor.u32 %v766, %v767
        %v770 = vshrl.u32 %v713, 16
        %v772 = vrot.slane %v770, 7
        %v773 = vshll.u32 %v713, 16
        %v775 = vor.u32 %v772, %v773
        %v776 = vshrl.u32 %v715, 16
        %v778 = vrot.slane %v776, 7
        %v779 = vshll.u32 %v715, 16
        %v781 = vor.u32 %v778, %v779
        %v782 = vshrl.u32 %v717, 16
        %v784 = vrot.slane %v782, 7
        %v785 = vshll.u32 %v717, 16
        %v787 = vor.u32 %v784, %v785
        %v788 = vshrl.u32 %v719, 16
        %v790 = vrot.slane %v788, 7
        %v791 = vshll.u32 %v719, 16
        %v793 = vor.u32 %v790, %v791
        %v794 = vshrl.u32 %v721, 16
        %v796 = vrot.slane %v794, 7
        %v797 = vshll.u32 %v721, 16
        %v799 = vor.u32 %v796, %v797
        %v800 = vshrl.u32 %v723, 16
        %v802 = vrot.slane %v800, 7
        %v803 = vshll.u32 %v723, 16
        %v805 = vor.u32 %v802, %v803
        %v806 = vshrl.u32 %v725, 16
        %v808 = vrot.slane %v806, 7
        %v809 = vshll.u32 %v725, 16
        %v811 = vor.u32 %v808, %v809
        %v812 = vshrl.u32 %v727, 16
        %v814 = vrot.slane %v812, 7
        %v815 = vshll.u32 %v727, 16
        %v817 = vor.u32 %v814, %v815
        %v818 = vshrl.u32 %v729, 16
        %v820 = vrot.slane %v818, 7
        %v821 = vshll.u32 %v729, 16
        %v823 = vor.u32 %v820, %v821
        %v824 = vshrl.u32 %v731, 16
        %v826 = vrot.slane %v824, 7
        %v827 = vshll.u32 %v731, 16
        %v829 = vor.u32 %v826, %v827
        %v830 = vshrl.u32 %v733, 16
        %v832 = vrot.slane %v830, 7
        %v833 = vshll.u32 %v733, 16
        %v835 = vor.u32 %v832, %v833
        %vm870 = vcmask 1040384
        %vm871 = vsmask.f32 256
        %vm872 = vmand %vm870, %vm871
        %v873 = vsel %vm872, 0, %v739
        %v874 = vsel %vm872, 0, %v745
        %v875 = vsel %vm872, 0, %v751
        %v876 = vsel %vm872, 0, %v757
        %v877 = vsel %vm872, 0, %v763
        %v878 = vsel %vm872, 0, %v769
        %v879 = vsel %vm872, 0, %v775
        %v880 = vsel %vm872, 0, %v781
        %v881 = vsel %vm872, 0, %v787
        %v882 = vsel %vm872, 0, %v793
        %v883 = vsel %vm872, 0, %v799
        %v884 = vsel %vm872, 0, %v805
        %v885 = vsel %vm872, 0, %v811
        %v886 = vsel %vm872, 0, %v817
        %v887 = vsel %vm872, 0, %v823
        %v888 = vsel %vm872, 0, %v829
        %v889 = vsel %vm872, 0, %v835
        %v890 = vsel %vm872, %v736, 0
        %v891 = vsel %vm872, %v742, 0
        %v892 = vsel %vm872, %v748, 0
        %v893 = vsel %vm872, %v754, 0
        %v894 = vsel %vm872, %v760, 0
        %v895 = vsel %vm872, %v766, 0
        %v896 = vsel %vm872, %v772, 0
        %v897 = vsel %vm872, %v778, 0
        %v898 = vsel %vm872, %v784, 0
        %v899 = vsel %vm872, %v790, 0
        %v900 = vsel %vm872, %v796, 0
        %v901 = vsel %vm872, %v802, 0
        %v902 = vsel %vm872, %v808, 0
        %v903 = vsel %vm872, %v814, 0
        %v904 = vsel %vm872, %v820, 0
        %v905 = vsel %vm872, %v826, 0
        %v906 = vsel %vm872, %v832, 0
        %vm907 = vsmask.f32 7424
        %v909 = vshrl.u32 %v873, 16
        %v911 = vshll.u32 %v873, 16
        %v913 = vrot.slane %v911, 1
        %v914 = vor.u32 %v909, %v913
        %v916 = vshll.u32 %v890, 16
        %v918 = vrot.slane %v916, 1
        %v919 = vsel %vm907, %v914, %v918
        %v921 = vshrl.u32 %v874, 16
        %v923 = vshll.u32 %v874, 16
        %v925 = vrot.slane %v923, 1
        %v926 = vor.u32 %v921, %v925
        %v928 = vshll.u32 %v891, 16
        %v930 = vrot.slane %v928, 1
        %v931 = vsel %vm907, %v926, %v930
        %v933 = vshrl.u32 %v875, 16
        %v935 = vshll.u32 %v875, 16
        %v937 = vrot.slane %v935, 1
        %v938 = vor.u32 %v933, %v937
        %v940 = vshll.u32 %v892, 16
        %v942 = vrot.slane %v940, 1
        %v943 = vsel %vm907, %v938, %v942
        %v945 = vshrl.u32 %v876, 16
        %v947 = vshll.u32 %v876, 16
        %v949 = vrot.slane %v947, 1
        %v950 = vor.u32 %v945, %v949
        %v952 = vshll.u32 %v893, 16
        %v954 = vrot.slane %v952, 1
        %v955 = vsel %vm907, %v950, %v954
        %v957 = vshrl.u32 %v877, 16
        %v959 = vshll.u32 %v877, 16
        %v961 = vrot.slane %v959, 1
        %v962 = vor.u32 %v957, %v961
        %v964 = vshll.u32 %v894, 16
        %v966 = vrot.slane %v964, 1
        %v967 = vsel %vm907, %v962, %v966
        %v969 = vshrl.u32 %v878, 16
        %v971 = vshll.u32 %v878, 16
        %v973 = vrot.slane %v971, 1
        %v974 = vor.u32 %v969, %v973
        %v976 = vshll.u32 %v895, 16
        %v978 = vrot.slane %v976, 1
        %v979 = vsel %vm907, %v974, %v978
        %v981 = vshrl.u32 %v879, 16
        %v983 = vshll.u32 %v879, 16
        %v985 = vrot.slane %v983, 1
        %v986 = vor.u32 %v981, %v985
        %v988 = vshll.u32 %v896, 16
        %v990 = vrot.slane %v988, 1
        %v991 = vsel %vm907, %v986, %v990
        %v993 = vshrl.u32 %v880, 16
        %v995 = vshll.u32 %v880, 16
        %v997 = vrot.slane %v995, 1
        %v998 = vor.u32 %v993, %v997
        %v1000 = vshll.u32 %v897, 16
        %v1002 = vrot.slane %v1000, 1
        %v1003 = vsel %vm907, %v998, %v1002
        %v1005 = vshrl.u32 %v881, 16
        %v1007 = vshll.u32 %v881, 16
        %v1009 = vrot.slane %v1007, 1
        %v1010 = vor.u32 %v1005, %v1009
        %v1012 = vshll.u32 %v898, 16
        %v1014 = vrot.slane %v1012, 1
        %v1015 = vsel %vm907, %v1010, %v1014
        %v1017 = vshrl.u32 %v882, 16
        %v1019 = vshll.u32 %v882, 16
        %v1021 = vrot.slane %v1019, 1
        %v1022 = vor.u32 %v1017, %v1021
        %v1024 = vshll.u32 %v899, 16
        %v1026 = vrot.slane %v1024, 1
        %v1027 = vsel %vm907, %v1022, %v1026
        %v1029 = vshrl.u32 %v883, 16
        %v1031 = vshll.u32 %v883, 16
        %v1033 = vrot.slane %v1031, 1
        %v1034 = vor.u32 %v1029, %v1033
        %v1036 = vshll.u32 %v900, 16
        %v1038 = vrot.slane %v1036, 1
        %v1039 = vsel %vm907, %v1034, %v1038
        %v1041 = vshrl.u32 %v884, 16
        %v1043 = vshll.u32 %v884, 16
        %v1045 = vrot.slane %v1043, 1
        %v1046 = vor.u32 %v1041, %v1045
        %v1048 = vshll.u32 %v901, 16
        %v1050 = vrot.slane %v1048, 1
        %v1051 = vsel %vm907, %v1046, %v1050
        %v1053 = vshrl.u32 %v885, 16
        %v1055 = vshll.u32 %v885, 16
        %v1057 = vrot.slane %v1055, 1
        %v1058 = vor.u32 %v1053, %v1057
        %v1060 = vshll.u32 %v902, 16
        %v1062 = vrot.slane %v1060, 1
        %v1063 = vsel %vm907, %v1058, %v1062
        %v1065 = vshrl.u32 %v886, 16
        %v1067 = vshll.u32 %v886, 16
        %v1069 = vrot.slane %v1067, 1
        %v1070 = vor.u32 %v1065, %v1069
        %v1072 = vshll.u32 %v903, 16
        %v1074 = vrot.slane %v1072, 1
        %v1075 = vsel %vm907, %v1070, %v1074
        %v1077 = vshrl.u32 %v887, 16
        %v1079 = vshll.u32 %v887, 16
        %v1081 = vrot.slane %v1079, 1
        %v1082 = vor.u32 %v1077, %v1081
        %v1084 = vshll.u32 %v904, 16
        %v1086 = vrot.slane %v1084, 1
        %v1087 = vsel %vm907, %v1082, %v1086
        %v1089 = vshrl.u32 %v888, 16
        %v1091 = vshll.u32 %v888, 16
        %v1093 = vrot.slane %v1091, 1
        %v1094 = vor.u32 %v1089, %v1093
        %v1096 = vshll.u32 %v905, 16
        %v1098 = vrot.slane %v1096, 1
        %v1099 = vsel %vm907, %v1094, %v1098
        %1100 = vrot.lane.b32.xlu0 %v919, 8
        %v1101 = vpop.permute.xlu0 %1100
        %1102 = vrot.lane.b32.xlu0 %v931, 8
        %v1103 = vpop.permute.xlu0 %1102
        %1104 = vrot.lane.b32.xlu0 %v943, 8
        %v1105 = vpop.permute.xlu0 %1104
        %1106 = vrot.lane.b32.xlu0 %v955, 8
        %v1107 = vpop.permute.xlu0 %1106
        %1108 = vrot.lane.b32.xlu0 %v967, 8
        %v1109 = vpop.permute.xlu0 %1108
        %1110 = vrot.lane.b32.xlu0 %v979, 8
        %v1111 = vpop.permute.xlu0 %1110
        %1112 = vrot.lane.b32.xlu0 %v991, 8
        %v1113 = vpop.permute.xlu0 %1112
        %1114 = vrot.lane.b32.xlu0 %v1003, 8
        %v1115 = vpop.permute.xlu0 %1114
        %1116 = vrot.lane.b32.xlu0 %v1015, 8
        %v1117 = vpop.permute.xlu0 %1116
        %1118 = vrot.lane.b32.xlu0 %v1027, 8
        %v1119 = vpop.permute.xlu0 %1118
        %1120 = vrot.lane.b32.xlu0 %v1039, 8
        %v1121 = vpop.permute.xlu0 %1120
        %1122 = vrot.lane.b32.xlu0 %v1051, 8
        %v1123 = vpop.permute.xlu0 %1122
        %1124 = vrot.lane.b32.xlu0 %v1063, 8
        %v1125 = vpop.permute.xlu0 %1124
        %1126 = vrot.lane.b32.xlu0 %v1075, 8
        %v1127 = vpop.permute.xlu0 %1126
        %1128 = vrot.lane.b32.xlu0 %v1087, 8
        %v1129 = vpop.permute.xlu0 %1128
        %1130 = vrot.lane.b32.xlu0 %v1099, 8
        %v1131 = vpop.permute.xlu0 %1130
        %vm1164 = vcmask 1046528
        %v1165 = vrot.slane %v873, 1
        %v1166 = vrot.slane %v890, 1
        %v1167 = vsel %vm1164, %v1165, %v1166
        %v1168 = vrot.slane %v874, 1
        %v1169 = vrot.slane %v891, 1
        %v1170 = vsel %vm1164, %v1168, %v1169
        %v1171 = vrot.slane %v875, 1
        %v1172 = vrot.slane %v892, 1
        %v1173 = vsel %vm1164, %v1171, %v1172
        %v1174 = vrot.slane %v876, 1
        %v1175 = vrot.slane %v893, 1
        %v1176 = vsel %vm1164, %v1174, %v1175
        %v1177 = vrot.slane %v877, 1
        %v1178 = vrot.slane %v894, 1
        %v1179 = vsel %vm1164, %v1177, %v1178
        %v1180 = vrot.slane %v878, 1
        %v1181 = vrot.slane %v895, 1
        %v1182 = vsel %vm1164, %v1180, %v1181
        %v1183 = vrot.slane %v879, 1
        %v1184 = vrot.slane %v896, 1
        %v1185 = vsel %vm1164, %v1183, %v1184
        %v1186 = vrot.slane %v880, 1
        %v1187 = vrot.slane %v897, 1
        %v1188 = vsel %vm1164, %v1186, %v1187
        %v1189 = vrot.slane %v881, 1
        %v1190 = vrot.slane %v898, 1
        %v1191 = vsel %vm1164, %v1189, %v1190
        %v1192 = vrot.slane %v882, 1
        %v1193 = vrot.slane %v899, 1
        %v1194 = vsel %vm1164, %v1192, %v1193
        %v1195 = vrot.slane %v883, 1
        %v1196 = vrot.slane %v900, 1
        %v1197 = vsel %vm1164, %v1195, %v1196
        %v1198 = vrot.slane %v884, 1
        %v1199 = vrot.slane %v901, 1
        %v1200 = vsel %vm1164, %v1198, %v1199
        %v1201 = vrot.slane %v885, 1
        %v1202 = vrot.slane %v902, 1
        %v1203 = vsel %vm1164, %v1201, %v1202
        %v1204 = vrot.slane %v886, 1
        %v1205 = vrot.slane %v903, 1
        %v1206 = vsel %vm1164, %v1204, %v1205
        %v1207 = vrot.slane %v887, 1
        %v1208 = vrot.slane %v904, 1
        %v1209 = vsel %vm1164, %v1207, %v1208
        %v1210 = vrot.slane %v888, 1
        %v1211 = vrot.slane %v905, 1
        %v1212 = vsel %vm1164, %v1210, %v1211
        %1213 = vrot.lane.b32.xlu0 %v1167, 16
        %v1214 = vpop.permute.xlu0 %1213
        %1215 = vrot.lane.b32.xlu0 %v1170, 16
        %v1216 = vpop.permute.xlu0 %1215
        %1217 = vrot.lane.b32.xlu0 %v1173, 16
        %v1218 = vpop.permute.xlu0 %1217
        %1219 = vrot.lane.b32.xlu0 %v1176, 16
        %v1220 = vpop.permute.xlu0 %1219
        %1221 = vrot.lane.b32.xlu0 %v1179, 16
        %v1222 = vpop.permute.xlu0 %1221
        %1223 = vrot.lane.b32.xlu0 %v1182, 16
        %v1224 = vpop.permute.xlu0 %1223
        %1225 = vrot.lane.b32.xlu0 %v1185, 16
        %v1226 = vpop.permute.xlu0 %1225
        %1227 = vrot.lane.b32.xlu0 %v1188, 16
        %v1228 = vpop.permute.xlu0 %1227
        %1229 = vrot.lane.b32.xlu0 %v1191, 16
        %v1230 = vpop.permute.xlu0 %1229
        %1231 = vrot.lane.b32.xlu0 %v1194, 16
        %v1232 = vpop.permute.xlu0 %1231
        %1233 = vrot.lane.b32.xlu0 %v1197, 16
        %v1234 = vpop.permute.xlu0 %1233
        %1235 = vrot.lane.b32.xlu0 %v1200, 16
        %v1236 = vpop.permute.xlu0 %1235
        %1237 = vrot.lane.b32.xlu0 %v1203, 16
        %v1238 = vpop.permute.xlu0 %1237
        %1239 = vrot.lane.b32.xlu0 %v1206, 16
        %v1240 = vpop.permute.xlu0 %1239
        %1241 = vrot.lane.b32.xlu0 %v1209, 16
        %v1242 = vpop.permute.xlu0 %1241
        %1243 = vrot.lane.b32.xlu0 %v1212, 16
        %v1244 = vpop.permute.xlu0 %1243
        %1246 = vrot.lane.b32.xlu0 %v874, 24
        %v1247 = vpop.permute.xlu0 %1246
        %1248 = vrot.lane.b32.xlu0 %v875, 24
        %v1249 = vpop.permute.xlu0 %1248
        %1250 = vrot.lane.b32.xlu0 %v876, 24
        %v1251 = vpop.permute.xlu0 %1250
        %1252 = vrot.lane.b32.xlu0 %v877, 24
        %v1253 = vpop.permute.xlu0 %1252
        %1254 = vrot.lane.b32.xlu0 %v878, 24
        %v1255 = vpop.permute.xlu0 %1254
        %1256 = vrot.lane.b32.xlu0 %v879, 24
        %v1257 = vpop.permute.xlu0 %1256
        %1258 = vrot.lane.b32.xlu0 %v880, 24
        %v1259 = vpop.permute.xlu0 %1258
        %1260 = vrot.lane.b32.xlu0 %v881, 24
        %v1261 = vpop.permute.xlu0 %1260
        %1262 = vrot.lane.b32.xlu0 %v882, 24
        %v1263 = vpop.permute.xlu0 %1262
        %1264 = vrot.lane.b32.xlu0 %v883, 24
        %v1265 = vpop.permute.xlu0 %1264
        %1266 = vrot.lane.b32.xlu0 %v884, 24
        %v1267 = vpop.permute.xlu0 %1266
        %1268 = vrot.lane.b32.xlu0 %v885, 24
        %v1269 = vpop.permute.xlu0 %1268
        %1270 = vrot.lane.b32.xlu0 %v886, 24
        %v1271 = vpop.permute.xlu0 %1270
        %1272 = vrot.lane.b32.xlu0 %v887, 24
        %v1273 = vpop.permute.xlu0 %1272
        %1274 = vrot.lane.b32.xlu0 %v888, 24
        %v1275 = vpop.permute.xlu0 %1274
        %1276 = vrot.lane.b32.xlu0 %v889, 24
        %v1277 = vpop.permute.xlu0 %1276
        %v1279 = vshrl.u32 %v889, 16
        %v1281 = vshll.u32 %v889, 16
        %v1283 = vrot.slane %v1281, 1
        %v1284 = vor.u32 %v1279, %v1283
        %v1286 = vshll.u32 %v906, 16
        %v1288 = vrot.slane %v1286, 1
        %v1289 = vsel %vm907, %v1284, %v1288
        %1290 = vrot.lane.b32.xlu0 %v931, 32
        %v1291 = vpop.permute.xlu0 %1290
        %1292 = vrot.lane.b32.xlu0 %v943, 32
        %v1293 = vpop.permute.xlu0 %1292
        %1294 = vrot.lane.b32.xlu0 %v955, 32
        %v1295 = vpop.permute.xlu0 %1294
        %1296 = vrot.lane.b32.xlu0 %v967, 32
        %v1297 = vpop.permute.xlu0 %1296
        %1298 = vrot.lane.b32.xlu0 %v979, 32
        %v1299 = vpop.permute.xlu0 %1298
        %1300 = vrot.lane.b32.xlu0 %v991, 32
        %v1301 = vpop.permute.xlu0 %1300
        %1302 = vrot.lane.b32.xlu0 %v1003, 32
        %v1303 = vpop.permute.xlu0 %1302
        %1304 = vrot.lane.b32.xlu0 %v1015, 32
        %v1305 = vpop.permute.xlu0 %1304
        %1306 = vrot.lane.b32.xlu0 %v1027, 32
        %v1307 = vpop.permute.xlu0 %1306
        %1308 = vrot.lane.b32.xlu0 %v1039, 32
        %v1309 = vpop.permute.xlu0 %1308
        %1310 = vrot.lane.b32.xlu0 %v1051, 32
        %v1311 = vpop.permute.xlu0 %1310
        %1312 = vrot.lane.b32.xlu0 %v1063, 32
        %v1313 = vpop.permute.xlu0 %1312
        %1314 = vrot.lane.b32.xlu0 %v1075, 32
        %v1315 = vpop.permute.xlu0 %1314
        %1316 = vrot.lane.b32.xlu0 %v1087, 32
        %v1317 = vpop.permute.xlu0 %1316
        %1318 = vrot.lane.b32.xlu0 %v1099, 32
        %v1319 = vpop.permute.xlu0 %1318
        %1320 = vrot.lane.b32.xlu0 %v1289, 32
        %v1321 = vpop.permute.xlu0 %1320
        %v1323 = vrot.slane %v889, 1
        %v1324 = vrot.slane %v906, 1
        %v1325 = vsel %vm1164, %v1323, %v1324
        %1326 = vrot.lane.b32.xlu0 %v1170, 40
        %v1327 = vpop.permute.xlu0 %1326
        %1328 = vrot.lane.b32.xlu0 %v1173, 40
        %v1329 = vpop.permute.xlu0 %1328
        %1330 = vrot.lane.b32.xlu0 %v1176, 40
        %v1331 = vpop.permute.xlu0 %1330
        %1332 = vrot.lane.b32.xlu0 %v1179, 40
        %v1333 = vpop.permute.xlu0 %1332
        %1334 = vrot.lane.b32.xlu0 %v1182, 40
        %v1335 = vpop.permute.xlu0 %1334
        %1336 = vrot.lane.b32.xlu0 %v1185, 40
        %v1337 = vpop.permute.xlu0 %1336
        %1338 = vrot.lane.b32.xlu0 %v1188, 40
        %v1339 = vpop.permute.xlu0 %1338
        %1340 = vrot.lane.b32.xlu0 %v1191, 40
        %v1341 = vpop.permute.xlu0 %1340
        %1342 = vrot.lane.b32.xlu0 %v1194, 40
        %v1343 = vpop.permute.xlu0 %1342
        %1344 = vrot.lane.b32.xlu0 %v1197, 40
        %v1345 = vpop.permute.xlu0 %1344
        %1346 = vrot.lane.b32.xlu0 %v1200, 40
        %v1347 = vpop.permute.xlu0 %1346
        %1348 = vrot.lane.b32.xlu0 %v1203, 40
        %v1349 = vpop.permute.xlu0 %1348
        %1350 = vrot.lane.b32.xlu0 %v1206, 40
        %v1351 = vpop.permute.xlu0 %1350
        %1352 = vrot.lane.b32.xlu0 %v1209, 40
        %v1353 = vpop.permute.xlu0 %1352
        %1354 = vrot.lane.b32.xlu0 %v1212, 40
        %v1355 = vpop.permute.xlu0 %1354
        %1356 = vrot.lane.b32.xlu0 %v1325, 40
        %v1357 = vpop.permute.xlu0 %1356
        %1358 = vrot.lane.b32.xlu0 %v875, 48
        %v1359 = vpop.permute.xlu0 %1358
        %1360 = vrot.lane.b32.xlu0 %v876, 48
        %v1361 = vpop.permute.xlu0 %1360
        %1362 = vrot.lane.b32.xlu0 %v877, 48
        %v1363 = vpop.permute.xlu0 %1362
        %1364 = vrot.lane.b32.xlu0 %v878, 48
        %v1365 = vpop.permute.xlu0 %1364
        %1366 = vrot.lane.b32.xlu0 %v879, 48
        %v1367 = vpop.permute.xlu0 %1366
        %1368 = vrot.lane.b32.xlu0 %v880, 48
        %v1369 = vpop.permute.xlu0 %1368
        %1370 = vrot.lane.b32.xlu0 %v881, 48
        %v1371 = vpop.permute.xlu0 %1370
        %1372 = vrot.lane.b32.xlu0 %v882, 48
        %v1373 = vpop.permute.xlu0 %1372
        %1374 = vrot.lane.b32.xlu0 %v883, 48
        %v1375 = vpop.permute.xlu0 %1374
        %1376 = vrot.lane.b32.xlu0 %v884, 48
        %v1377 = vpop.permute.xlu0 %1376
        %1378 = vrot.lane.b32.xlu0 %v885, 48
        %v1379 = vpop.permute.xlu0 %1378
        %1380 = vrot.lane.b32.xlu0 %v886, 48
        %v1381 = vpop.permute.xlu0 %1380
        %1382 = vrot.lane.b32.xlu0 %v887, 48
        %v1383 = vpop.permute.xlu0 %1382
        %1384 = vrot.lane.b32.xlu0 %v888, 48
        %v1385 = vpop.permute.xlu0 %1384
        %1386 = vrot.lane.b32.xlu0 %v889, 48
        %v1387 = vpop.permute.xlu0 %1386
        %1388 = vrot.lane.b32.xlu0 %v873, 48
        %v1389 = vpop.permute.xlu0 %1388
        %1390 = vrot.lane.b32.xlu0 %v943, 56
        %v1391 = vpop.permute.xlu0 %1390
        %1392 = vrot.lane.b32.xlu0 %v955, 56
        %v1393 = vpop.permute.xlu0 %1392
        %1394 = vrot.lane.b32.xlu0 %v967, 56
        %v1395 = vpop.permute.xlu0 %1394
        %1396 = vrot.lane.b32.xlu0 %v979, 56
        %v1397 = vpop.permute.xlu0 %1396
        %1398 = vrot.lane.b32.xlu0 %v991, 56
        %v1399 = vpop.permute.xlu0 %1398
        %1400 = vrot.lane.b32.xlu0 %v1003, 56
        %v1401 = vpop.permute.xlu0 %1400
        %1402 = vrot.lane.b32.xlu0 %v1015, 56
        %v1403 = vpop.permute.xlu0 %1402
        %1404 = vrot.lane.b32.xlu0 %v1027, 56
        %v1405 = vpop.permute.xlu0 %1404
        %1406 = vrot.lane.b32.xlu0 %v1039, 56
        %v1407 = vpop.permute.xlu0 %1406
        %1408 = vrot.lane.b32.xlu0 %v1051, 56
        %v1409 = vpop.permute.xlu0 %1408
        %1410 = vrot.lane.b32.xlu0 %v1063, 56
        %v1411 = vpop.permute.xlu0 %1410
        %1412 = vrot.lane.b32.xlu0 %v1075, 56
        %v1413 = vpop.permute.xlu0 %1412
        %1414 = vrot.lane.b32.xlu0 %v1087, 56
        %v1415 = vpop.permute.xlu0 %1414
        %1416 = vrot.lane.b32.xlu0 %v1099, 56
        %v1417 = vpop.permute.xlu0 %1416
        %1418 = vrot.lane.b32.xlu0 %v1289, 56
        %v1419 = vpop.permute.xlu0 %1418
        %1420 = vrot.lane.b32.xlu0 %v919, 56
        %v1421 = vpop.permute.xlu0 %1420
        %1422 = vrot.lane.b32.xlu0 %v1173, 64
        %v1423 = vpop.permute.xlu0 %1422
        %1424 = vrot.lane.b32.xlu0 %v1176, 64
        %v1425 = vpop.permute.xlu0 %1424
        %1426 = vrot.lane.b32.xlu0 %v1179, 64
        %v1427 = vpop.permute.xlu0 %1426
        %1428 = vrot.lane.b32.xlu0 %v1182, 64
        %v1429 = vpop.permute.xlu0 %1428
        %1430 = vrot.lane.b32.xlu0 %v1185, 64
        %v1431 = vpop.permute.xlu0 %1430
        %1432 = vrot.lane.b32.xlu0 %v1188, 64
        %v1433 = vpop.permute.xlu0 %1432
        %1434 = vrot.lane.b32.xlu0 %v1191, 64
        %v1435 = vpop.permute.xlu0 %1434
        %1436 = vrot.lane.b32.xlu0 %v1194, 64
        %v1437 = vpop.permute.xlu0 %1436
        %1438 = vrot.lane.b32.xlu0 %v1197, 64
        %v1439 = vpop.permute.xlu0 %1438
        %1440 = vrot.lane.b32.xlu0 %v1200, 64
        %v1441 = vpop.permute.xlu0 %1440
        %1442 = vrot.lane.b32.xlu0 %v1203, 64
        %v1443 = vpop.permute.xlu0 %1442
        %1444 = vrot.lane.b32.xlu0 %v1206, 64
        %v1445 = vpop.permute.xlu0 %1444
        %1446 = vrot.lane.b32.xlu0 %v1209, 64
        %v1447 = vpop.permute.xlu0 %1446
        %1448 = vrot.lane.b32.xlu0 %v1212, 64
        %v1449 = vpop.permute.xlu0 %1448
        %1450 = vrot.lane.b32.xlu0 %v1325, 64
        %v1451 = vpop.permute.xlu0 %1450
        %1452 = vrot.lane.b32.xlu0 %v1167, 64
        %v1453 = vpop.permute.xlu0 %1452
        %vm1454 = vcmask 64512
        %v1456 = vsel %vm1454, %v873, %v1101
        %v1458 = vsel %vm1454, %v874, %v1103
        %v1460 = vsel %vm1454, %v875, %v1105
        %v1462 = vsel %vm1454, %v876, %v1107
        %v1464 = vsel %vm1454, %v877, %v1109
        %v1466 = vsel %vm1454, %v878, %v1111
        %v1468 = vsel %vm1454, %v879, %v1113
        %v1470 = vsel %vm1454, %v880, %v1115
        %v1472 = vsel %vm1454, %v881, %v1117
        %v1474 = vsel %vm1454, %v882, %v1119
        %v1476 = vsel %vm1454, %v883, %v1121
        %v1478 = vsel %vm1454, %v884, %v1123
        %v1480 = vsel %vm1454, %v885, %v1125
        %v1482 = vsel %vm1454, %v886, %v1127
        %v1484 = vsel %vm1454, %v887, %v1129
        %v1486 = vsel %vm1454, %v888, %v1131
        %vm1487 = vcmask 130048
        %v1489 = vsel %vm1487, %v1456, %v1214
        %v1491 = vsel %vm1487, %v1458, %v1216
        %v1493 = vsel %vm1487, %v1460, %v1218
        %v1495 = vsel %vm1487, %v1462, %v1220
        %v1497 = vsel %vm1487, %v1464, %v1222
        %v1499 = vsel %vm1487, %v1466, %v1224
        %v1501 = vsel %vm1487, %v1468, %v1226
        %v1503 = vsel %vm1487, %v1470, %v1228
        %v1505 = vsel %vm1487, %v1472, %v1230
        %v1507 = vsel %vm1487, %v1474, %v1232
        %v1509 = vsel %vm1487, %v1476, %v1234
        %v1511 = vsel %vm1487, %v1478, %v1236
        %v1513 = vsel %vm1487, %v1480, %v1238
        %v1515 = vsel %vm1487, %v1482, %v1240
        %v1517 = vsel %vm1487, %v1484, %v1242
        %v1519 = vsel %vm1487, %v1486, %v1244
        %vm1520 = vcmask 195584
        %v1522 = vsel %vm1520, %v1489, %v1247
        %v1524 = vsel %vm1520, %v1491, %v1249
        %v1526 = vsel %vm1520, %v1493, %v1251
        %v1528 = vsel %vm1520, %v1495, %v1253
        %v1530 = vsel %vm1520, %v1497, %v1255
        %v1532 = vsel %vm1520, %v1499, %v1257
        %v1534 = vsel %vm1520, %v1501, %v1259
        %v1536 = vsel %vm1520, %v1503, %v1261
        %v1538 = vsel %vm1520, %v1505, %v1263
        %v1540 = vsel %vm1520, %v1507, %v1265
        %v1542 = vsel %vm1520, %v1509, %v1267
        %v1544 = vsel %vm1520, %v1511, %v1269
        %v1546 = vsel %vm1520, %v1513, %v1271
        %v1548 = vsel %vm1520, %v1515, %v1273
        %v1550 = vsel %vm1520, %v1517, %v1275
        %v1552 = vsel %vm1520, %v1519, %v1277
        %vm1553 = vcmask 261120
        %v1555 = vsel %vm1553, %v1522, %v1291
        %v1557 = vsel %vm1553, %v1524, %v1293
        %v1559 = vsel %vm1553, %v1526, %v1295
        %v1561 = vsel %vm1553, %v1528, %v1297
        %v1563 = vsel %vm1553, %v1530, %v1299
        %v1565 = vsel %vm1553, %v1532, %v1301
        %v1567 = vsel %vm1553, %v1534, %v1303
        %v1569 = vsel %vm1553, %v1536, %v1305
        %v1571 = vsel %vm1553, %v1538, %v1307
        %v1573 = vsel %vm1553, %v1540, %v1309
        %v1575 = vsel %vm1553, %v1542, %v1311
        %v1577 = vsel %vm1553, %v1544, %v1313
        %v1579 = vsel %vm1553, %v1546, %v1315
        %v1581 = vsel %vm1553, %v1548, %v1317
        %v1583 = vsel %vm1553, %v1550, %v1319
        %v1585 = vsel %vm1553, %v1552, %v1321
        %vm1586 = vcmask 326656
        %v1588 = vsel %vm1586, %v1555, %v1327
        %v1590 = vsel %vm1586, %v1557, %v1329
        %v1592 = vsel %vm1586, %v1559, %v1331
        %v1594 = vsel %vm1586, %v1561, %v1333
        %v1596 = vsel %vm1586, %v1563, %v1335
        %v1598 = vsel %vm1586, %v1565, %v1337
        %v1600 = vsel %vm1586, %v1567, %v1339
        %v1602 = vsel %vm1586, %v1569, %v1341
        %v1604 = vsel %vm1586, %v1571, %v1343
        %v1606 = vsel %vm1586, %v1573, %v1345
        %v1608 = vsel %vm1586, %v1575, %v1347
        %v1610 = vsel %vm1586, %v1577, %v1349
        %v1612 = vsel %vm1586, %v1579, %v1351
        %v1614 = vsel %vm1586, %v1581, %v1353
        %v1616 = vsel %vm1586, %v1583, %v1355
        %v1618 = vsel %vm1586, %v1585, %v1357
        %vm1619 = vcmask 392192
        %v1621 = vsel %vm1619, %v1588, %v1359
        %v1623 = vsel %vm1619, %v1590, %v1361
        %v1625 = vsel %vm1619, %v1592, %v1363
        %v1627 = vsel %vm1619, %v1594, %v1365
        %v1629 = vsel %vm1619, %v1596, %v1367
        %v1631 = vsel %vm1619, %v1598, %v1369
        %v1633 = vsel %vm1619, %v1600, %v1371
        %v1635 = vsel %vm1619, %v1602, %v1373
        %v1637 = vsel %vm1619, %v1604, %v1375
        %v1639 = vsel %vm1619, %v1606, %v1377
        %v1641 = vsel %vm1619, %v1608, %v1379
        %v1643 = vsel %vm1619, %v1610, %v1381
        %v1645 = vsel %vm1619, %v1612, %v1383
        %v1647 = vsel %vm1619, %v1614, %v1385
        %v1649 = vsel %vm1619, %v1616, %v1387
        %v1651 = vsel %vm1619, %v1618, %v1389
        %vm1652 = vcmask 457728
        %v1654 = vsel %vm1652, %v1621, %v1391
        %v1656 = vsel %vm1652, %v1623, %v1393
        %v1658 = vsel %vm1652, %v1625, %v1395
        %v1660 = vsel %vm1652, %v1627, %v1397
        %v1662 = vsel %vm1652, %v1629, %v1399
        %v1664 = vsel %vm1652, %v1631, %v1401
        %v1666 = vsel %vm1652, %v1633, %v1403
        %v1668 = vsel %vm1652, %v1635, %v1405
        %v1670 = vsel %vm1652, %v1637, %v1407
        %v1672 = vsel %vm1652, %v1639, %v1409
        %v1674 = vsel %vm1652, %v1641, %v1411
        %v1676 = vsel %vm1652, %v1643, %v1413
        %v1678 = vsel %vm1652, %v1645, %v1415
        %v1680 = vsel %vm1652, %v1647, %v1417
        %v1682 = vsel %vm1652, %v1649, %v1419
        %v1684 = vsel %vm1652, %v1651, %v1421
        %vm1685 = vcmask 523264
        %v1687 = vsel %vm1685, %v1654, %v1423
        %v1689 = vsel %vm1685, %v1656, %v1425
        %v1691 = vsel %vm1685, %v1658, %v1427
        %v1693 = vsel %vm1685, %v1660, %v1429
        %v1695 = vsel %vm1685, %v1662, %v1431
        %v1697 = vsel %vm1685, %v1664, %v1433
        %v1699 = vsel %vm1685, %v1666, %v1435
        %v1701 = vsel %vm1685, %v1668, %v1437
        %v1703 = vsel %vm1685, %v1670, %v1439
        %v1705 = vsel %vm1685, %v1672, %v1441
        %v1707 = vsel %vm1685, %v1674, %v1443
        %v1709 = vsel %vm1685, %v1676, %v1445
        %v1711 = vsel %vm1685, %v1678, %v1447
        %v1713 = vsel %vm1685, %v1680, %v1449
        %v1715 = vsel %vm1685, %v1682, %v1451
        %v1717 = vsel %vm1685, %v1684, %v1453
        %v1718 = vld [vmem:[%s2] sm:$0xf]
        %v1719 = vld [vmem:[%s2 + $0x4] sm:$0xf]
        %v1720 = vld [vmem:[%s2 + $0x8] sm:$0xf]
        %v1721 = vld [vmem:[%s2 + $0xc] sm:$0xf]
        %v1722 = vld [vmem:[%s2 + $0x10] sm:$0xf]
        %v1723 = vld [vmem:[%s2 + $0x14] sm:$0xf]
        %v1724 = vld [vmem:[%s2 + $0x18] sm:$0xf]
        %v1725 = vld [vmem:[%s2 + $0x1c] sm:$0xf]
        %v1726 = vld [vmem:[%s2 + $0x20] sm:$0xf]
        %v1727 = vld [vmem:[%s9] sm:$0x1]
        %v1729 = vlaneseq
        %v1730 = vshrl.u32 %v1729, 7
        %v1731 = vsub.s32 0, %v1730
        %v1732 = vrot.slane %v1727, %v1731
        %v1743 = vunpack.c.l.b16 %v1718
        %v1744 = vunpack.c.l.b16 %v1719
        %v1745 = vunpack.c.l.b16 %v1720
        %v1746 = vunpack.c.l.b16 %v1721
        %v1747 = vunpack.c.l.b16 %v1722
        %v1748 = vunpack.c.l.b16 %v1723
        %v1749 = vunpack.c.l.b16 %v1724
        %v1750 = vunpack.c.l.b16 %v1725
        %v1751 = vunpack.c.l.b16 %v1726
        %v1752 = vpack.c.b16 %v1744, %v1743
        %v1753 = vpack.c.b16 %v1746, %v1745
        %v1754 = vpack.c.b16 %v1748, %v1747
        %v1755 = vpack.c.b16 %v1750, %v1749
        %v1756 = vpack.c.b16 %v1751, %v1751
        %vm1761 = vcmask 588800
        %v1762 = vsel %vm1761, %v1687, 0
        %v1764 = vsel %vm1761, %v1689, 0
        %v1766 = vsel %vm1761, %v1691, 0
        %v1768 = vsel %vm1761, %v1693, 0
        %v1770 = vsel %vm1761, %v1695, 0
        %v1772 = vsel %vm1761, %v1697, 0
        %v1774 = vsel %vm1761, %v1699, 0
        %v1776 = vsel %vm1761, %v1701, 0
        %v1778 = vsel %vm1761, %v1703, 0
        %v1780 = vsel %vm1761, %v1705, 0
        %v1782 = vsel %vm1761, %v1707, 0
        %v1784 = vsel %vm1761, %v1709, 0
        %v1786 = vsel %vm1761, %v1711, 0
        %v1788 = vsel %vm1761, %v1713, 0
        %v1790 = vsel %vm1761, %v1715, 0
        %v1792 = vsel %vm1761, %v1717, 0
        %vm1794 = vcmask 1043456
        %v1796 = vsel %vm1794, %v1756, 0
        %1798 = vmatprep.subr.bf16.mxu0 0
        %1799 = vmatpush1.bf16.msra.mxu0 %v1752
        %1800 = vmatprep.subr.bf16.mxu0 0
        %1801 = vmatpush1.bf16.msra.mxu0 %v1753
        %1802 = vmatprep.subr.bf16.mxu0 0
        %1803 = vmatpush1.bf16.msra.mxu0 %v1754
        %1804 = vmatprep.subr.bf16.mxu0 0
        %1805 = vmatpush1.bf16.msra.mxu0 %v1755
        %1806 = vmatprep.subr.bf16.mxu0 0
        %1807 = vmatpush1.bf16.msra.mxu0 %v1796
        %1808 = vmatprep.subr.bf16.mxu0 0
        %1809 = vmatpush1.bf16.msra.mxu0 0
        %1810 = vmatprep.subr.bf16.mxu0 0
        %1811 = vmatpush1.bf16.msra.mxu0 0
        %1812 = vmatprep.subr.bf16.mxu0 0
        %1813 = vmatpush1.bf16.msra.mxu0 0
        %1814 = vmatprep.subr.bf16.mxu0 0
        %1815 = vmatpush1.bf16.msra.mxu0 0
        %1816 = vmatprep.subr.bf16.mxu0 0
        %1817 = vmatpush1.bf16.msra.mxu0 0
        %1818 = vmatprep.subr.bf16.mxu0 0
        %1819 = vmatpush1.bf16.msra.mxu0 0
        %1820 = vmatprep.subr.bf16.mxu0 0
        %1821 = vmatpush1.bf16.msra.mxu0 0
        %1822 = vmatprep.subr.bf16.mxu0 0
        %1823 = vmatpush1.bf16.msra.mxu0 0
        %1824 = vmatprep.subr.bf16.mxu0 0
        %1825 = vmatpush1.bf16.msra.mxu0 0
        %1826 = vmatprep.subr.bf16.mxu0 0
        %1827 = vmatpush1.bf16.msra.mxu0 0
        %1828 = vmatprep.subr.bf16.mxu0 0
        %1829 = vmatpush1.bf16.msra.mxu0 0
        %1830 = vmatprep.mubr.bf16.mxu0 0
        %1831 = vmatmul.mubr.bf16.gmra.mrb[0].mxu0 %v1762
        %v1832 = vpop.f32.mrb[0].mxu0
        %v1833 = vadd.f32 %v1732, %v1832
        %v1834 = vpop.f32.mrb[0].mxu0
        %v1835 = vpop.f32.mrb[0].mxu0
        %v1836 = vadd.f32 %v1732, %v1835
        %v1837 = vpop.f32.mrb[0].mxu0
        %1838 = vmatprep.mubr.bf16.mxu0 0
        %1839 = vmatmul.mubr.bf16.gmra.mrb[0].mxu0 %v1764
        %v1840 = vpop.f32.mrb[0].mxu0
        %v1841 = vadd.f32 %v1732, %v1840
        %v1842 = vpop.f32.mrb[0].mxu0
        %v1843 = vpop.f32.mrb[0].mxu0
        %v1844 = vadd.f32 %v1732, %v1843
        %v1845 = vpop.f32.mrb[0].mxu0
        %1846 = vmatprep.mubr.bf16.mxu0 0
        %1847 = vmatmul.mubr.bf16.gmra.mrb[0].mxu0 %v1766
        %v1848 = vpop.f32.mrb[0].mxu0
        %v1849 = vadd.f32 %v1732, %v1848
        %v1850 = vpop.f32.mrb[0].mxu0
        %v1851 = vpop.f32.mrb[0].mxu0
        %v1852 = vadd.f32 %v1732, %v1851
        %v1853 = vpop.f32.mrb[0].mxu0
        %1854 = vmatprep.mubr.bf16.mxu0 0
        %1855 = vmatmul.mubr.bf16.gmra.mrb[0].mxu0 %v1768
        %v1856 = vpop.f32.mrb[0].mxu0
        %v1857 = vadd.f32 %v1732, %v1856
        %v1858 = vpop.f32.mrb[0].mxu0
        %v1859 = vpop.f32.mrb[0].mxu0
        %v1860 = vadd.f32 %v1732, %v1859
        %v1861 = vpop.f32.mrb[0].mxu0
        %1862 = vmatprep.mubr.bf16.mxu0 0
        %1863 = vmatmul.mubr.bf16.gmra.mrb[0].mxu0 %v1770
        %v1864 = vpop.f32.mrb[0].mxu0
        %v1865 = vadd.f32 %v1732, %v1864
        %v1866 = vpop.f32.mrb[0].mxu0
        %v1867 = vpop.f32.mrb[0].mxu0
        %v1868 = vadd.f32 %v1732, %v1867
        %v1869 = vpop.f32.mrb[0].mxu0
        %1870 = vmatprep.mubr.bf16.mxu0 0
        %1871 = vmatmul.mubr.bf16.gmra.mrb[0].mxu0 %v1772
        %v1872 = vpop.f32.mrb[0].mxu0
        %v1873 = vadd.f32 %v1732, %v1872
        %v1874 = vpop.f32.mrb[0].mxu0
        %v1875 = vpop.f32.mrb[0].mxu0
        %v1876 = vadd.f32 %v1732, %v1875
        %v1877 = vpop.f32.mrb[0].mxu0
        %1878 = vmatprep.mubr.bf16.mxu0 0
        %1879 = vmatmul.mubr.bf16.gmra.mrb[0].mxu0 %v1774
        %v1880 = vpop.f32.mrb[0].mxu0
        %v1881 = vadd.f32 %v1732, %v1880
        %v1882 = vpop.f32.mrb[0].mxu0
        %v1883 = vpop.f32.mrb[0].mxu0
        %v1884 = vadd.f32 %v1732, %v1883
        %v1885 = vpop.f32.mrb[0].mxu0
        %1886 = vmatprep.mubr.bf16.mxu0 0
        %1887 = vmatmul.mubr.bf16.gmra.mrb[0].mxu0 %v1776
        %v1888 = vpop.f32.mrb[0].mxu0
        %v1889 = vadd.f32 %v1732, %v1888
        %v1890 = vpop.f32.mrb[0].mxu0
        %v1891 = vpop.f32.mrb[0].mxu0
        %v1892 = vadd.f32 %v1732, %v1891
        %v1893 = vpop.f32.mrb[0].mxu0
        %1894 = vmatprep.mubr.bf16.mxu0 0
        %1895 = vmatmul.mubr.bf16.gmra.mrb[0].mxu0 %v1778
        %v1896 = vpop.f32.mrb[0].mxu0
        %v1897 = vadd.f32 %v1732, %v1896
        %v1898 = vpop.f32.mrb[0].mxu0
        %v1899 = vpop.f32.mrb[0].mxu0
        %v1900 = vadd.f32 %v1732, %v1899
        %v1901 = vpop.f32.mrb[0].mxu0
        %1902 = vmatprep.mubr.bf16.mxu0 0
        %1903 = vmatmul.mubr.bf16.gmra.mrb[0].mxu0 %v1780
        %v1904 = vpop.f32.mrb[0].mxu0
        %v1905 = vadd.f32 %v1732, %v1904
        %v1906 = vpop.f32.mrb[0].mxu0
        %v1907 = vpop.f32.mrb[0].mxu0
        %v1908 = vadd.f32 %v1732, %v1907
        %v1909 = vpop.f32.mrb[0].mxu0
        %1910 = vmatprep.mubr.bf16.mxu0 0
        %1911 = vmatmul.mubr.bf16.gmra.mrb[0].mxu0 %v1782
        %v1912 = vpop.f32.mrb[0].mxu0
        %v1913 = vadd.f32 %v1732, %v1912
        %v1914 = vpop.f32.mrb[0].mxu0
        %v1915 = vpop.f32.mrb[0].mxu0
        %v1916 = vadd.f32 %v1732, %v1915
        %v1917 = vpop.f32.mrb[0].mxu0
        %1918 = vmatprep.mubr.bf16.mxu0 0
        %1919 = vmatmul.mubr.bf16.gmra.mrb[0].mxu0 %v1784
        %v1920 = vpop.f32.mrb[0].mxu0
        %v1921 = vadd.f32 %v1732, %v1920
        %v1922 = vpop.f32.mrb[0].mxu0
        %v1923 = vpop.f32.mrb[0].mxu0
        %v1924 = vadd.f32 %v1732, %v1923
        %v1925 = vpop.f32.mrb[0].mxu0
        %1926 = vmatprep.mubr.bf16.mxu0 0
        %1927 = vmatmul.mubr.bf16.gmra.mrb[0].mxu0 %v1786
        %v1928 = vpop.f32.mrb[0].mxu0
        %v1929 = vadd.f32 %v1732, %v1928
        %v1930 = vpop.f32.mrb[0].mxu0
        %v1931 = vpop.f32.mrb[0].mxu0
        %v1932 = vadd.f32 %v1732, %v1931
        %v1933 = vpop.f32.mrb[0].mxu0
        %1934 = vmatprep.mubr.bf16.mxu0 0
        %1935 = vmatmul.mubr.bf16.gmra.mrb[0].mxu0 %v1788
        %v1936 = vpop.f32.mrb[0].mxu0
        %v1937 = vadd.f32 %v1732, %v1936
        %v1938 = vpop.f32.mrb[0].mxu0
        %v1939 = vpop.f32.mrb[0].mxu0
        %v1940 = vadd.f32 %v1732, %v1939
        %v1941 = vpop.f32.mrb[0].mxu0
        %1942 = vmatprep.mubr.bf16.mxu0 0
        %1943 = vmatmul.mubr.bf16.gmra.mrb[0].mxu0 %v1790
        %v1944 = vpop.f32.mrb[0].mxu0
        %v1945 = vadd.f32 %v1732, %v1944
        %v1946 = vpop.f32.mrb[0].mxu0
        %v1947 = vpop.f32.mrb[0].mxu0
        %v1948 = vadd.f32 %v1732, %v1947
        %v1949 = vpop.f32.mrb[0].mxu0
        %1950 = vmatprep.mubr.bf16.mxu0 0
        %1951 = vmatmul.mubr.bf16.gmra.mrb[0].mxu0 %v1792
        %v1952 = vpop.f32.mrb[0].mxu0
        %v1953 = vadd.f32 %v1732, %v1952
        %v1954 = vpop.f32.mrb[0].mxu0
        %v1955 = vpop.f32.mrb[0].mxu0
        %v1956 = vadd.f32 %v1732, %v1955
        %v1957 = vpop.f32.mrb[0].mxu0
        %1958 = vdwg.mxu0
        %v1959 = vmax.f32 %v1833, 0.0
        %v1960 = vmax.f32 %v1836, 0.0
        %v1961 = vmax.f32 %v1841, 0.0
        %v1962 = vmax.f32 %v1844, 0.0
        %v1963 = vmax.f32 %v1849, 0.0
        %v1964 = vmax.f32 %v1852, 0.0
        %v1965 = vmax.f32 %v1857, 0.0
        %v1966 = vmax.f32 %v1860, 0.0
        %v1967 = vmax.f32 %v1865, 0.0
        %v1968 = vmax.f32 %v1868, 0.0
        %v1969 = vmax.f32 %v1873, 0.0
        %v1970 = vmax.f32 %v1876, 0.0
        %v1971 = vmax.f32 %v1881, 0.0
        %v1972 = vmax.f32 %v1884, 0.0
        %v1973 = vmax.f32 %v1889, 0.0
        %v1974 = vmax.f32 %v1892, 0.0
        %v1975 = vmax.f32 %v1897, 0.0
        %v1976 = vmax.f32 %v1900, 0.0
        %v1977 = vmax.f32 %v1905, 0.0
        %v1978 = vmax.f32 %v1908, 0.0
        %v1979 = vmax.f32 %v1913, 0.0
        %v1980 = vmax.f32 %v1916, 0.0
        %v1981 = vmax.f32 %v1921, 0.0
        %v1982 = vmax.f32 %v1924, 0.0
        %v1983 = vmax.f32 %v1929, 0.0
        %v1984 = vmax.f32 %v1932, 0.0
        %v1985 = vmax.f32 %v1937, 0.0
        %v1986 = vmax.f32 %v1940, 0.0
        %v1987 = vmax.f32 %v1945, 0.0
        %v1988 = vmax.f32 %v1948, 0.0
        %v1989 = vmax.f32 %v1953, 0.0
        %v1990 = vmax.f32 %v1956, 0.0
        %v1991 = vpack.c.bf16 %v1960, %v1959
        %v1992 = vpack.c.bf16 %v1962, %v1961
        %v1993 = vpack.c.bf16 %v1964, %v1963
        %v1994 = vpack.c.bf16 %v1966, %v1965
        %v1995 = vpack.c.bf16 %v1968, %v1967
        %v1996 = vpack.c.bf16 %v1970, %v1969
        %v1997 = vpack.c.bf16 %v1972, %v1971
        %v1998 = vpack.c.bf16 %v1974, %v1973
        %v1999 = vpack.c.bf16 %v1976, %v1975
        %v2000 = vpack.c.bf16 %v1978, %v1977
        %v2001 = vpack.c.bf16 %v1980, %v1979
        %v2002 = vpack.c.bf16 %v1982, %v1981
        %v2003 = vpack.c.bf16 %v1984, %v1983
        %v2004 = vpack.c.bf16 %v1986, %v1985
        %v2005 = vpack.c.bf16 %v1988, %v1987
        %v2006 = vpack.c.bf16 %v1990, %v1989
        %v2008 = vshrl.u32 %v1991, 16
        %v2010 = vrot.slane %v2008, 7
        %v2011 = vshll.u32 %v1991, 16
        %v2013 = vor.u32 %v2010, %v2011
        %v2015 = vshrl.u32 %v1992, 16
        %v2017 = vrot.slane %v2015, 7
        %v2018 = vshll.u32 %v1992, 16
        %v2020 = vor.u32 %v2017, %v2018
        %v2022 = vshrl.u32 %v1993, 16
        %v2024 = vrot.slane %v2022, 7
        %v2025 = vshll.u32 %v1993, 16
        %v2027 = vor.u32 %v2024, %v2025
        %v2029 = vshrl.u32 %v1994, 16
        %v2031 = vrot.slane %v2029, 7
        %v2032 = vshll.u32 %v1994, 16
        %v2034 = vor.u32 %v2031, %v2032
        %v2036 = vshrl.u32 %v1995, 16
        %v2038 = vrot.slane %v2036, 7
        %v2039 = vshll.u32 %v1995, 16
        %v2041 = vor.u32 %v2038, %v2039
        %v2043 = vshrl.u32 %v1996, 16
        %v2045 = vrot.slane %v2043, 7
        %v2046 = vshll.u32 %v1996, 16
        %v2048 = vor.u32 %v2045, %v2046
        %v2050 = vshrl.u32 %v1997, 16
        %v2052 = vrot.slane %v2050, 7
        %v2053 = vshll.u32 %v1997, 16
        %v2055 = vor.u32 %v2052, %v2053
        %v2057 = vshrl.u32 %v1998, 16
        %v2059 = vrot.slane %v2057, 7
        %v2060 = vshll.u32 %v1998, 16
        %v2062 = vor.u32 %v2059, %v2060
        %v2064 = vshrl.u32 %v1999, 16
        %v2066 = vrot.slane %v2064, 7
        %v2067 = vshll.u32 %v1999, 16
        %v2069 = vor.u32 %v2066, %v2067
        %v2071 = vshrl.u32 %v2000, 16
        %v2073 = vrot.slane %v2071, 7
        %v2074 = vshll.u32 %v2000, 16
        %v2076 = vor.u32 %v2073, %v2074
        %v2078 = vshrl.u32 %v2001, 16
        %v2080 = vrot.slane %v2078, 7
        %v2081 = vshll.u32 %v2001, 16
        %v2083 = vor.u32 %v2080, %v2081
        %v2085 = vshrl.u32 %v2002, 16
        %v2087 = vrot.slane %v2085, 7
        %v2088 = vshll.u32 %v2002, 16
        %v2090 = vor.u32 %v2087, %v2088
        %v2092 = vshrl.u32 %v2003, 16
        %v2094 = vrot.slane %v2092, 7
        %v2095 = vshll.u32 %v2003, 16
        %v2097 = vor.u32 %v2094, %v2095
        %v2099 = vshrl.u32 %v2004, 16
        %v2101 = vrot.slane %v2099, 7
        %v2102 = vshll.u32 %v2004, 16
        %v2104 = vor.u32 %v2101, %v2102
        %v2106 = vshrl.u32 %v2005, 16
        %v2108 = vrot.slane %v2106, 7
        %v2109 = vshll.u32 %v2005, 16
        %v2111 = vor.u32 %v2108, %v2109
        %v2113 = vshrl.u32 %v2006, 16
        %v2115 = vrot.slane %v2113, 7
        %v2116 = vshll.u32 %v2006, 16
        %v2118 = vor.u32 %v2115, %v2116
        %v2151 = vsel %vm872, 0, %v2013
        %v2152 = vsel %vm872, 0, %v2020
        %v2153 = vsel %vm872, 0, %v2027
        %v2154 = vsel %vm872, 0, %v2034
        %v2155 = vsel %vm872, 0, %v2041
        %v2156 = vsel %vm872, 0, %v2048
        %v2157 = vsel %vm872, 0, %v2055
        %v2158 = vsel %vm872, 0, %v2062
        %v2159 = vsel %vm872, 0, %v2069
        %v2160 = vsel %vm872, 0, %v2076
        %v2161 = vsel %vm872, 0, %v2083
        %v2162 = vsel %vm872, 0, %v2090
        %v2163 = vsel %vm872, 0, %v2097
        %v2164 = vsel %vm872, 0, %v2104
        %v2165 = vsel %vm872, 0, %v2111
        %v2166 = vsel %vm872, 0, %v2118
        %v2167 = vsel %vm872, %v2010, 0
        %v2168 = vsel %vm872, %v2017, 0
        %v2169 = vsel %vm872, %v2024, 0
        %v2170 = vsel %vm872, %v2031, 0
        %v2171 = vsel %vm872, %v2038, 0
        %v2172 = vsel %vm872, %v2045, 0
        %v2173 = vsel %vm872, %v2052, 0
        %v2174 = vsel %vm872, %v2059, 0
        %v2175 = vsel %vm872, %v2066, 0
        %v2176 = vsel %vm872, %v2073, 0
        %v2177 = vsel %vm872, %v2080, 0
        %v2178 = vsel %vm872, %v2087, 0
        %v2179 = vsel %vm872, %v2094, 0
        %v2180 = vsel %vm872, %v2101, 0
        %v2181 = vsel %vm872, %v2108, 0
        %v2182 = vsel %vm872, %v2115, 0
        %v2184 = vshrl.u32 %v2151, 16
        %v2186 = vshll.u32 %v2151, 16
        %v2188 = vrot.slane %v2186, 1
        %v2189 = vor.u32 %v2184, %v2188
        %v2191 = vshll.u32 %v2167, 16
        %v2193 = vrot.slane %v2191, 1
        %v2194 = vsel %vm907, %v2189, %v2193
        %v2196 = vshrl.u32 %v2152, 16
        %v2198 = vshll.u32 %v2152, 16
        %v2200 = vrot.slane %v2198, 1
        %v2201 = vor.u32 %v2196, %v2200
        %v2203 = vshll.u32 %v2168, 16
        %v2205 = vrot.slane %v2203, 1
        %v2206 = vsel %vm907, %v2201, %v2205
        %v2208 = vshrl.u32 %v2153, 16
        %v2210 = vshll.u32 %v2153, 16
        %v2212 = vrot.slane %v2210, 1
        %v2213 = vor.u32 %v2208, %v2212
        %v2215 = vshll.u32 %v2169, 16
        %v2217 = vrot.slane %v2215, 1
        %v2218 = vsel %vm907, %v2213, %v2217
        %v2220 = vshrl.u32 %v2154, 16
        %v2222 = vshll.u32 %v2154, 16
        %v2224 = vrot.slane %v2222, 1
        %v2225 = vor.u32 %v2220, %v2224
        %v2227 = vshll.u32 %v2170, 16
        %v2229 = vrot.slane %v2227, 1
        %v2230 = vsel %vm907, %v2225, %v2229
        %v2232 = vshrl.u32 %v2155, 16
        %v2234 = vshll.u32 %v2155, 16
        %v2236 = vrot.slane %v2234, 1
        %v2237 = vor.u32 %v2232, %v2236
        %v2239 = vshll.u32 %v2171, 16
        %v2241 = vrot.slane %v2239, 1
        %v2242 = vsel %vm907, %v2237, %v2241
        %v2244 = vshrl.u32 %v2156, 16
        %v2246 = vshll.u32 %v2156, 16
        %v2248 = vrot.slane %v2246, 1
        %v2249 = vor.u32 %v2244, %v2248
        %v2251 = vshll.u32 %v2172, 16
        %v2253 = vrot.slane %v2251, 1
        %v2254 = vsel %vm907, %v2249, %v2253
        %v2256 = vshrl.u32 %v2157, 16
        %v2258 = vshll.u32 %v2157, 16
        %v2260 = vrot.slane %v2258, 1
        %v2261 = vor.u32 %v2256, %v2260
        %v2263 = vshll.u32 %v2173, 16
        %v2265 = vrot.slane %v2263, 1
        %v2266 = vsel %vm907, %v2261, %v2265
        %v2268 = vshrl.u32 %v2158, 16
        %v2270 = vshll.u32 %v2158, 16
        %v2272 = vrot.slane %v2270, 1
        %v2273 = vor.u32 %v2268, %v2272
        %v2275 = vshll.u32 %v2174, 16
        %v2277 = vrot.slane %v2275, 1
        %v2278 = vsel %vm907, %v2273, %v2277
        %v2280 = vshrl.u32 %v2159, 16
        %v2282 = vshll.u32 %v2159, 16
        %v2284 = vrot.slane %v2282, 1
        %v2285 = vor.u32 %v2280, %v2284
        %v2287 = vshll.u32 %v2175, 16
        %v2289 = vrot.slane %v2287, 1
        %v2290 = vsel %vm907, %v2285, %v2289
        %v2292 = vshrl.u32 %v2160, 16
        %v2294 = vshll.u32 %v2160, 16
        %v2296 = vrot.slane %v2294, 1
        %v2297 = vor.u32 %v2292, %v2296
        %v2299 = vshll.u32 %v2176, 16
        %v2301 = vrot.slane %v2299, 1
        %v2302 = vsel %vm907, %v2297, %v2301
        %v2304 = vshrl.u32 %v2161, 16
        %v2306 = vshll.u32 %v2161, 16
        %v2308 = vrot.slane %v2306, 1
        %v2309 = vor.u32 %v2304, %v2308
        %v2311 = vshll.u32 %v2177, 16
        %v2313 = vrot.slane %v2311, 1
        %v2314 = vsel %vm907, %v2309, %v2313
        %v2316 = vshrl.u32 %v2162, 16
        %v2318 = vshll.u32 %v2162, 16
        %v2320 = vrot.slane %v2318, 1
        %v2321 = vor.u32 %v2316, %v2320
        %v2323 = vshll.u32 %v2178, 16
        %v2325 = vrot.slane %v2323, 1
        %v2326 = vsel %vm907, %v2321, %v2325
        %v2328 = vshrl.u32 %v2163, 16
        %v2330 = vshll.u32 %v2163, 16
        %v2332 = vrot.slane %v2330, 1
        %v2333 = vor.u32 %v2328, %v2332
        %v2335 = vshll.u32 %v2179, 16
        %v2337 = vrot.slane %v2335, 1
        %v2338 = vsel %vm907, %v2333, %v2337
        %v2340 = vshrl.u32 %v2164, 16
        %v2342 = vshll.u32 %v2164, 16
        %v2344 = vrot.slane %v2342, 1
        %v2345 = vor.u32 %v2340, %v2344
        %v2347 = vshll.u32 %v2180, 16
        %v2349 = vrot.slane %v2347, 1
        %v2350 = vsel %vm907, %v2345, %v2349
        %v2352 = vshrl.u32 %v2165, 16
        %v2354 = vshll.u32 %v2165, 16
        %v2356 = vrot.slane %v2354, 1
        %v2357 = vor.u32 %v2352, %v2356
        %v2359 = vshll.u32 %v2181, 16
        %v2361 = vrot.slane %v2359, 1
        %v2362 = vsel %vm907, %v2357, %v2361
        %2363 = vrot.lane.b32.xlu0 %v919, 32
        %v2364 = vpop.permute.xlu0 %2363
        %2365 = vrot.lane.b32.xlu0 %v2194, 32
        %v2366 = vpop.permute.xlu0 %2365
        %2367 = vrot.lane.b32.xlu0 %v2206, 32
        %v2368 = vpop.permute.xlu0 %2367
        %2369 = vrot.lane.b32.xlu0 %v2218, 32
        %v2370 = vpop.permute.xlu0 %2369
        %2371 = vrot.lane.b32.xlu0 %v2230, 32
        %v2372 = vpop.permute.xlu0 %2371
        %2373 = vrot.lane.b32.xlu0 %v2242, 32
        %v2374 = vpop.permute.xlu0 %2373
        %2375 = vrot.lane.b32.xlu0 %v2254, 32
        %v2376 = vpop.permute.xlu0 %2375
        %2377 = vrot.lane.b32.xlu0 %v2266, 32
        %v2378 = vpop.permute.xlu0 %2377
        %2379 = vrot.lane.b32.xlu0 %v2278, 32
        %v2380 = vpop.permute.xlu0 %2379
        %2381 = vrot.lane.b32.xlu0 %v2290, 32
        %v2382 = vpop.permute.xlu0 %2381
        %2383 = vrot.lane.b32.xlu0 %v2302, 32
        %v2384 = vpop.permute.xlu0 %2383
        %2385 = vrot.lane.b32.xlu0 %v2314, 32
        %v2386 = vpop.permute.xlu0 %2385
        %2387 = vrot.lane.b32.xlu0 %v2326, 32
        %v2388 = vpop.permute.xlu0 %2387
        %2389 = vrot.lane.b32.xlu0 %v2338, 32
        %v2390 = vpop.permute.xlu0 %2389
        %2391 = vrot.lane.b32.xlu0 %v2350, 32
        %v2392 = vpop.permute.xlu0 %2391
        %2393 = vrot.lane.b32.xlu0 %v2362, 32
        %v2394 = vpop.permute.xlu0 %2393
        %v2425 = vrot.slane %v2151, 1
        %v2426 = vrot.slane %v2167, 1
        %v2427 = vsel %vm1164, %v2425, %v2426
        %v2428 = vrot.slane %v2152, 1
        %v2429 = vrot.slane %v2168, 1
        %v2430 = vsel %vm1164, %v2428, %v2429
        %v2431 = vrot.slane %v2153, 1
        %v2432 = vrot.slane %v2169, 1
        %v2433 = vsel %vm1164, %v2431, %v2432
        %v2434 = vrot.slane %v2154, 1
        %v2435 = vrot.slane %v2170, 1
        %v2436 = vsel %vm1164, %v2434, %v2435
        %v2437 = vrot.slane %v2155, 1
        %v2438 = vrot.slane %v2171, 1
        %v2439 = vsel %vm1164, %v2437, %v2438
        %v2440 = vrot.slane %v2156, 1
        %v2441 = vrot.slane %v2172, 1
        %v2442 = vsel %vm1164, %v2440, %v2441
        %v2443 = vrot.slane %v2157, 1
        %v2444 = vrot.slane %v2173, 1
        %v2445 = vsel %vm1164, %v2443, %v2444
        %v2446 = vrot.slane %v2158, 1
        %v2447 = vrot.slane %v2174, 1
        %v2448 = vsel %vm1164, %v2446, %v2447
        %v2449 = vrot.slane %v2159, 1
        %v2450 = vrot.slane %v2175, 1
        %v2451 = vsel %vm1164, %v2449, %v2450
        %v2452 = vrot.slane %v2160, 1
        %v2453 = vrot.slane %v2176, 1
        %v2454 = vsel %vm1164, %v2452, %v2453
        %v2455 = vrot.slane %v2161, 1
        %v2456 = vrot.slane %v2177, 1
        %v2457 = vsel %vm1164, %v2455, %v2456
        %v2458 = vrot.slane %v2162, 1
        %v2459 = vrot.slane %v2178, 1
        %v2460 = vsel %vm1164, %v2458, %v2459
        %v2461 = vrot.slane %v2163, 1
        %v2462 = vrot.slane %v2179, 1
        %v2463 = vsel %vm1164, %v2461, %v2462
        %v2464 = vrot.slane %v2164, 1
        %v2465 = vrot.slane %v2180, 1
        %v2466 = vsel %vm1164, %v2464, %v2465
        %v2467 = vrot.slane %v2165, 1
        %v2468 = vrot.slane %v2181, 1
        %v2469 = vsel %vm1164, %v2467, %v2468
        %2470 = vrot.lane.b32.xlu0 %v2427, 64
        %v2471 = vpop.permute.xlu0 %2470
        %2472 = vrot.lane.b32.xlu0 %v2430, 64
        %v2473 = vpop.permute.xlu0 %2472
        %2474 = vrot.lane.b32.xlu0 %v2433, 64
        %v2475 = vpop.permute.xlu0 %2474
        %2476 = vrot.lane.b32.xlu0 %v2436, 64
        %v2477 = vpop.permute.xlu0 %2476
        %2478 = vrot.lane.b32.xlu0 %v2439, 64
        %v2479 = vpop.permute.xlu0 %2478
        %2480 = vrot.lane.b32.xlu0 %v2442, 64
        %v2481 = vpop.permute.xlu0 %2480
        %2482 = vrot.lane.b32.xlu0 %v2445, 64
        %v2483 = vpop.permute.xlu0 %2482
        %2484 = vrot.lane.b32.xlu0 %v2448, 64
        %v2485 = vpop.permute.xlu0 %2484
        %2486 = vrot.lane.b32.xlu0 %v2451, 64
        %v2487 = vpop.permute.xlu0 %2486
        %2488 = vrot.lane.b32.xlu0 %v2454, 64
        %v2489 = vpop.permute.xlu0 %2488
        %2490 = vrot.lane.b32.xlu0 %v2457, 64
        %v2491 = vpop.permute.xlu0 %2490
        %2492 = vrot.lane.b32.xlu0 %v2460, 64
        %v2493 = vpop.permute.xlu0 %2492
        %2494 = vrot.lane.b32.xlu0 %v2463, 64
        %v2495 = vpop.permute.xlu0 %2494
        %2496 = vrot.lane.b32.xlu0 %v2466, 64
        %v2497 = vpop.permute.xlu0 %2496
        %2498 = vrot.lane.b32.xlu0 %v2469, 64
        %v2499 = vpop.permute.xlu0 %2498
        %2501 = vrot.lane.b32.xlu0 %v2151, 96
        %v2502 = vpop.permute.xlu0 %2501
        %2503 = vrot.lane.b32.xlu0 %v2152, 96
        %v2504 = vpop.permute.xlu0 %2503
        %2505 = vrot.lane.b32.xlu0 %v2153, 96
        %v2506 = vpop.permute.xlu0 %2505
        %2507 = vrot.lane.b32.xlu0 %v2154, 96
        %v2508 = vpop.permute.xlu0 %2507
        %2509 = vrot.lane.b32.xlu0 %v2155, 96
        %v2510 = vpop.permute.xlu0 %2509
        %2511 = vrot.lane.b32.xlu0 %v2156, 96
        %v2512 = vpop.permute.xlu0 %2511
        %2513 = vrot.lane.b32.xlu0 %v2157, 96
        %v2514 = vpop.permute.xlu0 %2513
        %2515 = vrot.lane.b32.xlu0 %v2158, 96
        %v2516 = vpop.permute.xlu0 %2515
        %2517 = vrot.lane.b32.xlu0 %v2159, 96
        %v2518 = vpop.permute.xlu0 %2517
        %2519 = vrot.lane.b32.xlu0 %v2160, 96
        %v2520 = vpop.permute.xlu0 %2519
        %2521 = vrot.lane.b32.xlu0 %v2161, 96
        %v2522 = vpop.permute.xlu0 %2521
        %2523 = vrot.lane.b32.xlu0 %v2162, 96
        %v2524 = vpop.permute.xlu0 %2523
        %2525 = vrot.lane.b32.xlu0 %v2163, 96
        %v2526 = vpop.permute.xlu0 %2525
        %2527 = vrot.lane.b32.xlu0 %v2164, 96
        %v2528 = vpop.permute.xlu0 %2527
        %2529 = vrot.lane.b32.xlu0 %v2165, 96
        %v2530 = vpop.permute.xlu0 %2529
        %2531 = vrot.lane.b32.xlu0 %v2166, 96
        %v2532 = vpop.permute.xlu0 %2531
        %v2534 = vshrl.u32 %v2166, 16
        %v2536 = vshll.u32 %v2166, 16
        %v2538 = vrot.slane %v2536, 1
        %v2539 = vor.u32 %v2534, %v2538
        %v2541 = vshll.u32 %v2182, 16
        %v2543 = vrot.slane %v2541, 1
        %v2544 = vsel %vm907, %v2539, %v2543
        %v2546 = vrot.slane %v2166, 1
        %v2547 = vrot.slane %v2182, 1
        %v2548 = vsel %vm1164, %v2546, %v2547
        %2549 = vrot.lane.b32.xlu0 %v2427, 32
        %v2550 = vpop.permute.xlu0 %2549
        %2551 = vrot.lane.b32.xlu0 %v2430, 32
        %v2552 = vpop.permute.xlu0 %2551
        %2553 = vrot.lane.b32.xlu0 %v2433, 32
        %v2554 = vpop.permute.xlu0 %2553
        %2555 = vrot.lane.b32.xlu0 %v2436, 32
        %v2556 = vpop.permute.xlu0 %2555
        %2557 = vrot.lane.b32.xlu0 %v2439, 32
        %v2558 = vpop.permute.xlu0 %2557
        %2559 = vrot.lane.b32.xlu0 %v2442, 32
        %v2560 = vpop.permute.xlu0 %2559
        %2561 = vrot.lane.b32.xlu0 %v2445, 32
        %v2562 = vpop.permute.xlu0 %2561
        %2563 = vrot.lane.b32.xlu0 %v2448, 32
        %v2564 = vpop.permute.xlu0 %2563
        %2565 = vrot.lane.b32.xlu0 %v2451, 32
        %v2566 = vpop.permute.xlu0 %2565
        %2567 = vrot.lane.b32.xlu0 %v2454, 32
        %v2568 = vpop.permute.xlu0 %2567
        %2569 = vrot.lane.b32.xlu0 %v2457, 32
        %v2570 = vpop.permute.xlu0 %2569
        %2571 = vrot.lane.b32.xlu0 %v2460, 32
        %v2572 = vpop.permute.xlu0 %2571
        %2573 = vrot.lane.b32.xlu0 %v2463, 32
        %v2574 = vpop.permute.xlu0 %2573
        %2575 = vrot.lane.b32.xlu0 %v2466, 32
        %v2576 = vpop.permute.xlu0 %2575
        %2577 = vrot.lane.b32.xlu0 %v2469, 32
        %v2578 = vpop.permute.xlu0 %2577
        %2579 = vrot.lane.b32.xlu0 %v2548, 32
        %v2580 = vpop.permute.xlu0 %2579
        %2581 = vrot.lane.b32.xlu0 %v2152, 64
        %v2582 = vpop.permute.xlu0 %2581
        %2583 = vrot.lane.b32.xlu0 %v2153, 64
        %v2584 = vpop.permute.xlu0 %2583
        %2585 = vrot.lane.b32.xlu0 %v2154, 64
        %v2586 = vpop.permute.xlu0 %2585
        %2587 = vrot.lane.b32.xlu0 %v2155, 64
        %v2588 = vpop.permute.xlu0 %2587
        %2589 = vrot.lane.b32.xlu0 %v2156, 64
        %v2590 = vpop.permute.xlu0 %2589
        %2591 = vrot.lane.b32.xlu0 %v2157, 64
        %v2592 = vpop.permute.xlu0 %2591
        %2593 = vrot.lane.b32.xlu0 %v2158, 64
        %v2594 = vpop.permute.xlu0 %2593
        %2595 = vrot.lane.b32.xlu0 %v2159, 64
        %v2596 = vpop.permute.xlu0 %2595
        %2597 = vrot.lane.b32.xlu0 %v2160, 64
        %v2598 = vpop.permute.xlu0 %2597
        %2599 = vrot.lane.b32.xlu0 %v2161, 64
        %v2600 = vpop.permute.xlu0 %2599
        %2601 = vrot.lane.b32.xlu0 %v2162, 64
        %v2602 = vpop.permute.xlu0 %2601
        %2603 = vrot.lane.b32.xlu0 %v2163, 64
        %v2604 = vpop.permute.xlu0 %2603
        %2605 = vrot.lane.b32.xlu0 %v2164, 64
        %v2606 = vpop.permute.xlu0 %2605
        %2607 = vrot.lane.b32.xlu0 %v2165, 64
        %v2608 = vpop.permute.xlu0 %2607
        %2609 = vrot.lane.b32.xlu0 %v2166, 64
        %v2610 = vpop.permute.xlu0 %2609
        %2611 = vrot.lane.b32.xlu0 %v873, 64
        %v2612 = vpop.permute.xlu0 %2611
        %2613 = vrot.lane.b32.xlu0 %v2206, 96
        %v2614 = vpop.permute.xlu0 %2613
        %2615 = vrot.lane.b32.xlu0 %v2218, 96
        %v2616 = vpop.permute.xlu0 %2615
        %2617 = vrot.lane.b32.xlu0 %v2230, 96
        %v2618 = vpop.permute.xlu0 %2617
        %2619 = vrot.lane.b32.xlu0 %v2242, 96
        %v2620 = vpop.permute.xlu0 %2619
        %2621 = vrot.lane.b32.xlu0 %v2254, 96
        %v2622 = vpop.permute.xlu0 %2621
        %2623 = vrot.lane.b32.xlu0 %v2266, 96
        %v2624 = vpop.permute.xlu0 %2623
        %2625 = vrot.lane.b32.xlu0 %v2278, 96
        %v2626 = vpop.permute.xlu0 %2625
        %2627 = vrot.lane.b32.xlu0 %v2290, 96
        %v2628 = vpop.permute.xlu0 %2627
        %2629 = vrot.lane.b32.xlu0 %v2302, 96
        %v2630 = vpop.permute.xlu0 %2629
        %2631 = vrot.lane.b32.xlu0 %v2314, 96
        %v2632 = vpop.permute.xlu0 %2631
        %2633 = vrot.lane.b32.xlu0 %v2326, 96
        %v2634 = vpop.permute.xlu0 %2633
        %2635 = vrot.lane.b32.xlu0 %v2338, 96
        %v2636 = vpop.permute.xlu0 %2635
        %2637 = vrot.lane.b32.xlu0 %v2350, 96
        %v2638 = vpop.permute.xlu0 %2637
        %2639 = vrot.lane.b32.xlu0 %v2362, 96
        %v2640 = vpop.permute.xlu0 %2639
        %2641 = vrot.lane.b32.xlu0 %v2544, 96
        %v2642 = vpop.permute.xlu0 %2641
        %2643 = vrot.lane.b32.xlu0 %v919, 96
        %v2644 = vpop.permute.xlu0 %2643
        %v2646 = vsel %vm1553, %v873, %v2364
        %v2648 = vsel %vm1553, %v2151, %v2366
        %v2650 = vsel %vm1553, %v2152, %v2368
        %v2652 = vsel %vm1553, %v2153, %v2370
        %v2654 = vsel %vm1553, %v2154, %v2372
        %v2656 = vsel %vm1553, %v2155, %v2374
        %v2658 = vsel %vm1553, %v2156, %v2376
        %v2660 = vsel %vm1553, %v2157, %v2378
        %v2662 = vsel %vm1553, %v2158, %v2380
        %v2664 = vsel %vm1553, %v2159, %v2382
        %v2666 = vsel %vm1553, %v2160, %v2384
        %v2668 = vsel %vm1553, %v2161, %v2386
        %v2670 = vsel %vm1553, %v2162, %v2388
        %v2672 = vsel %vm1553, %v2163, %v2390
        %v2674 = vsel %vm1553, %v2164, %v2392
        %v2676 = vsel %vm1553, %v2165, %v2394
        %v2677 = vsel %vm1685, %v2646, %v1453
        %v2679 = vsel %vm1685, %v2648, %v2471
        %v2681 = vsel %vm1685, %v2650, %v2473
        %v2683 = vsel %vm1685, %v2652, %v2475
        %v2685 = vsel %vm1685, %v2654, %v2477
        %v2687 = vsel %vm1685, %v2656, %v2479
        %v2689 = vsel %vm1685, %v2658, %v2481
        %v2691 = vsel %vm1685, %v2660, %v2483
        %v2693 = vsel %vm1685, %v2662, %v2485
        %v2695 = vsel %vm1685, %v2664, %v2487
        %v2697 = vsel %vm1685, %v2666, %v2489
        %v2699 = vsel %vm1685, %v2668, %v2491
        %v2701 = vsel %vm1685, %v2670, %v2493
        %v2703 = vsel %vm1685, %v2672, %v2495
        %v2705 = vsel %vm1685, %v2674, %v2497
        %v2707 = vsel %vm1685, %v2676, %v2499
        %vm2708 = vcmask 785408
        %v2710 = vsel %vm2708, %v2677, %v2502
        %v2713 = vsel %vm2708, %v2679, %v2504
        %v2716 = vsel %vm2708, %v2681, %v2506
        %v2719 = vsel %vm2708, %v2683, %v2508
        %v2722 = vsel %vm2708, %v2685, %v2510
        %v2725 = vsel %vm2708, %v2687, %v2512
        %v2728 = vsel %vm2708, %v2689, %v2514
        %v2731 = vsel %vm2708, %v2691, %v2516
        %v2734 = vsel %vm2708, %v2693, %v2518
        %v2737 = vsel %vm2708, %v2695, %v2520
        %v2740 = vsel %vm2708, %v2697, %v2522
        %v2743 = vsel %vm2708, %v2699, %v2524
        %v2746 = vsel %vm2708, %v2701, %v2526
        %v2749 = vsel %vm2708, %v2703, %v2528
        %v2752 = vsel %vm2708, %v2705, %v2530
        %v2755 = vsel %vm2708, %v2707, %v2532
        %v2759 = vsel %vm1553, %v2194, %v2550
        %v2762 = vsel %vm1553, %v2206, %v2552
        %v2765 = vsel %vm1553, %v2218, %v2554
        %v2768 = vsel %vm1553, %v2230, %v2556
        %v2771 = vsel %vm1553, %v2242, %v2558
        %v2774 = vsel %vm1553, %v2254, %v2560
        %v2777 = vsel %vm1553, %v2266, %v2562
        %v2780 = vsel %vm1553, %v2278, %v2564
        %v2783 = vsel %vm1553, %v2290, %v2566
        %v2786 = vsel %vm1553, %v2302, %v2568
        %v2789 = vsel %vm1553, %v2314, %v2570
        %v2792 = vsel %vm1553, %v2326, %v2572
        %v2795 = vsel %vm1553, %v2338, %v2574
        %v2798 = vsel %vm1553, %v2350, %v2576
        %v2801 = vsel %vm1553, %v2362, %v2578
        %v2804 = vsel %vm1553, %v2544, %v2580
        %v2806 = vsel %vm1685, %v2759, %v2582
        %v2808 = vsel %vm1685, %v2762, %v2584
        %v2810 = vsel %vm1685, %v2765, %v2586
        %v2812 = vsel %vm1685, %v2768, %v2588
        %v2814 = vsel %vm1685, %v2771, %v2590
        %v2816 = vsel %vm1685, %v2774, %v2592
        %v2818 = vsel %vm1685, %v2777, %v2594
        %v2820 = vsel %vm1685, %v2780, %v2596
        %v2822 = vsel %vm1685, %v2783, %v2598
        %v2824 = vsel %vm1685, %v2786, %v2600
        %v2826 = vsel %vm1685, %v2789, %v2602
        %v2828 = vsel %vm1685, %v2792, %v2604
        %v2830 = vsel %vm1685, %v2795, %v2606
        %v2832 = vsel %vm1685, %v2798, %v2608
        %v2834 = vsel %vm1685, %v2801, %v2610
        %v2836 = vsel %vm1685, %v2804, %v2612
        %v2838 = vsel %vm2708, %v2806, %v2614
        %v2841 = vsel %vm2708, %v2808, %v2616
        %v2844 = vsel %vm2708, %v2810, %v2618
        %v2847 = vsel %vm2708, %v2812, %v2620
        %v2850 = vsel %vm2708, %v2814, %v2622
        %v2853 = vsel %vm2708, %v2816, %v2624
        %v2856 = vsel %vm2708, %v2818, %v2626
        %v2859 = vsel %vm2708, %v2820, %v2628
        %v2862 = vsel %vm2708, %v2822, %v2630
        %v2865 = vsel %vm2708, %v2824, %v2632
        %v2868 = vsel %vm2708, %v2826, %v2634
        %v2871 = vsel %vm2708, %v2828, %v2636
        %v2874 = vsel %vm2708, %v2830, %v2638
        %v2877 = vsel %vm2708, %v2832, %v2640
        %v2880 = vsel %vm2708, %v2834, %v2642
        %v2883 = vsel %vm2708, %v2836, %v2644
        %v2885 = vld [vmem:[%s3] sm:$0xf]
        %v2886 = vld [vmem:[%s3 + $0x4] sm:$0xf]
        %v2887 = vld [vmem:[%s3 + $0x8] sm:$0xf]
        %v2888 = vld [vmem:[%s3 + $0xc] sm:$0xf]
        %v2889 = vld [vmem:[%s3 + $0x10] sm:$0xf]
        %v2890 = vld [vmem:[%s3 + $0x14] sm:$0xf]
        %v2891 = vld [vmem:[%s3 + $0x18] sm:$0xf]
        %v2892 = vld [vmem:[%s3 + $0x1c] sm:$0xf]
        %v2893 = vld [vmem:[%s3 + $0x20] sm:$0xf]
        %v2894 = vld [vmem:[%s3 + $0x24] sm:$0xf]
        %v2895 = vld [vmem:[%s3 + $0x28] sm:$0xf]
        %v2896 = vld [vmem:[%s3 + $0x2c] sm:$0xf]
        %v2897 = vld [vmem:[%s3 + $0x30] sm:$0xf]
        %v2898 = vld [vmem:[%s3 + $0x34] sm:$0xf]
        %v2899 = vld [vmem:[%s3 + $0x38] sm:$0xf]
        %v2900 = vld [vmem:[%s3 + $0x3c] sm:$0xf]
        %v2901 = vld [vmem:[%s3 + $0x40] sm:$0xf]
        %v2902 = vld [vmem:[%s3 + $0x44] sm:$0xf]
        %v2903 = vld [vmem:[%s3 + $0x48] sm:$0xf]
        %v2904 = vld [vmem:[%s3 + $0x4c] sm:$0xf]
        %v2905 = vld [vmem:[%s3 + $0x50] sm:$0xf]
        %v2906 = vld [vmem:[%s3 + $0x54] sm:$0xf]
        %v2907 = vld [vmem:[%s3 + $0x58] sm:$0xf]
        %v2908 = vld [vmem:[%s3 + $0x5c] sm:$0xf]
        %v2909 = vld [vmem:[%s3 + $0x60] sm:$0xf]
        %v2910 = vld [vmem:[%s3 + $0x64] sm:$0xf]
        %v2911 = vld [vmem:[%s3 + $0x68] sm:$0xf]
        %v2912 = vld [vmem:[%s3 + $0x6c] sm:$0xf]
        %v2913 = vld [vmem:[%s3 + $0x70] sm:$0xf]
        %v2914 = vld [vmem:[%s3 + $0x74] sm:$0xf]
        %v2915 = vld [vmem:[%s3 + $0x78] sm:$0xf]
        %v2916 = vld [vmem:[%s3 + $0x7c] sm:$0xf]
        %v2917 = vld [vmem:[%s3 + $0x80] sm:$0xf]
        %v2918 = vld [vmem:[%s3 + $0x84] sm:$0xf]
        %v2919 = vld [vmem:[%s3 + $0x88] sm:$0xf]
        %v2920 = vld [vmem:[%s3 + $0x8c] sm:$0xf]
        %v2957 = vunpack.c.l.b16 %v2885
        %v2958 = vunpack.c.l.b16 %v2886
        %v2959 = vunpack.c.l.b16 %v2887
        %v2960 = vunpack.c.l.b16 %v2888
        %v2961 = vunpack.c.l.b16 %v2889
        %v2962 = vunpack.c.l.b16 %v2890
        %v2963 = vunpack.c.l.b16 %v2891
        %v2964 = vunpack.c.l.b16 %v2892
        %v2965 = vunpack.c.l.b16 %v2893
        %v2966 = vunpack.c.l.b16 %v2894
        %v2967 = vunpack.c.l.b16 %v2895
        %v2968 = vunpack.c.l.b16 %v2896
        %v2969 = vunpack.c.l.b16 %v2897
        %v2970 = vunpack.c.l.b16 %v2898
        %v2971 = vunpack.c.l.b16 %v2899
        %v2972 = vunpack.c.l.b16 %v2900
        %v2973 = vunpack.c.l.b16 %v2901
        %v2974 = vunpack.c.l.b16 %v2902
        %v2975 = vunpack.c.l.b16 %v2903
        %v2976 = vunpack.c.l.b16 %v2904
        %v2977 = vunpack.c.l.b16 %v2905
        %v2978 = vunpack.c.l.b16 %v2906
        %v2979 = vunpack.c.l.b16 %v2907
        %v2980 = vunpack.c.l.b16 %v2908
        %v2981 = vunpack.c.l.b16 %v2909
        %v2982 = vunpack.c.l.b16 %v2910
        %v2983 = vunpack.c.l.b16 %v2911
        %v2984 = vunpack.c.l.b16 %v2912
        %v2985 = vunpack.c.l.b16 %v2913
        %v2986 = vunpack.c.l.b16 %v2914
        %v2987 = vunpack.c.l.b16 %v2915
        %v2988 = vunpack.c.l.b16 %v2916
        %v2989 = vunpack.c.l.b16 %v2917
        %v2990 = vunpack.c.l.b16 %v2918
        %v2991 = vunpack.c.l.b16 %v2919
        %v2992 = vunpack.c.l.b16 %v2920
        %v2993 = vpack.c.b16 %v2958, %v2957
        %v2994 = vpack.c.b16 %v2960, %v2959
        %v2995 = vpack.c.b16 %v2962, %v2961
        %v2996 = vpack.c.b16 %v2964, %v2963
        %v2997 = vpack.c.b16 %v2966, %v2965
        %v2998 = vpack.c.b16 %v2968, %v2967
        %v2999 = vpack.c.b16 %v2970, %v2969
        %v3000 = vpack.c.b16 %v2972, %v2971
        %v3001 = vpack.c.b16 %v2974, %v2973
        %v3002 = vpack.c.b16 %v2976, %v2975
        %v3003 = vpack.c.b16 %v2978, %v2977
        %v3004 = vpack.c.b16 %v2980, %v2979
        %v3005 = vpack.c.b16 %v2982, %v2981
        %v3006 = vpack.c.b16 %v2984, %v2983
        %v3007 = vpack.c.b16 %v2986, %v2985
        %v3008 = vpack.c.b16 %v2988, %v2987
        %v3009 = vpack.c.b16 %v2990, %v2989
        %v3010 = vpack.c.b16 %v2992, %v2991
        %v3030 = vsel %vm1553, %v2430, 0
        %v3033 = vsel %vm1553, %v2433, 0
        %v3036 = vsel %vm1553, %v2436, 0
        %v3039 = vsel %vm1553, %v2439, 0
        %v3042 = vsel %vm1553, %v2442, 0
        %v3045 = vsel %vm1553, %v2445, 0
        %v3048 = vsel %vm1553, %v2448, 0
        %v3051 = vsel %vm1553, %v2451, 0
        %v3054 = vsel %vm1553, %v2454, 0
        %v3057 = vsel %vm1553, %v2457, 0
        %v3060 = vsel %vm1553, %v2460, 0
        %v3063 = vsel %vm1553, %v2463, 0
        %v3066 = vsel %vm1553, %v2466, 0
        %v3069 = vsel %vm1553, %v2469, 0
        %v3072 = vsel %vm1553, %v2548, 0
        %v3075 = vsel %vm1553, %v1167, 0
        %3077 = vmatprep.subr.bf16.mxu0 0
        %3078 = vmatpush1.bf16.msra.mxu0 %v2993
        %3079 = vmatprep.subr.bf16.mxu0 0
        %3080 = vmatpush1.bf16.msra.mxu0 %v2994
        %3081 = vmatprep.subr.bf16.mxu0 0
        %3082 = vmatpush1.bf16.msra.mxu0 %v2995
        %3083 = vmatprep.subr.bf16.mxu0 0
        %3084 = vmatpush1.bf16.msra.mxu0 %v2996
        %3085 = vmatprep.subr.bf16.mxu0 0
        %3086 = vmatpush1.bf16.msra.mxu0 %v2997
        %3087 = vmatprep.subr.bf16.mxu0 0
        %3088 = vmatpush1.bf16.msra.mxu0 %v2998
        %3089 = vmatprep.subr.bf16.mxu0 0
        %3090 = vmatpush1.bf16.msra.mxu0 %v2999
        %3091 = vmatprep.subr.bf16.mxu0 0
        %3092 = vmatpush1.bf16.msra.mxu0 %v3000
        %3093 = vmatprep.subr.bf16.mxu0 0
        %3094 = vmatpush1.bf16.msra.mxu0 %v3001
        %3095 = vmatprep.subr.bf16.mxu0 0
        %3096 = vmatpush1.bf16.msra.mxu0 %v3002
        %3097 = vmatprep.subr.bf16.mxu0 0
        %3098 = vmatpush1.bf16.msra.mxu0 %v3003
        %3099 = vmatprep.subr.bf16.mxu0 0
        %3100 = vmatpush1.bf16.msra.mxu0 %v3004
        %3101 = vmatprep.subr.bf16.mxu0 0
        %3102 = vmatpush1.bf16.msra.mxu0 %v3005
        %3103 = vmatprep.subr.bf16.mxu0 0
        %3104 = vmatpush1.bf16.msra.mxu0 %v3006
        %3105 = vmatprep.subr.bf16.mxu0 0
        %3106 = vmatpush1.bf16.msra.mxu0 %v3007
        %3107 = vmatprep.subr.bf16.mxu0 0
        %3108 = vmatpush1.bf16.msra.mxu0 %v3008
        %3109 = vmatprep.mubr.bf16.mxu0 %v2838
        %3110 = vmatmul.mubr.bf16.gmra.mrb[0].mxu0 %v2710
        %v3111 = vpop.f32.mrb[0].mxu0
        %v3112 = vadd.f32 0.0, %v3111
        %v3113 = vpop.f32.mrb[0].mxu0
        %v3114 = vpop.f32.mrb[0].mxu0
        %v3115 = vadd.f32 0.0, %v3114
        %v3116 = vpop.f32.mrb[0].mxu0
        %3117 = vmatprep.mubr.bf16.mxu0 %v2841
        %3118 = vmatmul.mubr.bf16.gmra.mrb[0].mxu0 %v2713
        %v3119 = vpop.f32.mrb[0].mxu0
        %v3120 = vadd.f32 0.0, %v3119
        %v3121 = vpop.f32.mrb[0].mxu0
        %v3122 = vpop.f32.mrb[0].mxu0
        %v3123 = vadd.f32 0.0, %v3122
        %v3124 = vpop.f32.mrb[0].mxu0
        %3125 = vmatprep.mubr.bf16.mxu0 %v2844
        %3126 = vmatmul.mubr.bf16.gmra.mrb[0].mxu0 %v2716
        %v3127 = vpop.f32.mrb[0].mxu0
        %v3128 = vadd.f32 0.0, %v3127
        %v3129 = vpop.f32.mrb[0].mxu0
        %v3130 = vpop.f32.mrb[0].mxu0
        %v3131 = vadd.f32 0.0, %v3130
        %v3132 = vpop.f32.mrb[0].mxu0
        %3133 = vmatprep.mubr.bf16.mxu0 %v2847
        %3134 = vmatmul.mubr.bf16.gmra.mrb[0].mxu0 %v2719
        %v3135 = vpop.f32.mrb[0].mxu0
        %v3136 = vadd.f32 0.0, %v3135
        %v3137 = vpop.f32.mrb[0].mxu0
        %v3138 = vpop.f32.mrb[0].mxu0
        %v3139 = vadd.f32 0.0, %v3138
        %v3140 = vpop.f32.mrb[0].mxu0
        %3141 = vmatprep.mubr.bf16.mxu0 %v2850
        %3142 = vmatmul.mubr.bf16.gmra.mrb[0].mxu0 %v2722
        %v3143 = vpop.f32.mrb[0].mxu0
        %v3144 = vadd.f32 0.0, %v3143
        %v3145 = vpop.f32.mrb[0].mxu0
        %v3146 = vpop.f32.mrb[0].mxu0
        %v3147 = vadd.f32 0.0, %v3146
        %v3148 = vpop.f32.mrb[0].mxu0
        %3149 = vmatprep.mubr.bf16.mxu0 %v2853
        %3150 = vmatmul.mubr.bf16.gmra.mrb[0].mxu0 %v2725
        %v3151 = vpop.f32.mrb[0].mxu0
        %v3152 = vadd.f32 0.0, %v3151
        %v3153 = vpop.f32.mrb[0].mxu0
        %v3154 = vpop.f32.mrb[0].mxu0
        %v3155 = vadd.f32 0.0, %v3154
        %v3156 = vpop.f32.mrb[0].mxu0
        %3157 = vmatprep.mubr.bf16.mxu0 %v2856
        %3158 = vmatmul.mubr.bf16.gmra.mrb[0].mxu0 %v2728
        %v3159 = vpop.f32.mrb[0].mxu0
        %v3160 = vadd.f32 0.0, %v3159
        %v3161 = vpop.f32.mrb[0].mxu0
        %v3162 = vpop.f32.mrb[0].mxu0
        %v3163 = vadd.f32 0.0, %v3162
        %v3164 = vpop.f32.mrb[0].mxu0
        %3165 = vmatprep.mubr.bf16.mxu0 %v2859
        %3166 = vmatmul.mubr.bf16.gmra.mrb[0].mxu0 %v2731
        %v3167 = vpop.f32.mrb[0].mxu0
        %v3168 = vadd.f32 0.0, %v3167
        %v3169 = vpop.f32.mrb[0].mxu0
        %v3170 = vpop.f32.mrb[0].mxu0
        %v3171 = vadd.f32 0.0, %v3170
        %v3172 = vpop.f32.mrb[0].mxu0
        %3173 = vmatprep.mubr.bf16.mxu0 %v2862
        %3174 = vmatmul.mubr.bf16.gmra.mrb[0].mxu0 %v2734
        %v3175 = vpop.f32.mrb[0].mxu0
        %v3176 = vadd.f32 0.0, %v3175
        %v3177 = vpop.f32.mrb[0].mxu0
        %v3178 = vpop.f32.mrb[0].mxu0
        %v3179 = vadd.f32 0.0, %v3178
        %v3180 = vpop.f32.mrb[0].mxu0
        %3181 = vmatprep.mubr.bf16.mxu0 %v2865
        %3182 = vmatmul.mubr.bf16.gmra.mrb[0].mxu0 %v2737
        %v3183 = vpop.f32.mrb[0].mxu0
        %v3184 = vadd.f32 0.0, %v3183
        %v3185 = vpop.f32.mrb[0].mxu0
        %v3186 = vpop.f32.mrb[0].mxu0
        %v3187 = vadd.f32 0.0, %v3186
        %v3188 = vpop.f32.mrb[0].mxu0
        %3189 = vmatprep.mubr.bf16.mxu0 %v2868
        %3190 = vmatmul.mubr.bf16.gmra.mrb[0].mxu0 %v2740
        %v3191 = vpop.f32.mrb[0].mxu0
        %v3192 = vadd.f32 0.0, %v3191
        %v3193 = vpop.f32.mrb[0].mxu0
        %v3194 = vpop.f32.mrb[0].mxu0
        %v3195 = vadd.f32 0.0, %v3194
        %v3196 = vpop.f32.mrb[0].mxu0
        %3197 = vmatprep.mubr.bf16.mxu0 %v2871
        %3198 = vmatmul.mubr.bf16.gmra.mrb[0].mxu0 %v2743
        %v3199 = vpop.f32.mrb[0].mxu0
        %v3200 = vadd.f32 0.0, %v3199
        %v3201 = vpop.f32.mrb[0].mxu0
        %v3202 = vpop.f32.mrb[0].mxu0
        %v3203 = vadd.f32 0.0, %v3202
        %v3204 = vpop.f32.mrb[0].mxu0
        %3205 = vmatprep.mubr.bf16.mxu0 %v2874
        %3206 = vmatmul.mubr.bf16.gmra.mrb[0].mxu0 %v2746
        %v3207 = vpop.f32.mrb[0].mxu0
        %v3208 = vadd.f32 0.0, %v3207
        %v3209 = vpop.f32.mrb[0].mxu0
        %v3210 = vpop.f32.mrb[0].mxu0
        %v3211 = vadd.f32 0.0, %v3210
        %v3212 = vpop.f32.mrb[0].mxu0
        %3213 = vmatprep.mubr.bf16.mxu0 %v2877
        %3214 = vmatmul.mubr.bf16.gmra.mrb[0].mxu0 %v2749
        %v3215 = vpop.f32.mrb[0].mxu0
        %v3216 = vadd.f32 0.0, %v3215
        %v3217 = vpop.f32.mrb[0].mxu0
        %v3218 = vpop.f32.mrb[0].mxu0
        %v3219 = vadd.f32 0.0, %v3218
        %v3220 = vpop.f32.mrb[0].mxu0
        %3221 = vmatprep.mubr.bf16.mxu0 %v2880
        %3222 = vmatmul.mubr.bf16.gmra.mrb[0].mxu0 %v2752
        %v3223 = vpop.f32.mrb[0].mxu0
        %v3224 = vadd.f32 0.0, %v3223
        %v3225 = vpop.f32.mrb[0].mxu0
        %v3226 = vpop.f32.mrb[0].mxu0
        %v3227 = vadd.f32 0.0, %v3226
        %v3228 = vpop.f32.mrb[0].mxu0
        %3229 = vmatprep.mubr.bf16.mxu0 %v2883
        %3230 = vmatmul.mubr.bf16.gmra.mrb[0].mxu0 %v2755
        %v3231 = vpop.f32.mrb[0].mxu0
        %v3232 = vadd.f32 0.0, %v3231
        %v3233 = vpop.f32.mrb[0].mxu0
        %v3234 = vpop.f32.mrb[0].mxu0
        %v3235 = vadd.f32 0.0, %v3234
        %v3236 = vpop.f32.mrb[0].mxu0
        %3237 = vdwg.mxu0
        %3238 = vmatprep.subr.bf16.mxu0 0
        %3239 = vmatpush1.bf16.msra.mxu0 %v3009
        %3240 = vmatprep.subr.bf16.mxu0 0
        %3241 = vmatpush1.bf16.msra.mxu0 %v3010
        %3242 = vmatprep.subr.bf16.mxu0 0
        %3243 = vmatpush1.bf16.msra.mxu0 0
        %3244 = vmatprep.subr.bf16.mxu0 0
        %3245 = vmatpush1.bf16.msra.mxu0 0
        %3246 = vmatprep.subr.bf16.mxu0 0
        %3247 = vmatpush1.bf16.msra.mxu0 0
        %3248 = vmatprep.subr.bf16.mxu0 0
        %3249 = vmatpush1.bf16.msra.mxu0 0
        %3250 = vmatprep.subr.bf16.mxu0 0
        %3251 = vmatpush1.bf16.msra.mxu0 0
        %3252 = vmatprep.subr.bf16.mxu0 0
        %3253 = vmatpush1.bf16.msra.mxu0 0
        %3254 = vmatprep.subr.bf16.mxu0 0
        %3255 = vmatpush1.bf16.msra.mxu0 0
        %3256 = vmatprep.subr.bf16.mxu0 0
        %3257 = vmatpush1.bf16.msra.mxu0 0
        %3258 = vmatprep.subr.bf16.mxu0 0
        %3259 = vmatpush1.bf16.msra.mxu0 0
        %3260 = vmatprep.subr.bf16.mxu0 0
        %3261 = vmatpush1.bf16.msra.mxu0 0
        %3262 = vmatprep.subr.bf16.mxu0 0
        %3263 = vmatpush1.bf16.msra.mxu0 0
        %3264 = vmatprep.subr.bf16.mxu0 0
        %3265 = vmatpush1.bf16.msra.mxu0 0
        %3266 = vmatprep.subr.bf16.mxu0 0
        %3267 = vmatpush1.bf16.msra.mxu0 0
        %3268 = vmatprep.subr.bf16.mxu0 0
        %3269 = vmatpush1.bf16.msra.mxu0 0
        %3270 = vmatprep.mubr.bf16.mxu0 0
        %3271 = vmatmul.mubr.bf16.gmra.mrb[0].mxu0 %v3030
        %v3272 = vpop.f32.mrb[0].mxu0
        %v3273 = vadd.f32 %v3112, %v3272
        %v3274 = vpop.f32.mrb[0].mxu0
        %v3275 = vpop.f32.mrb[0].mxu0
        %v3276 = vadd.f32 %v3115, %v3275
        %v3277 = vpop.f32.mrb[0].mxu0
        %3278 = vmatprep.mubr.bf16.mxu0 0
        %3279 = vmatmul.mubr.bf16.gmra.mrb[0].mxu0 %v3033
        %v3280 = vpop.f32.mrb[0].mxu0
        %v3281 = vadd.f32 %v3120, %v3280
        %v3282 = vpop.f32.mrb[0].mxu0
        %v3283 = vpop.f32.mrb[0].mxu0
        %v3284 = vadd.f32 %v3123, %v3283
        %v3285 = vpop.f32.mrb[0].mxu0
        %3286 = vmatprep.mubr.bf16.mxu0 0
        %3287 = vmatmul.mubr.bf16.gmra.mrb[0].mxu0 %v3036
        %v3288 = vpop.f32.mrb[0].mxu0
        %v3289 = vadd.f32 %v3128, %v3288
        %v3290 = vpop.f32.mrb[0].mxu0
        %v3291 = vpop.f32.mrb[0].mxu0
        %v3292 = vadd.f32 %v3131, %v3291
        %v3293 = vpop.f32.mrb[0].mxu0
        %3294 = vmatprep.mubr.bf16.mxu0 0
        %3295 = vmatmul.mubr.bf16.gmra.mrb[0].mxu0 %v3039
        %v3296 = vpop.f32.mrb[0].mxu0
        %v3297 = vadd.f32 %v3136, %v3296
        %v3298 = vpop.f32.mrb[0].mxu0
        %v3299 = vpop.f32.mrb[0].mxu0
        %v3300 = vadd.f32 %v3139, %v3299
        %v3301 = vpop.f32.mrb[0].mxu0
        %3302 = vmatprep.mubr.bf16.mxu0 0
        %3303 = vmatmul.mubr.bf16.gmra.mrb[0].mxu0 %v3042
        %v3304 = vpop.f32.mrb[0].mxu0
        %v3305 = vadd.f32 %v3144, %v3304
        %v3306 = vpop.f32.mrb[0].mxu0
        %v3307 = vpop.f32.mrb[0].mxu0
        %v3308 = vadd.f32 %v3147, %v3307
        %v3309 = vpop.f32.mrb[0].mxu0
        %3310 = vmatprep.mubr.bf16.mxu0 0
        %3311 = vmatmul.mubr.bf16.gmra.mrb[0].mxu0 %v3045
        %v3312 = vpop.f32.mrb[0].mxu0
        %v3313 = vadd.f32 %v3152, %v3312
        %v3314 = vpop.f32.mrb[0].mxu0
        %v3315 = vpop.f32.mrb[0].mxu0
        %v3316 = vadd.f32 %v3155, %v3315
        %v3317 = vpop.f32.mrb[0].mxu0
        %3318 = vmatprep.mubr.bf16.mxu0 0
        %3319 = vmatmul.mubr.bf16.gmra.mrb[0].mxu0 %v3048
        %v3320 = vpop.f32.mrb[0].mxu0
        %v3321 = vadd.f32 %v3160, %v3320
        %v3322 = vpop.f32.mrb[0].mxu0
        %v3323 = vpop.f32.mrb[0].mxu0
        %v3324 = vadd.f32 %v3163, %v3323
        %v3325 = vpop.f32.mrb[0].mxu0
        %3326 = vmatprep.mubr.bf16.mxu0 0
        %3327 = vmatmul.mubr.bf16.gmra.mrb[0].mxu0 %v3051
        %v3328 = vpop.f32.mrb[0].mxu0
        %v3329 = vadd.f32 %v3168, %v3328
        %v3330 = vpop.f32.mrb[0].mxu0
        %v3331 = vpop.f32.mrb[0].mxu0
        %v3332 = vadd.f32 %v3171, %v3331
        %v3333 = vpop.f32.mrb[0].mxu0
        %3334 = vmatprep.mubr.bf16.mxu0 0
        %3335 = vmatmul.mubr.bf16.gmra.mrb[0].mxu0 %v3054
        %v3336 = vpop.f32.mrb[0].mxu0
        %v3337 = vadd.f32 %v3176, %v3336
        %v3338 = vpop.f32.mrb[0].mxu0
        %v3339 = vpop.f32.mrb[0].mxu0
        %v3340 = vadd.f32 %v3179, %v3339
        %v3341 = vpop.f32.mrb[0].mxu0
        %3342 = vmatprep.mubr.bf16.mxu0 0
        %3343 = vmatmul.mubr.bf16.gmra.mrb[0].mxu0 %v3057
        %v3344 = vpop.f32.mrb[0].mxu0
        %v3345 = vadd.f32 %v3184, %v3344
        %v3346 = vpop.f32.mrb[0].mxu0
        %v3347 = vpop.f32.mrb[0].mxu0
        %v3348 = vadd.f32 %v3187, %v3347
        %v3349 = vpop.f32.mrb[0].mxu0
        %3350 = vmatprep.mubr.bf16.mxu0 0
        %3351 = vmatmul.mubr.bf16.gmra.mrb[0].mxu0 %v3060
        %v3352 = vpop.f32.mrb[0].mxu0
        %v3353 = vadd.f32 %v3192, %v3352
        %v3354 = vpop.f32.mrb[0].mxu0
        %v3355 = vpop.f32.mrb[0].mxu0
        %v3356 = vadd.f32 %v3195, %v3355
        %v3357 = vpop.f32.mrb[0].mxu0
        %3358 = vmatprep.mubr.bf16.mxu0 0
        %3359 = vmatmul.mubr.bf16.gmra.mrb[0].mxu0 %v3063
        %v3360 = vpop.f32.mrb[0].mxu0
        %v3361 = vadd.f32 %v3200, %v3360
        %v3362 = vpop.f32.mrb[0].mxu0
        %v3363 = vpop.f32.mrb[0].mxu0
        %v3364 = vadd.f32 %v3203, %v3363
        %v3365 = vpop.f32.mrb[0].mxu0
        %3366 = vmatprep.mubr.bf16.mxu0 0
        %3367 = vmatmul.mubr.bf16.gmra.mrb[0].mxu0 %v3066
        %v3368 = vpop.f32.mrb[0].mxu0
        %v3369 = vadd.f32 %v3208, %v3368
        %v3370 = vpop.f32.mrb[0].mxu0
        %v3371 = vpop.f32.mrb[0].mxu0
        %v3372 = vadd.f32 %v3211, %v3371
        %v3373 = vpop.f32.mrb[0].mxu0
        %3374 = vmatprep.mubr.bf16.mxu0 0
        %3375 = vmatmul.mubr.bf16.gmra.mrb[0].mxu0 %v3069
        %v3376 = vpop.f32.mrb[0].mxu0
        %v3377 = vadd.f32 %v3216, %v3376
        %v3378 = vpop.f32.mrb[0].mxu0
        %v3379 = vpop.f32.mrb[0].mxu0
        %v3380 = vadd.f32 %v3219, %v3379
        %v3381 = vpop.f32.mrb[0].mxu0
        %3382 = vmatprep.mubr.bf16.mxu0 0
        %3383 = vmatmul.mubr.bf16.gmra.mrb[0].mxu0 %v3072
        %v3384 = vpop.f32.mrb[0].mxu0
        %v3385 = vadd.f32 %v3224, %v3384
        %v3386 = vpop.f32.mrb[0].mxu0
        %v3387 = vpop.f32.mrb[0].mxu0
        %v3388 = vadd.f32 %v3227, %v3387
        %v3389 = vpop.f32.mrb[0].mxu0
        %3390 = vmatprep.mubr.bf16.mxu0 0
        %3391 = vmatmul.mubr.bf16.gmra.mrb[0].mxu0 %v3075
        %v3392 = vpop.f32.mrb[0].mxu0
        %v3393 = vadd.f32 %v3232, %v3392
        %v3394 = vpop.f32.mrb[0].mxu0
        %v3395 = vpop.f32.mrb[0].mxu0
        %v3396 = vadd.f32 %v3235, %v3395
        %v3397 = vpop.f32.mrb[0].mxu0
        %3398 = vdwg.mxu0
        %v3399 = vld [vmem:[%s10] sm:$0x1]
        %v3401 = vlaneseq
        %v3402 = vshrl.u32 %v3401, 7
        %v3403 = vsub.s32 0, %v3402
        %v3404 = vrot.slane %v3399, %v3403
        %v3406 = vadd.f32 %v3273, %v3404
        %v3407 = vadd.f32 %v3276, %v3404
        %v3408 = vadd.f32 %v3281, %v3404
        %v3409 = vadd.f32 %v3284, %v3404
        %v3410 = vadd.f32 %v3289, %v3404
        %v3411 = vadd.f32 %v3292, %v3404
        %v3412 = vadd.f32 %v3297, %v3404
        %v3413 = vadd.f32 %v3300, %v3404
        %v3414 = vadd.f32 %v3305, %v3404
        %v3415 = vadd.f32 %v3308, %v3404
        %v3416 = vadd.f32 %v3313, %v3404
        %v3417 = vadd.f32 %v3316, %v3404
        %v3418 = vadd.f32 %v3321, %v3404
        %v3419 = vadd.f32 %v3324, %v3404
        %v3420 = vadd.f32 %v3329, %v3404
        %v3421 = vadd.f32 %v3332, %v3404
        %v3422 = vadd.f32 %v3337, %v3404
        %v3423 = vadd.f32 %v3340, %v3404
        %v3424 = vadd.f32 %v3345, %v3404
        %v3425 = vadd.f32 %v3348, %v3404
        %v3426 = vadd.f32 %v3353, %v3404
        %v3427 = vadd.f32 %v3356, %v3404
        %v3428 = vadd.f32 %v3361, %v3404
        %v3429 = vadd.f32 %v3364, %v3404
        %v3430 = vadd.f32 %v3369, %v3404
        %v3431 = vadd.f32 %v3372, %v3404
        %v3432 = vadd.f32 %v3377, %v3404
        %v3433 = vadd.f32 %v3380, %v3404
        %v3434 = vadd.f32 %v3385, %v3404
        %v3435 = vadd.f32 %v3388, %v3404
        %v3436 = vadd.f32 %v3393, %v3404
        %v3437 = vadd.f32 %v3396, %v3404
        %v3438 = vmax.f32 %v3406, 0.0
        %v3439 = vmax.f32 %v3407, 0.0
        %v3440 = vmax.f32 %v3408, 0.0
        %v3441 = vmax.f32 %v3409, 0.0
        %v3442 = vmax.f32 %v3410, 0.0
        %v3443 = vmax.f32 %v3411, 0.0
        %v3444 = vmax.f32 %v3412, 0.0
        %v3445 = vmax.f32 %v3413, 0.0
        %v3446 = vmax.f32 %v3414, 0.0
        %v3447 = vmax.f32 %v3415, 0.0
        %v3448 = vmax.f32 %v3416, 0.0
        %v3449 = vmax.f32 %v3417, 0.0
        %v3450 = vmax.f32 %v3418, 0.0
        %v3451 = vmax.f32 %v3419, 0.0
        %v3452 = vmax.f32 %v3420, 0.0
        %v3453 = vmax.f32 %v3421, 0.0
        %v3454 = vmax.f32 %v3422, 0.0
        %v3455 = vmax.f32 %v3423, 0.0
        %v3456 = vmax.f32 %v3424, 0.0
        %v3457 = vmax.f32 %v3425, 0.0
        %v3458 = vmax.f32 %v3426, 0.0
        %v3459 = vmax.f32 %v3427, 0.0
        %v3460 = vmax.f32 %v3428, 0.0
        %v3461 = vmax.f32 %v3429, 0.0
        %v3462 = vmax.f32 %v3430, 0.0
        %v3463 = vmax.f32 %v3431, 0.0
        %v3464 = vmax.f32 %v3432, 0.0
        %v3465 = vmax.f32 %v3433, 0.0
        %v3466 = vmax.f32 %v3434, 0.0
        %v3467 = vmax.f32 %v3435, 0.0
        %v3468 = vmax.f32 %v3436, 0.0
        %v3469 = vmax.f32 %v3437, 0.0
        %v3470 = vpack.c.bf16 %v3439, %v3438
        %v3471 = vpack.c.bf16 %v3441, %v3440
        %v3472 = vpack.c.bf16 %v3443, %v3442
        %v3473 = vpack.c.bf16 %v3445, %v3444
        %v3474 = vpack.c.bf16 %v3447, %v3446
        %v3475 = vpack.c.bf16 %v3449, %v3448
        %v3476 = vpack.c.bf16 %v3451, %v3450
        %v3477 = vpack.c.bf16 %v3453, %v3452
        %v3478 = vpack.c.bf16 %v3455, %v3454
        %v3479 = vpack.c.bf16 %v3457, %v3456
        %v3480 = vpack.c.bf16 %v3459, %v3458
        %v3481 = vpack.c.bf16 %v3461, %v3460
        %v3482 = vpack.c.bf16 %v3463, %v3462
        %v3483 = vpack.c.bf16 %v3465, %v3464
        %v3484 = vpack.c.bf16 %v3467, %v3466
        %v3485 = vpack.c.bf16 %v3469, %v3468
        %v3487 = vshrl.u32 %v3470, 16
        %v3489 = vrot.slane %v3487, 7
        %v3490 = vshll.u32 %v3470, 16
        %v3492 = vor.u32 %v3489, %v3490
        %v3494 = vshrl.u32 %v3471, 16
        %v3496 = vrot.slane %v3494, 7
        %v3497 = vshll.u32 %v3471, 16
        %v3499 = vor.u32 %v3496, %v3497
        %v3501 = vshrl.u32 %v3472, 16
        %v3503 = vrot.slane %v3501, 7
        %v3504 = vshll.u32 %v3472, 16
        %v3506 = vor.u32 %v3503, %v3504
        %v3508 = vshrl.u32 %v3473, 16
        %v3510 = vrot.slane %v3508, 7
        %v3511 = vshll.u32 %v3473, 16
        %v3513 = vor.u32 %v3510, %v3511
        %v3515 = vshrl.u32 %v3474, 16
        %v3517 = vrot.slane %v3515, 7
        %v3518 = vshll.u32 %v3474, 16
        %v3520 = vor.u32 %v3517, %v3518
        %v3522 = vshrl.u32 %v3475, 16
        %v3524 = vrot.slane %v3522, 7
        %v3525 = vshll.u32 %v3475, 16
        %v3527 = vor.u32 %v3524, %v3525
        %v3529 = vshrl.u32 %v3476, 16
        %v3531 = vrot.slane %v3529, 7
        %v3532 = vshll.u32 %v3476, 16
        %v3534 = vor.u32 %v3531, %v3532
        %v3536 = vshrl.u32 %v3477, 16
        %v3538 = vrot.slane %v3536, 7
        %v3539 = vshll.u32 %v3477, 16
        %v3541 = vor.u32 %v3538, %v3539
        %v3543 = vshrl.u32 %v3478, 16
        %v3545 = vrot.slane %v3543, 7
        %v3546 = vshll.u32 %v3478, 16
        %v3548 = vor.u32 %v3545, %v3546
        %v3550 = vshrl.u32 %v3479, 16
        %v3552 = vrot.slane %v3550, 7
        %v3553 = vshll.u32 %v3479, 16
        %v3555 = vor.u32 %v3552, %v3553
        %v3557 = vshrl.u32 %v3480, 16
        %v3559 = vrot.slane %v3557, 7
        %v3560 = vshll.u32 %v3480, 16
        %v3562 = vor.u32 %v3559, %v3560
        %v3564 = vshrl.u32 %v3481, 16
        %v3566 = vrot.slane %v3564, 7
        %v3567 = vshll.u32 %v3481, 16
        %v3569 = vor.u32 %v3566, %v3567
        %v3571 = vshrl.u32 %v3482, 16
        %v3573 = vrot.slane %v3571, 7
        %v3574 = vshll.u32 %v3482, 16
        %v3576 = vor.u32 %v3573, %v3574
        %v3578 = vshrl.u32 %v3483, 16
        %v3580 = vrot.slane %v3578, 7
        %v3581 = vshll.u32 %v3483, 16
        %v3583 = vor.u32 %v3580, %v3581
        %v3585 = vshrl.u32 %v3484, 16
        %v3587 = vrot.slane %v3585, 7
        %v3588 = vshll.u32 %v3484, 16
        %v3590 = vor.u32 %v3587, %v3588
        %v3592 = vshrl.u32 %v3485, 16
        %v3594 = vrot.slane %v3592, 7
        %v3595 = vshll.u32 %v3485, 16
        %v3597 = vor.u32 %v3594, %v3595
        %v3630 = vsel %vm872, 0, %v3492
        %v3631 = vsel %vm872, 0, %v3499
        %v3632 = vsel %vm872, 0, %v3506
        %v3633 = vsel %vm872, 0, %v3513
        %v3634 = vsel %vm872, 0, %v3520
        %v3635 = vsel %vm872, 0, %v3527
        %v3636 = vsel %vm872, 0, %v3534
        %v3637 = vsel %vm872, 0, %v3541
        %v3638 = vsel %vm872, 0, %v3548
        %v3639 = vsel %vm872, 0, %v3555
        %v3640 = vsel %vm872, 0, %v3562
        %v3641 = vsel %vm872, 0, %v3569
        %v3642 = vsel %vm872, 0, %v3576
        %v3643 = vsel %vm872, 0, %v3583
        %v3644 = vsel %vm872, 0, %v3590
        %v3645 = vsel %vm872, 0, %v3597
        %v3646 = vsel %vm872, %v3489, 0
        %v3647 = vsel %vm872, %v3496, 0
        %v3648 = vsel %vm872, %v3503, 0
        %v3649 = vsel %vm872, %v3510, 0
        %v3650 = vsel %vm872, %v3517, 0
        %v3651 = vsel %vm872, %v3524, 0
        %v3652 = vsel %vm872, %v3531, 0
        %v3653 = vsel %vm872, %v3538, 0
        %v3654 = vsel %vm872, %v3545, 0
        %v3655 = vsel %vm872, %v3552, 0
        %v3656 = vsel %vm872, %v3559, 0
        %v3657 = vsel %vm872, %v3566, 0
        %v3658 = vsel %vm872, %v3573, 0
        %v3659 = vsel %vm872, %v3580, 0
        %v3660 = vsel %vm872, %v3587, 0
        %v3661 = vsel %vm872, %v3594, 0
        %v3663 = vshrl.u32 %v3630, 16
        %v3665 = vshll.u32 %v3630, 16
        %v3667 = vrot.slane %v3665, 1
        %v3668 = vor.u32 %v3663, %v3667
        %v3670 = vshll.u32 %v3646, 16
        %v3672 = vrot.slane %v3670, 1
        %v3673 = vsel %vm907, %v3668, %v3672
        %v3675 = vshrl.u32 %v3631, 16
        %v3677 = vshll.u32 %v3631, 16
        %v3679 = vrot.slane %v3677, 1
        %v3680 = vor.u32 %v3675, %v3679
        %v3682 = vshll.u32 %v3647, 16
        %v3684 = vrot.slane %v3682, 1
        %v3685 = vsel %vm907, %v3680, %v3684
        %v3687 = vshrl.u32 %v3632, 16
        %v3689 = vshll.u32 %v3632, 16
        %v3691 = vrot.slane %v3689, 1
        %v3692 = vor.u32 %v3687, %v3691
        %v3694 = vshll.u32 %v3648, 16
        %v3696 = vrot.slane %v3694, 1
        %v3697 = vsel %vm907, %v3692, %v3696
        %v3699 = vshrl.u32 %v3633, 16
        %v3701 = vshll.u32 %v3633, 16
        %v3703 = vrot.slane %v3701, 1
        %v3704 = vor.u32 %v3699, %v3703
        %v3706 = vshll.u32 %v3649, 16
        %v3708 = vrot.slane %v3706, 1
        %v3709 = vsel %vm907, %v3704, %v3708
        %v3711 = vshrl.u32 %v3634, 16
        %v3713 = vshll.u32 %v3634, 16
        %v3715 = vrot.slane %v3713, 1
        %v3716 = vor.u32 %v3711, %v3715
        %v3718 = vshll.u32 %v3650, 16
        %v3720 = vrot.slane %v3718, 1
        %v3721 = vsel %vm907, %v3716, %v3720
        %v3723 = vshrl.u32 %v3635, 16
        %v3725 = vshll.u32 %v3635, 16
        %v3727 = vrot.slane %v3725, 1
        %v3728 = vor.u32 %v3723, %v3727
        %v3730 = vshll.u32 %v3651, 16
        %v3732 = vrot.slane %v3730, 1
        %v3733 = vsel %vm907, %v3728, %v3732
        %v3735 = vshrl.u32 %v3636, 16
        %v3737 = vshll.u32 %v3636, 16
        %v3739 = vrot.slane %v3737, 1
        %v3740 = vor.u32 %v3735, %v3739
        %v3742 = vshll.u32 %v3652, 16
        %v3744 = vrot.slane %v3742, 1
        %v3745 = vsel %vm907, %v3740, %v3744
        %v3747 = vshrl.u32 %v3637, 16
        %v3749 = vshll.u32 %v3637, 16
        %v3751 = vrot.slane %v3749, 1
        %v3752 = vor.u32 %v3747, %v3751
        %v3754 = vshll.u32 %v3653, 16
        %v3756 = vrot.slane %v3754, 1
        %v3757 = vsel %vm907, %v3752, %v3756
        %v3759 = vshrl.u32 %v3638, 16
        %v3761 = vshll.u32 %v3638, 16
        %v3763 = vrot.slane %v3761, 1
        %v3764 = vor.u32 %v3759, %v3763
        %v3766 = vshll.u32 %v3654, 16
        %v3768 = vrot.slane %v3766, 1
        %v3769 = vsel %vm907, %v3764, %v3768
        %v3771 = vshrl.u32 %v3639, 16
        %v3773 = vshll.u32 %v3639, 16
        %v3775 = vrot.slane %v3773, 1
        %v3776 = vor.u32 %v3771, %v3775
        %v3778 = vshll.u32 %v3655, 16
        %v3780 = vrot.slane %v3778, 1
        %v3781 = vsel %vm907, %v3776, %v3780
        %v3783 = vshrl.u32 %v3640, 16
        %v3785 = vshll.u32 %v3640, 16
        %v3787 = vrot.slane %v3785, 1
        %v3788 = vor.u32 %v3783, %v3787
        %v3790 = vshll.u32 %v3656, 16
        %v3792 = vrot.slane %v3790, 1
        %v3793 = vsel %vm907, %v3788, %v3792
        %v3795 = vshrl.u32 %v3641, 16
        %v3797 = vshll.u32 %v3641, 16
        %v3799 = vrot.slane %v3797, 1
        %v3800 = vor.u32 %v3795, %v3799
        %v3802 = vshll.u32 %v3657, 16
        %v3804 = vrot.slane %v3802, 1
        %v3805 = vsel %vm907, %v3800, %v3804
        %v3807 = vshrl.u32 %v3642, 16
        %v3809 = vshll.u32 %v3642, 16
        %v3811 = vrot.slane %v3809, 1
        %v3812 = vor.u32 %v3807, %v3811
        %v3814 = vshll.u32 %v3658, 16
        %v3816 = vrot.slane %v3814, 1
        %v3817 = vsel %vm907, %v3812, %v3816
        %v3819 = vshrl.u32 %v3643, 16
        %v3821 = vshll.u32 %v3643, 16
        %v3823 = vrot.slane %v3821, 1
        %v3824 = vor.u32 %v3819, %v3823
        %v3826 = vshll.u32 %v3659, 16
        %v3828 = vrot.slane %v3826, 1
        %v3829 = vsel %vm907, %v3824, %v3828
        %v3831 = vshrl.u32 %v3644, 16
        %v3833 = vshll.u32 %v3644, 16
        %v3835 = vrot.slane %v3833, 1
        %v3836 = vor.u32 %v3831, %v3835
        %v3838 = vshll.u32 %v3660, 16
        %v3840 = vrot.slane %v3838, 1
        %v3841 = vsel %vm907, %v3836, %v3840
        %3842 = vrot.lane.b32.xlu0 %v3673, 32
        %v3843 = vpop.permute.xlu0 %3842
        %3844 = vrot.lane.b32.xlu0 %v3685, 32
        %v3845 = vpop.permute.xlu0 %3844
        %3846 = vrot.lane.b32.xlu0 %v3697, 32
        %v3847 = vpop.permute.xlu0 %3846
        %3848 = vrot.lane.b32.xlu0 %v3709, 32
        %v3849 = vpop.permute.xlu0 %3848
        %3850 = vrot.lane.b32.xlu0 %v3721, 32
        %v3851 = vpop.permute.xlu0 %3850
        %3852 = vrot.lane.b32.xlu0 %v3733, 32
        %v3853 = vpop.permute.xlu0 %3852
        %3854 = vrot.lane.b32.xlu0 %v3745, 32
        %v3855 = vpop.permute.xlu0 %3854
        %3856 = vrot.lane.b32.xlu0 %v3757, 32
        %v3857 = vpop.permute.xlu0 %3856
        %3858 = vrot.lane.b32.xlu0 %v3769, 32
        %v3859 = vpop.permute.xlu0 %3858
        %3860 = vrot.lane.b32.xlu0 %v3781, 32
        %v3861 = vpop.permute.xlu0 %3860
        %3862 = vrot.lane.b32.xlu0 %v3793, 32
        %v3863 = vpop.permute.xlu0 %3862
        %3864 = vrot.lane.b32.xlu0 %v3805, 32
        %v3865 = vpop.permute.xlu0 %3864
        %3866 = vrot.lane.b32.xlu0 %v3817, 32
        %v3867 = vpop.permute.xlu0 %3866
        %3868 = vrot.lane.b32.xlu0 %v3829, 32
        %v3869 = vpop.permute.xlu0 %3868
        %3870 = vrot.lane.b32.xlu0 %v3841, 32
        %v3871 = vpop.permute.xlu0 %3870
        %v3902 = vrot.slane %v3630, 1
        %v3903 = vrot.slane %v3646, 1
        %v3904 = vsel %vm1164, %v3902, %v3903
        %v3905 = vrot.slane %v3631, 1
        %v3906 = vrot.slane %v3647, 1
        %v3907 = vsel %vm1164, %v3905, %v3906
        %v3908 = vrot.slane %v3632, 1
        %v3909 = vrot.slane %v3648, 1
        %v3910 = vsel %vm1164, %v3908, %v3909
        %v3911 = vrot.slane %v3633, 1
        %v3912 = vrot.slane %v3649, 1
        %v3913 = vsel %vm1164, %v3911, %v3912
        %v3914 = vrot.slane %v3634, 1
        %v3915 = vrot.slane %v3650, 1
        %v3916 = vsel %vm1164, %v3914, %v3915
        %v3917 = vrot.slane %v3635, 1
        %v3918 = vrot.slane %v3651, 1
        %v3919 = vsel %vm1164, %v3917, %v3918
        %v3920 = vrot.slane %v3636, 1
        %v3921 = vrot.slane %v3652, 1
        %v3922 = vsel %vm1164, %v3920, %v3921
        %v3923 = vrot.slane %v3637, 1
        %v3924 = vrot.slane %v3653, 1
        %v3925 = vsel %vm1164, %v3923, %v3924
        %v3926 = vrot.slane %v3638, 1
        %v3927 = vrot.slane %v3654, 1
        %v3928 = vsel %vm1164, %v3926, %v3927
        %v3929 = vrot.slane %v3639, 1
        %v3930 = vrot.slane %v3655, 1
        %v3931 = vsel %vm1164, %v3929, %v3930
        %v3932 = vrot.slane %v3640, 1
        %v3933 = vrot.slane %v3656, 1
        %v3934 = vsel %vm1164, %v3932, %v3933
        %v3935 = vrot.slane %v3641, 1
        %v3936 = vrot.slane %v3657, 1
        %v3937 = vsel %vm1164, %v3935, %v3936
        %v3938 = vrot.slane %v3642, 1
        %v3939 = vrot.slane %v3658, 1
        %v3940 = vsel %vm1164, %v3938, %v3939
        %v3941 = vrot.slane %v3643, 1
        %v3942 = vrot.slane %v3659, 1
        %v3943 = vsel %vm1164, %v3941, %v3942
        %v3944 = vrot.slane %v3644, 1
        %v3945 = vrot.slane %v3660, 1
        %v3946 = vsel %vm1164, %v3944, %v3945
        %3947 = vrot.lane.b32.xlu0 %v3904, 64
        %v3948 = vpop.permute.xlu0 %3947
        %3949 = vrot.lane.b32.xlu0 %v3907, 64
        %v3950 = vpop.permute.xlu0 %3949
        %3951 = vrot.lane.b32.xlu0 %v3910, 64
        %v3952 = vpop.permute.xlu0 %3951
        %3953 = vrot.lane.b32.xlu0 %v3913, 64
        %v3954 = vpop.permute.xlu0 %3953
        %3955 = vrot.lane.b32.xlu0 %v3916, 64
        %v3956 = vpop.permute.xlu0 %3955
        %3957 = vrot.lane.b32.xlu0 %v3919, 64
        %v3958 = vpop.permute.xlu0 %3957
        %3959 = vrot.lane.b32.xlu0 %v3922, 64
        %v3960 = vpop.permute.xlu0 %3959
        %3961 = vrot.lane.b32.xlu0 %v3925, 64
        %v3962 = vpop.permute.xlu0 %3961
        %3963 = vrot.lane.b32.xlu0 %v3928, 64
        %v3964 = vpop.permute.xlu0 %3963
        %3965 = vrot.lane.b32.xlu0 %v3931, 64
        %v3966 = vpop.permute.xlu0 %3965
        %3967 = vrot.lane.b32.xlu0 %v3934, 64
        %v3968 = vpop.permute.xlu0 %3967
        %3969 = vrot.lane.b32.xlu0 %v3937, 64
        %v3970 = vpop.permute.xlu0 %3969
        %3971 = vrot.lane.b32.xlu0 %v3940, 64
        %v3972 = vpop.permute.xlu0 %3971
        %3973 = vrot.lane.b32.xlu0 %v3943, 64
        %v3974 = vpop.permute.xlu0 %3973
        %3975 = vrot.lane.b32.xlu0 %v3946, 64
        %v3976 = vpop.permute.xlu0 %3975
        %3978 = vrot.lane.b32.xlu0 %v3630, 96
        %v3979 = vpop.permute.xlu0 %3978
        %3980 = vrot.lane.b32.xlu0 %v3631, 96
        %v3981 = vpop.permute.xlu0 %3980
        %3982 = vrot.lane.b32.xlu0 %v3632, 96
        %v3983 = vpop.permute.xlu0 %3982
        %3984 = vrot.lane.b32.xlu0 %v3633, 96
        %v3985 = vpop.permute.xlu0 %3984
        %3986 = vrot.lane.b32.xlu0 %v3634, 96
        %v3987 = vpop.permute.xlu0 %3986
        %3988 = vrot.lane.b32.xlu0 %v3635, 96
        %v3989 = vpop.permute.xlu0 %3988
        %3990 = vrot.lane.b32.xlu0 %v3636, 96
        %v3991 = vpop.permute.xlu0 %3990
        %3992 = vrot.lane.b32.xlu0 %v3637, 96
        %v3993 = vpop.permute.xlu0 %3992
        %3994 = vrot.lane.b32.xlu0 %v3638, 96
        %v3995 = vpop.permute.xlu0 %3994
        %3996 = vrot.lane.b32.xlu0 %v3639, 96
        %v3997 = vpop.permute.xlu0 %3996
        %3998 = vrot.lane.b32.xlu0 %v3640, 96
        %v3999 = vpop.permute.xlu0 %3998
        %4000 = vrot.lane.b32.xlu0 %v3641, 96
        %v4001 = vpop.permute.xlu0 %4000
        %4002 = vrot.lane.b32.xlu0 %v3642, 96
        %v4003 = vpop.permute.xlu0 %4002
        %4004 = vrot.lane.b32.xlu0 %v3643, 96
        %v4005 = vpop.permute.xlu0 %4004
        %4006 = vrot.lane.b32.xlu0 %v3644, 96
        %v4007 = vpop.permute.xlu0 %4006
        %4008 = vrot.lane.b32.xlu0 %v3645, 96
        %v4009 = vpop.permute.xlu0 %4008
        %v4011 = vshrl.u32 %v3645, 16
        %v4013 = vshll.u32 %v3645, 16
        %v4015 = vrot.slane %v4013, 1
        %v4016 = vor.u32 %v4011, %v4015
        %v4018 = vshll.u32 %v3661, 16
        %v4020 = vrot.slane %v4018, 1
        %v4021 = vsel %vm907, %v4016, %v4020
        %v4023 = vrot.slane %v3645, 1
        %v4024 = vrot.slane %v3661, 1
        %v4025 = vsel %vm1164, %v4023, %v4024
        %4026 = vrot.lane.b32.xlu0 %v3904, 32
        %v4027 = vpop.permute.xlu0 %4026
        %4028 = vrot.lane.b32.xlu0 %v3907, 32
        %v4029 = vpop.permute.xlu0 %4028
        %4030 = vrot.lane.b32.xlu0 %v3910, 32
        %v4031 = vpop.permute.xlu0 %4030
        %4032 = vrot.lane.b32.xlu0 %v3913, 32
        %v4033 = vpop.permute.xlu0 %4032
        %4034 = vrot.lane.b32.xlu0 %v3916, 32
        %v4035 = vpop.permute.xlu0 %4034
        %4036 = vrot.lane.b32.xlu0 %v3919, 32
        %v4037 = vpop.permute.xlu0 %4036
        %4038 = vrot.lane.b32.xlu0 %v3922, 32
        %v4039 = vpop.permute.xlu0 %4038
        %4040 = vrot.lane.b32.xlu0 %v3925, 32
        %v4041 = vpop.permute.xlu0 %4040
        %4042 = vrot.lane.b32.xlu0 %v3928, 32
        %v4043 = vpop.permute.xlu0 %4042
        %4044 = vrot.lane.b32.xlu0 %v3931, 32
        %v4045 = vpop.permute.xlu0 %4044
        %4046 = vrot.lane.b32.xlu0 %v3934, 32
        %v4047 = vpop.permute.xlu0 %4046
        %4048 = vrot.lane.b32.xlu0 %v3937, 32
        %v4049 = vpop.permute.xlu0 %4048
        %4050 = vrot.lane.b32.xlu0 %v3940, 32
        %v4051 = vpop.permute.xlu0 %4050
        %4052 = vrot.lane.b32.xlu0 %v3943, 32
        %v4053 = vpop.permute.xlu0 %4052
        %4054 = vrot.lane.b32.xlu0 %v3946, 32
        %v4055 = vpop.permute.xlu0 %4054
        %4056 = vrot.lane.b32.xlu0 %v4025, 32
        %v4057 = vpop.permute.xlu0 %4056
        %4058 = vrot.lane.b32.xlu0 %v3631, 64
        %v4059 = vpop.permute.xlu0 %4058
        %4060 = vrot.lane.b32.xlu0 %v3632, 64
        %v4061 = vpop.permute.xlu0 %4060
        %4062 = vrot.lane.b32.xlu0 %v3633, 64
        %v4063 = vpop.permute.xlu0 %4062
        %4064 = vrot.lane.b32.xlu0 %v3634, 64
        %v4065 = vpop.permute.xlu0 %4064
        %4066 = vrot.lane.b32.xlu0 %v3635, 64
        %v4067 = vpop.permute.xlu0 %4066
        %4068 = vrot.lane.b32.xlu0 %v3636, 64
        %v4069 = vpop.permute.xlu0 %4068
        %4070 = vrot.lane.b32.xlu0 %v3637, 64
        %v4071 = vpop.permute.xlu0 %4070
        %4072 = vrot.lane.b32.xlu0 %v3638, 64
        %v4073 = vpop.permute.xlu0 %4072
        %4074 = vrot.lane.b32.xlu0 %v3639, 64
        %v4075 = vpop.permute.xlu0 %4074
        %4076 = vrot.lane.b32.xlu0 %v3640, 64
        %v4077 = vpop.permute.xlu0 %4076
        %4078 = vrot.lane.b32.xlu0 %v3641, 64
        %v4079 = vpop.permute.xlu0 %4078
        %4080 = vrot.lane.b32.xlu0 %v3642, 64
        %v4081 = vpop.permute.xlu0 %4080
        %4082 = vrot.lane.b32.xlu0 %v3643, 64
        %v4083 = vpop.permute.xlu0 %4082
        %4084 = vrot.lane.b32.xlu0 %v3644, 64
        %v4085 = vpop.permute.xlu0 %4084
        %4086 = vrot.lane.b32.xlu0 %v3645, 64
        %v4087 = vpop.permute.xlu0 %4086
        %4088 = vrot.lane.b32.xlu0 %v3685, 96
        %v4089 = vpop.permute.xlu0 %4088
        %4090 = vrot.lane.b32.xlu0 %v3697, 96
        %v4091 = vpop.permute.xlu0 %4090
        %4092 = vrot.lane.b32.xlu0 %v3709, 96
        %v4093 = vpop.permute.xlu0 %4092
        %4094 = vrot.lane.b32.xlu0 %v3721, 96
        %v4095 = vpop.permute.xlu0 %4094
        %4096 = vrot.lane.b32.xlu0 %v3733, 96
        %v4097 = vpop.permute.xlu0 %4096
        %4098 = vrot.lane.b32.xlu0 %v3745, 96
        %v4099 = vpop.permute.xlu0 %4098
        %4100 = vrot.lane.b32.xlu0 %v3757, 96
        %v4101 = vpop.permute.xlu0 %4100
        %4102 = vrot.lane.b32.xlu0 %v3769, 96
        %v4103 = vpop.permute.xlu0 %4102
        %4104 = vrot.lane.b32.xlu0 %v3781, 96
        %v4105 = vpop.permute.xlu0 %4104
        %4106 = vrot.lane.b32.xlu0 %v3793, 96
        %v4107 = vpop.permute.xlu0 %4106
        %4108 = vrot.lane.b32.xlu0 %v3805, 96
        %v4109 = vpop.permute.xlu0 %4108
        %4110 = vrot.lane.b32.xlu0 %v3817, 96
        %v4111 = vpop.permute.xlu0 %4110
        %4112 = vrot.lane.b32.xlu0 %v3829, 96
        %v4113 = vpop.permute.xlu0 %4112
        %4114 = vrot.lane.b32.xlu0 %v3841, 96
        %v4115 = vpop.permute.xlu0 %4114
        %4116 = vrot.lane.b32.xlu0 %v4021, 96
        %v4117 = vpop.permute.xlu0 %4116
        %v4119 = vsel %vm1553, %v3630, %v3843
        %v4121 = vsel %vm1553, %v3631, %v3845
        %v4123 = vsel %vm1553, %v3632, %v3847
        %v4125 = vsel %vm1553, %v3633, %v3849
        %v4127 = vsel %vm1553, %v3634, %v3851
        %v4129 = vsel %vm1553, %v3635, %v3853
        %v4131 = vsel %vm1553, %v3636, %v3855
        %v4133 = vsel %vm1553, %v3637, %v3857
        %v4135 = vsel %vm1553, %v3638, %v3859
        %v4137 = vsel %vm1553, %v3639, %v3861
        %v4139 = vsel %vm1553, %v3640, %v3863
        %v4141 = vsel %vm1553, %v3641, %v3865
        %v4143 = vsel %vm1553, %v3642, %v3867
        %v4145 = vsel %vm1553, %v3643, %v3869
        %v4147 = vsel %vm1553, %v3644, %v3871
        %v4149 = vsel %vm1685, %v4119, %v3948
        %v4151 = vsel %vm1685, %v4121, %v3950
        %v4153 = vsel %vm1685, %v4123, %v3952
        %v4155 = vsel %vm1685, %v4125, %v3954
        %v4157 = vsel %vm1685, %v4127, %v3956
        %v4159 = vsel %vm1685, %v4129, %v3958
        %v4161 = vsel %vm1685, %v4131, %v3960
        %v4163 = vsel %vm1685, %v4133, %v3962
        %v4165 = vsel %vm1685, %v4135, %v3964
        %v4167 = vsel %vm1685, %v4137, %v3966
        %v4169 = vsel %vm1685, %v4139, %v3968
        %v4171 = vsel %vm1685, %v4141, %v3970
        %v4173 = vsel %vm1685, %v4143, %v3972
        %v4175 = vsel %vm1685, %v4145, %v3974
        %v4177 = vsel %vm1685, %v4147, %v3976
        %v4179 = vsel %vm2708, %v2677, %v3979
        %v4182 = vsel %vm2708, %v4149, %v3981
        %v4185 = vsel %vm2708, %v4151, %v3983
        %v4188 = vsel %vm2708, %v4153, %v3985
        %v4191 = vsel %vm2708, %v4155, %v3987
        %v4194 = vsel %vm2708, %v4157, %v3989
        %v4197 = vsel %vm2708, %v4159, %v3991
        %v4200 = vsel %vm2708, %v4161, %v3993
        %v4203 = vsel %vm2708, %v4163, %v3995
        %v4206 = vsel %vm2708, %v4165, %v3997
        %v4209 = vsel %vm2708, %v4167, %v3999
        %v4212 = vsel %vm2708, %v4169, %v4001
        %v4215 = vsel %vm2708, %v4171, %v4003
        %v4218 = vsel %vm2708, %v4173, %v4005
        %v4221 = vsel %vm2708, %v4175, %v4007
        %v4224 = vsel %vm2708, %v4177, %v4009
        %v4228 = vsel %vm1553, %v3673, %v4027
        %v4231 = vsel %vm1553, %v3685, %v4029
        %v4234 = vsel %vm1553, %v3697, %v4031
        %v4237 = vsel %vm1553, %v3709, %v4033
        %v4240 = vsel %vm1553, %v3721, %v4035
        %v4243 = vsel %vm1553, %v3733, %v4037
        %v4246 = vsel %vm1553, %v3745, %v4039
        %v4249 = vsel %vm1553, %v3757, %v4041
        %v4252 = vsel %vm1553, %v3769, %v4043
        %v4255 = vsel %vm1553, %v3781, %v4045
        %v4258 = vsel %vm1553, %v3793, %v4047
        %v4261 = vsel %vm1553, %v3805, %v4049
        %v4264 = vsel %vm1553, %v3817, %v4051
        %v4267 = vsel %vm1553, %v3829, %v4053
        %v4270 = vsel %vm1553, %v3841, %v4055
        %v4273 = vsel %vm1553, %v4021, %v4057
        %v4275 = vsel %vm1685, %v4228, %v4059
        %v4277 = vsel %vm1685, %v4231, %v4061
        %v4279 = vsel %vm1685, %v4234, %v4063
        %v4281 = vsel %vm1685, %v4237, %v4065
        %v4283 = vsel %vm1685, %v4240, %v4067
        %v4285 = vsel %vm1685, %v4243, %v4069
        %v4287 = vsel %vm1685, %v4246, %v4071
        %v4289 = vsel %vm1685, %v4249, %v4073
        %v4291 = vsel %vm1685, %v4252, %v4075
        %v4293 = vsel %vm1685, %v4255, %v4077
        %v4295 = vsel %vm1685, %v4258, %v4079
        %v4297 = vsel %vm1685, %v4261, %v4081
        %v4299 = vsel %vm1685, %v4264, %v4083
        %v4301 = vsel %vm1685, %v4267, %v4085
        %v4303 = vsel %vm1685, %v4270, %v4087
        %v4304 = vsel %vm1685, %v4273, %v2612
        %v4306 = vsel %vm2708, %v4275, %v4089
        %v4309 = vsel %vm2708, %v4277, %v4091
        %v4312 = vsel %vm2708, %v4279, %v4093
        %v4315 = vsel %vm2708, %v4281, %v4095
        %v4318 = vsel %vm2708, %v4283, %v4097
        %v4321 = vsel %vm2708, %v4285, %v4099
        %v4324 = vsel %vm2708, %v4287, %v4101
        %v4327 = vsel %vm2708, %v4289, %v4103
        %v4330 = vsel %vm2708, %v4291, %v4105
        %v4333 = vsel %vm2708, %v4293, %v4107
        %v4336 = vsel %vm2708, %v4295, %v4109
        %v4339 = vsel %vm2708, %v4297, %v4111
        %v4342 = vsel %vm2708, %v4299, %v4113
        %v4345 = vsel %vm2708, %v4301, %v4115
        %v4348 = vsel %vm2708, %v4303, %v4117
        %v4350 = vsel %vm2708, %v4304, %v2644
        %v4352 = vld [vmem:[%s4] sm:$0xf]
        %v4353 = vld [vmem:[%s4 + $0x4] sm:$0xf]
        %v4354 = vld [vmem:[%s4 + $0x8] sm:$0xf]
        %v4355 = vld [vmem:[%s4 + $0xc] sm:$0xf]
        %v4356 = vld [vmem:[%s4 + $0x10] sm:$0xf]
        %v4357 = vld [vmem:[%s4 + $0x14] sm:$0xf]
        %v4358 = vld [vmem:[%s4 + $0x18] sm:$0xf]
        %v4359 = vld [vmem:[%s4 + $0x1c] sm:$0xf]
        %v4360 = vld [vmem:[%s4 + $0x20] sm:$0xf]
        %v4361 = vld [vmem:[%s4 + $0x24] sm:$0xf]
        %v4362 = vld [vmem:[%s4 + $0x28] sm:$0xf]
        %v4363 = vld [vmem:[%s4 + $0x2c] sm:$0xf]
        %v4364 = vld [vmem:[%s4 + $0x30] sm:$0xf]
        %v4365 = vld [vmem:[%s4 + $0x34] sm:$0xf]
        %v4366 = vld [vmem:[%s4 + $0x38] sm:$0xf]
        %v4367 = vld [vmem:[%s4 + $0x3c] sm:$0xf]
        %v4368 = vld [vmem:[%s4 + $0x40] sm:$0xf]
        %v4369 = vld [vmem:[%s4 + $0x44] sm:$0xf]
        %v4370 = vld [vmem:[%s4 + $0x48] sm:$0xf]
        %v4371 = vld [vmem:[%s4 + $0x4c] sm:$0xf]
        %v4372 = vld [vmem:[%s4 + $0x50] sm:$0xf]
        %v4373 = vld [vmem:[%s4 + $0x54] sm:$0xf]
        %v4374 = vld [vmem:[%s4 + $0x58] sm:$0xf]
        %v4375 = vld [vmem:[%s4 + $0x5c] sm:$0xf]
        %v4376 = vld [vmem:[%s4 + $0x60] sm:$0xf]
        %v4377 = vld [vmem:[%s4 + $0x64] sm:$0xf]
        %v4378 = vld [vmem:[%s4 + $0x68] sm:$0xf]
        %v4379 = vld [vmem:[%s4 + $0x6c] sm:$0xf]
        %v4380 = vld [vmem:[%s4 + $0x70] sm:$0xf]
        %v4381 = vld [vmem:[%s4 + $0x74] sm:$0xf]
        %v4382 = vld [vmem:[%s4 + $0x78] sm:$0xf]
        %v4383 = vld [vmem:[%s4 + $0x7c] sm:$0xf]
        %v4384 = vld [vmem:[%s4 + $0x80] sm:$0xf]
        %v4385 = vld [vmem:[%s4 + $0x84] sm:$0xf]
        %v4386 = vld [vmem:[%s4 + $0x88] sm:$0xf]
        %v4387 = vld [vmem:[%s4 + $0x8c] sm:$0xf]
        %v4424 = vunpack.c.l.b16 %v4352
        %v4425 = vunpack.c.l.b16 %v4353
        %v4426 = vunpack.c.l.b16 %v4354
        %v4427 = vunpack.c.l.b16 %v4355
        %v4428 = vunpack.c.l.b16 %v4356
        %v4429 = vunpack.c.l.b16 %v4357
        %v4430 = vunpack.c.l.b16 %v4358
        %v4431 = vunpack.c.l.b16 %v4359
        %v4432 = vunpack.c.l.b16 %v4360
        %v4433 = vunpack.c.l.b16 %v4361
        %v4434 = vunpack.c.l.b16 %v4362
        %v4435 = vunpack.c.l.b16 %v4363
        %v4436 = vunpack.c.l.b16 %v4364
        %v4437 = vunpack.c.l.b16 %v4365
        %v4438 = vunpack.c.l.b16 %v4366
        %v4439 = vunpack.c.l.b16 %v4367
        %v4440 = vunpack.c.l.b16 %v4368
        %v4441 = vunpack.c.l.b16 %v4369
        %v4442 = vunpack.c.l.b16 %v4370
        %v4443 = vunpack.c.l.b16 %v4371
        %v4444 = vunpack.c.l.b16 %v4372
        %v4445 = vunpack.c.l.b16 %v4373
        %v4446 = vunpack.c.l.b16 %v4374
        %v4447 = vunpack.c.l.b16 %v4375
        %v4448 = vunpack.c.l.b16 %v4376
        %v4449 = vunpack.c.l.b16 %v4377
        %v4450 = vunpack.c.l.b16 %v4378
        %v4451 = vunpack.c.l.b16 %v4379
        %v4452 = vunpack.c.l.b16 %v4380
        %v4453 = vunpack.c.l.b16 %v4381
        %v4454 = vunpack.c.l.b16 %v4382
        %v4455 = vunpack.c.l.b16 %v4383
        %v4456 = vunpack.c.l.b16 %v4384
        %v4457 = vunpack.c.l.b16 %v4385
        %v4458 = vunpack.c.l.b16 %v4386
        %v4459 = vunpack.c.l.b16 %v4387
        %v4460 = vpack.c.b16 %v4425, %v4424
        %v4461 = vpack.c.b16 %v4427, %v4426
        %v4462 = vpack.c.b16 %v4429, %v4428
        %v4463 = vpack.c.b16 %v4431, %v4430
        %v4464 = vpack.c.b16 %v4433, %v4432
        %v4465 = vpack.c.b16 %v4435, %v4434
        %v4466 = vpack.c.b16 %v4437, %v4436
        %v4467 = vpack.c.b16 %v4439, %v4438
        %v4468 = vpack.c.b16 %v4441, %v4440
        %v4469 = vpack.c.b16 %v4443, %v4442
        %v4470 = vpack.c.b16 %v4445, %v4444
        %v4471 = vpack.c.b16 %v4447, %v4446
        %v4472 = vpack.c.b16 %v4449, %v4448
        %v4473 = vpack.c.b16 %v4451, %v4450
        %v4474 = vpack.c.b16 %v4453, %v4452
        %v4475 = vpack.c.b16 %v4455, %v4454
        %v4476 = vpack.c.b16 %v4457, %v4456
        %v4477 = vpack.c.b16 %v4459, %v4458
        %v4497 = vsel %vm1553, %v3907, 0
        %v4500 = vsel %vm1553, %v3910, 0
        %v4503 = vsel %vm1553, %v3913, 0
        %v4506 = vsel %vm1553, %v3916, 0
        %v4509 = vsel %vm1553, %v3919, 0
        %v4512 = vsel %vm1553, %v3922, 0
        %v4515 = vsel %vm1553, %v3925, 0
        %v4518 = vsel %vm1553, %v3928, 0
        %v4521 = vsel %vm1553, %v3931, 0
        %v4524 = vsel %vm1553, %v3934, 0
        %v4527 = vsel %vm1553, %v3937, 0
        %v4530 = vsel %vm1553, %v3940, 0
        %v4533 = vsel %vm1553, %v3943, 0
        %v4536 = vsel %vm1553, %v3946, 0
        %v4539 = vsel %vm1553, %v4025, 0
        %4541 = vmatprep.subr.bf16.mxu0 0
        %4542 = vmatpush1.bf16.msra.mxu0 %v4460
        %4543 = vmatprep.subr.bf16.mxu0 0
        %4544 = vmatpush1.bf16.msra.mxu0 %v4461
        %4545 = vmatprep.subr.bf16.mxu0 0
        %4546 = vmatpush1.bf16.msra.mxu0 %v4462
        %4547 = vmatprep.subr.bf16.mxu0 0
        %4548 = vmatpush1.bf16.msra.mxu0 %v4463
        %4549 = vmatprep.subr.bf16.mxu0 0
        %4550 = vmatpush1.bf16.msra.mxu0 %v4464
        %4551 = vmatprep.subr.bf16.mxu0 0
        %4552 = vmatpush1.bf16.msra.mxu0 %v4465
        %4553 = vmatprep.subr.bf16.mxu0 0
        %4554 = vmatpush1.bf16.msra.mxu0 %v4466
        %4555 = vmatprep.subr.bf16.mxu0 0
        %4556 = vmatpush1.bf16.msra.mxu0 %v4467
        %4557 = vmatprep.subr.bf16.mxu0 0
        %4558 = vmatpush1.bf16.msra.mxu0 %v4468
        %4559 = vmatprep.subr.bf16.mxu0 0
        %4560 = vmatpush1.bf16.msra.mxu0 %v4469
        %4561 = vmatprep.subr.bf16.mxu0 0
        %4562 = vmatpush1.bf16.msra.mxu0 %v4470
        %4563 = vmatprep.subr.bf16.mxu0 0
        %4564 = vmatpush1.bf16.msra.mxu0 %v4471
        %4565 = vmatprep.subr.bf16.mxu0 0
        %4566 = vmatpush1.bf16.msra.mxu0 %v4472
        %4567 = vmatprep.subr.bf16.mxu0 0
        %4568 = vmatpush1.bf16.msra.mxu0 %v4473
        %4569 = vmatprep.subr.bf16.mxu0 0
        %4570 = vmatpush1.bf16.msra.mxu0 %v4474
        %4571 = vmatprep.subr.bf16.mxu0 0
        %4572 = vmatpush1.bf16.msra.mxu0 %v4475
        %4573 = vmatprep.mubr.bf16.mxu0 %v4306
        %4574 = vmatmul.mubr.bf16.gmra.mrb[0].mxu0 %v4179
        %v4575 = vpop.f32.mrb[0].mxu0
        %v4576 = vadd.f32 0.0, %v4575
        %v4577 = vpop.f32.mrb[0].mxu0
        %v4578 = vpop.f32.mrb[0].mxu0
        %v4579 = vadd.f32 0.0, %v4578
        %v4580 = vpop.f32.mrb[0].mxu0
        %4581 = vmatprep.mubr.bf16.mxu0 %v4309
        %4582 = vmatmul.mubr.bf16.gmra.mrb[0].mxu0 %v4182
        %v4583 = vpop.f32.mrb[0].mxu0
        %v4584 = vadd.f32 0.0, %v4583
        %v4585 = vpop.f32.mrb[0].mxu0
        %v4586 = vpop.f32.mrb[0].mxu0
        %v4587 = vadd.f32 0.0, %v4586
        %v4588 = vpop.f32.mrb[0].mxu0
        %4589 = vmatprep.mubr.bf16.mxu0 %v4312
        %4590 = vmatmul.mubr.bf16.gmra.mrb[0].mxu0 %v4185
        %v4591 = vpop.f32.mrb[0].mxu0
        %v4592 = vadd.f32 0.0, %v4591
        %v4593 = vpop.f32.mrb[0].mxu0
        %v4594 = vpop.f32.mrb[0].mxu0
        %v4595 = vadd.f32 0.0, %v4594
        %v4596 = vpop.f32.mrb[0].mxu0
        %4597 = vmatprep.mubr.bf16.mxu0 %v4315
        %4598 = vmatmul.mubr.bf16.gmra.mrb[0].mxu0 %v4188
        %v4599 = vpop.f32.mrb[0].mxu0
        %v4600 = vadd.f32 0.0, %v4599
        %v4601 = vpop.f32.mrb[0].mxu0
        %v4602 = vpop.f32.mrb[0].mxu0
        %v4603 = vadd.f32 0.0, %v4602
        %v4604 = vpop.f32.mrb[0].mxu0
        %4605 = vmatprep.mubr.bf16.mxu0 %v4318
        %4606 = vmatmul.mubr.bf16.gmra.mrb[0].mxu0 %v4191
        %v4607 = vpop.f32.mrb[0].mxu0
        %v4608 = vadd.f32 0.0, %v4607
        %v4609 = vpop.f32.mrb[0].mxu0
        %v4610 = vpop.f32.mrb[0].mxu0
        %v4611 = vadd.f32 0.0, %v4610
        %v4612 = vpop.f32.mrb[0].mxu0
        %4613 = vmatprep.mubr.bf16.mxu0 %v4321
        %4614 = vmatmul.mubr.bf16.gmra.mrb[0].mxu0 %v4194
        %v4615 = vpop.f32.mrb[0].mxu0
        %v4616 = vadd.f32 0.0, %v4615
        %v4617 = vpop.f32.mrb[0].mxu0
        %v4618 = vpop.f32.mrb[0].mxu0
        %v4619 = vadd.f32 0.0, %v4618
        %v4620 = vpop.f32.mrb[0].mxu0
        %4621 = vmatprep.mubr.bf16.mxu0 %v4324
        %4622 = vmatmul.mubr.bf16.gmra.mrb[0].mxu0 %v4197
        %v4623 = vpop.f32.mrb[0].mxu0
        %v4624 = vadd.f32 0.0, %v4623
        %v4625 = vpop.f32.mrb[0].mxu0
        %v4626 = vpop.f32.mrb[0].mxu0
        %v4627 = vadd.f32 0.0, %v4626
        %v4628 = vpop.f32.mrb[0].mxu0
        %4629 = vmatprep.mubr.bf16.mxu0 %v4327
        %4630 = vmatmul.mubr.bf16.gmra.mrb[0].mxu0 %v4200
        %v4631 = vpop.f32.mrb[0].mxu0
        %v4632 = vadd.f32 0.0, %v4631
        %v4633 = vpop.f32.mrb[0].mxu0
        %v4634 = vpop.f32.mrb[0].mxu0
        %v4635 = vadd.f32 0.0, %v4634
        %v4636 = vpop.f32.mrb[0].mxu0
        %4637 = vmatprep.mubr.bf16.mxu0 %v4330
        %4638 = vmatmul.mubr.bf16.gmra.mrb[0].mxu0 %v4203
        %v4639 = vpop.f32.mrb[0].mxu0
        %v4640 = vadd.f32 0.0, %v4639
        %v4641 = vpop.f32.mrb[0].mxu0
        %v4642 = vpop.f32.mrb[0].mxu0
        %v4643 = vadd.f32 0.0, %v4642
        %v4644 = vpop.f32.mrb[0].mxu0
        %4645 = vmatprep.mubr.bf16.mxu0 %v4333
        %4646 = vmatmul.mubr.bf16.gmra.mrb[0].mxu0 %v4206
        %v4647 = vpop.f32.mrb[0].mxu0
        %v4648 = vadd.f32 0.0, %v4647
        %v4649 = vpop.f32.mrb[0].mxu0
        %v4650 = vpop.f32.mrb[0].mxu0
        %v4651 = vadd.f32 0.0, %v4650
        %v4652 = vpop.f32.mrb[0].mxu0
        %4653 = vmatprep.mubr.bf16.mxu0 %v4336
        %4654 = vmatmul.mubr.bf16.gmra.mrb[0].mxu0 %v4209
        %v4655 = vpop.f32.mrb[0].mxu0
        %v4656 = vadd.f32 0.0, %v4655
        %v4657 = vpop.f32.mrb[0].mxu0
        %v4658 = vpop.f32.mrb[0].mxu0
        %v4659 = vadd.f32 0.0, %v4658
        %v4660 = vpop.f32.mrb[0].mxu0
        %4661 = vmatprep.mubr.bf16.mxu0 %v4339
        %4662 = vmatmul.mubr.bf16.gmra.mrb[0].mxu0 %v4212
        %v4663 = vpop.f32.mrb[0].mxu0
        %v4664 = vadd.f32 0.0, %v4663
        %v4665 = vpop.f32.mrb[0].mxu0
        %v4666 = vpop.f32.mrb[0].mxu0
        %v4667 = vadd.f32 0.0, %v4666
        %v4668 = vpop.f32.mrb[0].mxu0
        %4669 = vmatprep.mubr.bf16.mxu0 %v4342
        %4670 = vmatmul.mubr.bf16.gmra.mrb[0].mxu0 %v4215
        %v4671 = vpop.f32.mrb[0].mxu0
        %v4672 = vadd.f32 0.0, %v4671
        %v4673 = vpop.f32.mrb[0].mxu0
        %v4674 = vpop.f32.mrb[0].mxu0
        %v4675 = vadd.f32 0.0, %v4674
        %v4676 = vpop.f32.mrb[0].mxu0
        %4677 = vmatprep.mubr.bf16.mxu0 %v4345
        %4678 = vmatmul.mubr.bf16.gmra.mrb[0].mxu0 %v4218
        %v4679 = vpop.f32.mrb[0].mxu0
        %v4680 = vadd.f32 0.0, %v4679
        %v4681 = vpop.f32.mrb[0].mxu0
        %v4682 = vpop.f32.mrb[0].mxu0
        %v4683 = vadd.f32 0.0, %v4682
        %v4684 = vpop.f32.mrb[0].mxu0
        %4685 = vmatprep.mubr.bf16.mxu0 %v4348
        %4686 = vmatmul.mubr.bf16.gmra.mrb[0].mxu0 %v4221
        %v4687 = vpop.f32.mrb[0].mxu0
        %v4688 = vadd.f32 0.0, %v4687
        %v4689 = vpop.f32.mrb[0].mxu0
        %v4690 = vpop.f32.mrb[0].mxu0
        %v4691 = vadd.f32 0.0, %v4690
        %v4692 = vpop.f32.mrb[0].mxu0
        %4693 = vmatprep.mubr.bf16.mxu0 %v4350
        %4694 = vmatmul.mubr.bf16.gmra.mrb[0].mxu0 %v4224
        %v4695 = vpop.f32.mrb[0].mxu0
        %v4696 = vadd.f32 0.0, %v4695
        %v4697 = vpop.f32.mrb[0].mxu0
        %v4698 = vpop.f32.mrb[0].mxu0
        %v4699 = vadd.f32 0.0, %v4698
        %v4700 = vpop.f32.mrb[0].mxu0
        %4701 = vdwg.mxu0
        %4702 = vmatprep.subr.bf16.mxu0 0
        %4703 = vmatpush1.bf16.msra.mxu0 %v4476
        %4704 = vmatprep.subr.bf16.mxu0 0
        %4705 = vmatpush1.bf16.msra.mxu0 %v4477
        %4706 = vmatprep.subr.bf16.mxu0 0
        %4707 = vmatpush1.bf16.msra.mxu0 0
        %4708 = vmatprep.subr.bf16.mxu0 0
        %4709 = vmatpush1.bf16.msra.mxu0 0
        %4710 = vmatprep.subr.bf16.mxu0 0
        %4711 = vmatpush1.bf16.msra.mxu0 0
        %4712 = vmatprep.subr.bf16.mxu0 0
        %4713 = vmatpush1.bf16.msra.mxu0 0
        %4714 = vmatprep.subr.bf16.mxu0 0
        %4715 = vmatpush1.bf16.msra.mxu0 0
        %4716 = vmatprep.subr.bf16.mxu0 0
        %4717 = vmatpush1.bf16.msra.mxu0 0
        %4718 = vmatprep.subr.bf16.mxu0 0
        %4719 = vmatpush1.bf16.msra.mxu0 0
        %4720 = vmatprep.subr.bf16.mxu0 0
        %4721 = vmatpush1.bf16.msra.mxu0 0
        %4722 = vmatprep.subr.bf16.mxu0 0
        %4723 = vmatpush1.bf16.msra.mxu0 0
        %4724 = vmatprep.subr.bf16.mxu0 0
        %4725 = vmatpush1.bf16.msra.mxu0 0
        %4726 = vmatprep.subr.bf16.mxu0 0
        %4727 = vmatpush1.bf16.msra.mxu0 0
        %4728 = vmatprep.subr.bf16.mxu0 0
        %4729 = vmatpush1.bf16.msra.mxu0 0
        %4730 = vmatprep.subr.bf16.mxu0 0
        %4731 = vmatpush1.bf16.msra.mxu0 0
        %4732 = vmatprep.subr.bf16.mxu0 0
        %4733 = vmatpush1.bf16.msra.mxu0 0
        %4734 = vmatprep.mubr.bf16.mxu0 0
        %4735 = vmatmul.mubr.bf16.gmra.mrb[0].mxu0 %v4497
        %v4736 = vpop.f32.mrb[0].mxu0
        %v4737 = vadd.f32 %v4576, %v4736
        %v4738 = vpop.f32.mrb[0].mxu0
        %v4739 = vpop.f32.mrb[0].mxu0
        %v4740 = vadd.f32 %v4579, %v4739
        %v4741 = vpop.f32.mrb[0].mxu0
        %4742 = vmatprep.mubr.bf16.mxu0 0
        %4743 = vmatmul.mubr.bf16.gmra.mrb[0].mxu0 %v4500
        %v4744 = vpop.f32.mrb[0].mxu0
        %v4745 = vadd.f32 %v4584, %v4744
        %v4746 = vpop.f32.mrb[0].mxu0
        %v4747 = vpop.f32.mrb[0].mxu0
        %v4748 = vadd.f32 %v4587, %v4747
        %v4749 = vpop.f32.mrb[0].mxu0
        %4750 = vmatprep.mubr.bf16.mxu0 0
        %4751 = vmatmul.mubr.bf16.gmra.mrb[0].mxu0 %v4503
        %v4752 = vpop.f32.mrb[0].mxu0
        %v4753 = vadd.f32 %v4592, %v4752
        %v4754 = vpop.f32.mrb[0].mxu0
        %v4755 = vpop.f32.mrb[0].mxu0
        %v4756 = vadd.f32 %v4595, %v4755
        %v4757 = vpop.f32.mrb[0].mxu0
        %4758 = vmatprep.mubr.bf16.mxu0 0
        %4759 = vmatmul.mubr.bf16.gmra.mrb[0].mxu0 %v4506
        %v4760 = vpop.f32.mrb[0].mxu0
        %v4761 = vadd.f32 %v4600, %v4760
        %v4762 = vpop.f32.mrb[0].mxu0
        %v4763 = vpop.f32.mrb[0].mxu0
        %v4764 = vadd.f32 %v4603, %v4763
        %v4765 = vpop.f32.mrb[0].mxu0
        %4766 = vmatprep.mubr.bf16.mxu0 0
        %4767 = vmatmul.mubr.bf16.gmra.mrb[0].mxu0 %v4509
        %v4768 = vpop.f32.mrb[0].mxu0
        %v4769 = vadd.f32 %v4608, %v4768
        %v4770 = vpop.f32.mrb[0].mxu0
        %v4771 = vpop.f32.mrb[0].mxu0
        %v4772 = vadd.f32 %v4611, %v4771
        %v4773 = vpop.f32.mrb[0].mxu0
        %4774 = vmatprep.mubr.bf16.mxu0 0
        %4775 = vmatmul.mubr.bf16.gmra.mrb[0].mxu0 %v4512
        %v4776 = vpop.f32.mrb[0].mxu0
        %v4777 = vadd.f32 %v4616, %v4776
        %v4778 = vpop.f32.mrb[0].mxu0
        %v4779 = vpop.f32.mrb[0].mxu0
        %v4780 = vadd.f32 %v4619, %v4779
        %v4781 = vpop.f32.mrb[0].mxu0
        %4782 = vmatprep.mubr.bf16.mxu0 0
        %4783 = vmatmul.mubr.bf16.gmra.mrb[0].mxu0 %v4515
        %v4784 = vpop.f32.mrb[0].mxu0
        %v4785 = vadd.f32 %v4624, %v4784
        %v4786 = vpop.f32.mrb[0].mxu0
        %v4787 = vpop.f32.mrb[0].mxu0
        %v4788 = vadd.f32 %v4627, %v4787
        %v4789 = vpop.f32.mrb[0].mxu0
        %4790 = vmatprep.mubr.bf16.mxu0 0
        %4791 = vmatmul.mubr.bf16.gmra.mrb[0].mxu0 %v4518
        %v4792 = vpop.f32.mrb[0].mxu0
        %v4793 = vadd.f32 %v4632, %v4792
        %v4794 = vpop.f32.mrb[0].mxu0
        %v4795 = vpop.f32.mrb[0].mxu0
        %v4796 = vadd.f32 %v4635, %v4795
        %v4797 = vpop.f32.mrb[0].mxu0
        %4798 = vmatprep.mubr.bf16.mxu0 0
        %4799 = vmatmul.mubr.bf16.gmra.mrb[0].mxu0 %v4521
        %v4800 = vpop.f32.mrb[0].mxu0
        %v4801 = vadd.f32 %v4640, %v4800
        %v4802 = vpop.f32.mrb[0].mxu0
        %v4803 = vpop.f32.mrb[0].mxu0
        %v4804 = vadd.f32 %v4643, %v4803
        %v4805 = vpop.f32.mrb[0].mxu0
        %4806 = vmatprep.mubr.bf16.mxu0 0
        %4807 = vmatmul.mubr.bf16.gmra.mrb[0].mxu0 %v4524
        %v4808 = vpop.f32.mrb[0].mxu0
        %v4809 = vadd.f32 %v4648, %v4808
        %v4810 = vpop.f32.mrb[0].mxu0
        %v4811 = vpop.f32.mrb[0].mxu0
        %v4812 = vadd.f32 %v4651, %v4811
        %v4813 = vpop.f32.mrb[0].mxu0
        %4814 = vmatprep.mubr.bf16.mxu0 0
        %4815 = vmatmul.mubr.bf16.gmra.mrb[0].mxu0 %v4527
        %v4816 = vpop.f32.mrb[0].mxu0
        %v4817 = vadd.f32 %v4656, %v4816
        %v4818 = vpop.f32.mrb[0].mxu0
        %v4819 = vpop.f32.mrb[0].mxu0
        %v4820 = vadd.f32 %v4659, %v4819
        %v4821 = vpop.f32.mrb[0].mxu0
        %4822 = vmatprep.mubr.bf16.mxu0 0
        %4823 = vmatmul.mubr.bf16.gmra.mrb[0].mxu0 %v4530
        %v4824 = vpop.f32.mrb[0].mxu0
        %v4825 = vadd.f32 %v4664, %v4824
        %v4826 = vpop.f32.mrb[0].mxu0
        %v4827 = vpop.f32.mrb[0].mxu0
        %v4828 = vadd.f32 %v4667, %v4827
        %v4829 = vpop.f32.mrb[0].mxu0
        %4830 = vmatprep.mubr.bf16.mxu0 0
        %4831 = vmatmul.mubr.bf16.gmra.mrb[0].mxu0 %v4533
        %v4832 = vpop.f32.mrb[0].mxu0
        %v4833 = vadd.f32 %v4672, %v4832
        %v4834 = vpop.f32.mrb[0].mxu0
        %v4835 = vpop.f32.mrb[0].mxu0
        %v4836 = vadd.f32 %v4675, %v4835
        %v4837 = vpop.f32.mrb[0].mxu0
        %4838 = vmatprep.mubr.bf16.mxu0 0
        %4839 = vmatmul.mubr.bf16.gmra.mrb[0].mxu0 %v4536
        %v4840 = vpop.f32.mrb[0].mxu0
        %v4841 = vadd.f32 %v4680, %v4840
        %v4842 = vpop.f32.mrb[0].mxu0
        %v4843 = vpop.f32.mrb[0].mxu0
        %v4844 = vadd.f32 %v4683, %v4843
        %v4845 = vpop.f32.mrb[0].mxu0
        %4846 = vmatprep.mubr.bf16.mxu0 0
        %4847 = vmatmul.mubr.bf16.gmra.mrb[0].mxu0 %v4539
        %v4848 = vpop.f32.mrb[0].mxu0
        %v4849 = vadd.f32 %v4688, %v4848
        %v4850 = vpop.f32.mrb[0].mxu0
        %v4851 = vpop.f32.mrb[0].mxu0
        %v4852 = vadd.f32 %v4691, %v4851
        %v4853 = vpop.f32.mrb[0].mxu0
        %4854 = vmatprep.mubr.bf16.mxu0 0
        %4855 = vmatmul.mubr.bf16.gmra.mrb[0].mxu0 %v3075
        %v4856 = vpop.f32.mrb[0].mxu0
        %v4857 = vadd.f32 %v4696, %v4856
        %v4858 = vpop.f32.mrb[0].mxu0
        %v4859 = vpop.f32.mrb[0].mxu0
        %v4860 = vadd.f32 %v4699, %v4859
        %v4861 = vpop.f32.mrb[0].mxu0
        %4862 = vdwg.mxu0
        %v4863 = vld [vmem:[%s11] sm:$0x1]
        %v4865 = vlaneseq
        %v4866 = vshrl.u32 %v4865, 7
        %v4867 = vsub.s32 0, %v4866
        %v4868 = vrot.slane %v4863, %v4867
        %v4870 = vadd.f32 %v4737, %v4868
        %v4871 = vadd.f32 %v4740, %v4868
        %v4872 = vadd.f32 %v4745, %v4868
        %v4873 = vadd.f32 %v4748, %v4868
        %v4874 = vadd.f32 %v4753, %v4868
        %v4875 = vadd.f32 %v4756, %v4868
        %v4876 = vadd.f32 %v4761, %v4868
        %v4877 = vadd.f32 %v4764, %v4868
        %v4878 = vadd.f32 %v4769, %v4868
        %v4879 = vadd.f32 %v4772, %v4868
        %v4880 = vadd.f32 %v4777, %v4868
        %v4881 = vadd.f32 %v4780, %v4868
        %v4882 = vadd.f32 %v4785, %v4868
        %v4883 = vadd.f32 %v4788, %v4868
        %v4884 = vadd.f32 %v4793, %v4868
        %v4885 = vadd.f32 %v4796, %v4868
        %v4886 = vadd.f32 %v4801, %v4868
        %v4887 = vadd.f32 %v4804, %v4868
        %v4888 = vadd.f32 %v4809, %v4868
        %v4889 = vadd.f32 %v4812, %v4868
        %v4890 = vadd.f32 %v4817, %v4868
        %v4891 = vadd.f32 %v4820, %v4868
        %v4892 = vadd.f32 %v4825, %v4868
        %v4893 = vadd.f32 %v4828, %v4868
        %v4894 = vadd.f32 %v4833, %v4868
        %v4895 = vadd.f32 %v4836, %v4868
        %v4896 = vadd.f32 %v4841, %v4868
        %v4897 = vadd.f32 %v4844, %v4868
        %v4898 = vadd.f32 %v4849, %v4868
        %v4899 = vadd.f32 %v4852, %v4868
        %v4900 = vadd.f32 %v4857, %v4868
        %v4901 = vadd.f32 %v4860, %v4868
        %v4902 = vmax.f32 %v4870, 0.0
        %v4903 = vmax.f32 %v4871, 0.0
        %v4904 = vmax.f32 %v4872, 0.0
        %v4905 = vmax.f32 %v4873, 0.0
        %v4906 = vmax.f32 %v4874, 0.0
        %v4907 = vmax.f32 %v4875, 0.0
        %v4908 = vmax.f32 %v4876, 0.0
        %v4909 = vmax.f32 %v4877, 0.0
        %v4910 = vmax.f32 %v4878, 0.0
        %v4911 = vmax.f32 %v4879, 0.0
        %v4912 = vmax.f32 %v4880, 0.0
        %v4913 = vmax.f32 %v4881, 0.0
        %v4914 = vmax.f32 %v4882, 0.0
        %v4915 = vmax.f32 %v4883, 0.0
        %v4916 = vmax.f32 %v4884, 0.0
        %v4917 = vmax.f32 %v4885, 0.0
        %v4918 = vmax.f32 %v4886, 0.0
        %v4919 = vmax.f32 %v4887, 0.0
        %v4920 = vmax.f32 %v4888, 0.0
        %v4921 = vmax.f32 %v4889, 0.0
        %v4922 = vmax.f32 %v4890, 0.0
        %v4923 = vmax.f32 %v4891, 0.0
        %v4924 = vmax.f32 %v4892, 0.0
        %v4925 = vmax.f32 %v4893, 0.0
        %v4926 = vmax.f32 %v4894, 0.0
        %v4927 = vmax.f32 %v4895, 0.0
        %v4928 = vmax.f32 %v4896, 0.0
        %v4929 = vmax.f32 %v4897, 0.0
        %v4930 = vmax.f32 %v4898, 0.0
        %v4931 = vmax.f32 %v4899, 0.0
        %v4932 = vmax.f32 %v4900, 0.0
        %v4933 = vmax.f32 %v4901, 0.0
        %v4934 = vpack.c.bf16 %v4903, %v4902
        %v4935 = vpack.c.bf16 %v4905, %v4904
        %v4936 = vpack.c.bf16 %v4907, %v4906
        %v4937 = vpack.c.bf16 %v4909, %v4908
        %v4938 = vpack.c.bf16 %v4911, %v4910
        %v4939 = vpack.c.bf16 %v4913, %v4912
        %v4940 = vpack.c.bf16 %v4915, %v4914
        %v4941 = vpack.c.bf16 %v4917, %v4916
        %v4942 = vpack.c.bf16 %v4919, %v4918
        %v4943 = vpack.c.bf16 %v4921, %v4920
        %v4944 = vpack.c.bf16 %v4923, %v4922
        %v4945 = vpack.c.bf16 %v4925, %v4924
        %v4946 = vpack.c.bf16 %v4927, %v4926
        %v4947 = vpack.c.bf16 %v4929, %v4928
        %v4948 = vpack.c.bf16 %v4931, %v4930
        %v4949 = vpack.c.bf16 %v4933, %v4932
        %v4951 = vshrl.u32 %v4934, 16
        %v4953 = vrot.slane %v4951, 7
        %v4954 = vshll.u32 %v4934, 16
        %v4956 = vor.u32 %v4953, %v4954
        %v4958 = vshrl.u32 %v4935, 16
        %v4960 = vrot.slane %v4958, 7
        %v4961 = vshll.u32 %v4935, 16
        %v4963 = vor.u32 %v4960, %v4961
        %v4965 = vshrl.u32 %v4936, 16
        %v4967 = vrot.slane %v4965, 7
        %v4968 = vshll.u32 %v4936, 16
        %v4970 = vor.u32 %v4967, %v4968
        %v4972 = vshrl.u32 %v4937, 16
        %v4974 = vrot.slane %v4972, 7
        %v4975 = vshll.u32 %v4937, 16
        %v4977 = vor.u32 %v4974, %v4975
        %v4979 = vshrl.u32 %v4938, 16
        %v4981 = vrot.slane %v4979, 7
        %v4982 = vshll.u32 %v4938, 16
        %v4984 = vor.u32 %v4981, %v4982
        %v4986 = vshrl.u32 %v4939, 16
        %v4988 = vrot.slane %v4986, 7
        %v4989 = vshll.u32 %v4939, 16
        %v4991 = vor.u32 %v4988, %v4989
        %v4993 = vshrl.u32 %v4940, 16
        %v4995 = vrot.slane %v4993, 7
        %v4996 = vshll.u32 %v4940, 16
        %v4998 = vor.u32 %v4995, %v4996
        %v5000 = vshrl.u32 %v4941, 16
        %v5002 = vrot.slane %v5000, 7
        %v5003 = vshll.u32 %v4941, 16
        %v5005 = vor.u32 %v5002, %v5003
        %v5007 = vshrl.u32 %v4942, 16
        %v5009 = vrot.slane %v5007, 7
        %v5010 = vshll.u32 %v4942, 16
        %v5012 = vor.u32 %v5009, %v5010
        %v5014 = vshrl.u32 %v4943, 16
        %v5016 = vrot.slane %v5014, 7
        %v5017 = vshll.u32 %v4943, 16
        %v5019 = vor.u32 %v5016, %v5017
        %v5021 = vshrl.u32 %v4944, 16
        %v5023 = vrot.slane %v5021, 7
        %v5024 = vshll.u32 %v4944, 16
        %v5026 = vor.u32 %v5023, %v5024
        %v5028 = vshrl.u32 %v4945, 16
        %v5030 = vrot.slane %v5028, 7
        %v5031 = vshll.u32 %v4945, 16
        %v5033 = vor.u32 %v5030, %v5031
        %v5035 = vshrl.u32 %v4946, 16
        %v5037 = vrot.slane %v5035, 7
        %v5038 = vshll.u32 %v4946, 16
        %v5040 = vor.u32 %v5037, %v5038
        %v5042 = vshrl.u32 %v4947, 16
        %v5044 = vrot.slane %v5042, 7
        %v5045 = vshll.u32 %v4947, 16
        %v5047 = vor.u32 %v5044, %v5045
        %v5049 = vshrl.u32 %v4948, 16
        %v5051 = vrot.slane %v5049, 7
        %v5052 = vshll.u32 %v4948, 16
        %v5054 = vor.u32 %v5051, %v5052
        %v5056 = vshrl.u32 %v4949, 16
        %v5058 = vrot.slane %v5056, 7
        %v5059 = vshll.u32 %v4949, 16
        %v5061 = vor.u32 %v5058, %v5059
        %v5094 = vsel %vm872, 0, %v4956
        %v5095 = vsel %vm872, 0, %v4963
        %v5096 = vsel %vm872, 0, %v4970
        %v5097 = vsel %vm872, 0, %v4977
        %v5098 = vsel %vm872, 0, %v4984
        %v5099 = vsel %vm872, 0, %v4991
        %v5100 = vsel %vm872, 0, %v4998
        %v5101 = vsel %vm872, 0, %v5005
        %v5102 = vsel %vm872, 0, %v5012
        %v5103 = vsel %vm872, 0, %v5019
        %v5104 = vsel %vm872, 0, %v5026
        %v5105 = vsel %vm872, 0, %v5033
        %v5106 = vsel %vm872, 0, %v5040
        %v5107 = vsel %vm872, 0, %v5047
        %v5108 = vsel %vm872, 0, %v5054
        %v5109 = vsel %vm872, 0, %v5061
        %v5110 = vsel %vm872, %v4953, 0
        %v5111 = vsel %vm872, %v4960, 0
        %v5112 = vsel %vm872, %v4967, 0
        %v5113 = vsel %vm872, %v4974, 0
        %v5114 = vsel %vm872, %v4981, 0
        %v5115 = vsel %vm872, %v4988, 0
        %v5116 = vsel %vm872, %v4995, 0
        %v5117 = vsel %vm872, %v5002, 0
        %v5118 = vsel %vm872, %v5009, 0
        %v5119 = vsel %vm872, %v5016, 0
        %v5120 = vsel %vm872, %v5023, 0
        %v5121 = vsel %vm872, %v5030, 0
        %v5122 = vsel %vm872, %v5037, 0
        %v5123 = vsel %vm872, %v5044, 0
        %v5124 = vsel %vm872, %v5051, 0
        %v5125 = vsel %vm872, %v5058, 0
        %v5127 = vshrl.u32 %v5094, 16
        %v5129 = vshll.u32 %v5094, 16
        %v5131 = vrot.slane %v5129, 1
        %v5132 = vor.u32 %v5127, %v5131
        %v5134 = vshll.u32 %v5110, 16
        %v5136 = vrot.slane %v5134, 1
        %v5137 = vsel %vm907, %v5132, %v5136
        %v5139 = vshrl.u32 %v5095, 16
        %v5141 = vshll.u32 %v5095, 16
        %v5143 = vrot.slane %v5141, 1
        %v5144 = vor.u32 %v5139, %v5143
        %v5146 = vshll.u32 %v5111, 16
        %v5148 = vrot.slane %v5146, 1
        %v5149 = vsel %vm907, %v5144, %v5148
        %v5151 = vshrl.u32 %v5096, 16
        %v5153 = vshll.u32 %v5096, 16
        %v5155 = vrot.slane %v5153, 1
        %v5156 = vor.u32 %v5151, %v5155
        %v5158 = vshll.u32 %v5112, 16
        %v5160 = vrot.slane %v5158, 1
        %v5161 = vsel %vm907, %v5156, %v5160
        %v5163 = vshrl.u32 %v5097, 16
        %v5165 = vshll.u32 %v5097, 16
        %v5167 = vrot.slane %v5165, 1
        %v5168 = vor.u32 %v5163, %v5167
        %v5170 = vshll.u32 %v5113, 16
        %v5172 = vrot.slane %v5170, 1
        %v5173 = vsel %vm907, %v5168, %v5172
        %v5175 = vshrl.u32 %v5098, 16
        %v5177 = vshll.u32 %v5098, 16
        %v5179 = vrot.slane %v5177, 1
        %v5180 = vor.u32 %v5175, %v5179
        %v5182 = vshll.u32 %v5114, 16
        %v5184 = vrot.slane %v5182, 1
        %v5185 = vsel %vm907, %v5180, %v5184
        %v5187 = vshrl.u32 %v5099, 16
        %v5189 = vshll.u32 %v5099, 16
        %v5191 = vrot.slane %v5189, 1
        %v5192 = vor.u32 %v5187, %v5191
        %v5194 = vshll.u32 %v5115, 16
        %v5196 = vrot.slane %v5194, 1
        %v5197 = vsel %vm907, %v5192, %v5196
        %v5199 = vshrl.u32 %v5100, 16
        %v5201 = vshll.u32 %v5100, 16
        %v5203 = vrot.slane %v5201, 1
        %v5204 = vor.u32 %v5199, %v5203
        %v5206 = vshll.u32 %v5116, 16
        %v5208 = vrot.slane %v5206, 1
        %v5209 = vsel %vm907, %v5204, %v5208
        %v5211 = vshrl.u32 %v5101, 16
        %v5213 = vshll.u32 %v5101, 16
        %v5215 = vrot.slane %v5213, 1
        %v5216 = vor.u32 %v5211, %v5215
        %v5218 = vshll.u32 %v5117, 16
        %v5220 = vrot.slane %v5218, 1
        %v5221 = vsel %vm907, %v5216, %v5220
        %v5223 = vshrl.u32 %v5102, 16
        %v5225 = vshll.u32 %v5102, 16
        %v5227 = vrot.slane %v5225, 1
        %v5228 = vor.u32 %v5223, %v5227
        %v5230 = vshll.u32 %v5118, 16
        %v5232 = vrot.slane %v5230, 1
        %v5233 = vsel %vm907, %v5228, %v5232
        %v5235 = vshrl.u32 %v5103, 16
        %v5237 = vshll.u32 %v5103, 16
        %v5239 = vrot.slane %v5237, 1
        %v5240 = vor.u32 %v5235, %v5239
        %v5242 = vshll.u32 %v5119, 16
        %v5244 = vrot.slane %v5242, 1
        %v5245 = vsel %vm907, %v5240, %v5244
        %v5247 = vshrl.u32 %v5104, 16
        %v5249 = vshll.u32 %v5104, 16
        %v5251 = vrot.slane %v5249, 1
        %v5252 = vor.u32 %v5247, %v5251
        %v5254 = vshll.u32 %v5120, 16
        %v5256 = vrot.slane %v5254, 1
        %v5257 = vsel %vm907, %v5252, %v5256
        %v5259 = vshrl.u32 %v5105, 16
        %v5261 = vshll.u32 %v5105, 16
        %v5263 = vrot.slane %v5261, 1
        %v5264 = vor.u32 %v5259, %v5263
        %v5266 = vshll.u32 %v5121, 16
        %v5268 = vrot.slane %v5266, 1
        %v5269 = vsel %vm907, %v5264, %v5268
        %v5271 = vshrl.u32 %v5106, 16
        %v5273 = vshll.u32 %v5106, 16
        %v5275 = vrot.slane %v5273, 1
        %v5276 = vor.u32 %v5271, %v5275
        %v5278 = vshll.u32 %v5122, 16
        %v5280 = vrot.slane %v5278, 1
        %v5281 = vsel %vm907, %v5276, %v5280
        %v5283 = vshrl.u32 %v5107, 16
        %v5285 = vshll.u32 %v5107, 16
        %v5287 = vrot.slane %v5285, 1
        %v5288 = vor.u32 %v5283, %v5287
        %v5290 = vshll.u32 %v5123, 16
        %v5292 = vrot.slane %v5290, 1
        %v5293 = vsel %vm907, %v5288, %v5292
        %v5295 = vshrl.u32 %v5108, 16
        %v5297 = vshll.u32 %v5108, 16
        %v5299 = vrot.slane %v5297, 1
        %v5300 = vor.u32 %v5295, %v5299
        %v5302 = vshll.u32 %v5124, 16
        %v5304 = vrot.slane %v5302, 1
        %v5305 = vsel %vm907, %v5300, %v5304
        %5306 = vrot.lane.b32.xlu0 %v5137, 32
        %v5307 = vpop.permute.xlu0 %5306
        %5308 = vrot.lane.b32.xlu0 %v5149, 32
        %v5309 = vpop.permute.xlu0 %5308
        %5310 = vrot.lane.b32.xlu0 %v5161, 32
        %v5311 = vpop.permute.xlu0 %5310
        %5312 = vrot.lane.b32.xlu0 %v5173, 32
        %v5313 = vpop.permute.xlu0 %5312
        %5314 = vrot.lane.b32.xlu0 %v5185, 32
        %v5315 = vpop.permute.xlu0 %5314
        %5316 = vrot.lane.b32.xlu0 %v5197, 32
        %v5317 = vpop.permute.xlu0 %5316
        %5318 = vrot.lane.b32.xlu0 %v5209, 32
        %v5319 = vpop.permute.xlu0 %5318
        %5320 = vrot.lane.b32.xlu0 %v5221, 32
        %v5321 = vpop.permute.xlu0 %5320
        %5322 = vrot.lane.b32.xlu0 %v5233, 32
        %v5323 = vpop.permute.xlu0 %5322
        %5324 = vrot.lane.b32.xlu0 %v5245, 32
        %v5325 = vpop.permute.xlu0 %5324
        %5326 = vrot.lane.b32.xlu0 %v5257, 32
        %v5327 = vpop.permute.xlu0 %5326
        %5328 = vrot.lane.b32.xlu0 %v5269, 32
        %v5329 = vpop.permute.xlu0 %5328
        %5330 = vrot.lane.b32.xlu0 %v5281, 32
        %v5331 = vpop.permute.xlu0 %5330
        %5332 = vrot.lane.b32.xlu0 %v5293, 32
        %v5333 = vpop.permute.xlu0 %5332
        %5334 = vrot.lane.b32.xlu0 %v5305, 32
        %v5335 = vpop.permute.xlu0 %5334
        %v5366 = vrot.slane %v5094, 1
        %v5367 = vrot.slane %v5110, 1
        %v5368 = vsel %vm1164, %v5366, %v5367
        %v5369 = vrot.slane %v5095, 1
        %v5370 = vrot.slane %v5111, 1
        %v5371 = vsel %vm1164, %v5369, %v5370
        %v5372 = vrot.slane %v5096, 1
        %v5373 = vrot.slane %v5112, 1
        %v5374 = vsel %vm1164, %v5372, %v5373
        %v5375 = vrot.slane %v5097, 1
        %v5376 = vrot.slane %v5113, 1
        %v5377 = vsel %vm1164, %v5375, %v5376
        %v5378 = vrot.slane %v5098, 1
        %v5379 = vrot.slane %v5114, 1
        %v5380 = vsel %vm1164, %v5378, %v5379
        %v5381 = vrot.slane %v5099, 1
        %v5382 = vrot.slane %v5115, 1
        %v5383 = vsel %vm1164, %v5381, %v5382
        %v5384 = vrot.slane %v5100, 1
        %v5385 = vrot.slane %v5116, 1
        %v5386 = vsel %vm1164, %v5384, %v5385
        %v5387 = vrot.slane %v5101, 1
        %v5388 = vrot.slane %v5117, 1
        %v5389 = vsel %vm1164, %v5387, %v5388
        %v5390 = vrot.slane %v5102, 1
        %v5391 = vrot.slane %v5118, 1
        %v5392 = vsel %vm1164, %v5390, %v5391
        %v5393 = vrot.slane %v5103, 1
        %v5394 = vrot.slane %v5119, 1
        %v5395 = vsel %vm1164, %v5393, %v5394
        %v5396 = vrot.slane %v5104, 1
        %v5397 = vrot.slane %v5120, 1
        %v5398 = vsel %vm1164, %v5396, %v5397
        %v5399 = vrot.slane %v5105, 1
        %v5400 = vrot.slane %v5121, 1
        %v5401 = vsel %vm1164, %v5399, %v5400
        %v5402 = vrot.slane %v5106, 1
        %v5403 = vrot.slane %v5122, 1
        %v5404 = vsel %vm1164, %v5402, %v5403
        %v5405 = vrot.slane %v5107, 1
        %v5406 = vrot.slane %v5123, 1
        %v5407 = vsel %vm1164, %v5405, %v5406
        %v5408 = vrot.slane %v5108, 1
        %v5409 = vrot.slane %v5124, 1
        %v5410 = vsel %vm1164, %v5408, %v5409
        %5411 = vrot.lane.b32.xlu0 %v5368, 64
        %v5412 = vpop.permute.xlu0 %5411
        %5413 = vrot.lane.b32.xlu0 %v5371, 64
        %v5414 = vpop.permute.xlu0 %5413
        %5415 = vrot.lane.b32.xlu0 %v5374, 64
        %v5416 = vpop.permute.xlu0 %5415
        %5417 = vrot.lane.b32.xlu0 %v5377, 64
        %v5418 = vpop.permute.xlu0 %5417
        %5419 = vrot.lane.b32.xlu0 %v5380, 64
        %v5420 = vpop.permute.xlu0 %5419
        %5421 = vrot.lane.b32.xlu0 %v5383, 64
        %v5422 = vpop.permute.xlu0 %5421
        %5423 = vrot.lane.b32.xlu0 %v5386, 64
        %v5424 = vpop.permute.xlu0 %5423
        %5425 = vrot.lane.b32.xlu0 %v5389, 64
        %v5426 = vpop.permute.xlu0 %5425
        %5427 = vrot.lane.b32.xlu0 %v5392, 64
        %v5428 = vpop.permute.xlu0 %5427
        %5429 = vrot.lane.b32.xlu0 %v5395, 64
        %v5430 = vpop.permute.xlu0 %5429
        %5431 = vrot.lane.b32.xlu0 %v5398, 64
        %v5432 = vpop.permute.xlu0 %5431
        %5433 = vrot.lane.b32.xlu0 %v5401, 64
        %v5434 = vpop.permute.xlu0 %5433
        %5435 = vrot.lane.b32.xlu0 %v5404, 64
        %v5436 = vpop.permute.xlu0 %5435
        %5437 = vrot.lane.b32.xlu0 %v5407, 64
        %v5438 = vpop.permute.xlu0 %5437
        %5439 = vrot.lane.b32.xlu0 %v5410, 64
        %v5440 = vpop.permute.xlu0 %5439
        %5442 = vrot.lane.b32.xlu0 %v5094, 96
        %v5443 = vpop.permute.xlu0 %5442
        %5444 = vrot.lane.b32.xlu0 %v5095, 96
        %v5445 = vpop.permute.xlu0 %5444
        %5446 = vrot.lane.b32.xlu0 %v5096, 96
        %v5447 = vpop.permute.xlu0 %5446
        %5448 = vrot.lane.b32.xlu0 %v5097, 96
        %v5449 = vpop.permute.xlu0 %5448
        %5450 = vrot.lane.b32.xlu0 %v5098, 96
        %v5451 = vpop.permute.xlu0 %5450
        %5452 = vrot.lane.b32.xlu0 %v5099, 96
        %v5453 = vpop.permute.xlu0 %5452
        %5454 = vrot.lane.b32.xlu0 %v5100, 96
        %v5455 = vpop.permute.xlu0 %5454
        %5456 = vrot.lane.b32.xlu0 %v5101, 96
        %v5457 = vpop.permute.xlu0 %5456
        %5458 = vrot.lane.b32.xlu0 %v5102, 96
        %v5459 = vpop.permute.xlu0 %5458
        %5460 = vrot.lane.b32.xlu0 %v5103, 96
        %v5461 = vpop.permute.xlu0 %5460
        %5462 = vrot.lane.b32.xlu0 %v5104, 96
        %v5463 = vpop.permute.xlu0 %5462
        %5464 = vrot.lane.b32.xlu0 %v5105, 96
        %v5465 = vpop.permute.xlu0 %5464
        %5466 = vrot.lane.b32.xlu0 %v5106, 96
        %v5467 = vpop.permute.xlu0 %5466
        %5468 = vrot.lane.b32.xlu0 %v5107, 96
        %v5469 = vpop.permute.xlu0 %5468
        %5470 = vrot.lane.b32.xlu0 %v5108, 96
        %v5471 = vpop.permute.xlu0 %5470
        %5472 = vrot.lane.b32.xlu0 %v5109, 96
        %v5473 = vpop.permute.xlu0 %5472
        %v5475 = vshrl.u32 %v5109, 16
        %v5477 = vshll.u32 %v5109, 16
        %v5479 = vrot.slane %v5477, 1
        %v5480 = vor.u32 %v5475, %v5479
        %v5482 = vshll.u32 %v5125, 16
        %v5484 = vrot.slane %v5482, 1
        %v5485 = vsel %vm907, %v5480, %v5484
        %v5487 = vrot.slane %v5109, 1
        %v5488 = vrot.slane %v5125, 1
        %v5489 = vsel %vm1164, %v5487, %v5488
        %5490 = vrot.lane.b32.xlu0 %v5368, 32
        %v5491 = vpop.permute.xlu0 %5490
        %5492 = vrot.lane.b32.xlu0 %v5371, 32
        %v5493 = vpop.permute.xlu0 %5492
        %5494 = vrot.lane.b32.xlu0 %v5374, 32
        %v5495 = vpop.permute.xlu0 %5494
        %5496 = vrot.lane.b32.xlu0 %v5377, 32
        %v5497 = vpop.permute.xlu0 %5496
        %5498 = vrot.lane.b32.xlu0 %v5380, 32
        %v5499 = vpop.permute.xlu0 %5498
        %5500 = vrot.lane.b32.xlu0 %v5383, 32
        %v5501 = vpop.permute.xlu0 %5500
        %5502 = vrot.lane.b32.xlu0 %v5386, 32
        %v5503 = vpop.permute.xlu0 %5502
        %5504 = vrot.lane.b32.xlu0 %v5389, 32
        %v5505 = vpop.permute.xlu0 %5504
        %5506 = vrot.lane.b32.xlu0 %v5392, 32
        %v5507 = vpop.permute.xlu0 %5506
        %5508 = vrot.lane.b32.xlu0 %v5395, 32
        %v5509 = vpop.permute.xlu0 %5508
        %5510 = vrot.lane.b32.xlu0 %v5398, 32
        %v5511 = vpop.permute.xlu0 %5510
        %5512 = vrot.lane.b32.xlu0 %v5401, 32
        %v5513 = vpop.permute.xlu0 %5512
        %5514 = vrot.lane.b32.xlu0 %v5404, 32
        %v5515 = vpop.permute.xlu0 %5514
        %5516 = vrot.lane.b32.xlu0 %v5407, 32
        %v5517 = vpop.permute.xlu0 %5516
        %5518 = vrot.lane.b32.xlu0 %v5410, 32
        %v5519 = vpop.permute.xlu0 %5518
        %5520 = vrot.lane.b32.xlu0 %v5489, 32
        %v5521 = vpop.permute.xlu0 %5520
        %5522 = vrot.lane.b32.xlu0 %v5095, 64
        %v5523 = vpop.permute.xlu0 %5522
        %5524 = vrot.lane.b32.xlu0 %v5096, 64
        %v5525 = vpop.permute.xlu0 %5524
        %5526 = vrot.lane.b32.xlu0 %v5097, 64
        %v5527 = vpop.permute.xlu0 %5526
        %5528 = vrot.lane.b32.xlu0 %v5098, 64
        %v5529 = vpop.permute.xlu0 %5528
        %5530 = vrot.lane.b32.xlu0 %v5099, 64
        %v5531 = vpop.permute.xlu0 %5530
        %5532 = vrot.lane.b32.xlu0 %v5100, 64
        %v5533 = vpop.permute.xlu0 %5532
        %5534 = vrot.lane.b32.xlu0 %v5101, 64
        %v5535 = vpop.permute.xlu0 %5534
        %5536 = vrot.lane.b32.xlu0 %v5102, 64
        %v5537 = vpop.permute.xlu0 %5536
        %5538 = vrot.lane.b32.xlu0 %v5103, 64
        %v5539 = vpop.permute.xlu0 %5538
        %5540 = vrot.lane.b32.xlu0 %v5104, 64
        %v5541 = vpop.permute.xlu0 %5540
        %5542 = vrot.lane.b32.xlu0 %v5105, 64
        %v5543 = vpop.permute.xlu0 %5542
        %5544 = vrot.lane.b32.xlu0 %v5106, 64
        %v5545 = vpop.permute.xlu0 %5544
        %5546 = vrot.lane.b32.xlu0 %v5107, 64
        %v5547 = vpop.permute.xlu0 %5546
        %5548 = vrot.lane.b32.xlu0 %v5108, 64
        %v5549 = vpop.permute.xlu0 %5548
        %5550 = vrot.lane.b32.xlu0 %v5109, 64
        %v5551 = vpop.permute.xlu0 %5550
        %5552 = vrot.lane.b32.xlu0 %v5149, 96
        %v5553 = vpop.permute.xlu0 %5552
        %5554 = vrot.lane.b32.xlu0 %v5161, 96
        %v5555 = vpop.permute.xlu0 %5554
        %5556 = vrot.lane.b32.xlu0 %v5173, 96
        %v5557 = vpop.permute.xlu0 %5556
        %5558 = vrot.lane.b32.xlu0 %v5185, 96
        %v5559 = vpop.permute.xlu0 %5558
        %5560 = vrot.lane.b32.xlu0 %v5197, 96
        %v5561 = vpop.permute.xlu0 %5560
        %5562 = vrot.lane.b32.xlu0 %v5209, 96
        %v5563 = vpop.permute.xlu0 %5562
        %5564 = vrot.lane.b32.xlu0 %v5221, 96
        %v5565 = vpop.permute.xlu0 %5564
        %5566 = vrot.lane.b32.xlu0 %v5233, 96
        %v5567 = vpop.permute.xlu0 %5566
        %5568 = vrot.lane.b32.xlu0 %v5245, 96
        %v5569 = vpop.permute.xlu0 %5568
        %5570 = vrot.lane.b32.xlu0 %v5257, 96
        %v5571 = vpop.permute.xlu0 %5570
        %5572 = vrot.lane.b32.xlu0 %v5269, 96
        %v5573 = vpop.permute.xlu0 %5572
        %5574 = vrot.lane.b32.xlu0 %v5281, 96
        %v5575 = vpop.permute.xlu0 %5574
        %5576 = vrot.lane.b32.xlu0 %v5293, 96
        %v5577 = vpop.permute.xlu0 %5576
        %5578 = vrot.lane.b32.xlu0 %v5305, 96
        %v5579 = vpop.permute.xlu0 %5578
        %5580 = vrot.lane.b32.xlu0 %v5485, 96
        %v5581 = vpop.permute.xlu0 %5580
        %v5583 = vsel %vm1553, %v5094, %v5307
        %v5585 = vsel %vm1553, %v5095, %v5309
        %v5587 = vsel %vm1553, %v5096, %v5311
        %v5589 = vsel %vm1553, %v5097, %v5313
        %v5591 = vsel %vm1553, %v5098, %v5315
        %v5593 = vsel %vm1553, %v5099, %v5317
        %v5595 = vsel %vm1553, %v5100, %v5319
        %v5597 = vsel %vm1553, %v5101, %v5321
        %v5599 = vsel %vm1553, %v5102, %v5323
        %v5601 = vsel %vm1553, %v5103, %v5325
        %v5603 = vsel %vm1553, %v5104, %v5327
        %v5605 = vsel %vm1553, %v5105, %v5329
        %v5607 = vsel %vm1553, %v5106, %v5331
        %v5609 = vsel %vm1553, %v5107, %v5333
        %v5611 = vsel %vm1553, %v5108, %v5335
        %v5613 = vsel %vm1685, %v5583, %v5412
        %v5615 = vsel %vm1685, %v5585, %v5414
        %v5617 = vsel %vm1685, %v5587, %v5416
        %v5619 = vsel %vm1685, %v5589, %v5418
        %v5621 = vsel %vm1685, %v5591, %v5420
        %v5623 = vsel %vm1685, %v5593, %v5422
        %v5625 = vsel %vm1685, %v5595, %v5424
        %v5627 = vsel %vm1685, %v5597, %v5426
        %v5629 = vsel %vm1685, %v5599, %v5428
        %v5631 = vsel %vm1685, %v5601, %v5430
        %v5633 = vsel %vm1685, %v5603, %v5432
        %v5635 = vsel %vm1685, %v5605, %v5434
        %v5637 = vsel %vm1685, %v5607, %v5436
        %v5639 = vsel %vm1685, %v5609, %v5438
        %v5641 = vsel %vm1685, %v5611, %v5440
        %v5643 = vsel %vm2708, %v2677, %v5443
        %v5646 = vsel %vm2708, %v5613, %v5445
        %v5649 = vsel %vm2708, %v5615, %v5447
        %v5652 = vsel %vm2708, %v5617, %v5449
        %v5655 = vsel %vm2708, %v5619, %v5451
        %v5658 = vsel %vm2708, %v5621, %v5453
        %v5661 = vsel %vm2708, %v5623, %v5455
        %v5664 = vsel %vm2708, %v5625, %v5457
        %v5667 = vsel %vm2708, %v5627, %v5459
        %v5670 = vsel %vm2708, %v5629, %v5461
        %v5673 = vsel %vm2708, %v5631, %v5463
        %v5676 = vsel %vm2708, %v5633, %v5465
        %v5679 = vsel %vm2708, %v5635, %v5467
        %v5682 = vsel %vm2708, %v5637, %v5469
        %v5685 = vsel %vm2708, %v5639, %v5471
        %v5688 = vsel %vm2708, %v5641, %v5473
        %v5692 = vsel %vm1553, %v5137, %v5491
        %v5695 = vsel %vm1553, %v5149, %v5493
        %v5698 = vsel %vm1553, %v5161, %v5495
        %v5701 = vsel %vm1553, %v5173, %v5497
        %v5704 = vsel %vm1553, %v5185, %v5499
        %v5707 = vsel %vm1553, %v5197, %v5501
        %v5710 = vsel %vm1553, %v5209, %v5503
        %v5713 = vsel %vm1553, %v5221, %v5505
        %v5716 = vsel %vm1553, %v5233, %v5507
        %v5719 = vsel %vm1553, %v5245, %v5509
        %v5722 = vsel %vm1553, %v5257, %v5511
        %v5725 = vsel %vm1553, %v5269, %v5513
        %v5728 = vsel %vm1553, %v5281, %v5515
        %v5731 = vsel %vm1553, %v5293, %v5517
        %v5734 = vsel %vm1553, %v5305, %v5519
        %v5737 = vsel %vm1553, %v5485, %v5521
        %v5739 = vsel %vm1685, %v5692, %v5523
        %v5741 = vsel %vm1685, %v5695, %v5525
        %v5743 = vsel %vm1685, %v5698, %v5527
        %v5745 = vsel %vm1685, %v5701, %v5529
        %v5747 = vsel %vm1685, %v5704, %v5531
        %v5749 = vsel %vm1685, %v5707, %v5533
        %v5751 = vsel %vm1685, %v5710, %v5535
        %v5753 = vsel %vm1685, %v5713, %v5537
        %v5755 = vsel %vm1685, %v5716, %v5539
        %v5757 = vsel %vm1685, %v5719, %v5541
        %v5759 = vsel %vm1685, %v5722, %v5543
        %v5761 = vsel %vm1685, %v5725, %v5545
        %v5763 = vsel %vm1685, %v5728, %v5547
        %v5765 = vsel %vm1685, %v5731, %v5549
        %v5767 = vsel %vm1685, %v5734, %v5551
        %v5768 = vsel %vm1685, %v5737, %v2612
        %v5770 = vsel %vm2708, %v5739, %v5553
        %v5773 = vsel %vm2708, %v5741, %v5555
        %v5776 = vsel %vm2708, %v5743, %v5557
        %v5779 = vsel %vm2708, %v5745, %v5559
        %v5782 = vsel %vm2708, %v5747, %v5561
        %v5785 = vsel %vm2708, %v5749, %v5563
        %v5788 = vsel %vm2708, %v5751, %v5565
        %v5791 = vsel %vm2708, %v5753, %v5567
        %v5794 = vsel %vm2708, %v5755, %v5569
        %v5797 = vsel %vm2708, %v5757, %v5571
        %v5800 = vsel %vm2708, %v5759, %v5573
        %v5803 = vsel %vm2708, %v5761, %v5575
        %v5806 = vsel %vm2708, %v5763, %v5577
        %v5809 = vsel %vm2708, %v5765, %v5579
        %v5812 = vsel %vm2708, %v5767, %v5581
        %v5814 = vsel %vm2708, %v5768, %v2644
        %v5816 = vld [vmem:[%s5] sm:$0xf]
        %v5817 = vld [vmem:[%s5 + $0x4] sm:$0xf]
        %v5818 = vld [vmem:[%s5 + $0x8] sm:$0xf]
        %v5819 = vld [vmem:[%s5 + $0xc] sm:$0xf]
        %v5820 = vld [vmem:[%s5 + $0x10] sm:$0xf]
        %v5821 = vld [vmem:[%s5 + $0x14] sm:$0xf]
        %v5822 = vld [vmem:[%s5 + $0x18] sm:$0xf]
        %v5823 = vld [vmem:[%s5 + $0x1c] sm:$0xf]
        %v5824 = vld [vmem:[%s5 + $0x20] sm:$0xf]
        %v5825 = vld [vmem:[%s5 + $0x24] sm:$0xf]
        %v5826 = vld [vmem:[%s5 + $0x28] sm:$0xf]
        %v5827 = vld [vmem:[%s5 + $0x2c] sm:$0xf]
        %v5828 = vld [vmem:[%s5 + $0x30] sm:$0xf]
        %v5829 = vld [vmem:[%s5 + $0x34] sm:$0xf]
        %v5830 = vld [vmem:[%s5 + $0x38] sm:$0xf]
        %v5831 = vld [vmem:[%s5 + $0x3c] sm:$0xf]
        %v5832 = vld [vmem:[%s5 + $0x40] sm:$0xf]
        %v5833 = vld [vmem:[%s5 + $0x44] sm:$0xf]
        %v5834 = vld [vmem:[%s5 + $0x48] sm:$0xf]
        %v5835 = vld [vmem:[%s5 + $0x4c] sm:$0xf]
        %v5836 = vld [vmem:[%s5 + $0x50] sm:$0xf]
        %v5837 = vld [vmem:[%s5 + $0x54] sm:$0xf]
        %v5838 = vld [vmem:[%s5 + $0x58] sm:$0xf]
        %v5839 = vld [vmem:[%s5 + $0x5c] sm:$0xf]
        %v5840 = vld [vmem:[%s5 + $0x60] sm:$0xf]
        %v5841 = vld [vmem:[%s5 + $0x64] sm:$0xf]
        %v5842 = vld [vmem:[%s5 + $0x68] sm:$0xf]
        %v5843 = vld [vmem:[%s5 + $0x6c] sm:$0xf]
        %v5844 = vld [vmem:[%s5 + $0x70] sm:$0xf]
        %v5845 = vld [vmem:[%s5 + $0x74] sm:$0xf]
        %v5846 = vld [vmem:[%s5 + $0x78] sm:$0xf]
        %v5847 = vld [vmem:[%s5 + $0x7c] sm:$0xf]
        %v5848 = vld [vmem:[%s5 + $0x80] sm:$0xf]
        %v5849 = vld [vmem:[%s5 + $0x84] sm:$0xf]
        %v5850 = vld [vmem:[%s5 + $0x88] sm:$0xf]
        %v5851 = vld [vmem:[%s5 + $0x8c] sm:$0xf]
        %v5888 = vunpack.c.l.b16 %v5816
        %v5889 = vunpack.c.l.b16 %v5817
        %v5890 = vunpack.c.l.b16 %v5818
        %v5891 = vunpack.c.l.b16 %v5819
        %v5892 = vunpack.c.l.b16 %v5820
        %v5893 = vunpack.c.l.b16 %v5821
        %v5894 = vunpack.c.l.b16 %v5822
        %v5895 = vunpack.c.l.b16 %v5823
        %v5896 = vunpack.c.l.b16 %v5824
        %v5897 = vunpack.c.l.b16 %v5825
        %v5898 = vunpack.c.l.b16 %v5826
        %v5899 = vunpack.c.l.b16 %v5827
        %v5900 = vunpack.c.l.b16 %v5828
        %v5901 = vunpack.c.l.b16 %v5829
        %v5902 = vunpack.c.l.b16 %v5830
        %v5903 = vunpack.c.l.b16 %v5831
        %v5904 = vunpack.c.l.b16 %v5832
        %v5905 = vunpack.c.l.b16 %v5833
        %v5906 = vunpack.c.l.b16 %v5834
        %v5907 = vunpack.c.l.b16 %v5835
        %v5908 = vunpack.c.l.b16 %v5836
        %v5909 = vunpack.c.l.b16 %v5837
        %v5910 = vunpack.c.l.b16 %v5838
        %v5911 = vunpack.c.l.b16 %v5839
        %v5912 = vunpack.c.l.b16 %v5840
        %v5913 = vunpack.c.l.b16 %v5841
        %v5914 = vunpack.c.l.b16 %v5842
        %v5915 = vunpack.c.l.b16 %v5843
        %v5916 = vunpack.c.l.b16 %v5844
        %v5917 = vunpack.c.l.b16 %v5845
        %v5918 = vunpack.c.l.b16 %v5846
        %v5919 = vunpack.c.l.b16 %v5847
        %v5920 = vunpack.c.l.b16 %v5848
        %v5921 = vunpack.c.l.b16 %v5849
        %v5922 = vunpack.c.l.b16 %v5850
        %v5923 = vunpack.c.l.b16 %v5851
        %v5924 = vpack.c.b16 %v5889, %v5888
        %v5925 = vpack.c.b16 %v5891, %v5890
        %v5926 = vpack.c.b16 %v5893, %v5892
        %v5927 = vpack.c.b16 %v5895, %v5894
        %v5928 = vpack.c.b16 %v5897, %v5896
        %v5929 = vpack.c.b16 %v5899, %v5898
        %v5930 = vpack.c.b16 %v5901, %v5900
        %v5931 = vpack.c.b16 %v5903, %v5902
        %v5932 = vpack.c.b16 %v5905, %v5904
        %v5933 = vpack.c.b16 %v5907, %v5906
        %v5934 = vpack.c.b16 %v5909, %v5908
        %v5935 = vpack.c.b16 %v5911, %v5910
        %v5936 = vpack.c.b16 %v5913, %v5912
        %v5937 = vpack.c.b16 %v5915, %v5914
        %v5938 = vpack.c.b16 %v5917, %v5916
        %v5939 = vpack.c.b16 %v5919, %v5918
        %v5940 = vpack.c.b16 %v5921, %v5920
        %v5941 = vpack.c.b16 %v5923, %v5922
        %v5961 = vsel %vm1553, %v5371, 0
        %v5964 = vsel %vm1553, %v5374, 0
        %v5967 = vsel %vm1553, %v5377, 0
        %v5970 = vsel %vm1553, %v5380, 0
        %v5973 = vsel %vm1553, %v5383, 0
        %v5976 = vsel %vm1553, %v5386, 0
        %v5979 = vsel %vm1553, %v5389, 0
        %v5982 = vsel %vm1553, %v5392, 0
        %v5985 = vsel %vm1553, %v5395, 0
        %v5988 = vsel %vm1553, %v5398, 0
        %v5991 = vsel %vm1553, %v5401, 0
        %v5994 = vsel %vm1553, %v5404, 0
        %v5997 = vsel %vm1553, %v5407, 0
        %v6000 = vsel %vm1553, %v5410, 0
        %v6003 = vsel %vm1553, %v5489, 0
        %6005 = vmatprep.subr.bf16.mxu0 0
        %6006 = vmatpush1.bf16.msra.mxu0 %v5924
        %6007 = vmatprep.subr.bf16.mxu0 0
        %6008 = vmatpush1.bf16.msra.mxu0 %v5925
        %6009 = vmatprep.subr.bf16.mxu0 0
        %6010 = vmatpush1.bf16.msra.mxu0 %v5926
        %6011 = vmatprep.subr.bf16.mxu0 0
        %6012 = vmatpush1.bf16.msra.mxu0 %v5927
        %6013 = vmatprep.subr.bf16.mxu0 0
        %6014 = vmatpush1.bf16.msra.mxu0 %v5928
        %6015 = vmatprep.subr.bf16.mxu0 0
        %6016 = vmatpush1.bf16.msra.mxu0 %v5929
        %6017 = vmatprep.subr.bf16.mxu0 0
        %6018 = vmatpush1.bf16.msra.mxu0 %v5930
        %6019 = vmatprep.subr.bf16.mxu0 0
        %6020 = vmatpush1.bf16.msra.mxu0 %v5931
        %6021 = vmatprep.subr.bf16.mxu0 0
        %6022 = vmatpush1.bf16.msra.mxu0 %v5932
        %6023 = vmatprep.subr.bf16.mxu0 0
        %6024 = vmatpush1.bf16.msra.mxu0 %v5933
        %6025 = vmatprep.subr.bf16.mxu0 0
        %6026 = vmatpush1.bf16.msra.mxu0 %v5934
        %6027 = vmatprep.subr.bf16.mxu0 0
        %6028 = vmatpush1.bf16.msra.mxu0 %v5935
        %6029 = vmatprep.subr.bf16.mxu0 0
        %6030 = vmatpush1.bf16.msra.mxu0 %v5936
        %6031 = vmatprep.subr.bf16.mxu0 0
        %6032 = vmatpush1.bf16.msra.mxu0 %v5937
        %6033 = vmatprep.subr.bf16.mxu0 0
        %6034 = vmatpush1.bf16.msra.mxu0 %v5938
        %6035 = vmatprep.subr.bf16.mxu0 0
        %6036 = vmatpush1.bf16.msra.mxu0 %v5939
        %6037 = vmatprep.mubr.bf16.mxu0 %v5770
        %6038 = vmatmul.mubr.bf16.gmra.mrb[0].mxu0 %v5643
        %v6039 = vpop.f32.mrb[0].mxu0
        %v6040 = vadd.f32 0.0, %v6039
        %v6041 = vpop.f32.mrb[0].mxu0
        %v6042 = vpop.f32.mrb[0].mxu0
        %v6043 = vadd.f32 0.0, %v6042
        %v6044 = vpop.f32.mrb[0].mxu0
        %6045 = vmatprep.mubr.bf16.mxu0 %v5773
        %6046 = vmatmul.mubr.bf16.gmra.mrb[0].mxu0 %v5646
        %v6047 = vpop.f32.mrb[0].mxu0
        %v6048 = vadd.f32 0.0, %v6047
        %v6049 = vpop.f32.mrb[0].mxu0
        %v6050 = vpop.f32.mrb[0].mxu0
        %v6051 = vadd.f32 0.0, %v6050
        %v6052 = vpop.f32.mrb[0].mxu0
        %6053 = vmatprep.mubr.bf16.mxu0 %v5776
        %6054 = vmatmul.mubr.bf16.gmra.mrb[0].mxu0 %v5649
        %v6055 = vpop.f32.mrb[0].mxu0
        %v6056 = vadd.f32 0.0, %v6055
        %v6057 = vpop.f32.mrb[0].mxu0
        %v6058 = vpop.f32.mrb[0].mxu0
        %v6059 = vadd.f32 0.0, %v6058
        %v6060 = vpop.f32.mrb[0].mxu0
        %6061 = vmatprep.mubr.bf16.mxu0 %v5779
        %6062 = vmatmul.mubr.bf16.gmra.mrb[0].mxu0 %v5652
        %v6063 = vpop.f32.mrb[0].mxu0
        %v6064 = vadd.f32 0.0, %v6063
        %v6065 = vpop.f32.mrb[0].mxu0
        %v6066 = vpop.f32.mrb[0].mxu0
        %v6067 = vadd.f32 0.0, %v6066
        %v6068 = vpop.f32.mrb[0].mxu0
        %6069 = vmatprep.mubr.bf16.mxu0 %v5782
        %6070 = vmatmul.mubr.bf16.gmra.mrb[0].mxu0 %v5655
        %v6071 = vpop.f32.mrb[0].mxu0
        %v6072 = vadd.f32 0.0, %v6071
        %v6073 = vpop.f32.mrb[0].mxu0
        %v6074 = vpop.f32.mrb[0].mxu0
        %v6075 = vadd.f32 0.0, %v6074
        %v6076 = vpop.f32.mrb[0].mxu0
        %6077 = vmatprep.mubr.bf16.mxu0 %v5785
        %6078 = vmatmul.mubr.bf16.gmra.mrb[0].mxu0 %v5658
        %v6079 = vpop.f32.mrb[0].mxu0
        %v6080 = vadd.f32 0.0, %v6079
        %v6081 = vpop.f32.mrb[0].mxu0
        %v6082 = vpop.f32.mrb[0].mxu0
        %v6083 = vadd.f32 0.0, %v6082
        %v6084 = vpop.f32.mrb[0].mxu0
        %6085 = vmatprep.mubr.bf16.mxu0 %v5788
        %6086 = vmatmul.mubr.bf16.gmra.mrb[0].mxu0 %v5661
        %v6087 = vpop.f32.mrb[0].mxu0
        %v6088 = vadd.f32 0.0, %v6087
        %v6089 = vpop.f32.mrb[0].mxu0
        %v6090 = vpop.f32.mrb[0].mxu0
        %v6091 = vadd.f32 0.0, %v6090
        %v6092 = vpop.f32.mrb[0].mxu0
        %6093 = vmatprep.mubr.bf16.mxu0 %v5791
        %6094 = vmatmul.mubr.bf16.gmra.mrb[0].mxu0 %v5664
        %v6095 = vpop.f32.mrb[0].mxu0
        %v6096 = vadd.f32 0.0, %v6095
        %v6097 = vpop.f32.mrb[0].mxu0
        %v6098 = vpop.f32.mrb[0].mxu0
        %v6099 = vadd.f32 0.0, %v6098
        %v6100 = vpop.f32.mrb[0].mxu0
        %6101 = vmatprep.mubr.bf16.mxu0 %v5794
        %6102 = vmatmul.mubr.bf16.gmra.mrb[0].mxu0 %v5667
        %v6103 = vpop.f32.mrb[0].mxu0
        %v6104 = vadd.f32 0.0, %v6103
        %v6105 = vpop.f32.mrb[0].mxu0
        %v6106 = vpop.f32.mrb[0].mxu0
        %v6107 = vadd.f32 0.0, %v6106
        %v6108 = vpop.f32.mrb[0].mxu0
        %6109 = vmatprep.mubr.bf16.mxu0 %v5797
        %6110 = vmatmul.mubr.bf16.gmra.mrb[0].mxu0 %v5670
        %v6111 = vpop.f32.mrb[0].mxu0
        %v6112 = vadd.f32 0.0, %v6111
        %v6113 = vpop.f32.mrb[0].mxu0
        %v6114 = vpop.f32.mrb[0].mxu0
        %v6115 = vadd.f32 0.0, %v6114
        %v6116 = vpop.f32.mrb[0].mxu0
        %6117 = vmatprep.mubr.bf16.mxu0 %v5800
        %6118 = vmatmul.mubr.bf16.gmra.mrb[0].mxu0 %v5673
        %v6119 = vpop.f32.mrb[0].mxu0
        %v6120 = vadd.f32 0.0, %v6119
        %v6121 = vpop.f32.mrb[0].mxu0
        %v6122 = vpop.f32.mrb[0].mxu0
        %v6123 = vadd.f32 0.0, %v6122
        %v6124 = vpop.f32.mrb[0].mxu0
        %6125 = vmatprep.mubr.bf16.mxu0 %v5803
        %6126 = vmatmul.mubr.bf16.gmra.mrb[0].mxu0 %v5676
        %v6127 = vpop.f32.mrb[0].mxu0
        %v6128 = vadd.f32 0.0, %v6127
        %v6129 = vpop.f32.mrb[0].mxu0
        %v6130 = vpop.f32.mrb[0].mxu0
        %v6131 = vadd.f32 0.0, %v6130
        %v6132 = vpop.f32.mrb[0].mxu0
        %6133 = vmatprep.mubr.bf16.mxu0 %v5806
        %6134 = vmatmul.mubr.bf16.gmra.mrb[0].mxu0 %v5679
        %v6135 = vpop.f32.mrb[0].mxu0
        %v6136 = vadd.f32 0.0, %v6135
        %v6137 = vpop.f32.mrb[0].mxu0
        %v6138 = vpop.f32.mrb[0].mxu0
        %v6139 = vadd.f32 0.0, %v6138
        %v6140 = vpop.f32.mrb[0].mxu0
        %6141 = vmatprep.mubr.bf16.mxu0 %v5809
        %6142 = vmatmul.mubr.bf16.gmra.mrb[0].mxu0 %v5682
        %v6143 = vpop.f32.mrb[0].mxu0
        %v6144 = vadd.f32 0.0, %v6143
        %v6145 = vpop.f32.mrb[0].mxu0
        %v6146 = vpop.f32.mrb[0].mxu0
        %v6147 = vadd.f32 0.0, %v6146
        %v6148 = vpop.f32.mrb[0].mxu0
        %6149 = vmatprep.mubr.bf16.mxu0 %v5812
        %6150 = vmatmul.mubr.bf16.gmra.mrb[0].mxu0 %v5685
        %v6151 = vpop.f32.mrb[0].mxu0
        %v6152 = vadd.f32 0.0, %v6151
        %v6153 = vpop.f32.mrb[0].mxu0
        %v6154 = vpop.f32.mrb[0].mxu0
        %v6155 = vadd.f32 0.0, %v6154
        %v6156 = vpop.f32.mrb[0].mxu0
        %6157 = vmatprep.mubr.bf16.mxu0 %v5814
        %6158 = vmatmul.mubr.bf16.gmra.mrb[0].mxu0 %v5688
        %v6159 = vpop.f32.mrb[0].mxu0
        %v6160 = vadd.f32 0.0, %v6159
        %v6161 = vpop.f32.mrb[0].mxu0
        %v6162 = vpop.f32.mrb[0].mxu0
        %v6163 = vadd.f32 0.0, %v6162
        %v6164 = vpop.f32.mrb[0].mxu0
        %6165 = vdwg.mxu0
        %6166 = vmatprep.subr.bf16.mxu0 0
        %6167 = vmatpush1.bf16.msra.mxu0 %v5940
        %6168 = vmatprep.subr.bf16.mxu0 0
        %6169 = vmatpush1.bf16.msra.mxu0 %v5941
        %6170 = vmatprep.subr.bf16.mxu0 0
        %6171 = vmatpush1.bf16.msra.mxu0 0
        %6172 = vmatprep.subr.bf16.mxu0 0
        %6173 = vmatpush1.bf16.msra.mxu0 0
        %6174 = vmatprep.subr.bf16.mxu0 0
        %6175 = vmatpush1.bf16.msra.mxu0 0
        %6176 = vmatprep.subr.bf16.mxu0 0
        %6177 = vmatpush1.bf16.msra.mxu0 0
        %6178 = vmatprep.subr.bf16.mxu0 0
        %6179 = vmatpush1.bf16.msra.mxu0 0
        %6180 = vmatprep.subr.bf16.mxu0 0
        %6181 = vmatpush1.bf16.msra.mxu0 0
        %6182 = vmatprep.subr.bf16.mxu0 0
        %6183 = vmatpush1.bf16.msra.mxu0 0
        %6184 = vmatprep.subr.bf16.mxu0 0
        %6185 = vmatpush1.bf16.msra.mxu0 0
        %6186 = vmatprep.subr.bf16.mxu0 0
        %6187 = vmatpush1.bf16.msra.mxu0 0
        %6188 = vmatprep.subr.bf16.mxu0 0
        %6189 = vmatpush1.bf16.msra.mxu0 0
        %6190 = vmatprep.subr.bf16.mxu0 0
        %6191 = vmatpush1.bf16.msra.mxu0 0
        %6192 = vmatprep.subr.bf16.mxu0 0
        %6193 = vmatpush1.bf16.msra.mxu0 0
        %6194 = vmatprep.subr.bf16.mxu0 0
        %6195 = vmatpush1.bf16.msra.mxu0 0
        %6196 = vmatprep.subr.bf16.mxu0 0
        %6197 = vmatpush1.bf16.msra.mxu0 0
        %6198 = vmatprep.mubr.bf16.mxu0 0
        %6199 = vmatmul.mubr.bf16.gmra.mrb[0].mxu0 %v5961
        %v6200 = vpop.f32.mrb[0].mxu0
        %v6201 = vadd.f32 %v6040, %v6200
        %v6202 = vpop.f32.mrb[0].mxu0
        %v6203 = vpop.f32.mrb[0].mxu0
        %v6204 = vadd.f32 %v6043, %v6203
        %v6205 = vpop.f32.mrb[0].mxu0
        %6206 = vmatprep.mubr.bf16.mxu0 0
        %6207 = vmatmul.mubr.bf16.gmra.mrb[0].mxu0 %v5964
        %v6208 = vpop.f32.mrb[0].mxu0
        %v6209 = vadd.f32 %v6048, %v6208
        %v6210 = vpop.f32.mrb[0].mxu0
        %v6211 = vpop.f32.mrb[0].mxu0
        %v6212 = vadd.f32 %v6051, %v6211
        %v6213 = vpop.f32.mrb[0].mxu0
        %6214 = vmatprep.mubr.bf16.mxu0 0
        %6215 = vmatmul.mubr.bf16.gmra.mrb[0].mxu0 %v5967
        %v6216 = vpop.f32.mrb[0].mxu0
        %v6217 = vadd.f32 %v6056, %v6216
        %v6218 = vpop.f32.mrb[0].mxu0
        %v6219 = vpop.f32.mrb[0].mxu0
        %v6220 = vadd.f32 %v6059, %v6219
        %v6221 = vpop.f32.mrb[0].mxu0
        %6222 = vmatprep.mubr.bf16.mxu0 0
        %6223 = vmatmul.mubr.bf16.gmra.mrb[0].mxu0 %v5970
        %v6224 = vpop.f32.mrb[0].mxu0
        %v6225 = vadd.f32 %v6064, %v6224
        %v6226 = vpop.f32.mrb[0].mxu0
        %v6227 = vpop.f32.mrb[0].mxu0
        %v6228 = vadd.f32 %v6067, %v6227
        %v6229 = vpop.f32.mrb[0].mxu0
        %6230 = vmatprep.mubr.bf16.mxu0 0
        %6231 = vmatmul.mubr.bf16.gmra.mrb[0].mxu0 %v5973
        %v6232 = vpop.f32.mrb[0].mxu0
        %v6233 = vadd.f32 %v6072, %v6232
        %v6234 = vpop.f32.mrb[0].mxu0
        %v6235 = vpop.f32.mrb[0].mxu0
        %v6236 = vadd.f32 %v6075, %v6235
        %v6237 = vpop.f32.mrb[0].mxu0
        %6238 = vmatprep.mubr.bf16.mxu0 0
        %6239 = vmatmul.mubr.bf16.gmra.mrb[0].mxu0 %v5976
        %v6240 = vpop.f32.mrb[0].mxu0
        %v6241 = vadd.f32 %v6080, %v6240
        %v6242 = vpop.f32.mrb[0].mxu0
        %v6243 = vpop.f32.mrb[0].mxu0
        %v6244 = vadd.f32 %v6083, %v6243
        %v6245 = vpop.f32.mrb[0].mxu0
        %6246 = vmatprep.mubr.bf16.mxu0 0
        %6247 = vmatmul.mubr.bf16.gmra.mrb[0].mxu0 %v5979
        %v6248 = vpop.f32.mrb[0].mxu0
        %v6249 = vadd.f32 %v6088, %v6248
        %v6250 = vpop.f32.mrb[0].mxu0
        %v6251 = vpop.f32.mrb[0].mxu0
        %v6252 = vadd.f32 %v6091, %v6251
        %v6253 = vpop.f32.mrb[0].mxu0
        %6254 = vmatprep.mubr.bf16.mxu0 0
        %6255 = vmatmul.mubr.bf16.gmra.mrb[0].mxu0 %v5982
        %v6256 = vpop.f32.mrb[0].mxu0
        %v6257 = vadd.f32 %v6096, %v6256
        %v6258 = vpop.f32.mrb[0].mxu0
        %v6259 = vpop.f32.mrb[0].mxu0
        %v6260 = vadd.f32 %v6099, %v6259
        %v6261 = vpop.f32.mrb[0].mxu0
        %6262 = vmatprep.mubr.bf16.mxu0 0
        %6263 = vmatmul.mubr.bf16.gmra.mrb[0].mxu0 %v5985
        %v6264 = vpop.f32.mrb[0].mxu0
        %v6265 = vadd.f32 %v6104, %v6264
        %v6266 = vpop.f32.mrb[0].mxu0
        %v6267 = vpop.f32.mrb[0].mxu0
        %v6268 = vadd.f32 %v6107, %v6267
        %v6269 = vpop.f32.mrb[0].mxu0
        %6270 = vmatprep.mubr.bf16.mxu0 0
        %6271 = vmatmul.mubr.bf16.gmra.mrb[0].mxu0 %v5988
        %v6272 = vpop.f32.mrb[0].mxu0
        %v6273 = vadd.f32 %v6112, %v6272
        %v6274 = vpop.f32.mrb[0].mxu0
        %v6275 = vpop.f32.mrb[0].mxu0
        %v6276 = vadd.f32 %v6115, %v6275
        %v6277 = vpop.f32.mrb[0].mxu0
        %6278 = vmatprep.mubr.bf16.mxu0 0
        %6279 = vmatmul.mubr.bf16.gmra.mrb[0].mxu0 %v5991
        %v6280 = vpop.f32.mrb[0].mxu0
        %v6281 = vadd.f32 %v6120, %v6280
        %v6282 = vpop.f32.mrb[0].mxu0
        %v6283 = vpop.f32.mrb[0].mxu0
        %v6284 = vadd.f32 %v6123, %v6283
        %v6285 = vpop.f32.mrb[0].mxu0
        %6286 = vmatprep.mubr.bf16.mxu0 0
        %6287 = vmatmul.mubr.bf16.gmra.mrb[0].mxu0 %v5994
        %v6288 = vpop.f32.mrb[0].mxu0
        %v6289 = vadd.f32 %v6128, %v6288
        %v6290 = vpop.f32.mrb[0].mxu0
        %v6291 = vpop.f32.mrb[0].mxu0
        %v6292 = vadd.f32 %v6131, %v6291
        %v6293 = vpop.f32.mrb[0].mxu0
        %6294 = vmatprep.mubr.bf16.mxu0 0
        %6295 = vmatmul.mubr.bf16.gmra.mrb[0].mxu0 %v5997
        %v6296 = vpop.f32.mrb[0].mxu0
        %v6297 = vadd.f32 %v6136, %v6296
        %v6298 = vpop.f32.mrb[0].mxu0
        %v6299 = vpop.f32.mrb[0].mxu0
        %v6300 = vadd.f32 %v6139, %v6299
        %v6301 = vpop.f32.mrb[0].mxu0
        %6302 = vmatprep.mubr.bf16.mxu0 0
        %6303 = vmatmul.mubr.bf16.gmra.mrb[0].mxu0 %v6000
        %v6304 = vpop.f32.mrb[0].mxu0
        %v6305 = vadd.f32 %v6144, %v6304
        %v6306 = vpop.f32.mrb[0].mxu0
        %v6307 = vpop.f32.mrb[0].mxu0
        %v6308 = vadd.f32 %v6147, %v6307
        %v6309 = vpop.f32.mrb[0].mxu0
        %6310 = vmatprep.mubr.bf16.mxu0 0
        %6311 = vmatmul.mubr.bf16.gmra.mrb[0].mxu0 %v6003
        %v6312 = vpop.f32.mrb[0].mxu0
        %v6313 = vadd.f32 %v6152, %v6312
        %v6314 = vpop.f32.mrb[0].mxu0
        %v6315 = vpop.f32.mrb[0].mxu0
        %v6316 = vadd.f32 %v6155, %v6315
        %v6317 = vpop.f32.mrb[0].mxu0
        %6318 = vmatprep.mubr.bf16.mxu0 0
        %6319 = vmatmul.mubr.bf16.gmra.mrb[0].mxu0 %v3075
        %v6320 = vpop.f32.mrb[0].mxu0
        %v6321 = vadd.f32 %v6160, %v6320
        %v6322 = vpop.f32.mrb[0].mxu0
        %v6323 = vpop.f32.mrb[0].mxu0
        %v6324 = vadd.f32 %v6163, %v6323
        %v6325 = vpop.f32.mrb[0].mxu0
        %6326 = vdwg.mxu0
        %v6327 = vld [vmem:[%s12] sm:$0x1]
        %v6329 = vlaneseq
        %v6330 = vshrl.u32 %v6329, 7
        %v6331 = vsub.s32 0, %v6330
        %v6332 = vrot.slane %v6327, %v6331
        %v6334 = vadd.f32 %v6201, %v6332
        %v6335 = vadd.f32 %v6204, %v6332
        %v6336 = vadd.f32 %v6209, %v6332
        %v6337 = vadd.f32 %v6212, %v6332
        %v6338 = vadd.f32 %v6217, %v6332
        %v6339 = vadd.f32 %v6220, %v6332
        %v6340 = vadd.f32 %v6225, %v6332
        %v6341 = vadd.f32 %v6228, %v6332
        %v6342 = vadd.f32 %v6233, %v6332
        %v6343 = vadd.f32 %v6236, %v6332
        %v6344 = vadd.f32 %v6241, %v6332
        %v6345 = vadd.f32 %v6244, %v6332
        %v6346 = vadd.f32 %v6249, %v6332
        %v6347 = vadd.f32 %v6252, %v6332
        %v6348 = vadd.f32 %v6257, %v6332
        %v6349 = vadd.f32 %v6260, %v6332
        %v6350 = vadd.f32 %v6265, %v6332
        %v6351 = vadd.f32 %v6268, %v6332
        %v6352 = vadd.f32 %v6273, %v6332
        %v6353 = vadd.f32 %v6276, %v6332
        %v6354 = vadd.f32 %v6281, %v6332
        %v6355 = vadd.f32 %v6284, %v6332
        %v6356 = vadd.f32 %v6289, %v6332
        %v6357 = vadd.f32 %v6292, %v6332
        %v6358 = vadd.f32 %v6297, %v6332
        %v6359 = vadd.f32 %v6300, %v6332
        %v6360 = vadd.f32 %v6305, %v6332
        %v6361 = vadd.f32 %v6308, %v6332
        %v6362 = vadd.f32 %v6313, %v6332
        %v6363 = vadd.f32 %v6316, %v6332
        %v6364 = vadd.f32 %v6321, %v6332
        %v6365 = vadd.f32 %v6324, %v6332
        %v6366 = vmax.f32 %v6334, 0.0
        %v6367 = vmax.f32 %v6335, 0.0
        %v6368 = vmax.f32 %v6336, 0.0
        %v6369 = vmax.f32 %v6337, 0.0
        %v6370 = vmax.f32 %v6338, 0.0
        %v6371 = vmax.f32 %v6339, 0.0
        %v6372 = vmax.f32 %v6340, 0.0
        %v6373 = vmax.f32 %v6341, 0.0
        %v6374 = vmax.f32 %v6342, 0.0
        %v6375 = vmax.f32 %v6343, 0.0
        %v6376 = vmax.f32 %v6344, 0.0
        %v6377 = vmax.f32 %v6345, 0.0
        %v6378 = vmax.f32 %v6346, 0.0
        %v6379 = vmax.f32 %v6347, 0.0
        %v6380 = vmax.f32 %v6348, 0.0
        %v6381 = vmax.f32 %v6349, 0.0
        %v6382 = vmax.f32 %v6350, 0.0
        %v6383 = vmax.f32 %v6351, 0.0
        %v6384 = vmax.f32 %v6352, 0.0
        %v6385 = vmax.f32 %v6353, 0.0
        %v6386 = vmax.f32 %v6354, 0.0
        %v6387 = vmax.f32 %v6355, 0.0
        %v6388 = vmax.f32 %v6356, 0.0
        %v6389 = vmax.f32 %v6357, 0.0
        %v6390 = vmax.f32 %v6358, 0.0
        %v6391 = vmax.f32 %v6359, 0.0
        %v6392 = vmax.f32 %v6360, 0.0
        %v6393 = vmax.f32 %v6361, 0.0
        %v6394 = vmax.f32 %v6362, 0.0
        %v6395 = vmax.f32 %v6363, 0.0
        %v6396 = vmax.f32 %v6364, 0.0
        %v6397 = vmax.f32 %v6365, 0.0
        %v6398 = vpack.c.bf16 %v6367, %v6366
        %v6399 = vpack.c.bf16 %v6369, %v6368
        %v6400 = vpack.c.bf16 %v6371, %v6370
        %v6401 = vpack.c.bf16 %v6373, %v6372
        %v6402 = vpack.c.bf16 %v6375, %v6374
        %v6403 = vpack.c.bf16 %v6377, %v6376
        %v6404 = vpack.c.bf16 %v6379, %v6378
        %v6405 = vpack.c.bf16 %v6381, %v6380
        %v6406 = vpack.c.bf16 %v6383, %v6382
        %v6407 = vpack.c.bf16 %v6385, %v6384
        %v6408 = vpack.c.bf16 %v6387, %v6386
        %v6409 = vpack.c.bf16 %v6389, %v6388
        %v6410 = vpack.c.bf16 %v6391, %v6390
        %v6411 = vpack.c.bf16 %v6393, %v6392
        %v6412 = vpack.c.bf16 %v6395, %v6394
        %v6413 = vpack.c.bf16 %v6397, %v6396
        %v6415 = vshrl.u32 %v6398, 16
        %v6417 = vrot.slane %v6415, 7
        %v6418 = vshll.u32 %v6398, 16
        %v6420 = vor.u32 %v6417, %v6418
        %v6422 = vshrl.u32 %v6399, 16
        %v6424 = vrot.slane %v6422, 7
        %v6425 = vshll.u32 %v6399, 16
        %v6427 = vor.u32 %v6424, %v6425
        %v6429 = vshrl.u32 %v6400, 16
        %v6431 = vrot.slane %v6429, 7
        %v6432 = vshll.u32 %v6400, 16
        %v6434 = vor.u32 %v6431, %v6432
        %v6436 = vshrl.u32 %v6401, 16
        %v6438 = vrot.slane %v6436, 7
        %v6439 = vshll.u32 %v6401, 16
        %v6441 = vor.u32 %v6438, %v6439
        %v6443 = vshrl.u32 %v6402, 16
        %v6445 = vrot.slane %v6443, 7
        %v6446 = vshll.u32 %v6402, 16
        %v6448 = vor.u32 %v6445, %v6446
        %v6450 = vshrl.u32 %v6403, 16
        %v6452 = vrot.slane %v6450, 7
        %v6453 = vshll.u32 %v6403, 16
        %v6455 = vor.u32 %v6452, %v6453
        %v6457 = vshrl.u32 %v6404, 16
        %v6459 = vrot.slane %v6457, 7
        %v6460 = vshll.u32 %v6404, 16
        %v6462 = vor.u32 %v6459, %v6460
        %v6464 = vshrl.u32 %v6405, 16
        %v6466 = vrot.slane %v6464, 7
        %v6467 = vshll.u32 %v6405, 16
        %v6469 = vor.u32 %v6466, %v6467
        %v6471 = vshrl.u32 %v6406, 16
        %v6473 = vrot.slane %v6471, 7
        %v6474 = vshll.u32 %v6406, 16
        %v6476 = vor.u32 %v6473, %v6474
        %v6478 = vshrl.u32 %v6407, 16
        %v6480 = vrot.slane %v6478, 7
        %v6481 = vshll.u32 %v6407, 16
        %v6483 = vor.u32 %v6480, %v6481
        %v6485 = vshrl.u32 %v6408, 16
        %v6487 = vrot.slane %v6485, 7
        %v6488 = vshll.u32 %v6408, 16
        %v6490 = vor.u32 %v6487, %v6488
        %v6492 = vshrl.u32 %v6409, 16
        %v6494 = vrot.slane %v6492, 7
        %v6495 = vshll.u32 %v6409, 16
        %v6497 = vor.u32 %v6494, %v6495
        %v6499 = vshrl.u32 %v6410, 16
        %v6501 = vrot.slane %v6499, 7
        %v6502 = vshll.u32 %v6410, 16
        %v6504 = vor.u32 %v6501, %v6502
        %v6506 = vshrl.u32 %v6411, 16
        %v6508 = vrot.slane %v6506, 7
        %v6509 = vshll.u32 %v6411, 16
        %v6511 = vor.u32 %v6508, %v6509
        %v6513 = vshrl.u32 %v6412, 16
        %v6515 = vrot.slane %v6513, 7
        %v6516 = vshll.u32 %v6412, 16
        %v6518 = vor.u32 %v6515, %v6516
        %v6520 = vshrl.u32 %v6413, 16
        %v6522 = vrot.slane %v6520, 7
        %v6523 = vshll.u32 %v6413, 16
        %v6525 = vor.u32 %v6522, %v6523
        %v6558 = vsel %vm872, 0, %v6420
        %v6559 = vsel %vm872, 0, %v6427
        %v6560 = vsel %vm872, 0, %v6434
        %v6561 = vsel %vm872, 0, %v6441
        %v6562 = vsel %vm872, 0, %v6448
        %v6563 = vsel %vm872, 0, %v6455
        %v6564 = vsel %vm872, 0, %v6462
        %v6565 = vsel %vm872, 0, %v6469
        %v6566 = vsel %vm872, 0, %v6476
        %v6567 = vsel %vm872, 0, %v6483
        %v6568 = vsel %vm872, 0, %v6490
        %v6569 = vsel %vm872, 0, %v6497
        %v6570 = vsel %vm872, 0, %v6504
        %v6571 = vsel %vm872, 0, %v6511
        %v6572 = vsel %vm872, 0, %v6518
        %v6573 = vsel %vm872, 0, %v6525
        %v6574 = vsel %vm872, %v6417, 0
        %v6575 = vsel %vm872, %v6424, 0
        %v6576 = vsel %vm872, %v6431, 0
        %v6577 = vsel %vm872, %v6438, 0
        %v6578 = vsel %vm872, %v6445, 0
        %v6579 = vsel %vm872, %v6452, 0
        %v6580 = vsel %vm872, %v6459, 0
        %v6581 = vsel %vm872, %v6466, 0
        %v6582 = vsel %vm872, %v6473, 0
        %v6583 = vsel %vm872, %v6480, 0
        %v6584 = vsel %vm872, %v6487, 0
        %v6585 = vsel %vm872, %v6494, 0
        %v6586 = vsel %vm872, %v6501, 0
        %v6587 = vsel %vm872, %v6508, 0
        %v6588 = vsel %vm872, %v6515, 0
        %v6589 = vsel %vm872, %v6522, 0
        %v6591 = vshrl.u32 %v6558, 16
        %v6593 = vshll.u32 %v6558, 16
        %v6595 = vrot.slane %v6593, 1
        %v6596 = vor.u32 %v6591, %v6595
        %v6598 = vshll.u32 %v6574, 16
        %v6600 = vrot.slane %v6598, 1
        %v6601 = vsel %vm907, %v6596, %v6600
        %v6603 = vshrl.u32 %v6559, 16
        %v6605 = vshll.u32 %v6559, 16
        %v6607 = vrot.slane %v6605, 1
        %v6608 = vor.u32 %v6603, %v6607
        %v6610 = vshll.u32 %v6575, 16
        %v6612 = vrot.slane %v6610, 1
        %v6613 = vsel %vm907, %v6608, %v6612
        %v6615 = vshrl.u32 %v6560, 16
        %v6617 = vshll.u32 %v6560, 16
        %v6619 = vrot.slane %v6617, 1
        %v6620 = vor.u32 %v6615, %v6619
        %v6622 = vshll.u32 %v6576, 16
        %v6624 = vrot.slane %v6622, 1
        %v6625 = vsel %vm907, %v6620, %v6624
        %v6627 = vshrl.u32 %v6561, 16
        %v6629 = vshll.u32 %v6561, 16
        %v6631 = vrot.slane %v6629, 1
        %v6632 = vor.u32 %v6627, %v6631
        %v6634 = vshll.u32 %v6577, 16
        %v6636 = vrot.slane %v6634, 1
        %v6637 = vsel %vm907, %v6632, %v6636
        %v6639 = vshrl.u32 %v6562, 16
        %v6641 = vshll.u32 %v6562, 16
        %v6643 = vrot.slane %v6641, 1
        %v6644 = vor.u32 %v6639, %v6643
        %v6646 = vshll.u32 %v6578, 16
        %v6648 = vrot.slane %v6646, 1
        %v6649 = vsel %vm907, %v6644, %v6648
        %v6651 = vshrl.u32 %v6563, 16
        %v6653 = vshll.u32 %v6563, 16
        %v6655 = vrot.slane %v6653, 1
        %v6656 = vor.u32 %v6651, %v6655
        %v6658 = vshll.u32 %v6579, 16
        %v6660 = vrot.slane %v6658, 1
        %v6661 = vsel %vm907, %v6656, %v6660
        %v6663 = vshrl.u32 %v6564, 16
        %v6665 = vshll.u32 %v6564, 16
        %v6667 = vrot.slane %v6665, 1
        %v6668 = vor.u32 %v6663, %v6667
        %v6670 = vshll.u32 %v6580, 16
        %v6672 = vrot.slane %v6670, 1
        %v6673 = vsel %vm907, %v6668, %v6672
        %v6675 = vshrl.u32 %v6565, 16
        %v6677 = vshll.u32 %v6565, 16
        %v6679 = vrot.slane %v6677, 1
        %v6680 = vor.u32 %v6675, %v6679
        %v6682 = vshll.u32 %v6581, 16
        %v6684 = vrot.slane %v6682, 1
        %v6685 = vsel %vm907, %v6680, %v6684
        %v6687 = vshrl.u32 %v6566, 16
        %v6689 = vshll.u32 %v6566, 16
        %v6691 = vrot.slane %v6689, 1
        %v6692 = vor.u32 %v6687, %v6691
        %v6694 = vshll.u32 %v6582, 16
        %v6696 = vrot.slane %v6694, 1
        %v6697 = vsel %vm907, %v6692, %v6696
        %v6699 = vshrl.u32 %v6567, 16
        %v6701 = vshll.u32 %v6567, 16
        %v6703 = vrot.slane %v6701, 1
        %v6704 = vor.u32 %v6699, %v6703
        %v6706 = vshll.u32 %v6583, 16
        %v6708 = vrot.slane %v6706, 1
        %v6709 = vsel %vm907, %v6704, %v6708
        %v6711 = vshrl.u32 %v6568, 16
        %v6713 = vshll.u32 %v6568, 16
        %v6715 = vrot.slane %v6713, 1
        %v6716 = vor.u32 %v6711, %v6715
        %v6718 = vshll.u32 %v6584, 16
        %v6720 = vrot.slane %v6718, 1
        %v6721 = vsel %vm907, %v6716, %v6720
        %v6723 = vshrl.u32 %v6569, 16
        %v6725 = vshll.u32 %v6569, 16
        %v6727 = vrot.slane %v6725, 1
        %v6728 = vor.u32 %v6723, %v6727
        %v6730 = vshll.u32 %v6585, 16
        %v6732 = vrot.slane %v6730, 1
        %v6733 = vsel %vm907, %v6728, %v6732
        %v6735 = vshrl.u32 %v6570, 16
        %v6737 = vshll.u32 %v6570, 16
        %v6739 = vrot.slane %v6737, 1
        %v6740 = vor.u32 %v6735, %v6739
        %v6742 = vshll.u32 %v6586, 16
        %v6744 = vrot.slane %v6742, 1
        %v6745 = vsel %vm907, %v6740, %v6744
        %v6747 = vshrl.u32 %v6571, 16
        %v6749 = vshll.u32 %v6571, 16
        %v6751 = vrot.slane %v6749, 1
        %v6752 = vor.u32 %v6747, %v6751
        %v6754 = vshll.u32 %v6587, 16
        %v6756 = vrot.slane %v6754, 1
        %v6757 = vsel %vm907, %v6752, %v6756
        %v6759 = vshrl.u32 %v6572, 16
        %v6761 = vshll.u32 %v6572, 16
        %v6763 = vrot.slane %v6761, 1
        %v6764 = vor.u32 %v6759, %v6763
        %v6766 = vshll.u32 %v6588, 16
        %v6768 = vrot.slane %v6766, 1
        %v6769 = vsel %vm907, %v6764, %v6768
        %6770 = vrot.lane.b32.xlu0 %v6601, 32
        %v6771 = vpop.permute.xlu0 %6770
        %6772 = vrot.lane.b32.xlu0 %v6613, 32
        %v6773 = vpop.permute.xlu0 %6772
        %6774 = vrot.lane.b32.xlu0 %v6625, 32
        %v6775 = vpop.permute.xlu0 %6774
        %6776 = vrot.lane.b32.xlu0 %v6637, 32
        %v6777 = vpop.permute.xlu0 %6776
        %6778 = vrot.lane.b32.xlu0 %v6649, 32
        %v6779 = vpop.permute.xlu0 %6778
        %6780 = vrot.lane.b32.xlu0 %v6661, 32
        %v6781 = vpop.permute.xlu0 %6780
        %6782 = vrot.lane.b32.xlu0 %v6673, 32
        %v6783 = vpop.permute.xlu0 %6782
        %6784 = vrot.lane.b32.xlu0 %v6685, 32
        %v6785 = vpop.permute.xlu0 %6784
        %6786 = vrot.lane.b32.xlu0 %v6697, 32
        %v6787 = vpop.permute.xlu0 %6786
        %6788 = vrot.lane.b32.xlu0 %v6709, 32
        %v6789 = vpop.permute.xlu0 %6788
        %6790 = vrot.lane.b32.xlu0 %v6721, 32
        %v6791 = vpop.permute.xlu0 %6790
        %6792 = vrot.lane.b32.xlu0 %v6733, 32
        %v6793 = vpop.permute.xlu0 %6792
        %6794 = vrot.lane.b32.xlu0 %v6745, 32
        %v6795 = vpop.permute.xlu0 %6794
        %6796 = vrot.lane.b32.xlu0 %v6757, 32
        %v6797 = vpop.permute.xlu0 %6796
        %6798 = vrot.lane.b32.xlu0 %v6769, 32
        %v6799 = vpop.permute.xlu0 %6798
        %v6830 = vrot.slane %v6558, 1
        %v6831 = vrot.slane %v6574, 1
        %v6832 = vsel %vm1164, %v6830, %v6831
        %v6833 = vrot.slane %v6559, 1
        %v6834 = vrot.slane %v6575, 1
        %v6835 = vsel %vm1164, %v6833, %v6834
        %v6836 = vrot.slane %v6560, 1
        %v6837 = vrot.slane %v6576, 1
        %v6838 = vsel %vm1164, %v6836, %v6837
        %v6839 = vrot.slane %v6561, 1
        %v6840 = vrot.slane %v6577, 1
        %v6841 = vsel %vm1164, %v6839, %v6840
        %v6842 = vrot.slane %v6562, 1
        %v6843 = vrot.slane %v6578, 1
        %v6844 = vsel %vm1164, %v6842, %v6843
        %v6845 = vrot.slane %v6563, 1
        %v6846 = vrot.slane %v6579, 1
        %v6847 = vsel %vm1164, %v6845, %v6846
        %v6848 = vrot.slane %v6564, 1
        %v6849 = vrot.slane %v6580, 1
        %v6850 = vsel %vm1164, %v6848, %v6849
        %v6851 = vrot.slane %v6565, 1
        %v6852 = vrot.slane %v6581, 1
        %v6853 = vsel %vm1164, %v6851, %v6852
        %v6854 = vrot.slane %v6566, 1
        %v6855 = vrot.slane %v6582, 1
        %v6856 = vsel %vm1164, %v6854, %v6855
        %v6857 = vrot.slane %v6567, 1
        %v6858 = vrot.slane %v6583, 1
        %v6859 = vsel %vm1164, %v6857, %v6858
        %v6860 = vrot.slane %v6568, 1
        %v6861 = vrot.slane %v6584, 1
        %v6862 = vsel %vm1164, %v6860, %v6861
        %v6863 = vrot.slane %v6569, 1
        %v6864 = vrot.slane %v6585, 1
        %v6865 = vsel %vm1164, %v6863, %v6864
        %v6866 = vrot.slane %v6570, 1
        %v6867 = vrot.slane %v6586, 1
        %v6868 = vsel %vm1164, %v6866, %v6867
        %v6869 = vrot.slane %v6571, 1
        %v6870 = vrot.slane %v6587, 1
        %v6871 = vsel %vm1164, %v6869, %v6870
        %v6872 = vrot.slane %v6572, 1
        %v6873 = vrot.slane %v6588, 1
        %v6874 = vsel %vm1164, %v6872, %v6873
        %6875 = vrot.lane.b32.xlu0 %v6832, 64
        %v6876 = vpop.permute.xlu0 %6875
        %6877 = vrot.lane.b32.xlu0 %v6835, 64
        %v6878 = vpop.permute.xlu0 %6877
        %6879 = vrot.lane.b32.xlu0 %v6838, 64
        %v6880 = vpop.permute.xlu0 %6879
        %6881 = vrot.lane.b32.xlu0 %v6841, 64
        %v6882 = vpop.permute.xlu0 %6881
        %6883 = vrot.lane.b32.xlu0 %v6844, 64
        %v6884 = vpop.permute.xlu0 %6883
        %6885 = vrot.lane.b32.xlu0 %v6847, 64
        %v6886 = vpop.permute.xlu0 %6885
        %6887 = vrot.lane.b32.xlu0 %v6850, 64
        %v6888 = vpop.permute.xlu0 %6887
        %6889 = vrot.lane.b32.xlu0 %v6853, 64
        %v6890 = vpop.permute.xlu0 %6889
        %6891 = vrot.lane.b32.xlu0 %v6856, 64
        %v6892 = vpop.permute.xlu0 %6891
        %6893 = vrot.lane.b32.xlu0 %v6859, 64
        %v6894 = vpop.permute.xlu0 %6893
        %6895 = vrot.lane.b32.xlu0 %v6862, 64
        %v6896 = vpop.permute.xlu0 %6895
        %6897 = vrot.lane.b32.xlu0 %v6865, 64
        %v6898 = vpop.permute.xlu0 %6897
        %6899 = vrot.lane.b32.xlu0 %v6868, 64
        %v6900 = vpop.permute.xlu0 %6899
        %6901 = vrot.lane.b32.xlu0 %v6871, 64
        %v6902 = vpop.permute.xlu0 %6901
        %6903 = vrot.lane.b32.xlu0 %v6874, 64
        %v6904 = vpop.permute.xlu0 %6903
        %6906 = vrot.lane.b32.xlu0 %v6558, 96
        %v6907 = vpop.permute.xlu0 %6906
        %6908 = vrot.lane.b32.xlu0 %v6559, 96
        %v6909 = vpop.permute.xlu0 %6908
        %6910 = vrot.lane.b32.xlu0 %v6560, 96
        %v6911 = vpop.permute.xlu0 %6910
        %6912 = vrot.lane.b32.xlu0 %v6561, 96
        %v6913 = vpop.permute.xlu0 %6912
        %6914 = vrot.lane.b32.xlu0 %v6562, 96
        %v6915 = vpop.permute.xlu0 %6914
        %6916 = vrot.lane.b32.xlu0 %v6563, 96
        %v6917 = vpop.permute.xlu0 %6916
        %6918 = vrot.lane.b32.xlu0 %v6564, 96
        %v6919 = vpop.permute.xlu0 %6918
        %6920 = vrot.lane.b32.xlu0 %v6565, 96
        %v6921 = vpop.permute.xlu0 %6920
        %6922 = vrot.lane.b32.xlu0 %v6566, 96
        %v6923 = vpop.permute.xlu0 %6922
        %6924 = vrot.lane.b32.xlu0 %v6567, 96
        %v6925 = vpop.permute.xlu0 %6924
        %6926 = vrot.lane.b32.xlu0 %v6568, 96
        %v6927 = vpop.permute.xlu0 %6926
        %6928 = vrot.lane.b32.xlu0 %v6569, 96
        %v6929 = vpop.permute.xlu0 %6928
        %6930 = vrot.lane.b32.xlu0 %v6570, 96
        %v6931 = vpop.permute.xlu0 %6930
        %6932 = vrot.lane.b32.xlu0 %v6571, 96
        %v6933 = vpop.permute.xlu0 %6932
        %6934 = vrot.lane.b32.xlu0 %v6572, 96
        %v6935 = vpop.permute.xlu0 %6934
        %6936 = vrot.lane.b32.xlu0 %v6573, 96
        %v6937 = vpop.permute.xlu0 %6936
        %v6939 = vshrl.u32 %v6573, 16
        %v6941 = vshll.u32 %v6573, 16
        %v6943 = vrot.slane %v6941, 1
        %v6944 = vor.u32 %v6939, %v6943
        %v6946 = vshll.u32 %v6589, 16
        %v6948 = vrot.slane %v6946, 1
        %v6949 = vsel %vm907, %v6944, %v6948
        %v6951 = vrot.slane %v6573, 1
        %v6952 = vrot.slane %v6589, 1
        %v6953 = vsel %vm1164, %v6951, %v6952
        %6954 = vrot.lane.b32.xlu0 %v6832, 32
        %v6955 = vpop.permute.xlu0 %6954
        %6956 = vrot.lane.b32.xlu0 %v6835, 32
        %v6957 = vpop.permute.xlu0 %6956
        %6958 = vrot.lane.b32.xlu0 %v6838, 32
        %v6959 = vpop.permute.xlu0 %6958
        %6960 = vrot.lane.b32.xlu0 %v6841, 32
        %v6961 = vpop.permute.xlu0 %6960
        %6962 = vrot.lane.b32.xlu0 %v6844, 32
        %v6963 = vpop.permute.xlu0 %6962
        %6964 = vrot.lane.b32.xlu0 %v6847, 32
        %v6965 = vpop.permute.xlu0 %6964
        %6966 = vrot.lane.b32.xlu0 %v6850, 32
        %v6967 = vpop.permute.xlu0 %6966
        %6968 = vrot.lane.b32.xlu0 %v6853, 32
        %v6969 = vpop.permute.xlu0 %6968
        %6970 = vrot.lane.b32.xlu0 %v6856, 32
        %v6971 = vpop.permute.xlu0 %6970
        %6972 = vrot.lane.b32.xlu0 %v6859, 32
        %v6973 = vpop.permute.xlu0 %6972
        %6974 = vrot.lane.b32.xlu0 %v6862, 32
        %v6975 = vpop.permute.xlu0 %6974
        %6976 = vrot.lane.b32.xlu0 %v6865, 32
        %v6977 = vpop.permute.xlu0 %6976
        %6978 = vrot.lane.b32.xlu0 %v6868, 32
        %v6979 = vpop.permute.xlu0 %6978
        %6980 = vrot.lane.b32.xlu0 %v6871, 32
        %v6981 = vpop.permute.xlu0 %6980
        %6982 = vrot.lane.b32.xlu0 %v6874, 32
        %v6983 = vpop.permute.xlu0 %6982
        %6984 = vrot.lane.b32.xlu0 %v6953, 32
        %v6985 = vpop.permute.xlu0 %6984
        %6986 = vrot.lane.b32.xlu0 %v6559, 64
        %v6987 = vpop.permute.xlu0 %6986
        %6988 = vrot.lane.b32.xlu0 %v6560, 64
        %v6989 = vpop.permute.xlu0 %6988
        %6990 = vrot.lane.b32.xlu0 %v6561, 64
        %v6991 = vpop.permute.xlu0 %6990
        %6992 = vrot.lane.b32.xlu0 %v6562, 64
        %v6993 = vpop.permute.xlu0 %6992
        %6994 = vrot.lane.b32.xlu0 %v6563, 64
        %v6995 = vpop.permute.xlu0 %6994
        %6996 = vrot.lane.b32.xlu0 %v6564, 64
        %v6997 = vpop.permute.xlu0 %6996
        %6998 = vrot.lane.b32.xlu0 %v6565, 64
        %v6999 = vpop.permute.xlu0 %6998
        %7000 = vrot.lane.b32.xlu0 %v6566, 64
        %v7001 = vpop.permute.xlu0 %7000
        %7002 = vrot.lane.b32.xlu0 %v6567, 64
        %v7003 = vpop.permute.xlu0 %7002
        %7004 = vrot.lane.b32.xlu0 %v6568, 64
        %v7005 = vpop.permute.xlu0 %7004
        %7006 = vrot.lane.b32.xlu0 %v6569, 64
        %v7007 = vpop.permute.xlu0 %7006
        %7008 = vrot.lane.b32.xlu0 %v6570, 64
        %v7009 = vpop.permute.xlu0 %7008
        %7010 = vrot.lane.b32.xlu0 %v6571, 64
        %v7011 = vpop.permute.xlu0 %7010
        %7012 = vrot.lane.b32.xlu0 %v6572, 64
        %v7013 = vpop.permute.xlu0 %7012
        %7014 = vrot.lane.b32.xlu0 %v6573, 64
        %v7015 = vpop.permute.xlu0 %7014
        %7016 = vrot.lane.b32.xlu0 %v6613, 96
        %v7017 = vpop.permute.xlu0 %7016
        %7018 = vrot.lane.b32.xlu0 %v6625, 96
        %v7019 = vpop.permute.xlu0 %7018
        %7020 = vrot.lane.b32.xlu0 %v6637, 96
        %v7021 = vpop.permute.xlu0 %7020
        %7022 = vrot.lane.b32.xlu0 %v6649, 96
        %v7023 = vpop.permute.xlu0 %7022
        %7024 = vrot.lane.b32.xlu0 %v6661, 96
        %v7025 = vpop.permute.xlu0 %7024
        %7026 = vrot.lane.b32.xlu0 %v6673, 96
        %v7027 = vpop.permute.xlu0 %7026
        %7028 = vrot.lane.b32.xlu0 %v6685, 96
        %v7029 = vpop.permute.xlu0 %7028
        %7030 = vrot.lane.b32.xlu0 %v6697, 96
        %v7031 = vpop.permute.xlu0 %7030
        %7032 = vrot.lane.b32.xlu0 %v6709, 96
        %v7033 = vpop.permute.xlu0 %7032
        %7034 = vrot.lane.b32.xlu0 %v6721, 96
        %v7035 = vpop.permute.xlu0 %7034
        %7036 = vrot.lane.b32.xlu0 %v6733, 96
        %v7037 = vpop.permute.xlu0 %7036
        %7038 = vrot.lane.b32.xlu0 %v6745, 96
        %v7039 = vpop.permute.xlu0 %7038
        %7040 = vrot.lane.b32.xlu0 %v6757, 96
        %v7041 = vpop.permute.xlu0 %7040
        %7042 = vrot.lane.b32.xlu0 %v6769, 96
        %v7043 = vpop.permute.xlu0 %7042
        %7044 = vrot.lane.b32.xlu0 %v6949, 96
        %v7045 = vpop.permute.xlu0 %7044
        %v7047 = vsel %vm1553, %v6558, %v6771
        %v7049 = vsel %vm1553, %v6559, %v6773
        %v7051 = vsel %vm1553, %v6560, %v6775
        %v7053 = vsel %vm1553, %v6561, %v6777
        %v7055 = vsel %vm1553, %v6562, %v6779
        %v7057 = vsel %vm1553, %v6563, %v6781
        %v7059 = vsel %vm1553, %v6564, %v6783
        %v7061 = vsel %vm1553, %v6565, %v6785
        %v7063 = vsel %vm1553, %v6566, %v6787
        %v7065 = vsel %vm1553, %v6567, %v6789
        %v7067 = vsel %vm1553, %v6568, %v6791
        %v7069 = vsel %vm1553, %v6569, %v6793
        %v7071 = vsel %vm1553, %v6570, %v6795
        %v7073 = vsel %vm1553, %v6571, %v6797
        %v7075 = vsel %vm1553, %v6572, %v6799
        %v7077 = vsel %vm1685, %v7047, %v6876
        %v7079 = vsel %vm1685, %v7049, %v6878
        %v7081 = vsel %vm1685, %v7051, %v6880
        %v7083 = vsel %vm1685, %v7053, %v6882
        %v7085 = vsel %vm1685, %v7055, %v6884
        %v7087 = vsel %vm1685, %v7057, %v6886
        %v7089 = vsel %vm1685, %v7059, %v6888
        %v7091 = vsel %vm1685, %v7061, %v6890
        %v7093 = vsel %vm1685, %v7063, %v6892
        %v7095 = vsel %vm1685, %v7065, %v6894
        %v7097 = vsel %vm1685, %v7067, %v6896
        %v7099 = vsel %vm1685, %v7069, %v6898
        %v7101 = vsel %vm1685, %v7071, %v6900
        %v7103 = vsel %vm1685, %v7073, %v6902
        %v7105 = vsel %vm1685, %v7075, %v6904
        %v7107 = vsel %vm2708, %v2677, %v6907
        %v7110 = vsel %vm2708, %v7077, %v6909
        %v7113 = vsel %vm2708, %v7079, %v6911
        %v7116 = vsel %vm2708, %v7081, %v6913
        %v7119 = vsel %vm2708, %v7083, %v6915
        %v7122 = vsel %vm2708, %v7085, %v6917
        %v7125 = vsel %vm2708, %v7087, %v6919
        %v7128 = vsel %vm2708, %v7089, %v6921
        %v7131 = vsel %vm2708, %v7091, %v6923
        %v7134 = vsel %vm2708, %v7093, %v6925
        %v7137 = vsel %vm2708, %v7095, %v6927
        %v7140 = vsel %vm2708, %v7097, %v6929
        %v7143 = vsel %vm2708, %v7099, %v6931
        %v7146 = vsel %vm2708, %v7101, %v6933
        %v7149 = vsel %vm2708, %v7103, %v6935
        %v7152 = vsel %vm2708, %v7105, %v6937
        %v7156 = vsel %vm1553, %v6601, %v6955
        %v7159 = vsel %vm1553, %v6613, %v6957
        %v7162 = vsel %vm1553, %v6625, %v6959
        %v7165 = vsel %vm1553, %v6637, %v6961
        %v7168 = vsel %vm1553, %v6649, %v6963
        %v7171 = vsel %vm1553, %v6661, %v6965
        %v7174 = vsel %vm1553, %v6673, %v6967
        %v7177 = vsel %vm1553, %v6685, %v6969
        %v7180 = vsel %vm1553, %v6697, %v6971
        %v7183 = vsel %vm1553, %v6709, %v6973
        %v7186 = vsel %vm1553, %v6721, %v6975
        %v7189 = vsel %vm1553, %v6733, %v6977
        %v7192 = vsel %vm1553, %v6745, %v6979
        %v7195 = vsel %vm1553, %v6757, %v6981
        %v7198 = vsel %vm1553, %v6769, %v6983
        %v7201 = vsel %vm1553, %v6949, %v6985
        %v7203 = vsel %vm1685, %v7156, %v6987
        %v7205 = vsel %vm1685, %v7159, %v6989
        %v7207 = vsel %vm1685, %v7162, %v6991
        %v7209 = vsel %vm1685, %v7165, %v6993
        %v7211 = vsel %vm1685, %v7168, %v6995
        %v7213 = vsel %vm1685, %v7171, %v6997
        %v7215 = vsel %vm1685, %v7174, %v6999
        %v7217 = vsel %vm1685, %v7177, %v7001
        %v7219 = vsel %vm1685, %v7180, %v7003
        %v7221 = vsel %vm1685, %v7183, %v7005
        %v7223 = vsel %vm1685, %v7186, %v7007
        %v7225 = vsel %vm1685, %v7189, %v7009
        %v7227 = vsel %vm1685, %v7192, %v7011
        %v7229 = vsel %vm1685, %v7195, %v7013
        %v7231 = vsel %vm1685, %v7198, %v7015
        %v7232 = vsel %vm1685, %v7201, %v2612
        %v7234 = vsel %vm2708, %v7203, %v7017
        %v7237 = vsel %vm2708, %v7205, %v7019
        %v7240 = vsel %vm2708, %v7207, %v7021
        %v7243 = vsel %vm2708, %v7209, %v7023
        %v7246 = vsel %vm2708, %v7211, %v7025
        %v7249 = vsel %vm2708, %v7213, %v7027
        %v7252 = vsel %vm2708, %v7215, %v7029
        %v7255 = vsel %vm2708, %v7217, %v7031
        %v7258 = vsel %vm2708, %v7219, %v7033
        %v7261 = vsel %vm2708, %v7221, %v7035
        %v7264 = vsel %vm2708, %v7223, %v7037
        %v7267 = vsel %vm2708, %v7225, %v7039
        %v7270 = vsel %vm2708, %v7227, %v7041
        %v7273 = vsel %vm2708, %v7229, %v7043
        %v7276 = vsel %vm2708, %v7231, %v7045
        %v7278 = vsel %vm2708, %v7232, %v2644
        %v7280 = vld [vmem:[%s6] sm:$0xf]
        %v7281 = vld [vmem:[%s6 + $0x4] sm:$0xf]
        %v7282 = vld [vmem:[%s6 + $0x8] sm:$0xf]
        %v7283 = vld [vmem:[%s6 + $0xc] sm:$0xf]
        %v7284 = vld [vmem:[%s6 + $0x10] sm:$0xf]
        %v7285 = vld [vmem:[%s6 + $0x14] sm:$0xf]
        %v7286 = vld [vmem:[%s6 + $0x18] sm:$0xf]
        %v7287 = vld [vmem:[%s6 + $0x1c] sm:$0xf]
        %v7288 = vld [vmem:[%s6 + $0x20] sm:$0xf]
        %v7289 = vld [vmem:[%s6 + $0x24] sm:$0xf]
        %v7290 = vld [vmem:[%s6 + $0x28] sm:$0xf]
        %v7291 = vld [vmem:[%s6 + $0x2c] sm:$0xf]
        %v7292 = vld [vmem:[%s6 + $0x30] sm:$0xf]
        %v7293 = vld [vmem:[%s6 + $0x34] sm:$0xf]
        %v7294 = vld [vmem:[%s6 + $0x38] sm:$0xf]
        %v7295 = vld [vmem:[%s6 + $0x3c] sm:$0xf]
        %v7296 = vld [vmem:[%s6 + $0x40] sm:$0xf]
        %v7297 = vld [vmem:[%s6 + $0x44] sm:$0xf]
        %v7298 = vld [vmem:[%s6 + $0x48] sm:$0xf]
        %v7299 = vld [vmem:[%s6 + $0x4c] sm:$0xf]
        %v7300 = vld [vmem:[%s6 + $0x50] sm:$0xf]
        %v7301 = vld [vmem:[%s6 + $0x54] sm:$0xf]
        %v7302 = vld [vmem:[%s6 + $0x58] sm:$0xf]
        %v7303 = vld [vmem:[%s6 + $0x5c] sm:$0xf]
        %v7304 = vld [vmem:[%s6 + $0x60] sm:$0xf]
        %v7305 = vld [vmem:[%s6 + $0x64] sm:$0xf]
        %v7306 = vld [vmem:[%s6 + $0x68] sm:$0xf]
        %v7307 = vld [vmem:[%s6 + $0x6c] sm:$0xf]
        %v7308 = vld [vmem:[%s6 + $0x70] sm:$0xf]
        %v7309 = vld [vmem:[%s6 + $0x74] sm:$0xf]
        %v7310 = vld [vmem:[%s6 + $0x78] sm:$0xf]
        %v7311 = vld [vmem:[%s6 + $0x7c] sm:$0xf]
        %v7312 = vld [vmem:[%s6 + $0x80] sm:$0xf]
        %v7313 = vld [vmem:[%s6 + $0x84] sm:$0xf]
        %v7314 = vld [vmem:[%s6 + $0x88] sm:$0xf]
        %v7315 = vld [vmem:[%s6 + $0x8c] sm:$0xf]
        %v7352 = vunpack.c.l.b16 %v7280
        %v7353 = vunpack.c.l.b16 %v7281
        %v7354 = vunpack.c.l.b16 %v7282
        %v7355 = vunpack.c.l.b16 %v7283
        %v7356 = vunpack.c.l.b16 %v7284
        %v7357 = vunpack.c.l.b16 %v7285
        %v7358 = vunpack.c.l.b16 %v7286
        %v7359 = vunpack.c.l.b16 %v7287
        %v7360 = vunpack.c.l.b16 %v7288
        %v7361 = vunpack.c.l.b16 %v7289
        %v7362 = vunpack.c.l.b16 %v7290
        %v7363 = vunpack.c.l.b16 %v7291
        %v7364 = vunpack.c.l.b16 %v7292
        %v7365 = vunpack.c.l.b16 %v7293
        %v7366 = vunpack.c.l.b16 %v7294
        %v7367 = vunpack.c.l.b16 %v7295
        %v7368 = vunpack.c.l.b16 %v7296
        %v7369 = vunpack.c.l.b16 %v7297
        %v7370 = vunpack.c.l.b16 %v7298
        %v7371 = vunpack.c.l.b16 %v7299
        %v7372 = vunpack.c.l.b16 %v7300
        %v7373 = vunpack.c.l.b16 %v7301
        %v7374 = vunpack.c.l.b16 %v7302
        %v7375 = vunpack.c.l.b16 %v7303
        %v7376 = vunpack.c.l.b16 %v7304
        %v7377 = vunpack.c.l.b16 %v7305
        %v7378 = vunpack.c.l.b16 %v7306
        %v7379 = vunpack.c.l.b16 %v7307
        %v7380 = vunpack.c.l.b16 %v7308
        %v7381 = vunpack.c.l.b16 %v7309
        %v7382 = vunpack.c.l.b16 %v7310
        %v7383 = vunpack.c.l.b16 %v7311
        %v7384 = vunpack.c.l.b16 %v7312
        %v7385 = vunpack.c.l.b16 %v7313
        %v7386 = vunpack.c.l.b16 %v7314
        %v7387 = vunpack.c.l.b16 %v7315
        %v7388 = vpack.c.b16 %v7353, %v7352
        %v7389 = vpack.c.b16 %v7355, %v7354
        %v7390 = vpack.c.b16 %v7357, %v7356
        %v7391 = vpack.c.b16 %v7359, %v7358
        %v7392 = vpack.c.b16 %v7361, %v7360
        %v7393 = vpack.c.b16 %v7363, %v7362
        %v7394 = vpack.c.b16 %v7365, %v7364
        %v7395 = vpack.c.b16 %v7367, %v7366
        %v7396 = vpack.c.b16 %v7369, %v7368
        %v7397 = vpack.c.b16 %v7371, %v7370
        %v7398 = vpack.c.b16 %v7373, %v7372
        %v7399 = vpack.c.b16 %v7375, %v7374
        %v7400 = vpack.c.b16 %v7377, %v7376
        %v7401 = vpack.c.b16 %v7379, %v7378
        %v7402 = vpack.c.b16 %v7381, %v7380
        %v7403 = vpack.c.b16 %v7383, %v7382
        %v7404 = vpack.c.b16 %v7385, %v7384
        %v7405 = vpack.c.b16 %v7387, %v7386
        %v7425 = vsel %vm1553, %v6835, 0
        %v7428 = vsel %vm1553, %v6838, 0
        %v7431 = vsel %vm1553, %v6841, 0
        %v7434 = vsel %vm1553, %v6844, 0
        %v7437 = vsel %vm1553, %v6847, 0
        %v7440 = vsel %vm1553, %v6850, 0
        %v7443 = vsel %vm1553, %v6853, 0
        %v7446 = vsel %vm1553, %v6856, 0
        %v7449 = vsel %vm1553, %v6859, 0
        %v7452 = vsel %vm1553, %v6862, 0
        %v7455 = vsel %vm1553, %v6865, 0
        %v7458 = vsel %vm1553, %v6868, 0
        %v7461 = vsel %vm1553, %v6871, 0
        %v7464 = vsel %vm1553, %v6874, 0
        %v7467 = vsel %vm1553, %v6953, 0
        %7469 = vmatprep.subr.bf16.mxu0 0
        %7470 = vmatpush1.bf16.msra.mxu0 %v7388
        %7471 = vmatprep.subr.bf16.mxu0 0
        %7472 = vmatpush1.bf16.msra.mxu0 %v7389
        %7473 = vmatprep.subr.bf16.mxu0 0
        %7474 = vmatpush1.bf16.msra.mxu0 %v7390
        %7475 = vmatprep.subr.bf16.mxu0 0
        %7476 = vmatpush1.bf16.msra.mxu0 %v7391
        %7477 = vmatprep.subr.bf16.mxu0 0
        %7478 = vmatpush1.bf16.msra.mxu0 %v7392
        %7479 = vmatprep.subr.bf16.mxu0 0
        %7480 = vmatpush1.bf16.msra.mxu0 %v7393
        %7481 = vmatprep.subr.bf16.mxu0 0
        %7482 = vmatpush1.bf16.msra.mxu0 %v7394
        %7483 = vmatprep.subr.bf16.mxu0 0
        %7484 = vmatpush1.bf16.msra.mxu0 %v7395
        %7485 = vmatprep.subr.bf16.mxu0 0
        %7486 = vmatpush1.bf16.msra.mxu0 %v7396
        %7487 = vmatprep.subr.bf16.mxu0 0
        %7488 = vmatpush1.bf16.msra.mxu0 %v7397
        %7489 = vmatprep.subr.bf16.mxu0 0
        %7490 = vmatpush1.bf16.msra.mxu0 %v7398
        %7491 = vmatprep.subr.bf16.mxu0 0
        %7492 = vmatpush1.bf16.msra.mxu0 %v7399
        %7493 = vmatprep.subr.bf16.mxu0 0
        %7494 = vmatpush1.bf16.msra.mxu0 %v7400
        %7495 = vmatprep.subr.bf16.mxu0 0
        %7496 = vmatpush1.bf16.msra.mxu0 %v7401
        %7497 = vmatprep.subr.bf16.mxu0 0
        %7498 = vmatpush1.bf16.msra.mxu0 %v7402
        %7499 = vmatprep.subr.bf16.mxu0 0
        %7500 = vmatpush1.bf16.msra.mxu0 %v7403
        %7501 = vmatprep.mubr.bf16.mxu0 %v7234
        %7502 = vmatmul.mubr.bf16.gmra.mrb[0].mxu0 %v7107
        %v7503 = vpop.f32.mrb[0].mxu0
        %v7504 = vadd.f32 0.0, %v7503
        %v7505 = vpop.f32.mrb[0].mxu0
        %v7506 = vpop.f32.mrb[0].mxu0
        %v7507 = vadd.f32 0.0, %v7506
        %v7508 = vpop.f32.mrb[0].mxu0
        %7509 = vmatprep.mubr.bf16.mxu0 %v7237
        %7510 = vmatmul.mubr.bf16.gmra.mrb[0].mxu0 %v7110
        %v7511 = vpop.f32.mrb[0].mxu0
        %v7512 = vadd.f32 0.0, %v7511
        %v7513 = vpop.f32.mrb[0].mxu0
        %v7514 = vpop.f32.mrb[0].mxu0
        %v7515 = vadd.f32 0.0, %v7514
        %v7516 = vpop.f32.mrb[0].mxu0
        %7517 = vmatprep.mubr.bf16.mxu0 %v7240
        %7518 = vmatmul.mubr.bf16.gmra.mrb[0].mxu0 %v7113
        %v7519 = vpop.f32.mrb[0].mxu0
        %v7520 = vadd.f32 0.0, %v7519
        %v7521 = vpop.f32.mrb[0].mxu0
        %v7522 = vpop.f32.mrb[0].mxu0
        %v7523 = vadd.f32 0.0, %v7522
        %v7524 = vpop.f32.mrb[0].mxu0
        %7525 = vmatprep.mubr.bf16.mxu0 %v7243
        %7526 = vmatmul.mubr.bf16.gmra.mrb[0].mxu0 %v7116
        %v7527 = vpop.f32.mrb[0].mxu0
        %v7528 = vadd.f32 0.0, %v7527
        %v7529 = vpop.f32.mrb[0].mxu0
        %v7530 = vpop.f32.mrb[0].mxu0
        %v7531 = vadd.f32 0.0, %v7530
        %v7532 = vpop.f32.mrb[0].mxu0
        %7533 = vmatprep.mubr.bf16.mxu0 %v7246
        %7534 = vmatmul.mubr.bf16.gmra.mrb[0].mxu0 %v7119
        %v7535 = vpop.f32.mrb[0].mxu0
        %v7536 = vadd.f32 0.0, %v7535
        %v7537 = vpop.f32.mrb[0].mxu0
        %v7538 = vpop.f32.mrb[0].mxu0
        %v7539 = vadd.f32 0.0, %v7538
        %v7540 = vpop.f32.mrb[0].mxu0
        %7541 = vmatprep.mubr.bf16.mxu0 %v7249
        %7542 = vmatmul.mubr.bf16.gmra.mrb[0].mxu0 %v7122
        %v7543 = vpop.f32.mrb[0].mxu0
        %v7544 = vadd.f32 0.0, %v7543
        %v7545 = vpop.f32.mrb[0].mxu0
        %v7546 = vpop.f32.mrb[0].mxu0
        %v7547 = vadd.f32 0.0, %v7546
        %v7548 = vpop.f32.mrb[0].mxu0
        %7549 = vmatprep.mubr.bf16.mxu0 %v7252
        %7550 = vmatmul.mubr.bf16.gmra.mrb[0].mxu0 %v7125
        %v7551 = vpop.f32.mrb[0].mxu0
        %v7552 = vadd.f32 0.0, %v7551
        %v7553 = vpop.f32.mrb[0].mxu0
        %v7554 = vpop.f32.mrb[0].mxu0
        %v7555 = vadd.f32 0.0, %v7554
        %v7556 = vpop.f32.mrb[0].mxu0
        %7557 = vmatprep.mubr.bf16.mxu0 %v7255
        %7558 = vmatmul.mubr.bf16.gmra.mrb[0].mxu0 %v7128
        %v7559 = vpop.f32.mrb[0].mxu0
        %v7560 = vadd.f32 0.0, %v7559
        %v7561 = vpop.f32.mrb[0].mxu0
        %v7562 = vpop.f32.mrb[0].mxu0
        %v7563 = vadd.f32 0.0, %v7562
        %v7564 = vpop.f32.mrb[0].mxu0
        %7565 = vmatprep.mubr.bf16.mxu0 %v7258
        %7566 = vmatmul.mubr.bf16.gmra.mrb[0].mxu0 %v7131
        %v7567 = vpop.f32.mrb[0].mxu0
        %v7568 = vadd.f32 0.0, %v7567
        %v7569 = vpop.f32.mrb[0].mxu0
        %v7570 = vpop.f32.mrb[0].mxu0
        %v7571 = vadd.f32 0.0, %v7570
        %v7572 = vpop.f32.mrb[0].mxu0
        %7573 = vmatprep.mubr.bf16.mxu0 %v7261
        %7574 = vmatmul.mubr.bf16.gmra.mrb[0].mxu0 %v7134
        %v7575 = vpop.f32.mrb[0].mxu0
        %v7576 = vadd.f32 0.0, %v7575
        %v7577 = vpop.f32.mrb[0].mxu0
        %v7578 = vpop.f32.mrb[0].mxu0
        %v7579 = vadd.f32 0.0, %v7578
        %v7580 = vpop.f32.mrb[0].mxu0
        %7581 = vmatprep.mubr.bf16.mxu0 %v7264
        %7582 = vmatmul.mubr.bf16.gmra.mrb[0].mxu0 %v7137
        %v7583 = vpop.f32.mrb[0].mxu0
        %v7584 = vadd.f32 0.0, %v7583
        %v7585 = vpop.f32.mrb[0].mxu0
        %v7586 = vpop.f32.mrb[0].mxu0
        %v7587 = vadd.f32 0.0, %v7586
        %v7588 = vpop.f32.mrb[0].mxu0
        %7589 = vmatprep.mubr.bf16.mxu0 %v7267
        %7590 = vmatmul.mubr.bf16.gmra.mrb[0].mxu0 %v7140
        %v7591 = vpop.f32.mrb[0].mxu0
        %v7592 = vadd.f32 0.0, %v7591
        %v7593 = vpop.f32.mrb[0].mxu0
        %v7594 = vpop.f32.mrb[0].mxu0
        %v7595 = vadd.f32 0.0, %v7594
        %v7596 = vpop.f32.mrb[0].mxu0
        %7597 = vmatprep.mubr.bf16.mxu0 %v7270
        %7598 = vmatmul.mubr.bf16.gmra.mrb[0].mxu0 %v7143
        %v7599 = vpop.f32.mrb[0].mxu0
        %v7600 = vadd.f32 0.0, %v7599
        %v7601 = vpop.f32.mrb[0].mxu0
        %v7602 = vpop.f32.mrb[0].mxu0
        %v7603 = vadd.f32 0.0, %v7602
        %v7604 = vpop.f32.mrb[0].mxu0
        %7605 = vmatprep.mubr.bf16.mxu0 %v7273
        %7606 = vmatmul.mubr.bf16.gmra.mrb[0].mxu0 %v7146
        %v7607 = vpop.f32.mrb[0].mxu0
        %v7608 = vadd.f32 0.0, %v7607
        %v7609 = vpop.f32.mrb[0].mxu0
        %v7610 = vpop.f32.mrb[0].mxu0
        %v7611 = vadd.f32 0.0, %v7610
        %v7612 = vpop.f32.mrb[0].mxu0
        %7613 = vmatprep.mubr.bf16.mxu0 %v7276
        %7614 = vmatmul.mubr.bf16.gmra.mrb[0].mxu0 %v7149
        %v7615 = vpop.f32.mrb[0].mxu0
        %v7616 = vadd.f32 0.0, %v7615
        %v7617 = vpop.f32.mrb[0].mxu0
        %v7618 = vpop.f32.mrb[0].mxu0
        %v7619 = vadd.f32 0.0, %v7618
        %v7620 = vpop.f32.mrb[0].mxu0
        %7621 = vmatprep.mubr.bf16.mxu0 %v7278
        %7622 = vmatmul.mubr.bf16.gmra.mrb[0].mxu0 %v7152
        %v7623 = vpop.f32.mrb[0].mxu0
        %v7624 = vadd.f32 0.0, %v7623
        %v7625 = vpop.f32.mrb[0].mxu0
        %v7626 = vpop.f32.mrb[0].mxu0
        %v7627 = vadd.f32 0.0, %v7626
        %v7628 = vpop.f32.mrb[0].mxu0
        %7629 = vdwg.mxu0
        %7630 = vmatprep.subr.bf16.mxu0 0
        %7631 = vmatpush1.bf16.msra.mxu0 %v7404
        %7632 = vmatprep.subr.bf16.mxu0 0
        %7633 = vmatpush1.bf16.msra.mxu0 %v7405
        %7634 = vmatprep.subr.bf16.mxu0 0
        %7635 = vmatpush1.bf16.msra.mxu0 0
        %7636 = vmatprep.subr.bf16.mxu0 0
        %7637 = vmatpush1.bf16.msra.mxu0 0
        %7638 = vmatprep.subr.bf16.mxu0 0
        %7639 = vmatpush1.bf16.msra.mxu0 0
        %7640 = vmatprep.subr.bf16.mxu0 0
        %7641 = vmatpush1.bf16.msra.mxu0 0
        %7642 = vmatprep.subr.bf16.mxu0 0
        %7643 = vmatpush1.bf16.msra.mxu0 0
        %7644 = vmatprep.subr.bf16.mxu0 0
        %7645 = vmatpush1.bf16.msra.mxu0 0
        %7646 = vmatprep.subr.bf16.mxu0 0
        %7647 = vmatpush1.bf16.msra.mxu0 0
        %7648 = vmatprep.subr.bf16.mxu0 0
        %7649 = vmatpush1.bf16.msra.mxu0 0
        %7650 = vmatprep.subr.bf16.mxu0 0
        %7651 = vmatpush1.bf16.msra.mxu0 0
        %7652 = vmatprep.subr.bf16.mxu0 0
        %7653 = vmatpush1.bf16.msra.mxu0 0
        %7654 = vmatprep.subr.bf16.mxu0 0
        %7655 = vmatpush1.bf16.msra.mxu0 0
        %7656 = vmatprep.subr.bf16.mxu0 0
        %7657 = vmatpush1.bf16.msra.mxu0 0
        %7658 = vmatprep.subr.bf16.mxu0 0
        %7659 = vmatpush1.bf16.msra.mxu0 0
        %7660 = vmatprep.subr.bf16.mxu0 0
        %7661 = vmatpush1.bf16.msra.mxu0 0
        %7662 = vmatprep.mubr.bf16.mxu0 0
        %7663 = vmatmul.mubr.bf16.gmra.mrb[0].mxu0 %v7425
        %v7664 = vpop.f32.mrb[0].mxu0
        %v7665 = vadd.f32 %v7504, %v7664
        %v7666 = vpop.f32.mrb[0].mxu0
        %v7667 = vpop.f32.mrb[0].mxu0
        %v7668 = vadd.f32 %v7507, %v7667
        %v7669 = vpop.f32.mrb[0].mxu0
        %7670 = vmatprep.mubr.bf16.mxu0 0
        %7671 = vmatmul.mubr.bf16.gmra.mrb[0].mxu0 %v7428
        %v7672 = vpop.f32.mrb[0].mxu0
        %v7673 = vadd.f32 %v7512, %v7672
        %v7674 = vpop.f32.mrb[0].mxu0
        %v7675 = vpop.f32.mrb[0].mxu0
        %v7676 = vadd.f32 %v7515, %v7675
        %v7677 = vpop.f32.mrb[0].mxu0
        %7678 = vmatprep.mubr.bf16.mxu0 0
        %7679 = vmatmul.mubr.bf16.gmra.mrb[0].mxu0 %v7431
        %v7680 = vpop.f32.mrb[0].mxu0
        %v7681 = vadd.f32 %v7520, %v7680
        %v7682 = vpop.f32.mrb[0].mxu0
        %v7683 = vpop.f32.mrb[0].mxu0
        %v7684 = vadd.f32 %v7523, %v7683
        %v7685 = vpop.f32.mrb[0].mxu0
        %7686 = vmatprep.mubr.bf16.mxu0 0
        %7687 = vmatmul.mubr.bf16.gmra.mrb[0].mxu0 %v7434
        %v7688 = vpop.f32.mrb[0].mxu0
        %v7689 = vadd.f32 %v7528, %v7688
        %v7690 = vpop.f32.mrb[0].mxu0
        %v7691 = vpop.f32.mrb[0].mxu0
        %v7692 = vadd.f32 %v7531, %v7691
        %v7693 = vpop.f32.mrb[0].mxu0
        %7694 = vmatprep.mubr.bf16.mxu0 0
        %7695 = vmatmul.mubr.bf16.gmra.mrb[0].mxu0 %v7437
        %v7696 = vpop.f32.mrb[0].mxu0
        %v7697 = vadd.f32 %v7536, %v7696
        %v7698 = vpop.f32.mrb[0].mxu0
        %v7699 = vpop.f32.mrb[0].mxu0
        %v7700 = vadd.f32 %v7539, %v7699
        %v7701 = vpop.f32.mrb[0].mxu0
        %7702 = vmatprep.mubr.bf16.mxu0 0
        %7703 = vmatmul.mubr.bf16.gmra.mrb[0].mxu0 %v7440
        %v7704 = vpop.f32.mrb[0].mxu0
        %v7705 = vadd.f32 %v7544, %v7704
        %v7706 = vpop.f32.mrb[0].mxu0
        %v7707 = vpop.f32.mrb[0].mxu0
        %v7708 = vadd.f32 %v7547, %v7707
        %v7709 = vpop.f32.mrb[0].mxu0
        %7710 = vmatprep.mubr.bf16.mxu0 0
        %7711 = vmatmul.mubr.bf16.gmra.mrb[0].mxu0 %v7443
        %v7712 = vpop.f32.mrb[0].mxu0
        %v7713 = vadd.f32 %v7552, %v7712
        %v7714 = vpop.f32.mrb[0].mxu0
        %v7715 = vpop.f32.mrb[0].mxu0
        %v7716 = vadd.f32 %v7555, %v7715
        %v7717 = vpop.f32.mrb[0].mxu0
        %7718 = vmatprep.mubr.bf16.mxu0 0
        %7719 = vmatmul.mubr.bf16.gmra.mrb[0].mxu0 %v7446
        %v7720 = vpop.f32.mrb[0].mxu0
        %v7721 = vadd.f32 %v7560, %v7720
        %v7722 = vpop.f32.mrb[0].mxu0
        %v7723 = vpop.f32.mrb[0].mxu0
        %v7724 = vadd.f32 %v7563, %v7723
        %v7725 = vpop.f32.mrb[0].mxu0
        %7726 = vmatprep.mubr.bf16.mxu0 0
        %7727 = vmatmul.mubr.bf16.gmra.mrb[0].mxu0 %v7449
        %v7728 = vpop.f32.mrb[0].mxu0
        %v7729 = vadd.f32 %v7568, %v7728
        %v7730 = vpop.f32.mrb[0].mxu0
        %v7731 = vpop.f32.mrb[0].mxu0
        %v7732 = vadd.f32 %v7571, %v7731
        %v7733 = vpop.f32.mrb[0].mxu0
        %7734 = vmatprep.mubr.bf16.mxu0 0
        %7735 = vmatmul.mubr.bf16.gmra.mrb[0].mxu0 %v7452
        %v7736 = vpop.f32.mrb[0].mxu0
        %v7737 = vadd.f32 %v7576, %v7736
        %v7738 = vpop.f32.mrb[0].mxu0
        %v7739 = vpop.f32.mrb[0].mxu0
        %v7740 = vadd.f32 %v7579, %v7739
        %v7741 = vpop.f32.mrb[0].mxu0
        %7742 = vmatprep.mubr.bf16.mxu0 0
        %7743 = vmatmul.mubr.bf16.gmra.mrb[0].mxu0 %v7455
        %v7744 = vpop.f32.mrb[0].mxu0
        %v7745 = vadd.f32 %v7584, %v7744
        %v7746 = vpop.f32.mrb[0].mxu0
        %v7747 = vpop.f32.mrb[0].mxu0
        %v7748 = vadd.f32 %v7587, %v7747
        %v7749 = vpop.f32.mrb[0].mxu0
        %7750 = vmatprep.mubr.bf16.mxu0 0
        %7751 = vmatmul.mubr.bf16.gmra.mrb[0].mxu0 %v7458
        %v7752 = vpop.f32.mrb[0].mxu0
        %v7753 = vadd.f32 %v7592, %v7752
        %v7754 = vpop.f32.mrb[0].mxu0
        %v7755 = vpop.f32.mrb[0].mxu0
        %v7756 = vadd.f32 %v7595, %v7755
        %v7757 = vpop.f32.mrb[0].mxu0
        %7758 = vmatprep.mubr.bf16.mxu0 0
        %7759 = vmatmul.mubr.bf16.gmra.mrb[0].mxu0 %v7461
        %v7760 = vpop.f32.mrb[0].mxu0
        %v7761 = vadd.f32 %v7600, %v7760
        %v7762 = vpop.f32.mrb[0].mxu0
        %v7763 = vpop.f32.mrb[0].mxu0
        %v7764 = vadd.f32 %v7603, %v7763
        %v7765 = vpop.f32.mrb[0].mxu0
        %7766 = vmatprep.mubr.bf16.mxu0 0
        %7767 = vmatmul.mubr.bf16.gmra.mrb[0].mxu0 %v7464
        %v7768 = vpop.f32.mrb[0].mxu0
        %v7769 = vadd.f32 %v7608, %v7768
        %v7770 = vpop.f32.mrb[0].mxu0
        %v7771 = vpop.f32.mrb[0].mxu0
        %v7772 = vadd.f32 %v7611, %v7771
        %v7773 = vpop.f32.mrb[0].mxu0
        %7774 = vmatprep.mubr.bf16.mxu0 0
        %7775 = vmatmul.mubr.bf16.gmra.mrb[0].mxu0 %v7467
        %v7776 = vpop.f32.mrb[0].mxu0
        %v7777 = vadd.f32 %v7616, %v7776
        %v7778 = vpop.f32.mrb[0].mxu0
        %v7779 = vpop.f32.mrb[0].mxu0
        %v7780 = vadd.f32 %v7619, %v7779
        %v7781 = vpop.f32.mrb[0].mxu0
        %7782 = vmatprep.mubr.bf16.mxu0 0
        %7783 = vmatmul.mubr.bf16.gmra.mrb[0].mxu0 %v3075
        %v7784 = vpop.f32.mrb[0].mxu0
        %v7785 = vadd.f32 %v7624, %v7784
        %v7786 = vpop.f32.mrb[0].mxu0
        %v7787 = vpop.f32.mrb[0].mxu0
        %v7788 = vadd.f32 %v7627, %v7787
        %v7789 = vpop.f32.mrb[0].mxu0
        %7790 = vdwg.mxu0
        %7823 = vrot.lane.b32.xlu0 %v7665, 32
        %v7824 = vpop.permute.xlu0 %7823
        %7825 = vrot.lane.b32.xlu0 %v7668, 32
        %v7826 = vpop.permute.xlu0 %7825
        %7827 = vrot.lane.b32.xlu0 %v7673, 32
        %v7828 = vpop.permute.xlu0 %7827
        %7829 = vrot.lane.b32.xlu0 %v7676, 32
        %v7830 = vpop.permute.xlu0 %7829
        %7831 = vrot.lane.b32.xlu0 %v7681, 32
        %v7832 = vpop.permute.xlu0 %7831
        %7833 = vrot.lane.b32.xlu0 %v7684, 32
        %v7834 = vpop.permute.xlu0 %7833
        %7835 = vrot.lane.b32.xlu0 %v7689, 32
        %v7836 = vpop.permute.xlu0 %7835
        %7837 = vrot.lane.b32.xlu0 %v7692, 32
        %v7838 = vpop.permute.xlu0 %7837
        %7839 = vrot.lane.b32.xlu0 %v7697, 32
        %v7840 = vpop.permute.xlu0 %7839
        %7841 = vrot.lane.b32.xlu0 %v7700, 32
        %v7842 = vpop.permute.xlu0 %7841
        %7843 = vrot.lane.b32.xlu0 %v7705, 32
        %v7844 = vpop.permute.xlu0 %7843
        %7845 = vrot.lane.b32.xlu0 %v7708, 32
        %v7846 = vpop.permute.xlu0 %7845
        %7847 = vrot.lane.b32.xlu0 %v7713, 32
        %v7848 = vpop.permute.xlu0 %7847
        %7849 = vrot.lane.b32.xlu0 %v7716, 32
        %v7850 = vpop.permute.xlu0 %7849
        %7851 = vrot.lane.b32.xlu0 %v7721, 32
        %v7852 = vpop.permute.xlu0 %7851
        %7853 = vrot.lane.b32.xlu0 %v7724, 32
        %v7854 = vpop.permute.xlu0 %7853
        %7855 = vrot.lane.b32.xlu0 %v7729, 32
        %v7856 = vpop.permute.xlu0 %7855
        %7857 = vrot.lane.b32.xlu0 %v7732, 32
        %v7858 = vpop.permute.xlu0 %7857
        %7859 = vrot.lane.b32.xlu0 %v7737, 32
        %v7860 = vpop.permute.xlu0 %7859
        %7861 = vrot.lane.b32.xlu0 %v7740, 32
        %v7862 = vpop.permute.xlu0 %7861
        %7863 = vrot.lane.b32.xlu0 %v7745, 32
        %v7864 = vpop.permute.xlu0 %7863
        %7865 = vrot.lane.b32.xlu0 %v7748, 32
        %v7866 = vpop.permute.xlu0 %7865
        %7867 = vrot.lane.b32.xlu0 %v7753, 32
        %v7868 = vpop.permute.xlu0 %7867
        %7869 = vrot.lane.b32.xlu0 %v7756, 32
        %v7870 = vpop.permute.xlu0 %7869
        %7871 = vrot.lane.b32.xlu0 %v7761, 32
        %v7872 = vpop.permute.xlu0 %7871
        %7873 = vrot.lane.b32.xlu0 %v7764, 32
        %v7874 = vpop.permute.xlu0 %7873
        %7875 = vrot.lane.b32.xlu0 %v7769, 32
        %v7876 = vpop.permute.xlu0 %7875
        %7877 = vrot.lane.b32.xlu0 %v7772, 32
        %v7878 = vpop.permute.xlu0 %7877
        %7879 = vrot.lane.b32.xlu0 %v7777, 32
        %v7880 = vpop.permute.xlu0 %7879
        %7881 = vrot.lane.b32.xlu0 %v7780, 32
        %v7882 = vpop.permute.xlu0 %7881
        %7883 = vrot.lane.b32.xlu0 %v7785, 32
        %v7884 = vpop.permute.xlu0 %7883
        %7885 = vrot.lane.b32.xlu0 %v7788, 32
        %v7886 = vpop.permute.xlu0 %7885
        %v7919 = vadd.f32 %v6201, %v7824
        %v7920 = vadd.f32 %v6204, %v7826
        %v7921 = vadd.f32 %v6209, %v7828
        %v7922 = vadd.f32 %v6212, %v7830
        %v7923 = vadd.f32 %v6217, %v7832
        %v7924 = vadd.f32 %v6220, %v7834
        %v7925 = vadd.f32 %v6225, %v7836
        %v7926 = vadd.f32 %v6228, %v7838
        %v7927 = vadd.f32 %v6233, %v7840
        %v7928 = vadd.f32 %v6236, %v7842
        %v7929 = vadd.f32 %v6241, %v7844
        %v7930 = vadd.f32 %v6244, %v7846
        %v7931 = vadd.f32 %v6249, %v7848
        %v7932 = vadd.f32 %v6252, %v7850
        %v7933 = vadd.f32 %v6257, %v7852
        %v7934 = vadd.f32 %v6260, %v7854
        %v7935 = vadd.f32 %v6265, %v7856
        %v7936 = vadd.f32 %v6268, %v7858
        %v7937 = vadd.f32 %v6273, %v7860
        %v7938 = vadd.f32 %v6276, %v7862
        %v7939 = vadd.f32 %v6281, %v7864
        %v7940 = vadd.f32 %v6284, %v7866
        %v7941 = vadd.f32 %v6289, %v7868
        %v7942 = vadd.f32 %v6292, %v7870
        %v7943 = vadd.f32 %v6297, %v7872
        %v7944 = vadd.f32 %v6300, %v7874
        %v7945 = vadd.f32 %v6305, %v7876
        %v7946 = vadd.f32 %v6308, %v7878
        %v7947 = vadd.f32 %v6313, %v7880
        %v7948 = vadd.f32 %v6316, %v7882
        %v7949 = vadd.f32 %v6321, %v7884
        %v7950 = vadd.f32 %v6324, %v7886
        %v7951 = vld [vmem:[%s13] sm:$0x1]
        %v7953 = vlaneseq
        %v7954 = vshrl.u32 %v7953, 7
        %v7955 = vsub.s32 0, %v7954
        %v7956 = vrot.slane %v7951, %v7955
        %7957 = vrot.lane.b32.xlu0 %v7956, 32
        %v7958 = vpop.permute.xlu0 %7957
        %v7960 = vadd.f32 %v7919, %v7958
        %v7961 = vadd.f32 %v7920, %v7958
        %v7962 = vadd.f32 %v7921, %v7958
        %v7963 = vadd.f32 %v7922, %v7958
        %v7964 = vadd.f32 %v7923, %v7958
        %v7965 = vadd.f32 %v7924, %v7958
        %v7966 = vadd.f32 %v7925, %v7958
        %v7967 = vadd.f32 %v7926, %v7958
        %v7968 = vadd.f32 %v7927, %v7958
        %v7969 = vadd.f32 %v7928, %v7958
        %v7970 = vadd.f32 %v7929, %v7958
        %v7971 = vadd.f32 %v7930, %v7958
        %v7972 = vadd.f32 %v7931, %v7958
        %v7973 = vadd.f32 %v7932, %v7958
        %v7974 = vadd.f32 %v7933, %v7958
        %v7975 = vadd.f32 %v7934, %v7958
        %v7976 = vadd.f32 %v7935, %v7958
        %v7977 = vadd.f32 %v7936, %v7958
        %v7978 = vadd.f32 %v7937, %v7958
        %v7979 = vadd.f32 %v7938, %v7958
        %v7980 = vadd.f32 %v7939, %v7958
        %v7981 = vadd.f32 %v7940, %v7958
        %v7982 = vadd.f32 %v7941, %v7958
        %v7983 = vadd.f32 %v7942, %v7958
        %v7984 = vadd.f32 %v7943, %v7958
        %v7985 = vadd.f32 %v7944, %v7958
        %v7986 = vadd.f32 %v7945, %v7958
        %v7987 = vadd.f32 %v7946, %v7958
        %v7988 = vadd.f32 %v7947, %v7958
        %v7989 = vadd.f32 %v7948, %v7958
        %v7990 = vadd.f32 %v7949, %v7958
        %v7991 = vadd.f32 %v7950, %v7958
        %v7992 = vmax.f32 %v7960, 0.0
        %v7993 = vmax.f32 %v7961, 0.0
        %v7994 = vmax.f32 %v7962, 0.0
        %v7995 = vmax.f32 %v7963, 0.0
        %v7996 = vmax.f32 %v7964, 0.0
        %v7997 = vmax.f32 %v7965, 0.0
        %v7998 = vmax.f32 %v7966, 0.0
        %v7999 = vmax.f32 %v7967, 0.0
        %v8000 = vmax.f32 %v7968, 0.0
        %v8001 = vmax.f32 %v7969, 0.0
        %v8002 = vmax.f32 %v7970, 0.0
        %v8003 = vmax.f32 %v7971, 0.0
        %v8004 = vmax.f32 %v7972, 0.0
        %v8005 = vmax.f32 %v7973, 0.0
        %v8006 = vmax.f32 %v7974, 0.0
        %v8007 = vmax.f32 %v7975, 0.0
        %v8008 = vmax.f32 %v7976, 0.0
        %v8009 = vmax.f32 %v7977, 0.0
        %v8010 = vmax.f32 %v7978, 0.0
        %v8011 = vmax.f32 %v7979, 0.0
        %v8012 = vmax.f32 %v7980, 0.0
        %v8013 = vmax.f32 %v7981, 0.0
        %v8014 = vmax.f32 %v7982, 0.0
        %v8015 = vmax.f32 %v7983, 0.0
        %v8016 = vmax.f32 %v7984, 0.0
        %v8017 = vmax.f32 %v7985, 0.0
        %v8018 = vmax.f32 %v7986, 0.0
        %v8019 = vmax.f32 %v7987, 0.0
        %v8020 = vmax.f32 %v7988, 0.0
        %v8021 = vmax.f32 %v7989, 0.0
        %v8022 = vmax.f32 %v7990, 0.0
        %v8023 = vmax.f32 %v7991, 0.0
        %v8024 = vpack.c.bf16 %v7993, %v7992
        %v8025 = vpack.c.bf16 %v7995, %v7994
        %v8026 = vpack.c.bf16 %v7997, %v7996
        %v8027 = vpack.c.bf16 %v7999, %v7998
        %v8028 = vpack.c.bf16 %v8001, %v8000
        %v8029 = vpack.c.bf16 %v8003, %v8002
        %v8030 = vpack.c.bf16 %v8005, %v8004
        %v8031 = vpack.c.bf16 %v8007, %v8006
        %v8032 = vpack.c.bf16 %v8009, %v8008
        %v8033 = vpack.c.bf16 %v8011, %v8010
        %v8034 = vpack.c.bf16 %v8013, %v8012
        %v8035 = vpack.c.bf16 %v8015, %v8014
        %v8036 = vpack.c.bf16 %v8017, %v8016
        %v8037 = vpack.c.bf16 %v8019, %v8018
        %v8038 = vpack.c.bf16 %v8021, %v8020
        %v8039 = vpack.c.bf16 %v8023, %v8022
        %8056 = vrot.lane.b32.xlu0 %v8024, 96
        %v8057 = vpop.permute.xlu0 %8056
        %8058 = vrot.lane.b32.xlu0 %v8025, 96
        %v8059 = vpop.permute.xlu0 %8058
        %8060 = vrot.lane.b32.xlu0 %v8026, 96
        %v8061 = vpop.permute.xlu0 %8060
        %8062 = vrot.lane.b32.xlu0 %v8027, 96
        %v8063 = vpop.permute.xlu0 %8062
        %8064 = vrot.lane.b32.xlu0 %v8028, 96
        %v8065 = vpop.permute.xlu0 %8064
        %8066 = vrot.lane.b32.xlu0 %v8029, 96
        %v8067 = vpop.permute.xlu0 %8066
        %8068 = vrot.lane.b32.xlu0 %v8030, 96
        %v8069 = vpop.permute.xlu0 %8068
        %8070 = vrot.lane.b32.xlu0 %v8031, 96
        %v8071 = vpop.permute.xlu0 %8070
        %8072 = vrot.lane.b32.xlu0 %v8032, 96
        %v8073 = vpop.permute.xlu0 %8072
        %8074 = vrot.lane.b32.xlu0 %v8033, 96
        %v8075 = vpop.permute.xlu0 %8074
        %8076 = vrot.lane.b32.xlu0 %v8034, 96
        %v8077 = vpop.permute.xlu0 %8076
        %8078 = vrot.lane.b32.xlu0 %v8035, 96
        %v8079 = vpop.permute.xlu0 %8078
        %8080 = vrot.lane.b32.xlu0 %v8036, 96
        %v8081 = vpop.permute.xlu0 %8080
        %8082 = vrot.lane.b32.xlu0 %v8037, 96
        %v8083 = vpop.permute.xlu0 %8082
        %8084 = vrot.lane.b32.xlu0 %v8038, 96
        %v8085 = vpop.permute.xlu0 %8084
        %8086 = vrot.lane.b32.xlu0 %v8039, 96
        %v8087 = vpop.permute.xlu0 %8086
        %v8089 = vshrl.u32 %v8057, 16
        %v8091 = vrot.slane %v8089, 7
        %v8092 = vshll.u32 %v8057, 16
        %v8094 = vor.u32 %v8091, %v8092
        %v8096 = vshrl.u32 %v8059, 16
        %v8098 = vrot.slane %v8096, 7
        %v8099 = vshll.u32 %v8059, 16
        %v8101 = vor.u32 %v8098, %v8099
        %v8103 = vshrl.u32 %v8061, 16
        %v8105 = vrot.slane %v8103, 7
        %v8106 = vshll.u32 %v8061, 16
        %v8108 = vor.u32 %v8105, %v8106
        %v8110 = vshrl.u32 %v8063, 16
        %v8112 = vrot.slane %v8110, 7
        %v8113 = vshll.u32 %v8063, 16
        %v8115 = vor.u32 %v8112, %v8113
        %v8117 = vshrl.u32 %v8065, 16
        %v8119 = vrot.slane %v8117, 7
        %v8120 = vshll.u32 %v8065, 16
        %v8122 = vor.u32 %v8119, %v8120
        %v8124 = vshrl.u32 %v8067, 16
        %v8126 = vrot.slane %v8124, 7
        %v8127 = vshll.u32 %v8067, 16
        %v8129 = vor.u32 %v8126, %v8127
        %v8131 = vshrl.u32 %v8069, 16
        %v8133 = vrot.slane %v8131, 7
        %v8134 = vshll.u32 %v8069, 16
        %v8136 = vor.u32 %v8133, %v8134
        %v8138 = vshrl.u32 %v8071, 16
        %v8140 = vrot.slane %v8138, 7
        %v8141 = vshll.u32 %v8071, 16
        %v8143 = vor.u32 %v8140, %v8141
        %v8145 = vshrl.u32 %v8073, 16
        %v8147 = vrot.slane %v8145, 7
        %v8148 = vshll.u32 %v8073, 16
        %v8150 = vor.u32 %v8147, %v8148
        %v8152 = vshrl.u32 %v8075, 16
        %v8154 = vrot.slane %v8152, 7
        %v8155 = vshll.u32 %v8075, 16
        %v8157 = vor.u32 %v8154, %v8155
        %v8159 = vshrl.u32 %v8077, 16
        %v8161 = vrot.slane %v8159, 7
        %v8162 = vshll.u32 %v8077, 16
        %v8164 = vor.u32 %v8161, %v8162
        %v8166 = vshrl.u32 %v8079, 16
        %v8168 = vrot.slane %v8166, 7
        %v8169 = vshll.u32 %v8079, 16
        %v8171 = vor.u32 %v8168, %v8169
        %v8173 = vshrl.u32 %v8081, 16
        %v8175 = vrot.slane %v8173, 7
        %v8176 = vshll.u32 %v8081, 16
        %v8178 = vor.u32 %v8175, %v8176
        %v8180 = vshrl.u32 %v8083, 16
        %v8182 = vrot.slane %v8180, 7
        %v8183 = vshll.u32 %v8083, 16
        %v8185 = vor.u32 %v8182, %v8183
        %v8187 = vshrl.u32 %v8085, 16
        %v8189 = vrot.slane %v8187, 7
        %v8190 = vshll.u32 %v8085, 16
        %v8192 = vor.u32 %v8189, %v8190
        %v8194 = vshrl.u32 %v8087, 16
        %v8196 = vrot.slane %v8194, 7
        %v8197 = vshll.u32 %v8087, 16
        %v8199 = vor.u32 %v8196, %v8197
        %v8232 = vsel %vm872, 0, %v8094
        %v8233 = vsel %vm872, 0, %v8101
        %v8234 = vsel %vm872, 0, %v8108
        %v8235 = vsel %vm872, 0, %v8115
        %v8236 = vsel %vm872, 0, %v8122
        %v8237 = vsel %vm872, 0, %v8129
        %v8238 = vsel %vm872, 0, %v8136
        %v8239 = vsel %vm872, 0, %v8143
        %v8240 = vsel %vm872, 0, %v8150
        %v8241 = vsel %vm872, 0, %v8157
        %v8242 = vsel %vm872, 0, %v8164
        %v8243 = vsel %vm872, 0, %v8171
        %v8244 = vsel %vm872, 0, %v8178
        %v8245 = vsel %vm872, 0, %v8185
        %v8246 = vsel %vm872, 0, %v8192
        %v8247 = vsel %vm872, 0, %v8199
        %v8248 = vsel %vm872, %v8091, 0
        %v8249 = vsel %vm872, %v8098, 0
        %v8250 = vsel %vm872, %v8105, 0
        %v8251 = vsel %vm872, %v8112, 0
        %v8252 = vsel %vm872, %v8119, 0
        %v8253 = vsel %vm872, %v8126, 0
        %v8254 = vsel %vm872, %v8133, 0
        %v8255 = vsel %vm872, %v8140, 0
        %v8256 = vsel %vm872, %v8147, 0
        %v8257 = vsel %vm872, %v8154, 0
        %v8258 = vsel %vm872, %v8161, 0
        %v8259 = vsel %vm872, %v8168, 0
        %v8260 = vsel %vm872, %v8175, 0
        %v8261 = vsel %vm872, %v8182, 0
        %v8262 = vsel %vm872, %v8189, 0
        %v8263 = vsel %vm872, %v8196, 0
        %v8265 = vshrl.u32 %v8232, 16
        %v8267 = vshll.u32 %v8232, 16
        %v8269 = vrot.slane %v8267, 1
        %v8270 = vor.u32 %v8265, %v8269
        %v8272 = vshll.u32 %v8248, 16
        %v8274 = vrot.slane %v8272, 1
        %v8275 = vsel %vm907, %v8270, %v8274
        %v8277 = vshrl.u32 %v8233, 16
        %v8279 = vshll.u32 %v8233, 16
        %v8281 = vrot.slane %v8279, 1
        %v8282 = vor.u32 %v8277, %v8281
        %v8284 = vshll.u32 %v8249, 16
        %v8286 = vrot.slane %v8284, 1
        %v8287 = vsel %vm907, %v8282, %v8286
        %v8289 = vshrl.u32 %v8234, 16
        %v8291 = vshll.u32 %v8234, 16
        %v8293 = vrot.slane %v8291, 1
        %v8294 = vor.u32 %v8289, %v8293
        %v8296 = vshll.u32 %v8250, 16
        %v8298 = vrot.slane %v8296, 1
        %v8299 = vsel %vm907, %v8294, %v8298
        %v8301 = vshrl.u32 %v8235, 16
        %v8303 = vshll.u32 %v8235, 16
        %v8305 = vrot.slane %v8303, 1
        %v8306 = vor.u32 %v8301, %v8305
        %v8308 = vshll.u32 %v8251, 16
        %v8310 = vrot.slane %v8308, 1
        %v8311 = vsel %vm907, %v8306, %v8310
        %v8313 = vshrl.u32 %v8236, 16
        %v8315 = vshll.u32 %v8236, 16
        %v8317 = vrot.slane %v8315, 1
        %v8318 = vor.u32 %v8313, %v8317
        %v8320 = vshll.u32 %v8252, 16
        %v8322 = vrot.slane %v8320, 1
        %v8323 = vsel %vm907, %v8318, %v8322
        %v8325 = vshrl.u32 %v8237, 16
        %v8327 = vshll.u32 %v8237, 16
        %v8329 = vrot.slane %v8327, 1
        %v8330 = vor.u32 %v8325, %v8329
        %v8332 = vshll.u32 %v8253, 16
        %v8334 = vrot.slane %v8332, 1
        %v8335 = vsel %vm907, %v8330, %v8334
        %v8337 = vshrl.u32 %v8238, 16
        %v8339 = vshll.u32 %v8238, 16
        %v8341 = vrot.slane %v8339, 1
        %v8342 = vor.u32 %v8337, %v8341
        %v8344 = vshll.u32 %v8254, 16
        %v8346 = vrot.slane %v8344, 1
        %v8347 = vsel %vm907, %v8342, %v8346
        %v8349 = vshrl.u32 %v8239, 16
        %v8351 = vshll.u32 %v8239, 16
        %v8353 = vrot.slane %v8351, 1
        %v8354 = vor.u32 %v8349, %v8353
        %v8356 = vshll.u32 %v8255, 16
        %v8358 = vrot.slane %v8356, 1
        %v8359 = vsel %vm907, %v8354, %v8358
        %v8361 = vshrl.u32 %v8240, 16
        %v8363 = vshll.u32 %v8240, 16
        %v8365 = vrot.slane %v8363, 1
        %v8366 = vor.u32 %v8361, %v8365
        %v8368 = vshll.u32 %v8256, 16
        %v8370 = vrot.slane %v8368, 1
        %v8371 = vsel %vm907, %v8366, %v8370
        %v8373 = vshrl.u32 %v8241, 16
        %v8375 = vshll.u32 %v8241, 16
        %v8377 = vrot.slane %v8375, 1
        %v8378 = vor.u32 %v8373, %v8377
        %v8380 = vshll.u32 %v8257, 16
        %v8382 = vrot.slane %v8380, 1
        %v8383 = vsel %vm907, %v8378, %v8382
        %v8385 = vshrl.u32 %v8242, 16
        %v8387 = vshll.u32 %v8242, 16
        %v8389 = vrot.slane %v8387, 1
        %v8390 = vor.u32 %v8385, %v8389
        %v8392 = vshll.u32 %v8258, 16
        %v8394 = vrot.slane %v8392, 1
        %v8395 = vsel %vm907, %v8390, %v8394
        %v8397 = vshrl.u32 %v8243, 16
        %v8399 = vshll.u32 %v8243, 16
        %v8401 = vrot.slane %v8399, 1
        %v8402 = vor.u32 %v8397, %v8401
        %v8404 = vshll.u32 %v8259, 16
        %v8406 = vrot.slane %v8404, 1
        %v8407 = vsel %vm907, %v8402, %v8406
        %v8409 = vshrl.u32 %v8244, 16
        %v8411 = vshll.u32 %v8244, 16
        %v8413 = vrot.slane %v8411, 1
        %v8414 = vor.u32 %v8409, %v8413
        %v8416 = vshll.u32 %v8260, 16
        %v8418 = vrot.slane %v8416, 1
        %v8419 = vsel %vm907, %v8414, %v8418
        %v8421 = vshrl.u32 %v8245, 16
        %v8423 = vshll.u32 %v8245, 16
        %v8425 = vrot.slane %v8423, 1
        %v8426 = vor.u32 %v8421, %v8425
        %v8428 = vshll.u32 %v8261, 16
        %v8430 = vrot.slane %v8428, 1
        %v8431 = vsel %vm907, %v8426, %v8430
        %v8433 = vshrl.u32 %v8246, 16
        %v8435 = vshll.u32 %v8246, 16
        %v8437 = vrot.slane %v8435, 1
        %v8438 = vor.u32 %v8433, %v8437
        %v8440 = vshll.u32 %v8262, 16
        %v8442 = vrot.slane %v8440, 1
        %v8443 = vsel %vm907, %v8438, %v8442
        %8444 = vrot.lane.b32.xlu0 %v8275, 32
        %v8445 = vpop.permute.xlu0 %8444
        %8446 = vrot.lane.b32.xlu0 %v8287, 32
        %v8447 = vpop.permute.xlu0 %8446
        %8448 = vrot.lane.b32.xlu0 %v8299, 32
        %v8449 = vpop.permute.xlu0 %8448
        %8450 = vrot.lane.b32.xlu0 %v8311, 32
        %v8451 = vpop.permute.xlu0 %8450
        %8452 = vrot.lane.b32.xlu0 %v8323, 32
        %v8453 = vpop.permute.xlu0 %8452
        %8454 = vrot.lane.b32.xlu0 %v8335, 32
        %v8455 = vpop.permute.xlu0 %8454
        %8456 = vrot.lane.b32.xlu0 %v8347, 32
        %v8457 = vpop.permute.xlu0 %8456
        %8458 = vrot.lane.b32.xlu0 %v8359, 32
        %v8459 = vpop.permute.xlu0 %8458
        %8460 = vrot.lane.b32.xlu0 %v8371, 32
        %v8461 = vpop.permute.xlu0 %8460
        %8462 = vrot.lane.b32.xlu0 %v8383, 32
        %v8463 = vpop.permute.xlu0 %8462
        %8464 = vrot.lane.b32.xlu0 %v8395, 32
        %v8465 = vpop.permute.xlu0 %8464
        %8466 = vrot.lane.b32.xlu0 %v8407, 32
        %v8467 = vpop.permute.xlu0 %8466
        %8468 = vrot.lane.b32.xlu0 %v8419, 32
        %v8469 = vpop.permute.xlu0 %8468
        %8470 = vrot.lane.b32.xlu0 %v8431, 32
        %v8471 = vpop.permute.xlu0 %8470
        %8472 = vrot.lane.b32.xlu0 %v8443, 32
        %v8473 = vpop.permute.xlu0 %8472
        %v8504 = vrot.slane %v8232, 1
        %v8505 = vrot.slane %v8248, 1
        %v8506 = vsel %vm1164, %v8504, %v8505
        %v8507 = vrot.slane %v8233, 1
        %v8508 = vrot.slane %v8249, 1
        %v8509 = vsel %vm1164, %v8507, %v8508
        %v8510 = vrot.slane %v8234, 1
        %v8511 = vrot.slane %v8250, 1
        %v8512 = vsel %vm1164, %v8510, %v8511
        %v8513 = vrot.slane %v8235, 1
        %v8514 = vrot.slane %v8251, 1
        %v8515 = vsel %vm1164, %v8513, %v8514
        %v8516 = vrot.slane %v8236, 1
        %v8517 = vrot.slane %v8252, 1
        %v8518 = vsel %vm1164, %v8516, %v8517
        %v8519 = vrot.slane %v8237, 1
        %v8520 = vrot.slane %v8253, 1
        %v8521 = vsel %vm1164, %v8519, %v8520
        %v8522 = vrot.slane %v8238, 1
        %v8523 = vrot.slane %v8254, 1
        %v8524 = vsel %vm1164, %v8522, %v8523
        %v8525 = vrot.slane %v8239, 1
        %v8526 = vrot.slane %v8255, 1
        %v8527 = vsel %vm1164, %v8525, %v8526
        %v8528 = vrot.slane %v8240, 1
        %v8529 = vrot.slane %v8256, 1
        %v8530 = vsel %vm1164, %v8528, %v8529
        %v8531 = vrot.slane %v8241, 1
        %v8532 = vrot.slane %v8257, 1
        %v8533 = vsel %vm1164, %v8531, %v8532
        %v8534 = vrot.slane %v8242, 1
        %v8535 = vrot.slane %v8258, 1
        %v8536 = vsel %vm1164, %v8534, %v8535
        %v8537 = vrot.slane %v8243, 1
        %v8538 = vrot.slane %v8259, 1
        %v8539 = vsel %vm1164, %v8537, %v8538
        %v8540 = vrot.slane %v8244, 1
        %v8541 = vrot.slane %v8260, 1
        %v8542 = vsel %vm1164, %v8540, %v8541
        %v8543 = vrot.slane %v8245, 1
        %v8544 = vrot.slane %v8261, 1
        %v8545 = vsel %vm1164, %v8543, %v8544
        %v8546 = vrot.slane %v8246, 1
        %v8547 = vrot.slane %v8262, 1
        %v8548 = vsel %vm1164, %v8546, %v8547
        %8549 = vrot.lane.b32.xlu0 %v8506, 64
        %v8550 = vpop.permute.xlu0 %8549
        %8551 = vrot.lane.b32.xlu0 %v8509, 64
        %v8552 = vpop.permute.xlu0 %8551
        %8553 = vrot.lane.b32.xlu0 %v8512, 64
        %v8554 = vpop.permute.xlu0 %8553
        %8555 = vrot.lane.b32.xlu0 %v8515, 64
        %v8556 = vpop.permute.xlu0 %8555
        %8557 = vrot.lane.b32.xlu0 %v8518, 64
        %v8558 = vpop.permute.xlu0 %8557
        %8559 = vrot.lane.b32.xlu0 %v8521, 64
        %v8560 = vpop.permute.xlu0 %8559
        %8561 = vrot.lane.b32.xlu0 %v8524, 64
        %v8562 = vpop.permute.xlu0 %8561
        %8563 = vrot.lane.b32.xlu0 %v8527, 64
        %v8564 = vpop.permute.xlu0 %8563
        %8565 = vrot.lane.b32.xlu0 %v8530, 64
        %v8566 = vpop.permute.xlu0 %8565
        %8567 = vrot.lane.b32.xlu0 %v8533, 64
        %v8568 = vpop.permute.xlu0 %8567
        %8569 = vrot.lane.b32.xlu0 %v8536, 64
        %v8570 = vpop.permute.xlu0 %8569
        %8571 = vrot.lane.b32.xlu0 %v8539, 64
        %v8572 = vpop.permute.xlu0 %8571
        %8573 = vrot.lane.b32.xlu0 %v8542, 64
        %v8574 = vpop.permute.xlu0 %8573
        %8575 = vrot.lane.b32.xlu0 %v8545, 64
        %v8576 = vpop.permute.xlu0 %8575
        %8577 = vrot.lane.b32.xlu0 %v8548, 64
        %v8578 = vpop.permute.xlu0 %8577
        %8580 = vrot.lane.b32.xlu0 %v8232, 96
        %v8581 = vpop.permute.xlu0 %8580
        %8582 = vrot.lane.b32.xlu0 %v8233, 96
        %v8583 = vpop.permute.xlu0 %8582
        %8584 = vrot.lane.b32.xlu0 %v8234, 96
        %v8585 = vpop.permute.xlu0 %8584
        %8586 = vrot.lane.b32.xlu0 %v8235, 96
        %v8587 = vpop.permute.xlu0 %8586
        %8588 = vrot.lane.b32.xlu0 %v8236, 96
        %v8589 = vpop.permute.xlu0 %8588
        %8590 = vrot.lane.b32.xlu0 %v8237, 96
        %v8591 = vpop.permute.xlu0 %8590
        %8592 = vrot.lane.b32.xlu0 %v8238, 96
        %v8593 = vpop.permute.xlu0 %8592
        %8594 = vrot.lane.b32.xlu0 %v8239, 96
        %v8595 = vpop.permute.xlu0 %8594
        %8596 = vrot.lane.b32.xlu0 %v8240, 96
        %v8597 = vpop.permute.xlu0 %8596
        %8598 = vrot.lane.b32.xlu0 %v8241, 96
        %v8599 = vpop.permute.xlu0 %8598
        %8600 = vrot.lane.b32.xlu0 %v8242, 96
        %v8601 = vpop.permute.xlu0 %8600
        %8602 = vrot.lane.b32.xlu0 %v8243, 96
        %v8603 = vpop.permute.xlu0 %8602
        %8604 = vrot.lane.b32.xlu0 %v8244, 96
        %v8605 = vpop.permute.xlu0 %8604
        %8606 = vrot.lane.b32.xlu0 %v8245, 96
        %v8607 = vpop.permute.xlu0 %8606
        %8608 = vrot.lane.b32.xlu0 %v8246, 96
        %v8609 = vpop.permute.xlu0 %8608
        %8610 = vrot.lane.b32.xlu0 %v8247, 96
        %v8611 = vpop.permute.xlu0 %8610
        %v8613 = vshrl.u32 %v8247, 16
        %v8615 = vshll.u32 %v8247, 16
        %v8617 = vrot.slane %v8615, 1
        %v8618 = vor.u32 %v8613, %v8617
        %v8620 = vshll.u32 %v8263, 16
        %v8622 = vrot.slane %v8620, 1
        %v8623 = vsel %vm907, %v8618, %v8622
        %v8625 = vrot.slane %v8247, 1
        %v8626 = vrot.slane %v8263, 1
        %v8627 = vsel %vm1164, %v8625, %v8626
        %8628 = vrot.lane.b32.xlu0 %v8506, 32
        %v8629 = vpop.permute.xlu0 %8628
        %8630 = vrot.lane.b32.xlu0 %v8509, 32
        %v8631 = vpop.permute.xlu0 %8630
        %8632 = vrot.lane.b32.xlu0 %v8512, 32
        %v8633 = vpop.permute.xlu0 %8632
        %8634 = vrot.lane.b32.xlu0 %v8515, 32
        %v8635 = vpop.permute.xlu0 %8634
        %8636 = vrot.lane.b32.xlu0 %v8518, 32
        %v8637 = vpop.permute.xlu0 %8636
        %8638 = vrot.lane.b32.xlu0 %v8521, 32
        %v8639 = vpop.permute.xlu0 %8638
        %8640 = vrot.lane.b32.xlu0 %v8524, 32
        %v8641 = vpop.permute.xlu0 %8640
        %8642 = vrot.lane.b32.xlu0 %v8527, 32
        %v8643 = vpop.permute.xlu0 %8642
        %8644 = vrot.lane.b32.xlu0 %v8530, 32
        %v8645 = vpop.permute.xlu0 %8644
        %8646 = vrot.lane.b32.xlu0 %v8533, 32
        %v8647 = vpop.permute.xlu0 %8646
        %8648 = vrot.lane.b32.xlu0 %v8536, 32
        %v8649 = vpop.permute.xlu0 %8648
        %8650 = vrot.lane.b32.xlu0 %v8539, 32
        %v8651 = vpop.permute.xlu0 %8650
        %8652 = vrot.lane.b32.xlu0 %v8542, 32
        %v8653 = vpop.permute.xlu0 %8652
        %8654 = vrot.lane.b32.xlu0 %v8545, 32
        %v8655 = vpop.permute.xlu0 %8654
        %8656 = vrot.lane.b32.xlu0 %v8548, 32
        %v8657 = vpop.permute.xlu0 %8656
        %8658 = vrot.lane.b32.xlu0 %v8627, 32
        %v8659 = vpop.permute.xlu0 %8658
        %8660 = vrot.lane.b32.xlu0 %v8233, 64
        %v8661 = vpop.permute.xlu0 %8660
        %8662 = vrot.lane.b32.xlu0 %v8234, 64
        %v8663 = vpop.permute.xlu0 %8662
        %8664 = vrot.lane.b32.xlu0 %v8235, 64
        %v8665 = vpop.permute.xlu0 %8664
        %8666 = vrot.lane.b32.xlu0 %v8236, 64
        %v8667 = vpop.permute.xlu0 %8666
        %8668 = vrot.lane.b32.xlu0 %v8237, 64
        %v8669 = vpop.permute.xlu0 %8668
        %8670 = vrot.lane.b32.xlu0 %v8238, 64
        %v8671 = vpop.permute.xlu0 %8670
        %8672 = vrot.lane.b32.xlu0 %v8239, 64
        %v8673 = vpop.permute.xlu0 %8672
        %8674 = vrot.lane.b32.xlu0 %v8240, 64
        %v8675 = vpop.permute.xlu0 %8674
        %8676 = vrot.lane.b32.xlu0 %v8241, 64
        %v8677 = vpop.permute.xlu0 %8676
        %8678 = vrot.lane.b32.xlu0 %v8242, 64
        %v8679 = vpop.permute.xlu0 %8678
        %8680 = vrot.lane.b32.xlu0 %v8243, 64
        %v8681 = vpop.permute.xlu0 %8680
        %8682 = vrot.lane.b32.xlu0 %v8244, 64
        %v8683 = vpop.permute.xlu0 %8682
        %8684 = vrot.lane.b32.xlu0 %v8245, 64
        %v8685 = vpop.permute.xlu0 %8684
        %8686 = vrot.lane.b32.xlu0 %v8246, 64
        %v8687 = vpop.permute.xlu0 %8686
        %8688 = vrot.lane.b32.xlu0 %v8247, 64
        %v8689 = vpop.permute.xlu0 %8688
        %8690 = vrot.lane.b32.xlu0 %v8287, 96
        %v8691 = vpop.permute.xlu0 %8690
        %8692 = vrot.lane.b32.xlu0 %v8299, 96
        %v8693 = vpop.permute.xlu0 %8692
        %8694 = vrot.lane.b32.xlu0 %v8311, 96
        %v8695 = vpop.permute.xlu0 %8694
        %8696 = vrot.lane.b32.xlu0 %v8323, 96
        %v8697 = vpop.permute.xlu0 %8696
        %8698 = vrot.lane.b32.xlu0 %v8335, 96
        %v8699 = vpop.permute.xlu0 %8698
        %8700 = vrot.lane.b32.xlu0 %v8347, 96
        %v8701 = vpop.permute.xlu0 %8700
        %8702 = vrot.lane.b32.xlu0 %v8359, 96
        %v8703 = vpop.permute.xlu0 %8702
        %8704 = vrot.lane.b32.xlu0 %v8371, 96
        %v8705 = vpop.permute.xlu0 %8704
        %8706 = vrot.lane.b32.xlu0 %v8383, 96
        %v8707 = vpop.permute.xlu0 %8706
        %8708 = vrot.lane.b32.xlu0 %v8395, 96
        %v8709 = vpop.permute.xlu0 %8708
        %8710 = vrot.lane.b32.xlu0 %v8407, 96
        %v8711 = vpop.permute.xlu0 %8710
        %8712 = vrot.lane.b32.xlu0 %v8419, 96
        %v8713 = vpop.permute.xlu0 %8712
        %8714 = vrot.lane.b32.xlu0 %v8431, 96
        %v8715 = vpop.permute.xlu0 %8714
        %8716 = vrot.lane.b32.xlu0 %v8443, 96
        %v8717 = vpop.permute.xlu0 %8716
        %8718 = vrot.lane.b32.xlu0 %v8623, 96
        %v8719 = vpop.permute.xlu0 %8718
        %v8721 = vsel %vm1553, %v8232, %v8445
        %v8723 = vsel %vm1553, %v8233, %v8447
        %v8725 = vsel %vm1553, %v8234, %v8449
        %v8727 = vsel %vm1553, %v8235, %v8451
        %v8729 = vsel %vm1553, %v8236, %v8453
        %v8731 = vsel %vm1553, %v8237, %v8455
        %v8733 = vsel %vm1553, %v8238, %v8457
        %v8735 = vsel %vm1553, %v8239, %v8459
        %v8737 = vsel %vm1553, %v8240, %v8461
        %v8739 = vsel %vm1553, %v8241, %v8463
        %v8741 = vsel %vm1553, %v8242, %v8465
        %v8743 = vsel %vm1553, %v8243, %v8467
        %v8745 = vsel %vm1553, %v8244, %v8469
        %v8747 = vsel %vm1553, %v8245, %v8471
        %v8749 = vsel %vm1553, %v8246, %v8473
        %v8751 = vsel %vm1685, %v8721, %v8550
        %v8753 = vsel %vm1685, %v8723, %v8552
        %v8755 = vsel %vm1685, %v8725, %v8554
        %v8757 = vsel %vm1685, %v8727, %v8556
        %v8759 = vsel %vm1685, %v8729, %v8558
        %v8761 = vsel %vm1685, %v8731, %v8560
        %v8763 = vsel %vm1685, %v8733, %v8562
        %v8765 = vsel %vm1685, %v8735, %v8564
        %v8767 = vsel %vm1685, %v8737, %v8566
        %v8769 = vsel %vm1685, %v8739, %v8568
        %v8771 = vsel %vm1685, %v8741, %v8570
        %v8773 = vsel %vm1685, %v8743, %v8572
        %v8775 = vsel %vm1685, %v8745, %v8574
        %v8777 = vsel %vm1685, %v8747, %v8576
        %v8779 = vsel %vm1685, %v8749, %v8578
        %v8781 = vsel %vm2708, %v2677, %v8581
        %v8784 = vsel %vm2708, %v8751, %v8583
        %v8787 = vsel %vm2708, %v8753, %v8585
        %v8790 = vsel %vm2708, %v8755, %v8587
        %v8793 = vsel %vm2708, %v8757, %v8589
        %v8796 = vsel %vm2708, %v8759, %v8591
        %v8799 = vsel %vm2708, %v8761, %v8593
        %v8802 = vsel %vm2708, %v8763, %v8595
        %v8805 = vsel %vm2708, %v8765, %v8597
        %v8808 = vsel %vm2708, %v8767, %v8599
        %v8811 = vsel %vm2708, %v8769, %v8601
        %v8814 = vsel %vm2708, %v8771, %v8603
        %v8817 = vsel %vm2708, %v8773, %v8605
        %v8820 = vsel %vm2708, %v8775, %v8607
        %v8823 = vsel %vm2708, %v8777, %v8609
        %v8826 = vsel %vm2708, %v8779, %v8611
        %v8830 = vsel %vm1553, %v8275, %v8629
        %v8833 = vsel %vm1553, %v8287, %v8631
        %v8836 = vsel %vm1553, %v8299, %v8633
        %v8839 = vsel %vm1553, %v8311, %v8635
        %v8842 = vsel %vm1553, %v8323, %v8637
        %v8845 = vsel %vm1553, %v8335, %v8639
        %v8848 = vsel %vm1553, %v8347, %v8641
        %v8851 = vsel %vm1553, %v8359, %v8643
        %v8854 = vsel %vm1553, %v8371, %v8645
        %v8857 = vsel %vm1553, %v8383, %v8647
        %v8860 = vsel %vm1553, %v8395, %v8649
        %v8863 = vsel %vm1553, %v8407, %v8651
        %v8866 = vsel %vm1553, %v8419, %v8653
        %v8869 = vsel %vm1553, %v8431, %v8655
        %v8872 = vsel %vm1553, %v8443, %v8657
        %v8875 = vsel %vm1553, %v8623, %v8659
        %v8877 = vsel %vm1685, %v8830, %v8661
        %v8879 = vsel %vm1685, %v8833, %v8663
        %v8881 = vsel %vm1685, %v8836, %v8665
        %v8883 = vsel %vm1685, %v8839, %v8667
        %v8885 = vsel %vm1685, %v8842, %v8669
        %v8887 = vsel %vm1685, %v8845, %v8671
        %v8889 = vsel %vm1685, %v8848, %v8673
        %v8891 = vsel %vm1685, %v8851, %v8675
        %v8893 = vsel %vm1685, %v8854, %v8677
        %v8895 = vsel %vm1685, %v8857, %v8679
        %v8897 = vsel %vm1685, %v8860, %v8681
        %v8899 = vsel %vm1685, %v8863, %v8683
        %v8901 = vsel %vm1685, %v8866, %v8685
        %v8903 = vsel %vm1685, %v8869, %v8687
        %v8905 = vsel %vm1685, %v8872, %v8689
        %v8906 = vsel %vm1685, %v8875, %v2612
        %v8908 = vsel %vm2708, %v8877, %v8691
        %v8911 = vsel %vm2708, %v8879, %v8693
        %v8914 = vsel %vm2708, %v8881, %v8695
        %v8917 = vsel %vm2708, %v8883, %v8697
        %v8920 = vsel %vm2708, %v8885, %v8699
        %v8923 = vsel %vm2708, %v8887, %v8701
        %v8926 = vsel %vm2708, %v8889, %v8703
        %v8929 = vsel %vm2708, %v8891, %v8705
        %v8932 = vsel %vm2708, %v8893, %v8707
        %v8935 = vsel %vm2708, %v8895, %v8709
        %v8938 = vsel %vm2708, %v8897, %v8711
        %v8941 = vsel %vm2708, %v8899, %v8713
        %v8944 = vsel %vm2708, %v8901, %v8715
        %v8947 = vsel %vm2708, %v8903, %v8717
        %v8950 = vsel %vm2708, %v8905, %v8719
        %v8952 = vsel %vm2708, %v8906, %v2644
        %v8954 = vld [vmem:[#allocation2] sm:$0xf]
        %v8955 = vld [vmem:[#allocation2 + $0x4] sm:$0xf]
        %v8956 = vld [vmem:[#allocation2 + $0x8] sm:$0xf]
        %v8957 = vld [vmem:[#allocation2 + $0xc] sm:$0xf]
        %v8958 = vld [vmem:[#allocation2 + $0x10] sm:$0xf]
        %v8959 = vld [vmem:[#allocation2 + $0x14] sm:$0xf]
        %v8960 = vld [vmem:[#allocation2 + $0x18] sm:$0xf]
        %v8961 = vld [vmem:[#allocation2 + $0x1c] sm:$0xf]
        %v8962 = vld [vmem:[#allocation2 + $0x20] sm:$0xf]
        %v8963 = vld [vmem:[#allocation2 + $0x24] sm:$0xf]
        %v8964 = vld [vmem:[#allocation2 + $0x28] sm:$0xf]
        %v8965 = vld [vmem:[#allocation2 + $0x2c] sm:$0xf]
        %v8966 = vld [vmem:[#allocation2 + $0x30] sm:$0xf]
        %v8967 = vld [vmem:[#allocation2 + $0x34] sm:$0xf]
        %v8968 = vld [vmem:[#allocation2 + $0x38] sm:$0xf]
        %v8969 = vld [vmem:[#allocation2 + $0x3c] sm:$0xf]
        %v8970 = vld [vmem:[#allocation2 + $0x40] sm:$0xf]
        %v8971 = vld [vmem:[#allocation2 + $0x44] sm:$0xf]
        %v8972 = vld [vmem:[#allocation2 + $0x48] sm:$0xf]
        %v8973 = vld [vmem:[#allocation2 + $0x4c] sm:$0xf]
        %v8974 = vld [vmem:[#allocation2 + $0x50] sm:$0xf]
        %v8975 = vld [vmem:[#allocation2 + $0x54] sm:$0xf]
        %v8976 = vld [vmem:[#allocation2 + $0x58] sm:$0xf]
        %v8977 = vld [vmem:[#allocation2 + $0x5c] sm:$0xf]
        %v8978 = vld [vmem:[#allocation2 + $0x60] sm:$0xf]
        %v8979 = vld [vmem:[#allocation2 + $0x64] sm:$0xf]
        %v8980 = vld [vmem:[#allocation2 + $0x68] sm:$0xf]
        %v8981 = vld [vmem:[#allocation2 + $0x6c] sm:$0xf]
        %v8982 = vld [vmem:[#allocation2 + $0x70] sm:$0xf]
        %v8983 = vld [vmem:[#allocation2 + $0x74] sm:$0xf]
        %v8984 = vld [vmem:[#allocation2 + $0x78] sm:$0xf]
        %v8985 = vld [vmem:[#allocation2 + $0x7c] sm:$0xf]
        %v8986 = vld [vmem:[#allocation2 + $0x80] sm:$0xf]
        %v8987 = vld [vmem:[#allocation2 + $0x84] sm:$0xf]
        %v8988 = vld [vmem:[#allocation2 + $0x88] sm:$0xf]
        %v8989 = vld [vmem:[#allocation2 + $0x8c] sm:$0xf]
        %v9026 = vunpack.c.l.b16 %v8954
        %v9027 = vunpack.c.l.b16 %v8955
        %v9028 = vunpack.c.l.b16 %v8956
        %v9029 = vunpack.c.l.b16 %v8957
        %v9030 = vunpack.c.l.b16 %v8958
        %v9031 = vunpack.c.l.b16 %v8959
        %v9032 = vunpack.c.l.b16 %v8960
        %v9033 = vunpack.c.l.b16 %v8961
        %v9034 = vunpack.c.l.b16 %v8962
        %v9035 = vunpack.c.l.b16 %v8963
        %v9036 = vunpack.c.l.b16 %v8964
        %v9037 = vunpack.c.l.b16 %v8965
        %v9038 = vunpack.c.l.b16 %v8966
        %v9039 = vunpack.c.l.b16 %v8967
        %v9040 = vunpack.c.l.b16 %v8968
        %v9041 = vunpack.c.l.b16 %v8969
        %v9042 = vunpack.c.l.b16 %v8970
        %v9043 = vunpack.c.l.b16 %v8971
        %v9044 = vunpack.c.l.b16 %v8972
        %v9045 = vunpack.c.l.b16 %v8973
        %v9046 = vunpack.c.l.b16 %v8974
        %v9047 = vunpack.c.l.b16 %v8975
        %v9048 = vunpack.c.l.b16 %v8976
        %v9049 = vunpack.c.l.b16 %v8977
        %v9050 = vunpack.c.l.b16 %v8978
        %v9051 = vunpack.c.l.b16 %v8979
        %v9052 = vunpack.c.l.b16 %v8980
        %v9053 = vunpack.c.l.b16 %v8981
        %v9054 = vunpack.c.l.b16 %v8982
        %v9055 = vunpack.c.l.b16 %v8983
        %v9056 = vunpack.c.l.b16 %v8984
        %v9057 = vunpack.c.l.b16 %v8985
        %v9058 = vunpack.c.l.b16 %v8986
        %v9059 = vunpack.c.l.b16 %v8987
        %v9060 = vunpack.c.l.b16 %v8988
        %v9061 = vunpack.c.l.b16 %v8989
        %v9062 = vpack.c.b16 %v9027, %v9026
        %v9063 = vpack.c.b16 %v9029, %v9028
        %v9064 = vpack.c.b16 %v9031, %v9030
        %v9065 = vpack.c.b16 %v9033, %v9032
        %v9066 = vpack.c.b16 %v9035, %v9034
        %v9067 = vpack.c.b16 %v9037, %v9036
        %v9068 = vpack.c.b16 %v9039, %v9038
        %v9069 = vpack.c.b16 %v9041, %v9040
        %v9070 = vpack.c.b16 %v9043, %v9042
        %v9071 = vpack.c.b16 %v9045, %v9044
        %v9072 = vpack.c.b16 %v9047, %v9046
        %v9073 = vpack.c.b16 %v9049, %v9048
        %v9074 = vpack.c.b16 %v9051, %v9050
        %v9075 = vpack.c.b16 %v9053, %v9052
        %v9076 = vpack.c.b16 %v9055, %v9054
        %v9077 = vpack.c.b16 %v9057, %v9056
        %v9078 = vpack.c.b16 %v9059, %v9058
        %v9079 = vpack.c.b16 %v9061, %v9060
        %v9099 = vsel %vm1553, %v8509, 0
        %v9102 = vsel %vm1553, %v8512, 0
        %v9105 = vsel %vm1553, %v8515, 0
        %v9108 = vsel %vm1553, %v8518, 0
        %v9111 = vsel %vm1553, %v8521, 0
        %v9114 = vsel %vm1553, %v8524, 0
        %v9117 = vsel %vm1553, %v8527, 0
        %v9120 = vsel %vm1553, %v8530, 0
        %v9123 = vsel %vm1553, %v8533, 0
        %v9126 = vsel %vm1553, %v8536, 0
        %v9129 = vsel %vm1553, %v8539, 0
        %v9132 = vsel %vm1553, %v8542, 0
        %v9135 = vsel %vm1553, %v8545, 0
        %v9138 = vsel %vm1553, %v8548, 0
        %v9141 = vsel %vm1553, %v8627, 0
        %9143 = vmatprep.subr.bf16.mxu0 0
        %9144 = vmatpush1.bf16.msra.mxu0 %v9062
        %9145 = vmatprep.subr.bf16.mxu0 0
        %9146 = vmatpush1.bf16.msra.mxu0 %v9063
        %9147 = vmatprep.subr.bf16.mxu0 0
        %9148 = vmatpush1.bf16.msra.mxu0 %v9064
        %9149 = vmatprep.subr.bf16.mxu0 0
        %9150 = vmatpush1.bf16.msra.mxu0 %v9065
        %9151 = vmatprep.subr.bf16.mxu0 0
        %9152 = vmatpush1.bf16.msra.mxu0 %v9066
        %9153 = vmatprep.subr.bf16.mxu0 0
        %9154 = vmatpush1.bf16.msra.mxu0 %v9067
        %9155 = vmatprep.subr.bf16.mxu0 0
        %9156 = vmatpush1.bf16.msra.mxu0 %v9068
        %9157 = vmatprep.subr.bf16.mxu0 0
        %9158 = vmatpush1.bf16.msra.mxu0 %v9069
        %9159 = vmatprep.subr.bf16.mxu0 0
        %9160 = vmatpush1.bf16.msra.mxu0 %v9070
        %9161 = vmatprep.subr.bf16.mxu0 0
        %9162 = vmatpush1.bf16.msra.mxu0 %v9071
        %9163 = vmatprep.subr.bf16.mxu0 0
        %9164 = vmatpush1.bf16.msra.mxu0 %v9072
        %9165 = vmatprep.subr.bf16.mxu0 0
        %9166 = vmatpush1.bf16.msra.mxu0 %v9073
        %9167 = vmatprep.subr.bf16.mxu0 0
        %9168 = vmatpush1.bf16.msra.mxu0 %v9074
        %9169 = vmatprep.subr.bf16.mxu0 0
        %9170 = vmatpush1.bf16.msra.mxu0 %v9075
        %9171 = vmatprep.subr.bf16.mxu0 0
        %9172 = vmatpush1.bf16.msra.mxu0 %v9076
        %9173 = vmatprep.subr.bf16.mxu0 0
        %9174 = vmatpush1.bf16.msra.mxu0 %v9077
        %9175 = vmatprep.mubr.bf16.mxu0 %v8908
        %9176 = vmatmul.mubr.bf16.gmra.mrb[0].mxu0 %v8781
        %v9177 = vpop.f32.mrb[0].mxu0
        %v9178 = vadd.f32 0.0, %v9177
        %v9179 = vpop.f32.mrb[0].mxu0
        %v9180 = vpop.f32.mrb[0].mxu0
        %v9181 = vadd.f32 0.0, %v9180
        %v9182 = vpop.f32.mrb[0].mxu0
        %9183 = vmatprep.mubr.bf16.mxu0 %v8911
        %9184 = vmatmul.mubr.bf16.gmra.mrb[0].mxu0 %v8784
        %v9185 = vpop.f32.mrb[0].mxu0
        %v9186 = vadd.f32 0.0, %v9185
        %v9187 = vpop.f32.mrb[0].mxu0
        %v9188 = vpop.f32.mrb[0].mxu0
        %v9189 = vadd.f32 0.0, %v9188
        %v9190 = vpop.f32.mrb[0].mxu0
        %9191 = vmatprep.mubr.bf16.mxu0 %v8914
        %9192 = vmatmul.mubr.bf16.gmra.mrb[0].mxu0 %v8787
        %v9193 = vpop.f32.mrb[0].mxu0
        %v9194 = vadd.f32 0.0, %v9193
        %v9195 = vpop.f32.mrb[0].mxu0
        %v9196 = vpop.f32.mrb[0].mxu0
        %v9197 = vadd.f32 0.0, %v9196
        %v9198 = vpop.f32.mrb[0].mxu0
        %9199 = vmatprep.mubr.bf16.mxu0 %v8917
        %9200 = vmatmul.mubr.bf16.gmra.mrb[0].mxu0 %v8790
        %v9201 = vpop.f32.mrb[0].mxu0
        %v9202 = vadd.f32 0.0, %v9201
        %v9203 = vpop.f32.mrb[0].mxu0
        %v9204 = vpop.f32.mrb[0].mxu0
        %v9205 = vadd.f32 0.0, %v9204
        %v9206 = vpop.f32.mrb[0].mxu0
        %9207 = vmatprep.mubr.bf16.mxu0 %v8920
        %9208 = vmatmul.mubr.bf16.gmra.mrb[0].mxu0 %v8793
        %v9209 = vpop.f32.mrb[0].mxu0
        %v9210 = vadd.f32 0.0, %v9209
        %v9211 = vpop.f32.mrb[0].mxu0
        %v9212 = vpop.f32.mrb[0].mxu0
        %v9213 = vadd.f32 0.0, %v9212
        %v9214 = vpop.f32.mrb[0].mxu0
        %9215 = vmatprep.mubr.bf16.mxu0 %v8923
        %9216 = vmatmul.mubr.bf16.gmra.mrb[0].mxu0 %v8796
        %v9217 = vpop.f32.mrb[0].mxu0
        %v9218 = vadd.f32 0.0, %v9217
        %v9219 = vpop.f32.mrb[0].mxu0
        %v9220 = vpop.f32.mrb[0].mxu0
        %v9221 = vadd.f32 0.0, %v9220
        %v9222 = vpop.f32.mrb[0].mxu0
        %9223 = vmatprep.mubr.bf16.mxu0 %v8926
        %9224 = vmatmul.mubr.bf16.gmra.mrb[0].mxu0 %v8799
        %v9225 = vpop.f32.mrb[0].mxu0
        %v9226 = vadd.f32 0.0, %v9225
        %v9227 = vpop.f32.mrb[0].mxu0
        %v9228 = vpop.f32.mrb[0].mxu0
        %v9229 = vadd.f32 0.0, %v9228
        %v9230 = vpop.f32.mrb[0].mxu0
        %9231 = vmatprep.mubr.bf16.mxu0 %v8929
        %9232 = vmatmul.mubr.bf16.gmra.mrb[0].mxu0 %v8802
        %v9233 = vpop.f32.mrb[0].mxu0
        %v9234 = vadd.f32 0.0, %v9233
        %v9235 = vpop.f32.mrb[0].mxu0
        %v9236 = vpop.f32.mrb[0].mxu0
        %v9237 = vadd.f32 0.0, %v9236
        %v9238 = vpop.f32.mrb[0].mxu0
        %9239 = vmatprep.mubr.bf16.mxu0 %v8932
        %9240 = vmatmul.mubr.bf16.gmra.mrb[0].mxu0 %v8805
        %v9241 = vpop.f32.mrb[0].mxu0
        %v9242 = vadd.f32 0.0, %v9241
        %v9243 = vpop.f32.mrb[0].mxu0
        %v9244 = vpop.f32.mrb[0].mxu0
        %v9245 = vadd.f32 0.0, %v9244
        %v9246 = vpop.f32.mrb[0].mxu0
        %9247 = vmatprep.mubr.bf16.mxu0 %v8935
        %9248 = vmatmul.mubr.bf16.gmra.mrb[0].mxu0 %v8808
        %v9249 = vpop.f32.mrb[0].mxu0
        %v9250 = vadd.f32 0.0, %v9249
        %v9251 = vpop.f32.mrb[0].mxu0
        %v9252 = vpop.f32.mrb[0].mxu0
        %v9253 = vadd.f32 0.0, %v9252
        %v9254 = vpop.f32.mrb[0].mxu0
        %9255 = vmatprep.mubr.bf16.mxu0 %v8938
        %9256 = vmatmul.mubr.bf16.gmra.mrb[0].mxu0 %v8811
        %v9257 = vpop.f32.mrb[0].mxu0
        %v9258 = vadd.f32 0.0, %v9257
        %v9259 = vpop.f32.mrb[0].mxu0
        %v9260 = vpop.f32.mrb[0].mxu0
        %v9261 = vadd.f32 0.0, %v9260
        %v9262 = vpop.f32.mrb[0].mxu0
        %9263 = vmatprep.mubr.bf16.mxu0 %v8941
        %9264 = vmatmul.mubr.bf16.gmra.mrb[0].mxu0 %v8814
        %v9265 = vpop.f32.mrb[0].mxu0
        %v9266 = vadd.f32 0.0, %v9265
        %v9267 = vpop.f32.mrb[0].mxu0
        %v9268 = vpop.f32.mrb[0].mxu0
        %v9269 = vadd.f32 0.0, %v9268
        %v9270 = vpop.f32.mrb[0].mxu0
        %9271 = vmatprep.mubr.bf16.mxu0 %v8944
        %9272 = vmatmul.mubr.bf16.gmra.mrb[0].mxu0 %v8817
        %v9273 = vpop.f32.mrb[0].mxu0
        %v9274 = vadd.f32 0.0, %v9273
        %v9275 = vpop.f32.mrb[0].mxu0
        %v9276 = vpop.f32.mrb[0].mxu0
        %v9277 = vadd.f32 0.0, %v9276
        %v9278 = vpop.f32.mrb[0].mxu0
        %9279 = vmatprep.mubr.bf16.mxu0 %v8947
        %9280 = vmatmul.mubr.bf16.gmra.mrb[0].mxu0 %v8820
        %v9281 = vpop.f32.mrb[0].mxu0
        %v9282 = vadd.f32 0.0, %v9281
        %v9283 = vpop.f32.mrb[0].mxu0
        %v9284 = vpop.f32.mrb[0].mxu0
        %v9285 = vadd.f32 0.0, %v9284
        %v9286 = vpop.f32.mrb[0].mxu0
        %9287 = vmatprep.mubr.bf16.mxu0 %v8950
        %9288 = vmatmul.mubr.bf16.gmra.mrb[0].mxu0 %v8823
        %v9289 = vpop.f32.mrb[0].mxu0
        %v9290 = vadd.f32 0.0, %v9289
        %v9291 = vpop.f32.mrb[0].mxu0
        %v9292 = vpop.f32.mrb[0].mxu0
        %v9293 = vadd.f32 0.0, %v9292
        %v9294 = vpop.f32.mrb[0].mxu0
        %9295 = vmatprep.mubr.bf16.mxu0 %v8952
        %9296 = vmatmul.mubr.bf16.gmra.mrb[0].mxu0 %v8826
        %v9297 = vpop.f32.mrb[0].mxu0
        %v9298 = vadd.f32 0.0, %v9297
        %v9299 = vpop.f32.mrb[0].mxu0
        %v9300 = vpop.f32.mrb[0].mxu0
        %v9301 = vadd.f32 0.0, %v9300
        %v9302 = vpop.f32.mrb[0].mxu0
        %9303 = vdwg.mxu0
        %9304 = vmatprep.subr.bf16.mxu0 0
        %9305 = vmatpush1.bf16.msra.mxu0 %v9078
        %9306 = vmatprep.subr.bf16.mxu0 0
        %9307 = vmatpush1.bf16.msra.mxu0 %v9079
        %9308 = vmatprep.subr.bf16.mxu0 0
        %9309 = vmatpush1.bf16.msra.mxu0 0
        %9310 = vmatprep.subr.bf16.mxu0 0
        %9311 = vmatpush1.bf16.msra.mxu0 0
        %9312 = vmatprep.subr.bf16.mxu0 0
        %9313 = vmatpush1.bf16.msra.mxu0 0
        %9314 = vmatprep.subr.bf16.mxu0 0
        %9315 = vmatpush1.bf16.msra.mxu0 0
        %9316 = vmatprep.subr.bf16.mxu0 0
        %9317 = vmatpush1.bf16.msra.mxu0 0
        %9318 = vmatprep.subr.bf16.mxu0 0
        %9319 = vmatpush1.bf16.msra.mxu0 0
        %9320 = vmatprep.subr.bf16.mxu0 0
        %9321 = vmatpush1.bf16.msra.mxu0 0
        %9322 = vmatprep.subr.bf16.mxu0 0
        %9323 = vmatpush1.bf16.msra.mxu0 0
        %9324 = vmatprep.subr.bf16.mxu0 0
        %9325 = vmatpush1.bf16.msra.mxu0 0
        %9326 = vmatprep.subr.bf16.mxu0 0
        %9327 = vmatpush1.bf16.msra.mxu0 0
        %9328 = vmatprep.subr.bf16.mxu0 0
        %9329 = vmatpush1.bf16.msra.mxu0 0
        %9330 = vmatprep.subr.bf16.mxu0 0
        %9331 = vmatpush1.bf16.msra.mxu0 0
        %9332 = vmatprep.subr.bf16.mxu0 0
        %9333 = vmatpush1.bf16.msra.mxu0 0
        %9334 = vmatprep.subr.bf16.mxu0 0
        %9335 = vmatpush1.bf16.msra.mxu0 0
        %9336 = vmatprep.mubr.bf16.mxu0 0
        %9337 = vmatmul.mubr.bf16.gmra.mrb[0].mxu0 %v9099
        %v9338 = vpop.f32.mrb[0].mxu0
        %v9339 = vadd.f32 %v9178, %v9338
        %v9340 = vpop.f32.mrb[0].mxu0
        %v9341 = vpop.f32.mrb[0].mxu0
        %v9342 = vadd.f32 %v9181, %v9341
        %v9343 = vpop.f32.mrb[0].mxu0
        %9344 = vmatprep.mubr.bf16.mxu0 0
        %9345 = vmatmul.mubr.bf16.gmra.mrb[0].mxu0 %v9102
        %v9346 = vpop.f32.mrb[0].mxu0
        %v9347 = vadd.f32 %v9186, %v9346
        %v9348 = vpop.f32.mrb[0].mxu0
        %v9349 = vpop.f32.mrb[0].mxu0
        %v9350 = vadd.f32 %v9189, %v9349
        %v9351 = vpop.f32.mrb[0].mxu0
        %9352 = vmatprep.mubr.bf16.mxu0 0
        %9353 = vmatmul.mubr.bf16.gmra.mrb[0].mxu0 %v9105
        %v9354 = vpop.f32.mrb[0].mxu0
        %v9355 = vadd.f32 %v9194, %v9354
        %v9356 = vpop.f32.mrb[0].mxu0
        %v9357 = vpop.f32.mrb[0].mxu0
        %v9358 = vadd.f32 %v9197, %v9357
        %v9359 = vpop.f32.mrb[0].mxu0
        %9360 = vmatprep.mubr.bf16.mxu0 0
        %9361 = vmatmul.mubr.bf16.gmra.mrb[0].mxu0 %v9108
        %v9362 = vpop.f32.mrb[0].mxu0
        %v9363 = vadd.f32 %v9202, %v9362
        %v9364 = vpop.f32.mrb[0].mxu0
        %v9365 = vpop.f32.mrb[0].mxu0
        %v9366 = vadd.f32 %v9205, %v9365
        %v9367 = vpop.f32.mrb[0].mxu0
        %9368 = vmatprep.mubr.bf16.mxu0 0
        %9369 = vmatmul.mubr.bf16.gmra.mrb[0].mxu0 %v9111
        %v9370 = vpop.f32.mrb[0].mxu0
        %v9371 = vadd.f32 %v9210, %v9370
        %v9372 = vpop.f32.mrb[0].mxu0
        %v9373 = vpop.f32.mrb[0].mxu0
        %v9374 = vadd.f32 %v9213, %v9373
        %v9375 = vpop.f32.mrb[0].mxu0
        %9376 = vmatprep.mubr.bf16.mxu0 0
        %9377 = vmatmul.mubr.bf16.gmra.mrb[0].mxu0 %v9114
        %v9378 = vpop.f32.mrb[0].mxu0
        %v9379 = vadd.f32 %v9218, %v9378
        %v9380 = vpop.f32.mrb[0].mxu0
        %v9381 = vpop.f32.mrb[0].mxu0
        %v9382 = vadd.f32 %v9221, %v9381
        %v9383 = vpop.f32.mrb[0].mxu0
        %9384 = vmatprep.mubr.bf16.mxu0 0
        %9385 = vmatmul.mubr.bf16.gmra.mrb[0].mxu0 %v9117
        %v9386 = vpop.f32.mrb[0].mxu0
        %v9387 = vadd.f32 %v9226, %v9386
        %v9388 = vpop.f32.mrb[0].mxu0
        %v9389 = vpop.f32.mrb[0].mxu0
        %v9390 = vadd.f32 %v9229, %v9389
        %v9391 = vpop.f32.mrb[0].mxu0
        %9392 = vmatprep.mubr.bf16.mxu0 0
        %9393 = vmatmul.mubr.bf16.gmra.mrb[0].mxu0 %v9120
        %v9394 = vpop.f32.mrb[0].mxu0
        %v9395 = vadd.f32 %v9234, %v9394
        %v9396 = vpop.f32.mrb[0].mxu0
        %v9397 = vpop.f32.mrb[0].mxu0
        %v9398 = vadd.f32 %v9237, %v9397
        %v9399 = vpop.f32.mrb[0].mxu0
        %9400 = vmatprep.mubr.bf16.mxu0 0
        %9401 = vmatmul.mubr.bf16.gmra.mrb[0].mxu0 %v9123
        %v9402 = vpop.f32.mrb[0].mxu0
        %v9403 = vadd.f32 %v9242, %v9402
        %v9404 = vpop.f32.mrb[0].mxu0
        %v9405 = vpop.f32.mrb[0].mxu0
        %v9406 = vadd.f32 %v9245, %v9405
        %v9407 = vpop.f32.mrb[0].mxu0
        %9408 = vmatprep.mubr.bf16.mxu0 0
        %9409 = vmatmul.mubr.bf16.gmra.mrb[0].mxu0 %v9126
        %v9410 = vpop.f32.mrb[0].mxu0
        %v9411 = vadd.f32 %v9250, %v9410
        %v9412 = vpop.f32.mrb[0].mxu0
        %v9413 = vpop.f32.mrb[0].mxu0
        %v9414 = vadd.f32 %v9253, %v9413
        %v9415 = vpop.f32.mrb[0].mxu0
        %9416 = vmatprep.mubr.bf16.mxu0 0
        %9417 = vmatmul.mubr.bf16.gmra.mrb[0].mxu0 %v9129
        %v9418 = vpop.f32.mrb[0].mxu0
        %v9419 = vadd.f32 %v9258, %v9418
        %v9420 = vpop.f32.mrb[0].mxu0
        %v9421 = vpop.f32.mrb[0].mxu0
        %v9422 = vadd.f32 %v9261, %v9421
        %v9423 = vpop.f32.mrb[0].mxu0
        %9424 = vmatprep.mubr.bf16.mxu0 0
        %9425 = vmatmul.mubr.bf16.gmra.mrb[0].mxu0 %v9132
        %v9426 = vpop.f32.mrb[0].mxu0
        %v9427 = vadd.f32 %v9266, %v9426
        %v9428 = vpop.f32.mrb[0].mxu0
        %v9429 = vpop.f32.mrb[0].mxu0
        %v9430 = vadd.f32 %v9269, %v9429
        %v9431 = vpop.f32.mrb[0].mxu0
        %9432 = vmatprep.mubr.bf16.mxu0 0
        %9433 = vmatmul.mubr.bf16.gmra.mrb[0].mxu0 %v9135
        %v9434 = vpop.f32.mrb[0].mxu0
        %v9435 = vadd.f32 %v9274, %v9434
        %v9436 = vpop.f32.mrb[0].mxu0
        %v9437 = vpop.f32.mrb[0].mxu0
        %v9438 = vadd.f32 %v9277, %v9437
        %v9439 = vpop.f32.mrb[0].mxu0
        %9440 = vmatprep.mubr.bf16.mxu0 0
        %9441 = vmatmul.mubr.bf16.gmra.mrb[0].mxu0 %v9138
        %v9442 = vpop.f32.mrb[0].mxu0
        %v9443 = vadd.f32 %v9282, %v9442
        %v9444 = vpop.f32.mrb[0].mxu0
        %v9445 = vpop.f32.mrb[0].mxu0
        %v9446 = vadd.f32 %v9285, %v9445
        %v9447 = vpop.f32.mrb[0].mxu0
        %9448 = vmatprep.mubr.bf16.mxu0 0
        %9449 = vmatmul.mubr.bf16.gmra.mrb[0].mxu0 %v9141
        %v9450 = vpop.f32.mrb[0].mxu0
        %v9451 = vadd.f32 %v9290, %v9450
        %v9452 = vpop.f32.mrb[0].mxu0
        %v9453 = vpop.f32.mrb[0].mxu0
        %v9454 = vadd.f32 %v9293, %v9453
        %v9455 = vpop.f32.mrb[0].mxu0
        %9456 = vmatprep.mubr.bf16.mxu0 0
        %9457 = vmatmul.mubr.bf16.gmra.mrb[0].mxu0 %v3075
        %v9458 = vpop.f32.mrb[0].mxu0
        %v9459 = vadd.f32 %v9298, %v9458
        %v9460 = vpop.f32.mrb[0].mxu0
        %v9461 = vpop.f32.mrb[0].mxu0
        %v9462 = vadd.f32 %v9301, %v9461
        %v9463 = vpop.f32.mrb[0].mxu0
        %9464 = vdwg.mxu0
        %9497 = vrot.lane.b32.xlu0 %v9339, 32
        %v9498 = vpop.permute.xlu0 %9497
        %9499 = vrot.lane.b32.xlu0 %v9342, 32
        %v9500 = vpop.permute.xlu0 %9499
        %9501 = vrot.lane.b32.xlu0 %v9347, 32
        %v9502 = vpop.permute.xlu0 %9501
        %9503 = vrot.lane.b32.xlu0 %v9350, 32
        %v9504 = vpop.permute.xlu0 %9503
        %9505 = vrot.lane.b32.xlu0 %v9355, 32
        %v9506 = vpop.permute.xlu0 %9505
        %9507 = vrot.lane.b32.xlu0 %v9358, 32
        %v9508 = vpop.permute.xlu0 %9507
        %9509 = vrot.lane.b32.xlu0 %v9363, 32
        %v9510 = vpop.permute.xlu0 %9509
        %9511 = vrot.lane.b32.xlu0 %v9366, 32
        %v9512 = vpop.permute.xlu0 %9511
        %9513 = vrot.lane.b32.xlu0 %v9371, 32
        %v9514 = vpop.permute.xlu0 %9513
        %9515 = vrot.lane.b32.xlu0 %v9374, 32
        %v9516 = vpop.permute.xlu0 %9515
        %9517 = vrot.lane.b32.xlu0 %v9379, 32
        %v9518 = vpop.permute.xlu0 %9517
        %9519 = vrot.lane.b32.xlu0 %v9382, 32
        %v9520 = vpop.permute.xlu0 %9519
        %9521 = vrot.lane.b32.xlu0 %v9387, 32
        %v9522 = vpop.permute.xlu0 %9521
        %9523 = vrot.lane.b32.xlu0 %v9390, 32
        %v9524 = vpop.permute.xlu0 %9523
        %9525 = vrot.lane.b32.xlu0 %v9395, 32
        %v9526 = vpop.permute.xlu0 %9525
        %9527 = vrot.lane.b32.xlu0 %v9398, 32
        %v9528 = vpop.permute.xlu0 %9527
        %9529 = vrot.lane.b32.xlu0 %v9403, 32
        %v9530 = vpop.permute.xlu0 %9529
        %9531 = vrot.lane.b32.xlu0 %v9406, 32
        %v9532 = vpop.permute.xlu0 %9531
        %9533 = vrot.lane.b32.xlu0 %v9411, 32
        %v9534 = vpop.permute.xlu0 %9533
        %9535 = vrot.lane.b32.xlu0 %v9414, 32
        %v9536 = vpop.permute.xlu0 %9535
        %9537 = vrot.lane.b32.xlu0 %v9419, 32
        %v9538 = vpop.permute.xlu0 %9537
        %9539 = vrot.lane.b32.xlu0 %v9422, 32
        %v9540 = vpop.permute.xlu0 %9539
        %9541 = vrot.lane.b32.xlu0 %v9427, 32
        %v9542 = vpop.permute.xlu0 %9541
        %9543 = vrot.lane.b32.xlu0 %v9430, 32
        %v9544 = vpop.permute.xlu0 %9543
        %9545 = vrot.lane.b32.xlu0 %v9435, 32
        %v9546 = vpop.permute.xlu0 %9545
        %9547 = vrot.lane.b32.xlu0 %v9438, 32
        %v9548 = vpop.permute.xlu0 %9547
        %9549 = vrot.lane.b32.xlu0 %v9443, 32
        %v9550 = vpop.permute.xlu0 %9549
        %9551 = vrot.lane.b32.xlu0 %v9446, 32
        %v9552 = vpop.permute.xlu0 %9551
        %9553 = vrot.lane.b32.xlu0 %v9451, 32
        %v9554 = vpop.permute.xlu0 %9553
        %9555 = vrot.lane.b32.xlu0 %v9454, 32
        %v9556 = vpop.permute.xlu0 %9555
        %9557 = vrot.lane.b32.xlu0 %v9459, 32
        %v9558 = vpop.permute.xlu0 %9557
        %9559 = vrot.lane.b32.xlu0 %v9462, 32
        %v9560 = vpop.permute.xlu0 %9559
        %v9593 = vadd.f32 %v4737, %v9498
        %v9594 = vadd.f32 %v4740, %v9500
        %v9595 = vadd.f32 %v4745, %v9502
        %v9596 = vadd.f32 %v4748, %v9504
        %v9597 = vadd.f32 %v4753, %v9506
        %v9598 = vadd.f32 %v4756, %v9508
        %v9599 = vadd.f32 %v4761, %v9510
        %v9600 = vadd.f32 %v4764, %v9512
        %v9601 = vadd.f32 %v4769, %v9514
        %v9602 = vadd.f32 %v4772, %v9516
        %v9603 = vadd.f32 %v4777, %v9518
        %v9604 = vadd.f32 %v4780, %v9520
        %v9605 = vadd.f32 %v4785, %v9522
        %v9606 = vadd.f32 %v4788, %v9524
        %v9607 = vadd.f32 %v4793, %v9526
        %v9608 = vadd.f32 %v4796, %v9528
        %v9609 = vadd.f32 %v4801, %v9530
        %v9610 = vadd.f32 %v4804, %v9532
        %v9611 = vadd.f32 %v4809, %v9534
        %v9612 = vadd.f32 %v4812, %v9536
        %v9613 = vadd.f32 %v4817, %v9538
        %v9614 = vadd.f32 %v4820, %v9540
        %v9615 = vadd.f32 %v4825, %v9542
        %v9616 = vadd.f32 %v4828, %v9544
        %v9617 = vadd.f32 %v4833, %v9546
        %v9618 = vadd.f32 %v4836, %v9548
        %v9619 = vadd.f32 %v4841, %v9550
        %v9620 = vadd.f32 %v4844, %v9552
        %v9621 = vadd.f32 %v4849, %v9554
        %v9622 = vadd.f32 %v4852, %v9556
        %v9623 = vadd.f32 %v4857, %v9558
        %v9624 = vadd.f32 %v4860, %v9560
        %v9625 = vld [vmem:[%s14] sm:$0x1]
        %v9627 = vlaneseq
        %v9628 = vshrl.u32 %v9627, 7
        %v9629 = vsub.s32 0, %v9628
        %v9630 = vrot.slane %v9625, %v9629
        %9631 = vrot.lane.b32.xlu0 %v9630, 32
        %v9632 = vpop.permute.xlu0 %9631
        %v9634 = vadd.f32 %v9593, %v9632
        %v9635 = vadd.f32 %v9594, %v9632
        %v9636 = vadd.f32 %v9595, %v9632
        %v9637 = vadd.f32 %v9596, %v9632
        %v9638 = vadd.f32 %v9597, %v9632
        %v9639 = vadd.f32 %v9598, %v9632
        %v9640 = vadd.f32 %v9599, %v9632
        %v9641 = vadd.f32 %v9600, %v9632
        %v9642 = vadd.f32 %v9601, %v9632
        %v9643 = vadd.f32 %v9602, %v9632
        %v9644 = vadd.f32 %v9603, %v9632
        %v9645 = vadd.f32 %v9604, %v9632
        %v9646 = vadd.f32 %v9605, %v9632
        %v9647 = vadd.f32 %v9606, %v9632
        %v9648 = vadd.f32 %v9607, %v9632
        %v9649 = vadd.f32 %v9608, %v9632
        %v9650 = vadd.f32 %v9609, %v9632
        %v9651 = vadd.f32 %v9610, %v9632
        %v9652 = vadd.f32 %v9611, %v9632
        %v9653 = vadd.f32 %v9612, %v9632
        %v9654 = vadd.f32 %v9613, %v9632
        %v9655 = vadd.f32 %v9614, %v9632
        %v9656 = vadd.f32 %v9615, %v9632
        %v9657 = vadd.f32 %v9616, %v9632
        %v9658 = vadd.f32 %v9617, %v9632
        %v9659 = vadd.f32 %v9618, %v9632
        %v9660 = vadd.f32 %v9619, %v9632
        %v9661 = vadd.f32 %v9620, %v9632
        %v9662 = vadd.f32 %v9621, %v9632
        %v9663 = vadd.f32 %v9622, %v9632
        %v9664 = vadd.f32 %v9623, %v9632
        %v9665 = vadd.f32 %v9624, %v9632
        %v9666 = vmax.f32 %v9634, 0.0
        %v9667 = vmax.f32 %v9635, 0.0
        %v9668 = vmax.f32 %v9636, 0.0
        %v9669 = vmax.f32 %v9637, 0.0
        %v9670 = vmax.f32 %v9638, 0.0
        %v9671 = vmax.f32 %v9639, 0.0
        %v9672 = vmax.f32 %v9640, 0.0
        %v9673 = vmax.f32 %v9641, 0.0
        %v9674 = vmax.f32 %v9642, 0.0
        %v9675 = vmax.f32 %v9643, 0.0
        %v9676 = vmax.f32 %v9644, 0.0
        %v9677 = vmax.f32 %v9645, 0.0
        %v9678 = vmax.f32 %v9646, 0.0
        %v9679 = vmax.f32 %v9647, 0.0
        %v9680 = vmax.f32 %v9648, 0.0
        %v9681 = vmax.f32 %v9649, 0.0
        %v9682 = vmax.f32 %v9650, 0.0
        %v9683 = vmax.f32 %v9651, 0.0
        %v9684 = vmax.f32 %v9652, 0.0
        %v9685 = vmax.f32 %v9653, 0.0
        %v9686 = vmax.f32 %v9654, 0.0
        %v9687 = vmax.f32 %v9655, 0.0
        %v9688 = vmax.f32 %v9656, 0.0
        %v9689 = vmax.f32 %v9657, 0.0
        %v9690 = vmax.f32 %v9658, 0.0
        %v9691 = vmax.f32 %v9659, 0.0
        %v9692 = vmax.f32 %v9660, 0.0
        %v9693 = vmax.f32 %v9661, 0.0
        %v9694 = vmax.f32 %v9662, 0.0
        %v9695 = vmax.f32 %v9663, 0.0
        %v9696 = vmax.f32 %v9664, 0.0
        %v9697 = vmax.f32 %v9665, 0.0
        %v9698 = vpack.c.bf16 %v9667, %v9666
        %v9699 = vpack.c.bf16 %v9669, %v9668
        %v9700 = vpack.c.bf16 %v9671, %v9670
        %v9701 = vpack.c.bf16 %v9673, %v9672
        %v9702 = vpack.c.bf16 %v9675, %v9674
        %v9703 = vpack.c.bf16 %v9677, %v9676
        %v9704 = vpack.c.bf16 %v9679, %v9678
        %v9705 = vpack.c.bf16 %v9681, %v9680
        %v9706 = vpack.c.bf16 %v9683, %v9682
        %v9707 = vpack.c.bf16 %v9685, %v9684
        %v9708 = vpack.c.bf16 %v9687, %v9686
        %v9709 = vpack.c.bf16 %v9689, %v9688
        %v9710 = vpack.c.bf16 %v9691, %v9690
        %v9711 = vpack.c.bf16 %v9693, %v9692
        %v9712 = vpack.c.bf16 %v9695, %v9694
        %v9713 = vpack.c.bf16 %v9697, %v9696
        %9730 = vrot.lane.b32.xlu0 %v9698, 96
        %v9731 = vpop.permute.xlu0 %9730
        %9732 = vrot.lane.b32.xlu0 %v9699, 96
        %v9733 = vpop.permute.xlu0 %9732
        %9734 = vrot.lane.b32.xlu0 %v9700, 96
        %v9735 = vpop.permute.xlu0 %9734
        %9736 = vrot.lane.b32.xlu0 %v9701, 96
        %v9737 = vpop.permute.xlu0 %9736
        %9738 = vrot.lane.b32.xlu0 %v9702, 96
        %v9739 = vpop.permute.xlu0 %9738
        %9740 = vrot.lane.b32.xlu0 %v9703, 96
        %v9741 = vpop.permute.xlu0 %9740
        %9742 = vrot.lane.b32.xlu0 %v9704, 96
        %v9743 = vpop.permute.xlu0 %9742
        %9744 = vrot.lane.b32.xlu0 %v9705, 96
        %v9745 = vpop.permute.xlu0 %9744
        %9746 = vrot.lane.b32.xlu0 %v9706, 96
        %v9747 = vpop.permute.xlu0 %9746
        %9748 = vrot.lane.b32.xlu0 %v9707, 96
        %v9749 = vpop.permute.xlu0 %9748
        %9750 = vrot.lane.b32.xlu0 %v9708, 96
        %v9751 = vpop.permute.xlu0 %9750
        %9752 = vrot.lane.b32.xlu0 %v9709, 96
        %v9753 = vpop.permute.xlu0 %9752
        %9754 = vrot.lane.b32.xlu0 %v9710, 96
        %v9755 = vpop.permute.xlu0 %9754
        %9756 = vrot.lane.b32.xlu0 %v9711, 96
        %v9757 = vpop.permute.xlu0 %9756
        %9758 = vrot.lane.b32.xlu0 %v9712, 96
        %v9759 = vpop.permute.xlu0 %9758
        %9760 = vrot.lane.b32.xlu0 %v9713, 96
        %v9761 = vpop.permute.xlu0 %9760
        %v9763 = vshrl.u32 %v9731, 16
        %v9765 = vrot.slane %v9763, 7
        %v9766 = vshll.u32 %v9731, 16
        %v9768 = vor.u32 %v9765, %v9766
        %v9770 = vshrl.u32 %v9733, 16
        %v9772 = vrot.slane %v9770, 7
        %v9773 = vshll.u32 %v9733, 16
        %v9775 = vor.u32 %v9772, %v9773
        %v9777 = vshrl.u32 %v9735, 16
        %v9779 = vrot.slane %v9777, 7
        %v9780 = vshll.u32 %v9735, 16
        %v9782 = vor.u32 %v9779, %v9780
        %v9784 = vshrl.u32 %v9737, 16
        %v9786 = vrot.slane %v9784, 7
        %v9787 = vshll.u32 %v9737, 16
        %v9789 = vor.u32 %v9786, %v9787
        %v9791 = vshrl.u32 %v9739, 16
        %v9793 = vrot.slane %v9791, 7
        %v9794 = vshll.u32 %v9739, 16
        %v9796 = vor.u32 %v9793, %v9794
        %v9798 = vshrl.u32 %v9741, 16
        %v9800 = vrot.slane %v9798, 7
        %v9801 = vshll.u32 %v9741, 16
        %v9803 = vor.u32 %v9800, %v9801
        %v9805 = vshrl.u32 %v9743, 16
        %v9807 = vrot.slane %v9805, 7
        %v9808 = vshll.u32 %v9743, 16
        %v9810 = vor.u32 %v9807, %v9808
        %v9812 = vshrl.u32 %v9745, 16
        %v9814 = vrot.slane %v9812, 7
        %v9815 = vshll.u32 %v9745, 16
        %v9817 = vor.u32 %v9814, %v9815
        %v9819 = vshrl.u32 %v9747, 16
        %v9821 = vrot.slane %v9819, 7
        %v9822 = vshll.u32 %v9747, 16
        %v9824 = vor.u32 %v9821, %v9822
        %v9826 = vshrl.u32 %v9749, 16
        %v9828 = vrot.slane %v9826, 7
        %v9829 = vshll.u32 %v9749, 16
        %v9831 = vor.u32 %v9828, %v9829
        %v9833 = vshrl.u32 %v9751, 16
        %v9835 = vrot.slane %v9833, 7
        %v9836 = vshll.u32 %v9751, 16
        %v9838 = vor.u32 %v9835, %v9836
        %v9840 = vshrl.u32 %v9753, 16
        %v9842 = vrot.slane %v9840, 7
        %v9843 = vshll.u32 %v9753, 16
        %v9845 = vor.u32 %v9842, %v9843
        %v9847 = vshrl.u32 %v9755, 16
        %v9849 = vrot.slane %v9847, 7
        %v9850 = vshll.u32 %v9755, 16
        %v9852 = vor.u32 %v9849, %v9850
        %v9854 = vshrl.u32 %v9757, 16
        %v9856 = vrot.slane %v9854, 7
        %v9857 = vshll.u32 %v9757, 16
        %v9859 = vor.u32 %v9856, %v9857
        %v9861 = vshrl.u32 %v9759, 16
        %v9863 = vrot.slane %v9861, 7
        %v9864 = vshll.u32 %v9759, 16
        %v9866 = vor.u32 %v9863, %v9864
        %v9868 = vshrl.u32 %v9761, 16
        %v9870 = vrot.slane %v9868, 7
        %v9871 = vshll.u32 %v9761, 16
        %v9873 = vor.u32 %v9870, %v9871
        %v9906 = vsel %vm872, 0, %v9768
        %v9907 = vsel %vm872, 0, %v9775
        %v9908 = vsel %vm872, 0, %v9782
        %v9909 = vsel %vm872, 0, %v9789
        %v9910 = vsel %vm872, 0, %v9796
        %v9911 = vsel %vm872, 0, %v9803
        %v9912 = vsel %vm872, 0, %v9810
        %v9913 = vsel %vm872, 0, %v9817
        %v9914 = vsel %vm872, 0, %v9824
        %v9915 = vsel %vm872, 0, %v9831
        %v9916 = vsel %vm872, 0, %v9838
        %v9917 = vsel %vm872, 0, %v9845
        %v9918 = vsel %vm872, 0, %v9852
        %v9919 = vsel %vm872, 0, %v9859
        %v9920 = vsel %vm872, 0, %v9866
        %v9921 = vsel %vm872, 0, %v9873
        %v9922 = vsel %vm872, %v9765, 0
        %v9923 = vsel %vm872, %v9772, 0
        %v9924 = vsel %vm872, %v9779, 0
        %v9925 = vsel %vm872, %v9786, 0
        %v9926 = vsel %vm872, %v9793, 0
        %v9927 = vsel %vm872, %v9800, 0
        %v9928 = vsel %vm872, %v9807, 0
        %v9929 = vsel %vm872, %v9814, 0
        %v9930 = vsel %vm872, %v9821, 0
        %v9931 = vsel %vm872, %v9828, 0
        %v9932 = vsel %vm872, %v9835, 0
        %v9933 = vsel %vm872, %v9842, 0
        %v9934 = vsel %vm872, %v9849, 0
        %v9935 = vsel %vm872, %v9856, 0
        %v9936 = vsel %vm872, %v9863, 0
        %v9937 = vsel %vm872, %v9870, 0
        %v9939 = vshrl.u32 %v9906, 16
        %v9941 = vshll.u32 %v9906, 16
        %v9943 = vrot.slane %v9941, 1
        %v9944 = vor.u32 %v9939, %v9943
        %v9946 = vshll.u32 %v9922, 16
        %v9948 = vrot.slane %v9946, 1
        %v9949 = vsel %vm907, %v9944, %v9948
        %v9951 = vshrl.u32 %v9907, 16
        %v9953 = vshll.u32 %v9907, 16
        %v9955 = vrot.slane %v9953, 1
        %v9956 = vor.u32 %v9951, %v9955
        %v9958 = vshll.u32 %v9923, 16
        %v9960 = vrot.slane %v9958, 1
        %v9961 = vsel %vm907, %v9956, %v9960
        %v9963 = vshrl.u32 %v9908, 16
        %v9965 = vshll.u32 %v9908, 16
        %v9967 = vrot.slane %v9965, 1
        %v9968 = vor.u32 %v9963, %v9967
        %v9970 = vshll.u32 %v9924, 16
        %v9972 = vrot.slane %v9970, 1
        %v9973 = vsel %vm907, %v9968, %v9972
        %v9975 = vshrl.u32 %v9909, 16
        %v9977 = vshll.u32 %v9909, 16
        %v9979 = vrot.slane %v9977, 1
        %v9980 = vor.u32 %v9975, %v9979
        %v9982 = vshll.u32 %v9925, 16
        %v9984 = vrot.slane %v9982, 1
        %v9985 = vsel %vm907, %v9980, %v9984
        %v9987 = vshrl.u32 %v9910, 16
        %v9989 = vshll.u32 %v9910, 16
        %v9991 = vrot.slane %v9989, 1
        %v9992 = vor.u32 %v9987, %v9991
        %v9994 = vshll.u32 %v9926, 16
        %v9996 = vrot.slane %v9994, 1
        %v9997 = vsel %vm907, %v9992, %v9996
        %v9999 = vshrl.u32 %v9911, 16
        %v10001 = vshll.u32 %v9911, 16
        %v10003 = vrot.slane %v10001, 1
        %v10004 = vor.u32 %v9999, %v10003
        %v10006 = vshll.u32 %v9927, 16
        %v10008 = vrot.slane %v10006, 1
        %v10009 = vsel %vm907, %v10004, %v10008
        %v10011 = vshrl.u32 %v9912, 16
        %v10013 = vshll.u32 %v9912, 16
        %v10015 = vrot.slane %v10013, 1
        %v10016 = vor.u32 %v10011, %v10015
        %v10018 = vshll.u32 %v9928, 16
        %v10020 = vrot.slane %v10018, 1
        %v10021 = vsel %vm907, %v10016, %v10020
        %v10023 = vshrl.u32 %v9913, 16
        %v10025 = vshll.u32 %v9913, 16
        %v10027 = vrot.slane %v10025, 1
        %v10028 = vor.u32 %v10023, %v10027
        %v10030 = vshll.u32 %v9929, 16
        %v10032 = vrot.slane %v10030, 1
        %v10033 = vsel %vm907, %v10028, %v10032
        %v10035 = vshrl.u32 %v9914, 16
        %v10037 = vshll.u32 %v9914, 16
        %v10039 = vrot.slane %v10037, 1
        %v10040 = vor.u32 %v10035, %v10039
        %v10042 = vshll.u32 %v9930, 16
        %v10044 = vrot.slane %v10042, 1
        %v10045 = vsel %vm907, %v10040, %v10044
        %v10047 = vshrl.u32 %v9915, 16
        %v10049 = vshll.u32 %v9915, 16
        %v10051 = vrot.slane %v10049, 1
        %v10052 = vor.u32 %v10047, %v10051
        %v10054 = vshll.u32 %v9931, 16
        %v10056 = vrot.slane %v10054, 1
        %v10057 = vsel %vm907, %v10052, %v10056
        %v10059 = vshrl.u32 %v9916, 16
        %v10061 = vshll.u32 %v9916, 16
        %v10063 = vrot.slane %v10061, 1
        %v10064 = vor.u32 %v10059, %v10063
        %v10066 = vshll.u32 %v9932, 16
        %v10068 = vrot.slane %v10066, 1
        %v10069 = vsel %vm907, %v10064, %v10068
        %v10071 = vshrl.u32 %v9917, 16
        %v10073 = vshll.u32 %v9917, 16
        %v10075 = vrot.slane %v10073, 1
        %v10076 = vor.u32 %v10071, %v10075
        %v10078 = vshll.u32 %v9933, 16
        %v10080 = vrot.slane %v10078, 1
        %v10081 = vsel %vm907, %v10076, %v10080
        %v10083 = vshrl.u32 %v9918, 16
        %v10085 = vshll.u32 %v9918, 16
        %v10087 = vrot.slane %v10085, 1
        %v10088 = vor.u32 %v10083, %v10087
        %v10090 = vshll.u32 %v9934, 16
        %v10092 = vrot.slane %v10090, 1
        %v10093 = vsel %vm907, %v10088, %v10092
        %v10095 = vshrl.u32 %v9919, 16
        %v10097 = vshll.u32 %v9919, 16
        %v10099 = vrot.slane %v10097, 1
        %v10100 = vor.u32 %v10095, %v10099
        %v10102 = vshll.u32 %v9935, 16
        %v10104 = vrot.slane %v10102, 1
        %v10105 = vsel %vm907, %v10100, %v10104
        %v10107 = vshrl.u32 %v9920, 16
        %v10109 = vshll.u32 %v9920, 16
        %v10111 = vrot.slane %v10109, 1
        %v10112 = vor.u32 %v10107, %v10111
        %v10114 = vshll.u32 %v9936, 16
        %v10116 = vrot.slane %v10114, 1
        %v10117 = vsel %vm907, %v10112, %v10116
        %10118 = vrot.lane.b32.xlu0 %v9949, 32
        %v10119 = vpop.permute.xlu0 %10118
        %10120 = vrot.lane.b32.xlu0 %v9961, 32
        %v10121 = vpop.permute.xlu0 %10120
        %10122 = vrot.lane.b32.xlu0 %v9973, 32
        %v10123 = vpop.permute.xlu0 %10122
        %10124 = vrot.lane.b32.xlu0 %v9985, 32
        %v10125 = vpop.permute.xlu0 %10124
        %10126 = vrot.lane.b32.xlu0 %v9997, 32
        %v10127 = vpop.permute.xlu0 %10126
        %10128 = vrot.lane.b32.xlu0 %v10009, 32
        %v10129 = vpop.permute.xlu0 %10128
        %10130 = vrot.lane.b32.xlu0 %v10021, 32
        %v10131 = vpop.permute.xlu0 %10130
        %10132 = vrot.lane.b32.xlu0 %v10033, 32
        %v10133 = vpop.permute.xlu0 %10132
        %10134 = vrot.lane.b32.xlu0 %v10045, 32
        %v10135 = vpop.permute.xlu0 %10134
        %10136 = vrot.lane.b32.xlu0 %v10057, 32
        %v10137 = vpop.permute.xlu0 %10136
        %10138 = vrot.lane.b32.xlu0 %v10069, 32
        %v10139 = vpop.permute.xlu0 %10138
        %10140 = vrot.lane.b32.xlu0 %v10081, 32
        %v10141 = vpop.permute.xlu0 %10140
        %10142 = vrot.lane.b32.xlu0 %v10093, 32
        %v10143 = vpop.permute.xlu0 %10142
        %10144 = vrot.lane.b32.xlu0 %v10105, 32
        %v10145 = vpop.permute.xlu0 %10144
        %10146 = vrot.lane.b32.xlu0 %v10117, 32
        %v10147 = vpop.permute.xlu0 %10146
        %v10178 = vrot.slane %v9906, 1
        %v10179 = vrot.slane %v9922, 1
        %v10180 = vsel %vm1164, %v10178, %v10179
        %v10181 = vrot.slane %v9907, 1
        %v10182 = vrot.slane %v9923, 1
        %v10183 = vsel %vm1164, %v10181, %v10182
        %v10184 = vrot.slane %v9908, 1
        %v10185 = vrot.slane %v9924, 1
        %v10186 = vsel %vm1164, %v10184, %v10185
        %v10187 = vrot.slane %v9909, 1
        %v10188 = vrot.slane %v9925, 1
        %v10189 = vsel %vm1164, %v10187, %v10188
        %v10190 = vrot.slane %v9910, 1
        %v10191 = vrot.slane %v9926, 1
        %v10192 = vsel %vm1164, %v10190, %v10191
        %v10193 = vrot.slane %v9911, 1
        %v10194 = vrot.slane %v9927, 1
        %v10195 = vsel %vm1164, %v10193, %v10194
        %v10196 = vrot.slane %v9912, 1
        %v10197 = vrot.slane %v9928, 1
        %v10198 = vsel %vm1164, %v10196, %v10197
        %v10199 = vrot.slane %v9913, 1
        %v10200 = vrot.slane %v9929, 1
        %v10201 = vsel %vm1164, %v10199, %v10200
        %v10202 = vrot.slane %v9914, 1
        %v10203 = vrot.slane %v9930, 1
        %v10204 = vsel %vm1164, %v10202, %v10203
        %v10205 = vrot.slane %v9915, 1
        %v10206 = vrot.slane %v9931, 1
        %v10207 = vsel %vm1164, %v10205, %v10206
        %v10208 = vrot.slane %v9916, 1
        %v10209 = vrot.slane %v9932, 1
        %v10210 = vsel %vm1164, %v10208, %v10209
        %v10211 = vrot.slane %v9917, 1
        %v10212 = vrot.slane %v9933, 1
        %v10213 = vsel %vm1164, %v10211, %v10212
        %v10214 = vrot.slane %v9918, 1
        %v10215 = vrot.slane %v9934, 1
        %v10216 = vsel %vm1164, %v10214, %v10215
        %v10217 = vrot.slane %v9919, 1
        %v10218 = vrot.slane %v9935, 1
        %v10219 = vsel %vm1164, %v10217, %v10218
        %v10220 = vrot.slane %v9920, 1
        %v10221 = vrot.slane %v9936, 1
        %v10222 = vsel %vm1164, %v10220, %v10221
        %10223 = vrot.lane.b32.xlu0 %v10180, 64
        %v10224 = vpop.permute.xlu0 %10223
        %10225 = vrot.lane.b32.xlu0 %v10183, 64
        %v10226 = vpop.permute.xlu0 %10225
        %10227 = vrot.lane.b32.xlu0 %v10186, 64
        %v10228 = vpop.permute.xlu0 %10227
        %10229 = vrot.lane.b32.xlu0 %v10189, 64
        %v10230 = vpop.permute.xlu0 %10229
        %10231 = vrot.lane.b32.xlu0 %v10192, 64
        %v10232 = vpop.permute.xlu0 %10231
        %10233 = vrot.lane.b32.xlu0 %v10195, 64
        %v10234 = vpop.permute.xlu0 %10233
        %10235 = vrot.lane.b32.xlu0 %v10198, 64
        %v10236 = vpop.permute.xlu0 %10235
        %10237 = vrot.lane.b32.xlu0 %v10201, 64
        %v10238 = vpop.permute.xlu0 %10237
        %10239 = vrot.lane.b32.xlu0 %v10204, 64
        %v10240 = vpop.permute.xlu0 %10239
        %10241 = vrot.lane.b32.xlu0 %v10207, 64
        %v10242 = vpop.permute.xlu0 %10241
        %10243 = vrot.lane.b32.xlu0 %v10210, 64
        %v10244 = vpop.permute.xlu0 %10243
        %10245 = vrot.lane.b32.xlu0 %v10213, 64
        %v10246 = vpop.permute.xlu0 %10245
        %10247 = vrot.lane.b32.xlu0 %v10216, 64
        %v10248 = vpop.permute.xlu0 %10247
        %10249 = vrot.lane.b32.xlu0 %v10219, 64
        %v10250 = vpop.permute.xlu0 %10249
        %10251 = vrot.lane.b32.xlu0 %v10222, 64
        %v10252 = vpop.permute.xlu0 %10251
        %10254 = vrot.lane.b32.xlu0 %v9906, 96
        %v10255 = vpop.permute.xlu0 %10254
        %10256 = vrot.lane.b32.xlu0 %v9907, 96
        %v10257 = vpop.permute.xlu0 %10256
        %10258 = vrot.lane.b32.xlu0 %v9908, 96
        %v10259 = vpop.permute.xlu0 %10258
        %10260 = vrot.lane.b32.xlu0 %v9909, 96
        %v10261 = vpop.permute.xlu0 %10260
        %10262 = vrot.lane.b32.xlu0 %v9910, 96
        %v10263 = vpop.permute.xlu0 %10262
        %10264 = vrot.lane.b32.xlu0 %v9911, 96
        %v10265 = vpop.permute.xlu0 %10264
        %10266 = vrot.lane.b32.xlu0 %v9912, 96
        %v10267 = vpop.permute.xlu0 %10266
        %10268 = vrot.lane.b32.xlu0 %v9913, 96
        %v10269 = vpop.permute.xlu0 %10268
        %10270 = vrot.lane.b32.xlu0 %v9914, 96
        %v10271 = vpop.permute.xlu0 %10270
        %10272 = vrot.lane.b32.xlu0 %v9915, 96
        %v10273 = vpop.permute.xlu0 %10272
        %10274 = vrot.lane.b32.xlu0 %v9916, 96
        %v10275 = vpop.permute.xlu0 %10274
        %10276 = vrot.lane.b32.xlu0 %v9917, 96
        %v10277 = vpop.permute.xlu0 %10276
        %10278 = vrot.lane.b32.xlu0 %v9918, 96
        %v10279 = vpop.permute.xlu0 %10278
        %10280 = vrot.lane.b32.xlu0 %v9919, 96
        %v10281 = vpop.permute.xlu0 %10280
        %10282 = vrot.lane.b32.xlu0 %v9920, 96
        %v10283 = vpop.permute.xlu0 %10282
        %10284 = vrot.lane.b32.xlu0 %v9921, 96
        %v10285 = vpop.permute.xlu0 %10284
        %v10287 = vshrl.u32 %v9921, 16
        %v10289 = vshll.u32 %v9921, 16
        %v10291 = vrot.slane %v10289, 1
        %v10292 = vor.u32 %v10287, %v10291
        %v10294 = vshll.u32 %v9937, 16
        %v10296 = vrot.slane %v10294, 1
        %v10297 = vsel %vm907, %v10292, %v10296
        %v10299 = vrot.slane %v9921, 1
        %v10300 = vrot.slane %v9937, 1
        %v10301 = vsel %vm1164, %v10299, %v10300
        %10302 = vrot.lane.b32.xlu0 %v10180, 32
        %v10303 = vpop.permute.xlu0 %10302
        %10304 = vrot.lane.b32.xlu0 %v10183, 32
        %v10305 = vpop.permute.xlu0 %10304
        %10306 = vrot.lane.b32.xlu0 %v10186, 32
        %v10307 = vpop.permute.xlu0 %10306
        %10308 = vrot.lane.b32.xlu0 %v10189, 32
        %v10309 = vpop.permute.xlu0 %10308
        %10310 = vrot.lane.b32.xlu0 %v10192, 32
        %v10311 = vpop.permute.xlu0 %10310
        %10312 = vrot.lane.b32.xlu0 %v10195, 32
        %v10313 = vpop.permute.xlu0 %10312
        %10314 = vrot.lane.b32.xlu0 %v10198, 32
        %v10315 = vpop.permute.xlu0 %10314
        %10316 = vrot.lane.b32.xlu0 %v10201, 32
        %v10317 = vpop.permute.xlu0 %10316
        %10318 = vrot.lane.b32.xlu0 %v10204, 32
        %v10319 = vpop.permute.xlu0 %10318
        %10320 = vrot.lane.b32.xlu0 %v10207, 32
        %v10321 = vpop.permute.xlu0 %10320
        %10322 = vrot.lane.b32.xlu0 %v10210, 32
        %v10323 = vpop.permute.xlu0 %10322
        %10324 = vrot.lane.b32.xlu0 %v10213, 32
        %v10325 = vpop.permute.xlu0 %10324
        %10326 = vrot.lane.b32.xlu0 %v10216, 32
        %v10327 = vpop.permute.xlu0 %10326
        %10328 = vrot.lane.b32.xlu0 %v10219, 32
        %v10329 = vpop.permute.xlu0 %10328
        %10330 = vrot.lane.b32.xlu0 %v10222, 32
        %v10331 = vpop.permute.xlu0 %10330
        %10332 = vrot.lane.b32.xlu0 %v10301, 32
        %v10333 = vpop.permute.xlu0 %10332
        %10334 = vrot.lane.b32.xlu0 %v9907, 64
        %v10335 = vpop.permute.xlu0 %10334
        %10336 = vrot.lane.b32.xlu0 %v9908, 64
        %v10337 = vpop.permute.xlu0 %10336
        %10338 = vrot.lane.b32.xlu0 %v9909, 64
        %v10339 = vpop.permute.xlu0 %10338
        %10340 = vrot.lane.b32.xlu0 %v9910, 64
        %v10341 = vpop.permute.xlu0 %10340
        %10342 = vrot.lane.b32.xlu0 %v9911, 64
        %v10343 = vpop.permute.xlu0 %10342
        %10344 = vrot.lane.b32.xlu0 %v9912, 64
        %v10345 = vpop.permute.xlu0 %10344
        %10346 = vrot.lane.b32.xlu0 %v9913, 64
        %v10347 = vpop.permute.xlu0 %10346
        %10348 = vrot.lane.b32.xlu0 %v9914, 64
        %v10349 = vpop.permute.xlu0 %10348
        %10350 = vrot.lane.b32.xlu0 %v9915, 64
        %v10351 = vpop.permute.xlu0 %10350
        %10352 = vrot.lane.b32.xlu0 %v9916, 64
        %v10353 = vpop.permute.xlu0 %10352
        %10354 = vrot.lane.b32.xlu0 %v9917, 64
        %v10355 = vpop.permute.xlu0 %10354
        %10356 = vrot.lane.b32.xlu0 %v9918, 64
        %v10357 = vpop.permute.xlu0 %10356
        %10358 = vrot.lane.b32.xlu0 %v9919, 64
        %v10359 = vpop.permute.xlu0 %10358
        %10360 = vrot.lane.b32.xlu0 %v9920, 64
        %v10361 = vpop.permute.xlu0 %10360
        %10362 = vrot.lane.b32.xlu0 %v9921, 64
        %v10363 = vpop.permute.xlu0 %10362
        %10364 = vrot.lane.b32.xlu0 %v9961, 96
        %v10365 = vpop.permute.xlu0 %10364
        %10366 = vrot.lane.b32.xlu0 %v9973, 96
        %v10367 = vpop.permute.xlu0 %10366
        %10368 = vrot.lane.b32.xlu0 %v9985, 96
        %v10369 = vpop.permute.xlu0 %10368
        %10370 = vrot.lane.b32.xlu0 %v9997, 96
        %v10371 = vpop.permute.xlu0 %10370
        %10372 = vrot.lane.b32.xlu0 %v10009, 96
        %v10373 = vpop.permute.xlu0 %10372
        %10374 = vrot.lane.b32.xlu0 %v10021, 96
        %v10375 = vpop.permute.xlu0 %10374
        %10376 = vrot.lane.b32.xlu0 %v10033, 96
        %v10377 = vpop.permute.xlu0 %10376
        %10378 = vrot.lane.b32.xlu0 %v10045, 96
        %v10379 = vpop.permute.xlu0 %10378
        %10380 = vrot.lane.b32.xlu0 %v10057, 96
        %v10381 = vpop.permute.xlu0 %10380
        %10382 = vrot.lane.b32.xlu0 %v10069, 96
        %v10383 = vpop.permute.xlu0 %10382
        %10384 = vrot.lane.b32.xlu0 %v10081, 96
        %v10385 = vpop.permute.xlu0 %10384
        %10386 = vrot.lane.b32.xlu0 %v10093, 96
        %v10387 = vpop.permute.xlu0 %10386
        %10388 = vrot.lane.b32.xlu0 %v10105, 96
        %v10389 = vpop.permute.xlu0 %10388
        %10390 = vrot.lane.b32.xlu0 %v10117, 96
        %v10391 = vpop.permute.xlu0 %10390
        %10392 = vrot.lane.b32.xlu0 %v10297, 96
        %v10393 = vpop.permute.xlu0 %10392
        %v10395 = vsel %vm1553, %v9906, %v10119
        %v10397 = vsel %vm1553, %v9907, %v10121
        %v10399 = vsel %vm1553, %v9908, %v10123
        %v10401 = vsel %vm1553, %v9909, %v10125
        %v10403 = vsel %vm1553, %v9910, %v10127
        %v10405 = vsel %vm1553, %v9911, %v10129
        %v10407 = vsel %vm1553, %v9912, %v10131
        %v10409 = vsel %vm1553, %v9913, %v10133
        %v10411 = vsel %vm1553, %v9914, %v10135
        %v10413 = vsel %vm1553, %v9915, %v10137
        %v10415 = vsel %vm1553, %v9916, %v10139
        %v10417 = vsel %vm1553, %v9917, %v10141
        %v10419 = vsel %vm1553, %v9918, %v10143
        %v10421 = vsel %vm1553, %v9919, %v10145
        %v10423 = vsel %vm1553, %v9920, %v10147
        %v10425 = vsel %vm1685, %v10395, %v10224
        %v10427 = vsel %vm1685, %v10397, %v10226
        %v10429 = vsel %vm1685, %v10399, %v10228
        %v10431 = vsel %vm1685, %v10401, %v10230
        %v10433 = vsel %vm1685, %v10403, %v10232
        %v10435 = vsel %vm1685, %v10405, %v10234
        %v10437 = vsel %vm1685, %v10407, %v10236
        %v10439 = vsel %vm1685, %v10409, %v10238
        %v10441 = vsel %vm1685, %v10411, %v10240
        %v10443 = vsel %vm1685, %v10413, %v10242
        %v10445 = vsel %vm1685, %v10415, %v10244
        %v10447 = vsel %vm1685, %v10417, %v10246
        %v10449 = vsel %vm1685, %v10419, %v10248
        %v10451 = vsel %vm1685, %v10421, %v10250
        %v10453 = vsel %vm1685, %v10423, %v10252
        %v10455 = vsel %vm2708, %v2677, %v10255
        %v10458 = vsel %vm2708, %v10425, %v10257
        %v10461 = vsel %vm2708, %v10427, %v10259
        %v10464 = vsel %vm2708, %v10429, %v10261
        %v10467 = vsel %vm2708, %v10431, %v10263
        %v10470 = vsel %vm2708, %v10433, %v10265
        %v10473 = vsel %vm2708, %v10435, %v10267
        %v10476 = vsel %vm2708, %v10437, %v10269
        %v10479 = vsel %vm2708, %v10439, %v10271
        %v10482 = vsel %vm2708, %v10441, %v10273
        %v10485 = vsel %vm2708, %v10443, %v10275
        %v10488 = vsel %vm2708, %v10445, %v10277
        %v10491 = vsel %vm2708, %v10447, %v10279
        %v10494 = vsel %vm2708, %v10449, %v10281
        %v10497 = vsel %vm2708, %v10451, %v10283
        %v10500 = vsel %vm2708, %v10453, %v10285
        %v10504 = vsel %vm1553, %v9949, %v10303
        %v10507 = vsel %vm1553, %v9961, %v10305
        %v10510 = vsel %vm1553, %v9973, %v10307
        %v10513 = vsel %vm1553, %v9985, %v10309
        %v10516 = vsel %vm1553, %v9997, %v10311
        %v10519 = vsel %vm1553, %v10009, %v10313
        %v10522 = vsel %vm1553, %v10021, %v10315
        %v10525 = vsel %vm1553, %v10033, %v10317
        %v10528 = vsel %vm1553, %v10045, %v10319
        %v10531 = vsel %vm1553, %v10057, %v10321
        %v10534 = vsel %vm1553, %v10069, %v10323
        %v10537 = vsel %vm1553, %v10081, %v10325
        %v10540 = vsel %vm1553, %v10093, %v10327
        %v10543 = vsel %vm1553, %v10105, %v10329
        %v10546 = vsel %vm1553, %v10117, %v10331
        %v10549 = vsel %vm1553, %v10297, %v10333
        %v10551 = vsel %vm1685, %v10504, %v10335
        %v10553 = vsel %vm1685, %v10507, %v10337
        %v10555 = vsel %vm1685, %v10510, %v10339
        %v10557 = vsel %vm1685, %v10513, %v10341
        %v10559 = vsel %vm1685, %v10516, %v10343
        %v10561 = vsel %vm1685, %v10519, %v10345
        %v10563 = vsel %vm1685, %v10522, %v10347
        %v10565 = vsel %vm1685, %v10525, %v10349
        %v10567 = vsel %vm1685, %v10528, %v10351
        %v10569 = vsel %vm1685, %v10531, %v10353
        %v10571 = vsel %vm1685, %v10534, %v10355
        %v10573 = vsel %vm1685, %v10537, %v10357
        %v10575 = vsel %vm1685, %v10540, %v10359
        %v10577 = vsel %vm1685, %v10543, %v10361
        %v10579 = vsel %vm1685, %v10546, %v10363
        %v10580 = vsel %vm1685, %v10549, %v2612
        %v10582 = vsel %vm2708, %v10551, %v10365
        %v10585 = vsel %vm2708, %v10553, %v10367
        %v10588 = vsel %vm2708, %v10555, %v10369
        %v10591 = vsel %vm2708, %v10557, %v10371
        %v10594 = vsel %vm2708, %v10559, %v10373
        %v10597 = vsel %vm2708, %v10561, %v10375
        %v10600 = vsel %vm2708, %v10563, %v10377
        %v10603 = vsel %vm2708, %v10565, %v10379
        %v10606 = vsel %vm2708, %v10567, %v10381
        %v10609 = vsel %vm2708, %v10569, %v10383
        %v10612 = vsel %vm2708, %v10571, %v10385
        %v10615 = vsel %vm2708, %v10573, %v10387
        %v10618 = vsel %vm2708, %v10575, %v10389
        %v10621 = vsel %vm2708, %v10577, %v10391
        %v10624 = vsel %vm2708, %v10579, %v10393
        %v10626 = vsel %vm2708, %v10580, %v2644
        %v10628 = vld [vmem:[#allocation4] sm:$0xf]
        %v10629 = vld [vmem:[#allocation4 + $0x4] sm:$0xf]
        %v10630 = vld [vmem:[#allocation4 + $0x8] sm:$0xf]
        %v10631 = vld [vmem:[#allocation4 + $0xc] sm:$0xf]
        %v10632 = vld [vmem:[#allocation4 + $0x10] sm:$0xf]
        %v10633 = vld [vmem:[#allocation4 + $0x14] sm:$0xf]
        %v10634 = vld [vmem:[#allocation4 + $0x18] sm:$0xf]
        %v10635 = vld [vmem:[#allocation4 + $0x1c] sm:$0xf]
        %v10636 = vld [vmem:[#allocation4 + $0x20] sm:$0xf]
        %v10637 = vld [vmem:[#allocation4 + $0x24] sm:$0xf]
        %v10638 = vld [vmem:[#allocation4 + $0x28] sm:$0xf]
        %v10639 = vld [vmem:[#allocation4 + $0x2c] sm:$0xf]
        %v10640 = vld [vmem:[#allocation4 + $0x30] sm:$0xf]
        %v10641 = vld [vmem:[#allocation4 + $0x34] sm:$0xf]
        %v10642 = vld [vmem:[#allocation4 + $0x38] sm:$0xf]
        %v10643 = vld [vmem:[#allocation4 + $0x3c] sm:$0xf]
        %v10644 = vld [vmem:[#allocation4 + $0x40] sm:$0xf]
        %v10645 = vld [vmem:[#allocation4 + $0x44] sm:$0xf]
        %v10646 = vld [vmem:[#allocation4 + $0x48] sm:$0xf]
        %v10647 = vld [vmem:[#allocation4 + $0x4c] sm:$0xf]
        %v10648 = vld [vmem:[#allocation4 + $0x50] sm:$0xf]
        %v10649 = vld [vmem:[#allocation4 + $0x54] sm:$0xf]
        %v10650 = vld [vmem:[#allocation4 + $0x58] sm:$0xf]
        %v10651 = vld [vmem:[#allocation4 + $0x5c] sm:$0xf]
        %v10652 = vld [vmem:[#allocation4 + $0x60] sm:$0xf]
        %v10653 = vld [vmem:[#allocation4 + $0x64] sm:$0xf]
        %v10654 = vld [vmem:[#allocation4 + $0x68] sm:$0xf]
        %v10655 = vld [vmem:[#allocation4 + $0x6c] sm:$0xf]
        %v10656 = vld [vmem:[#allocation4 + $0x70] sm:$0xf]
        %v10657 = vld [vmem:[#allocation4 + $0x74] sm:$0xf]
        %v10658 = vld [vmem:[#allocation4 + $0x78] sm:$0xf]
        %v10659 = vld [vmem:[#allocation4 + $0x7c] sm:$0xf]
        %v10660 = vld [vmem:[#allocation4 + $0x80] sm:$0xf]
        %v10661 = vld [vmem:[#allocation4 + $0x84] sm:$0xf]
        %v10662 = vld [vmem:[#allocation4 + $0x88] sm:$0xf]
        %v10663 = vld [vmem:[#allocation4 + $0x8c] sm:$0xf]
        %v10700 = vunpack.c.l.b16 %v10628
        %v10701 = vunpack.c.l.b16 %v10629
        %v10702 = vunpack.c.l.b16 %v10630
        %v10703 = vunpack.c.l.b16 %v10631
        %v10704 = vunpack.c.l.b16 %v10632
        %v10705 = vunpack.c.l.b16 %v10633
        %v10706 = vunpack.c.l.b16 %v10634
        %v10707 = vunpack.c.l.b16 %v10635
        %v10708 = vunpack.c.l.b16 %v10636
        %v10709 = vunpack.c.l.b16 %v10637
        %v10710 = vunpack.c.l.b16 %v10638
        %v10711 = vunpack.c.l.b16 %v10639
        %v10712 = vunpack.c.l.b16 %v10640
        %v10713 = vunpack.c.l.b16 %v10641
        %v10714 = vunpack.c.l.b16 %v10642
        %v10715 = vunpack.c.l.b16 %v10643
        %v10716 = vunpack.c.l.b16 %v10644
        %v10717 = vunpack.c.l.b16 %v10645
        %v10718 = vunpack.c.l.b16 %v10646
        %v10719 = vunpack.c.l.b16 %v10647
        %v10720 = vunpack.c.l.b16 %v10648
        %v10721 = vunpack.c.l.b16 %v10649
        %v10722 = vunpack.c.l.b16 %v10650
        %v10723 = vunpack.c.l.b16 %v10651
        %v10724 = vunpack.c.l.b16 %v10652
        %v10725 = vunpack.c.l.b16 %v10653
        %v10726 = vunpack.c.l.b16 %v10654
        %v10727 = vunpack.c.l.b16 %v10655
        %v10728 = vunpack.c.l.b16 %v10656
        %v10729 = vunpack.c.l.b16 %v10657
        %v10730 = vunpack.c.l.b16 %v10658
        %v10731 = vunpack.c.l.b16 %v10659
        %v10732 = vunpack.c.l.b16 %v10660
        %v10733 = vunpack.c.l.b16 %v10661
        %v10734 = vunpack.c.l.b16 %v10662
        %v10735 = vunpack.c.l.b16 %v10663
        %v10736 = vpack.c.b16 %v10701, %v10700
        %v10737 = vpack.c.b16 %v10703, %v10702
        %v10738 = vpack.c.b16 %v10705, %v10704
        %v10739 = vpack.c.b16 %v10707, %v10706
        %v10740 = vpack.c.b16 %v10709, %v10708
        %v10741 = vpack.c.b16 %v10711, %v10710
        %v10742 = vpack.c.b16 %v10713, %v10712
        %v10743 = vpack.c.b16 %v10715, %v10714
        %v10744 = vpack.c.b16 %v10717, %v10716
        %v10745 = vpack.c.b16 %v10719, %v10718
        %v10746 = vpack.c.b16 %v10721, %v10720
        %v10747 = vpack.c.b16 %v10723, %v10722
        %v10748 = vpack.c.b16 %v10725, %v10724
        %v10749 = vpack.c.b16 %v10727, %v10726
        %v10750 = vpack.c.b16 %v10729, %v10728
        %v10751 = vpack.c.b16 %v10731, %v10730
        %v10752 = vpack.c.b16 %v10733, %v10732
        %v10753 = vpack.c.b16 %v10735, %v10734
        %v10773 = vsel %vm1553, %v10183, 0
        %v10776 = vsel %vm1553, %v10186, 0
        %v10779 = vsel %vm1553, %v10189, 0
        %v10782 = vsel %vm1553, %v10192, 0
        %v10785 = vsel %vm1553, %v10195, 0
        %v10788 = vsel %vm1553, %v10198, 0
        %v10791 = vsel %vm1553, %v10201, 0
        %v10794 = vsel %vm1553, %v10204, 0
        %v10797 = vsel %vm1553, %v10207, 0
        %v10800 = vsel %vm1553, %v10210, 0
        %v10803 = vsel %vm1553, %v10213, 0
        %v10806 = vsel %vm1553, %v10216, 0
        %v10809 = vsel %vm1553, %v10219, 0
        %v10812 = vsel %vm1553, %v10222, 0
        %v10815 = vsel %vm1553, %v10301, 0
        %10817 = vmatprep.subr.bf16.mxu0 0
        %10818 = vmatpush1.bf16.msra.mxu0 %v10736
        %10819 = vmatprep.subr.bf16.mxu0 0
        %10820 = vmatpush1.bf16.msra.mxu0 %v10737
        %10821 = vmatprep.subr.bf16.mxu0 0
        %10822 = vmatpush1.bf16.msra.mxu0 %v10738
        %10823 = vmatprep.subr.bf16.mxu0 0
        %10824 = vmatpush1.bf16.msra.mxu0 %v10739
        %10825 = vmatprep.subr.bf16.mxu0 0
        %10826 = vmatpush1.bf16.msra.mxu0 %v10740
        %10827 = vmatprep.subr.bf16.mxu0 0
        %10828 = vmatpush1.bf16.msra.mxu0 %v10741
        %10829 = vmatprep.subr.bf16.mxu0 0
        %10830 = vmatpush1.bf16.msra.mxu0 %v10742
        %10831 = vmatprep.subr.bf16.mxu0 0
        %10832 = vmatpush1.bf16.msra.mxu0 %v10743
        %10833 = vmatprep.subr.bf16.mxu0 0
        %10834 = vmatpush1.bf16.msra.mxu0 %v10744
        %10835 = vmatprep.subr.bf16.mxu0 0
        %10836 = vmatpush1.bf16.msra.mxu0 %v10745
        %10837 = vmatprep.subr.bf16.mxu0 0
        %10838 = vmatpush1.bf16.msra.mxu0 %v10746
        %10839 = vmatprep.subr.bf16.mxu0 0
        %10840 = vmatpush1.bf16.msra.mxu0 %v10747
        %10841 = vmatprep.subr.bf16.mxu0 0
        %10842 = vmatpush1.bf16.msra.mxu0 %v10748
        %10843 = vmatprep.subr.bf16.mxu0 0
        %10844 = vmatpush1.bf16.msra.mxu0 %v10749
        %10845 = vmatprep.subr.bf16.mxu0 0
        %10846 = vmatpush1.bf16.msra.mxu0 %v10750
        %10847 = vmatprep.subr.bf16.mxu0 0
        %10848 = vmatpush1.bf16.msra.mxu0 %v10751
        %10849 = vmatprep.mubr.bf16.mxu0 %v10582
        %10850 = vmatmul.mubr.bf16.gmra.mrb[0].mxu0 %v10455
        %v10851 = vpop.f32.mrb[0].mxu0
        %v10852 = vadd.f32 0.0, %v10851
        %v10853 = vpop.f32.mrb[0].mxu0
        %v10854 = vpop.f32.mrb[0].mxu0
        %v10855 = vadd.f32 0.0, %v10854
        %v10856 = vpop.f32.mrb[0].mxu0
        %10857 = vmatprep.mubr.bf16.mxu0 %v10585
        %10858 = vmatmul.mubr.bf16.gmra.mrb[0].mxu0 %v10458
        %v10859 = vpop.f32.mrb[0].mxu0
        %v10860 = vadd.f32 0.0, %v10859
        %v10861 = vpop.f32.mrb[0].mxu0
        %v10862 = vpop.f32.mrb[0].mxu0
        %v10863 = vadd.f32 0.0, %v10862
        %v10864 = vpop.f32.mrb[0].mxu0
        %10865 = vmatprep.mubr.bf16.mxu0 %v10588
        %10866 = vmatmul.mubr.bf16.gmra.mrb[0].mxu0 %v10461
        %v10867 = vpop.f32.mrb[0].mxu0
        %v10868 = vadd.f32 0.0, %v10867
        %v10869 = vpop.f32.mrb[0].mxu0
        %v10870 = vpop.f32.mrb[0].mxu0
        %v10871 = vadd.f32 0.0, %v10870
        %v10872 = vpop.f32.mrb[0].mxu0
        %10873 = vmatprep.mubr.bf16.mxu0 %v10591
        %10874 = vmatmul.mubr.bf16.gmra.mrb[0].mxu0 %v10464
        %v10875 = vpop.f32.mrb[0].mxu0
        %v10876 = vadd.f32 0.0, %v10875
        %v10877 = vpop.f32.mrb[0].mxu0
        %v10878 = vpop.f32.mrb[0].mxu0
        %v10879 = vadd.f32 0.0, %v10878
        %v10880 = vpop.f32.mrb[0].mxu0
        %10881 = vmatprep.mubr.bf16.mxu0 %v10594
        %10882 = vmatmul.mubr.bf16.gmra.mrb[0].mxu0 %v10467
        %v10883 = vpop.f32.mrb[0].mxu0
        %v10884 = vadd.f32 0.0, %v10883
        %v10885 = vpop.f32.mrb[0].mxu0
        %v10886 = vpop.f32.mrb[0].mxu0
        %v10887 = vadd.f32 0.0, %v10886
        %v10888 = vpop.f32.mrb[0].mxu0
        %10889 = vmatprep.mubr.bf16.mxu0 %v10597
        %10890 = vmatmul.mubr.bf16.gmra.mrb[0].mxu0 %v10470
        %v10891 = vpop.f32.mrb[0].mxu0
        %v10892 = vadd.f32 0.0, %v10891
        %v10893 = vpop.f32.mrb[0].mxu0
        %v10894 = vpop.f32.mrb[0].mxu0
        %v10895 = vadd.f32 0.0, %v10894
        %v10896 = vpop.f32.mrb[0].mxu0
        %10897 = vmatprep.mubr.bf16.mxu0 %v10600
        %10898 = vmatmul.mubr.bf16.gmra.mrb[0].mxu0 %v10473
        %v10899 = vpop.f32.mrb[0].mxu0
        %v10900 = vadd.f32 0.0, %v10899
        %v10901 = vpop.f32.mrb[0].mxu0
        %v10902 = vpop.f32.mrb[0].mxu0
        %v10903 = vadd.f32 0.0, %v10902
        %v10904 = vpop.f32.mrb[0].mxu0
        %10905 = vmatprep.mubr.bf16.mxu0 %v10603
        %10906 = vmatmul.mubr.bf16.gmra.mrb[0].mxu0 %v10476
        %v10907 = vpop.f32.mrb[0].mxu0
        %v10908 = vadd.f32 0.0, %v10907
        %v10909 = vpop.f32.mrb[0].mxu0
        %v10910 = vpop.f32.mrb[0].mxu0
        %v10911 = vadd.f32 0.0, %v10910
        %v10912 = vpop.f32.mrb[0].mxu0
        %10913 = vmatprep.mubr.bf16.mxu0 %v10606
        %10914 = vmatmul.mubr.bf16.gmra.mrb[0].mxu0 %v10479
        %v10915 = vpop.f32.mrb[0].mxu0
        %v10916 = vadd.f32 0.0, %v10915
        %v10917 = vpop.f32.mrb[0].mxu0
        %v10918 = vpop.f32.mrb[0].mxu0
        %v10919 = vadd.f32 0.0, %v10918
        %v10920 = vpop.f32.mrb[0].mxu0
        %10921 = vmatprep.mubr.bf16.mxu0 %v10609
        %10922 = vmatmul.mubr.bf16.gmra.mrb[0].mxu0 %v10482
        %v10923 = vpop.f32.mrb[0].mxu0
        %v10924 = vadd.f32 0.0, %v10923
        %v10925 = vpop.f32.mrb[0].mxu0
        %v10926 = vpop.f32.mrb[0].mxu0
        %v10927 = vadd.f32 0.0, %v10926
        %v10928 = vpop.f32.mrb[0].mxu0
        %10929 = vmatprep.mubr.bf16.mxu0 %v10612
        %10930 = vmatmul.mubr.bf16.gmra.mrb[0].mxu0 %v10485
        %v10931 = vpop.f32.mrb[0].mxu0
        %v10932 = vadd.f32 0.0, %v10931
        %v10933 = vpop.f32.mrb[0].mxu0
        %v10934 = vpop.f32.mrb[0].mxu0
        %v10935 = vadd.f32 0.0, %v10934
        %v10936 = vpop.f32.mrb[0].mxu0
        %10937 = vmatprep.mubr.bf16.mxu0 %v10615
        %10938 = vmatmul.mubr.bf16.gmra.mrb[0].mxu0 %v10488
        %v10939 = vpop.f32.mrb[0].mxu0
        %v10940 = vadd.f32 0.0, %v10939
        %v10941 = vpop.f32.mrb[0].mxu0
        %v10942 = vpop.f32.mrb[0].mxu0
        %v10943 = vadd.f32 0.0, %v10942
        %v10944 = vpop.f32.mrb[0].mxu0
        %10945 = vmatprep.mubr.bf16.mxu0 %v10618
        %10946 = vmatmul.mubr.bf16.gmra.mrb[0].mxu0 %v10491
        %v10947 = vpop.f32.mrb[0].mxu0
        %v10948 = vadd.f32 0.0, %v10947
        %v10949 = vpop.f32.mrb[0].mxu0
        %v10950 = vpop.f32.mrb[0].mxu0
        %v10951 = vadd.f32 0.0, %v10950
        %v10952 = vpop.f32.mrb[0].mxu0
        %10953 = vmatprep.mubr.bf16.mxu0 %v10621
        %10954 = vmatmul.mubr.bf16.gmra.mrb[0].mxu0 %v10494
        %v10955 = vpop.f32.mrb[0].mxu0
        %v10956 = vadd.f32 0.0, %v10955
        %v10957 = vpop.f32.mrb[0].mxu0
        %v10958 = vpop.f32.mrb[0].mxu0
        %v10959 = vadd.f32 0.0, %v10958
        %v10960 = vpop.f32.mrb[0].mxu0
        %10961 = vmatprep.mubr.bf16.mxu0 %v10624
        %10962 = vmatmul.mubr.bf16.gmra.mrb[0].mxu0 %v10497
        %v10963 = vpop.f32.mrb[0].mxu0
        %v10964 = vadd.f32 0.0, %v10963
        %v10965 = vpop.f32.mrb[0].mxu0
        %v10966 = vpop.f32.mrb[0].mxu0
        %v10967 = vadd.f32 0.0, %v10966
        %v10968 = vpop.f32.mrb[0].mxu0
        %10969 = vmatprep.mubr.bf16.mxu0 %v10626
        %10970 = vmatmul.mubr.bf16.gmra.mrb[0].mxu0 %v10500
        %v10971 = vpop.f32.mrb[0].mxu0
        %v10972 = vadd.f32 0.0, %v10971
        %v10973 = vpop.f32.mrb[0].mxu0
        %v10974 = vpop.f32.mrb[0].mxu0
        %v10975 = vadd.f32 0.0, %v10974
        %v10976 = vpop.f32.mrb[0].mxu0
        %10977 = vdwg.mxu0
        %10978 = vmatprep.subr.bf16.mxu0 0
        %10979 = vmatpush1.bf16.msra.mxu0 %v10752
        %10980 = vmatprep.subr.bf16.mxu0 0
        %10981 = vmatpush1.bf16.msra.mxu0 %v10753
        %10982 = vmatprep.subr.bf16.mxu0 0
        %10983 = vmatpush1.bf16.msra.mxu0 0
        %10984 = vmatprep.subr.bf16.mxu0 0
        %10985 = vmatpush1.bf16.msra.mxu0 0
        %10986 = vmatprep.subr.bf16.mxu0 0
        %10987 = vmatpush1.bf16.msra.mxu0 0
        %10988 = vmatprep.subr.bf16.mxu0 0
        %10989 = vmatpush1.bf16.msra.mxu0 0
        %10990 = vmatprep.subr.bf16.mxu0 0
        %10991 = vmatpush1.bf16.msra.mxu0 0
        %10992 = vmatprep.subr.bf16.mxu0 0
        %10993 = vmatpush1.bf16.msra.mxu0 0
        %10994 = vmatprep.subr.bf16.mxu0 0
        %10995 = vmatpush1.bf16.msra.mxu0 0
        %10996 = vmatprep.subr.bf16.mxu0 0
        %10997 = vmatpush1.bf16.msra.mxu0 0
        %10998 = vmatprep.subr.bf16.mxu0 0
        %10999 = vmatpush1.bf16.msra.mxu0 0
        %11000 = vmatprep.subr.bf16.mxu0 0
        %11001 = vmatpush1.bf16.msra.mxu0 0
        %11002 = vmatprep.subr.bf16.mxu0 0
        %11003 = vmatpush1.bf16.msra.mxu0 0
        %11004 = vmatprep.subr.bf16.mxu0 0
        %11005 = vmatpush1.bf16.msra.mxu0 0
        %11006 = vmatprep.subr.bf16.mxu0 0
        %11007 = vmatpush1.bf16.msra.mxu0 0
        %11008 = vmatprep.subr.bf16.mxu0 0
        %11009 = vmatpush1.bf16.msra.mxu0 0
        %11010 = vmatprep.mubr.bf16.mxu0 0
        %11011 = vmatmul.mubr.bf16.gmra.mrb[0].mxu0 %v10773
        %v11012 = vpop.f32.mrb[0].mxu0
        %v11013 = vadd.f32 %v10852, %v11012
        %v11014 = vpop.f32.mrb[0].mxu0
        %v11015 = vpop.f32.mrb[0].mxu0
        %v11016 = vadd.f32 %v10855, %v11015
        %v11017 = vpop.f32.mrb[0].mxu0
        %11018 = vmatprep.mubr.bf16.mxu0 0
        %11019 = vmatmul.mubr.bf16.gmra.mrb[0].mxu0 %v10776
        %v11020 = vpop.f32.mrb[0].mxu0
        %v11021 = vadd.f32 %v10860, %v11020
        %v11022 = vpop.f32.mrb[0].mxu0
        %v11023 = vpop.f32.mrb[0].mxu0
        %v11024 = vadd.f32 %v10863, %v11023
        %v11025 = vpop.f32.mrb[0].mxu0
        %11026 = vmatprep.mubr.bf16.mxu0 0
        %11027 = vmatmul.mubr.bf16.gmra.mrb[0].mxu0 %v10779
        %v11028 = vpop.f32.mrb[0].mxu0
        %v11029 = vadd.f32 %v10868, %v11028
        %v11030 = vpop.f32.mrb[0].mxu0
        %v11031 = vpop.f32.mrb[0].mxu0
        %v11032 = vadd.f32 %v10871, %v11031
        %v11033 = vpop.f32.mrb[0].mxu0
        %11034 = vmatprep.mubr.bf16.mxu0 0
        %11035 = vmatmul.mubr.bf16.gmra.mrb[0].mxu0 %v10782
        %v11036 = vpop.f32.mrb[0].mxu0
        %v11037 = vadd.f32 %v10876, %v11036
        %v11038 = vpop.f32.mrb[0].mxu0
        %v11039 = vpop.f32.mrb[0].mxu0
        %v11040 = vadd.f32 %v10879, %v11039
        %v11041 = vpop.f32.mrb[0].mxu0
        %11042 = vmatprep.mubr.bf16.mxu0 0
        %11043 = vmatmul.mubr.bf16.gmra.mrb[0].mxu0 %v10785
        %v11044 = vpop.f32.mrb[0].mxu0
        %v11045 = vadd.f32 %v10884, %v11044
        %v11046 = vpop.f32.mrb[0].mxu0
        %v11047 = vpop.f32.mrb[0].mxu0
        %v11048 = vadd.f32 %v10887, %v11047
        %v11049 = vpop.f32.mrb[0].mxu0
        %11050 = vmatprep.mubr.bf16.mxu0 0
        %11051 = vmatmul.mubr.bf16.gmra.mrb[0].mxu0 %v10788
        %v11052 = vpop.f32.mrb[0].mxu0
        %v11053 = vadd.f32 %v10892, %v11052
        %v11054 = vpop.f32.mrb[0].mxu0
        %v11055 = vpop.f32.mrb[0].mxu0
        %v11056 = vadd.f32 %v10895, %v11055
        %v11057 = vpop.f32.mrb[0].mxu0
        %11058 = vmatprep.mubr.bf16.mxu0 0
        %11059 = vmatmul.mubr.bf16.gmra.mrb[0].mxu0 %v10791
        %v11060 = vpop.f32.mrb[0].mxu0
        %v11061 = vadd.f32 %v10900, %v11060
        %v11062 = vpop.f32.mrb[0].mxu0
        %v11063 = vpop.f32.mrb[0].mxu0
        %v11064 = vadd.f32 %v10903, %v11063
        %v11065 = vpop.f32.mrb[0].mxu0
        %11066 = vmatprep.mubr.bf16.mxu0 0
        %11067 = vmatmul.mubr.bf16.gmra.mrb[0].mxu0 %v10794
        %v11068 = vpop.f32.mrb[0].mxu0
        %v11069 = vadd.f32 %v10908, %v11068
        %v11070 = vpop.f32.mrb[0].mxu0
        %v11071 = vpop.f32.mrb[0].mxu0
        %v11072 = vadd.f32 %v10911, %v11071
        %v11073 = vpop.f32.mrb[0].mxu0
        %11074 = vmatprep.mubr.bf16.mxu0 0
        %11075 = vmatmul.mubr.bf16.gmra.mrb[0].mxu0 %v10797
        %v11076 = vpop.f32.mrb[0].mxu0
        %v11077 = vadd.f32 %v10916, %v11076
        %v11078 = vpop.f32.mrb[0].mxu0
        %v11079 = vpop.f32.mrb[0].mxu0
        %v11080 = vadd.f32 %v10919, %v11079
        %v11081 = vpop.f32.mrb[0].mxu0
        %11082 = vmatprep.mubr.bf16.mxu0 0
        %11083 = vmatmul.mubr.bf16.gmra.mrb[0].mxu0 %v10800
        %v11084 = vpop.f32.mrb[0].mxu0
        %v11085 = vadd.f32 %v10924, %v11084
        %v11086 = vpop.f32.mrb[0].mxu0
        %v11087 = vpop.f32.mrb[0].mxu0
        %v11088 = vadd.f32 %v10927, %v11087
        %v11089 = vpop.f32.mrb[0].mxu0
        %11090 = vmatprep.mubr.bf16.mxu0 0
        %11091 = vmatmul.mubr.bf16.gmra.mrb[0].mxu0 %v10803
        %v11092 = vpop.f32.mrb[0].mxu0
        %v11093 = vadd.f32 %v10932, %v11092
        %v11094 = vpop.f32.mrb[0].mxu0
        %v11095 = vpop.f32.mrb[0].mxu0
        %v11096 = vadd.f32 %v10935, %v11095
        %v11097 = vpop.f32.mrb[0].mxu0
        %11098 = vmatprep.mubr.bf16.mxu0 0
        %11099 = vmatmul.mubr.bf16.gmra.mrb[0].mxu0 %v10806
        %v11100 = vpop.f32.mrb[0].mxu0
        %v11101 = vadd.f32 %v10940, %v11100
        %v11102 = vpop.f32.mrb[0].mxu0
        %v11103 = vpop.f32.mrb[0].mxu0
        %v11104 = vadd.f32 %v10943, %v11103
        %v11105 = vpop.f32.mrb[0].mxu0
        %11106 = vmatprep.mubr.bf16.mxu0 0
        %11107 = vmatmul.mubr.bf16.gmra.mrb[0].mxu0 %v10809
        %v11108 = vpop.f32.mrb[0].mxu0
        %v11109 = vadd.f32 %v10948, %v11108
        %v11110 = vpop.f32.mrb[0].mxu0
        %v11111 = vpop.f32.mrb[0].mxu0
        %v11112 = vadd.f32 %v10951, %v11111
        %v11113 = vpop.f32.mrb[0].mxu0
        %11114 = vmatprep.mubr.bf16.mxu0 0
        %11115 = vmatmul.mubr.bf16.gmra.mrb[0].mxu0 %v10812
        %v11116 = vpop.f32.mrb[0].mxu0
        %v11117 = vadd.f32 %v10956, %v11116
        %v11118 = vpop.f32.mrb[0].mxu0
        %v11119 = vpop.f32.mrb[0].mxu0
        %v11120 = vadd.f32 %v10959, %v11119
        %v11121 = vpop.f32.mrb[0].mxu0
        %11122 = vmatprep.mubr.bf16.mxu0 0
        %11123 = vmatmul.mubr.bf16.gmra.mrb[0].mxu0 %v10815
        %v11124 = vpop.f32.mrb[0].mxu0
        %v11125 = vadd.f32 %v10964, %v11124
        %v11126 = vpop.f32.mrb[0].mxu0
        %v11127 = vpop.f32.mrb[0].mxu0
        %v11128 = vadd.f32 %v10967, %v11127
        %v11129 = vpop.f32.mrb[0].mxu0
        %11130 = vmatprep.mubr.bf16.mxu0 0
        %11131 = vmatmul.mubr.bf16.gmra.mrb[0].mxu0 %v3075
        %v11132 = vpop.f32.mrb[0].mxu0
        %v11133 = vadd.f32 %v10972, %v11132
        %v11134 = vpop.f32.mrb[0].mxu0
        %v11135 = vpop.f32.mrb[0].mxu0
        %v11136 = vadd.f32 %v10975, %v11135
        %v11137 = vpop.f32.mrb[0].mxu0
        %11138 = vdwg.mxu0
        %11171 = vrot.lane.b32.xlu0 %v11013, 32
        %v11172 = vpop.permute.xlu0 %11171
        %11173 = vrot.lane.b32.xlu0 %v11016, 32
        %v11174 = vpop.permute.xlu0 %11173
        %11175 = vrot.lane.b32.xlu0 %v11021, 32
        %v11176 = vpop.permute.xlu0 %11175
        %11177 = vrot.lane.b32.xlu0 %v11024, 32
        %v11178 = vpop.permute.xlu0 %11177
        %11179 = vrot.lane.b32.xlu0 %v11029, 32
        %v11180 = vpop.permute.xlu0 %11179
        %11181 = vrot.lane.b32.xlu0 %v11032, 32
        %v11182 = vpop.permute.xlu0 %11181
        %11183 = vrot.lane.b32.xlu0 %v11037, 32
        %v11184 = vpop.permute.xlu0 %11183
        %11185 = vrot.lane.b32.xlu0 %v11040, 32
        %v11186 = vpop.permute.xlu0 %11185
        %11187 = vrot.lane.b32.xlu0 %v11045, 32
        %v11188 = vpop.permute.xlu0 %11187
        %11189 = vrot.lane.b32.xlu0 %v11048, 32
        %v11190 = vpop.permute.xlu0 %11189
        %11191 = vrot.lane.b32.xlu0 %v11053, 32
        %v11192 = vpop.permute.xlu0 %11191
        %11193 = vrot.lane.b32.xlu0 %v11056, 32
        %v11194 = vpop.permute.xlu0 %11193
        %11195 = vrot.lane.b32.xlu0 %v11061, 32
        %v11196 = vpop.permute.xlu0 %11195
        %11197 = vrot.lane.b32.xlu0 %v11064, 32
        %v11198 = vpop.permute.xlu0 %11197
        %11199 = vrot.lane.b32.xlu0 %v11069, 32
        %v11200 = vpop.permute.xlu0 %11199
        %11201 = vrot.lane.b32.xlu0 %v11072, 32
        %v11202 = vpop.permute.xlu0 %11201
        %11203 = vrot.lane.b32.xlu0 %v11077, 32
        %v11204 = vpop.permute.xlu0 %11203
        %11205 = vrot.lane.b32.xlu0 %v11080, 32
        %v11206 = vpop.permute.xlu0 %11205
        %11207 = vrot.lane.b32.xlu0 %v11085, 32
        %v11208 = vpop.permute.xlu0 %11207
        %11209 = vrot.lane.b32.xlu0 %v11088, 32
        %v11210 = vpop.permute.xlu0 %11209
        %11211 = vrot.lane.b32.xlu0 %v11093, 32
        %v11212 = vpop.permute.xlu0 %11211
        %11213 = vrot.lane.b32.xlu0 %v11096, 32
        %v11214 = vpop.permute.xlu0 %11213
        %11215 = vrot.lane.b32.xlu0 %v11101, 32
        %v11216 = vpop.permute.xlu0 %11215
        %11217 = vrot.lane.b32.xlu0 %v11104, 32
        %v11218 = vpop.permute.xlu0 %11217
        %11219 = vrot.lane.b32.xlu0 %v11109, 32
        %v11220 = vpop.permute.xlu0 %11219
        %11221 = vrot.lane.b32.xlu0 %v11112, 32
        %v11222 = vpop.permute.xlu0 %11221
        %11223 = vrot.lane.b32.xlu0 %v11117, 32
        %v11224 = vpop.permute.xlu0 %11223
        %11225 = vrot.lane.b32.xlu0 %v11120, 32
        %v11226 = vpop.permute.xlu0 %11225
        %11227 = vrot.lane.b32.xlu0 %v11125, 32
        %v11228 = vpop.permute.xlu0 %11227
        %11229 = vrot.lane.b32.xlu0 %v11128, 32
        %v11230 = vpop.permute.xlu0 %11229
        %11231 = vrot.lane.b32.xlu0 %v11133, 32
        %v11232 = vpop.permute.xlu0 %11231
        %11233 = vrot.lane.b32.xlu0 %v11136, 32
        %v11234 = vpop.permute.xlu0 %11233
        %v11267 = vadd.f32 %v3273, %v11172
        %v11268 = vadd.f32 %v3276, %v11174
        %v11269 = vadd.f32 %v3281, %v11176
        %v11270 = vadd.f32 %v3284, %v11178
        %v11271 = vadd.f32 %v3289, %v11180
        %v11272 = vadd.f32 %v3292, %v11182
        %v11273 = vadd.f32 %v3297, %v11184
        %v11274 = vadd.f32 %v3300, %v11186
        %v11275 = vadd.f32 %v3305, %v11188
        %v11276 = vadd.f32 %v3308, %v11190
        %v11277 = vadd.f32 %v3313, %v11192
        %v11278 = vadd.f32 %v3316, %v11194
        %v11279 = vadd.f32 %v3321, %v11196
        %v11280 = vadd.f32 %v3324, %v11198
        %v11281 = vadd.f32 %v3329, %v11200
        %v11282 = vadd.f32 %v3332, %v11202
        %v11283 = vadd.f32 %v3337, %v11204
        %v11284 = vadd.f32 %v3340, %v11206
        %v11285 = vadd.f32 %v3345, %v11208
        %v11286 = vadd.f32 %v3348, %v11210
        %v11287 = vadd.f32 %v3353, %v11212
        %v11288 = vadd.f32 %v3356, %v11214
        %v11289 = vadd.f32 %v3361, %v11216
        %v11290 = vadd.f32 %v3364, %v11218
        %v11291 = vadd.f32 %v3369, %v11220
        %v11292 = vadd.f32 %v3372, %v11222
        %v11293 = vadd.f32 %v3377, %v11224
        %v11294 = vadd.f32 %v3380, %v11226
        %v11295 = vadd.f32 %v3385, %v11228
        %v11296 = vadd.f32 %v3388, %v11230
        %v11297 = vadd.f32 %v3393, %v11232
        %v11298 = vadd.f32 %v3396, %v11234
        %v11299 = vld [vmem:[%s15] sm:$0x1]
        %v11301 = vlaneseq
        %v11302 = vshrl.u32 %v11301, 7
        %v11303 = vsub.s32 0, %v11302
        %v11304 = vrot.slane %v11299, %v11303
        %11305 = vrot.lane.b32.xlu0 %v11304, 32
        %v11306 = vpop.permute.xlu0 %11305
        %v11308 = vadd.f32 %v11267, %v11306
        %v11309 = vadd.f32 %v11268, %v11306
        %v11310 = vadd.f32 %v11269, %v11306
        %v11311 = vadd.f32 %v11270, %v11306
        %v11312 = vadd.f32 %v11271, %v11306
        %v11313 = vadd.f32 %v11272, %v11306
        %v11314 = vadd.f32 %v11273, %v11306
        %v11315 = vadd.f32 %v11274, %v11306
        %v11316 = vadd.f32 %v11275, %v11306
        %v11317 = vadd.f32 %v11276, %v11306
        %v11318 = vadd.f32 %v11277, %v11306
        %v11319 = vadd.f32 %v11278, %v11306
        %v11320 = vadd.f32 %v11279, %v11306
        %v11321 = vadd.f32 %v11280, %v11306
        %v11322 = vadd.f32 %v11281, %v11306
        %v11323 = vadd.f32 %v11282, %v11306
        %v11324 = vadd.f32 %v11283, %v11306
        %v11325 = vadd.f32 %v11284, %v11306
        %v11326 = vadd.f32 %v11285, %v11306
        %v11327 = vadd.f32 %v11286, %v11306
        %v11328 = vadd.f32 %v11287, %v11306
        %v11329 = vadd.f32 %v11288, %v11306
        %v11330 = vadd.f32 %v11289, %v11306
        %v11331 = vadd.f32 %v11290, %v11306
        %v11332 = vadd.f32 %v11291, %v11306
        %v11333 = vadd.f32 %v11292, %v11306
        %v11334 = vadd.f32 %v11293, %v11306
        %v11335 = vadd.f32 %v11294, %v11306
        %v11336 = vadd.f32 %v11295, %v11306
        %v11337 = vadd.f32 %v11296, %v11306
        %v11338 = vadd.f32 %v11297, %v11306
        %v11339 = vadd.f32 %v11298, %v11306
        %v11340 = vtanh.pop %v11308
        %v11341 = vtanh.pop %v11309
        %v11342 = vtanh.pop %v11310
        %v11343 = vtanh.pop %v11311
        %v11344 = vtanh.pop %v11312
        %v11345 = vtanh.pop %v11313
        %v11346 = vtanh.pop %v11314
        %v11347 = vtanh.pop %v11315
        %v11348 = vtanh.pop %v11316
        %v11349 = vtanh.pop %v11317
        %v11350 = vtanh.pop %v11318
        %v11351 = vtanh.pop %v11319
        %v11352 = vtanh.pop %v11320
        %v11353 = vtanh.pop %v11321
        %v11354 = vtanh.pop %v11322
        %v11355 = vtanh.pop %v11323
        %v11356 = vtanh.pop %v11324
        %v11357 = vtanh.pop %v11325
        %v11358 = vtanh.pop %v11326
        %v11359 = vtanh.pop %v11327
        %v11360 = vtanh.pop %v11328
        %v11361 = vtanh.pop %v11329
        %v11362 = vtanh.pop %v11330
        %v11363 = vtanh.pop %v11331
        %v11364 = vtanh.pop %v11332
        %v11365 = vtanh.pop %v11333
        %v11366 = vtanh.pop %v11334
        %v11367 = vtanh.pop %v11335
        %v11368 = vtanh.pop %v11336
        %v11369 = vtanh.pop %v11337
        %v11370 = vtanh.pop %v11338
        %v11371 = vtanh.pop %v11339
        %11404 = vrot.lane.b32.xlu0 %v11340, 96
        %v11405 = vpop.permute.xlu0 %11404
        %11406 = vrot.lane.b32.xlu0 %v11341, 96
        %v11407 = vpop.permute.xlu0 %11406
        %11408 = vrot.lane.b32.xlu0 %v11342, 96
        %v11409 = vpop.permute.xlu0 %11408
        %11410 = vrot.lane.b32.xlu0 %v11343, 96
        %v11411 = vpop.permute.xlu0 %11410
        %11412 = vrot.lane.b32.xlu0 %v11344, 96
        %v11413 = vpop.permute.xlu0 %11412
        %11414 = vrot.lane.b32.xlu0 %v11345, 96
        %v11415 = vpop.permute.xlu0 %11414
        %11416 = vrot.lane.b32.xlu0 %v11346, 96
        %v11417 = vpop.permute.xlu0 %11416
        %11418 = vrot.lane.b32.xlu0 %v11347, 96
        %v11419 = vpop.permute.xlu0 %11418
        %11420 = vrot.lane.b32.xlu0 %v11348, 96
        %v11421 = vpop.permute.xlu0 %11420
        %11422 = vrot.lane.b32.xlu0 %v11349, 96
        %v11423 = vpop.permute.xlu0 %11422
        %11424 = vrot.lane.b32.xlu0 %v11350, 96
        %v11425 = vpop.permute.xlu0 %11424
        %11426 = vrot.lane.b32.xlu0 %v11351, 96
        %v11427 = vpop.permute.xlu0 %11426
        %11428 = vrot.lane.b32.xlu0 %v11352, 96
        %v11429 = vpop.permute.xlu0 %11428
        %11430 = vrot.lane.b32.xlu0 %v11353, 96
        %v11431 = vpop.permute.xlu0 %11430
        %11432 = vrot.lane.b32.xlu0 %v11354, 96
        %v11433 = vpop.permute.xlu0 %11432
        %11434 = vrot.lane.b32.xlu0 %v11355, 96
        %v11435 = vpop.permute.xlu0 %11434
        %11436 = vrot.lane.b32.xlu0 %v11356, 96
        %v11437 = vpop.permute.xlu0 %11436
        %11438 = vrot.lane.b32.xlu0 %v11357, 96
        %v11439 = vpop.permute.xlu0 %11438
        %11440 = vrot.lane.b32.xlu0 %v11358, 96
        %v11441 = vpop.permute.xlu0 %11440
        %11442 = vrot.lane.b32.xlu0 %v11359, 96
        %v11443 = vpop.permute.xlu0 %11442
        %11444 = vrot.lane.b32.xlu0 %v11360, 96
        %v11445 = vpop.permute.xlu0 %11444
        %11446 = vrot.lane.b32.xlu0 %v11361, 96
        %v11447 = vpop.permute.xlu0 %11446
        %11448 = vrot.lane.b32.xlu0 %v11362, 96
        %v11449 = vpop.permute.xlu0 %11448
        %11450 = vrot.lane.b32.xlu0 %v11363, 96
        %v11451 = vpop.permute.xlu0 %11450
        %11452 = vrot.lane.b32.xlu0 %v11364, 96
        %v11453 = vpop.permute.xlu0 %11452
        %11454 = vrot.lane.b32.xlu0 %v11365, 96
        %v11455 = vpop.permute.xlu0 %11454
        %11456 = vrot.lane.b32.xlu0 %v11366, 96
        %v11457 = vpop.permute.xlu0 %11456
        %11458 = vrot.lane.b32.xlu0 %v11367, 96
        %v11459 = vpop.permute.xlu0 %11458
        %11460 = vrot.lane.b32.xlu0 %v11368, 96
        %v11461 = vpop.permute.xlu0 %11460
        %11462 = vrot.lane.b32.xlu0 %v11369, 96
        %v11463 = vpop.permute.xlu0 %11462
        %11464 = vrot.lane.b32.xlu0 %v11370, 96
        %v11465 = vpop.permute.xlu0 %11464
        %11466 = vrot.lane.b32.xlu0 %v11371, 96
        %v11467 = vpop.permute.xlu0 %11466
        %11500 = vxpose.xlu0.b32.start [1/16] %v11405, 128
        %11501 = vxpose.xlu0.b32.cont [2/16] %v11407, 128
        %11502 = vxpose.xlu0.b32.cont [3/16] %v11409, 128
        %11503 = vxpose.xlu0.b32.cont [4/16] %v11411, 128
        %11504 = vxpose.xlu0.b32.cont [5/16] %v11413, 128
        %11505 = vxpose.xlu0.b32.cont [6/16] %v11415, 128
        %11506 = vxpose.xlu0.b32.cont [7/16] %v11417, 128
        %11507 = vxpose.xlu0.b32.cont [8/16] %v11419, 128
        %11508 = vxpose.xlu0.b32.cont [9/16] %v11421, 128
        %11509 = vxpose.xlu0.b32.cont [10/16] %v11423, 128
        %11510 = vxpose.xlu0.b32.cont [11/16] %v11425, 128
        %11511 = vxpose.xlu0.b32.cont [12/16] %v11427, 128
        %11512 = vxpose.xlu0.b32.cont [13/16] %v11429, 128
        %11513 = vxpose.xlu0.b32.cont [14/16] %v11431, 128
        %11514 = vxpose.xlu0.b32.cont [15/16] %v11433, 128
        %11515 = vxpose.xlu0.b32.end [16/16] %v11435, 128
        %v11516 = vpop.trf.xlu0
        %v11517 = vpop.trf.xlu0
        %v11518 = vpop.trf.xlu0
        %v11519 = vpop.trf.xlu0
        %v11520 = vpop.trf.xlu0
        %v11521 = vpop.trf.xlu0
        %v11522 = vpop.trf.xlu0
        %v11523 = vpop.trf.xlu0
        %v11524 = vpop.trf.xlu0
        %v11525 = vpop.trf.xlu0
        %v11526 = vpop.trf.xlu0
        %v11527 = vpop.trf.xlu0
        %v11528 = vpop.trf.xlu0
        %v11529 = vpop.trf.xlu0
        %v11530 = vpop.trf.xlu0
        %v11531 = vpop.trf.xlu0
        %11532 = vxpose.xlu0.b32.start [1/16] %v11437, 128
        %11533 = vxpose.xlu0.b32.cont [2/16] %v11439, 128
        %11534 = vxpose.xlu0.b32.cont [3/16] %v11441, 128
        %11535 = vxpose.xlu0.b32.cont [4/16] %v11443, 128
        %11536 = vxpose.xlu0.b32.cont [5/16] %v11445, 128
        %11537 = vxpose.xlu0.b32.cont [6/16] %v11447, 128
        %11538 = vxpose.xlu0.b32.cont [7/16] %v11449, 128
        %11539 = vxpose.xlu0.b32.cont [8/16] %v11451, 128
        %11540 = vxpose.xlu0.b32.cont [9/16] %v11453, 128
        %11541 = vxpose.xlu0.b32.cont [10/16] %v11455, 128
        %11542 = vxpose.xlu0.b32.cont [11/16] %v11457, 128
        %11543 = vxpose.xlu0.b32.cont [12/16] %v11459, 128
        %11544 = vxpose.xlu0.b32.cont [13/16] %v11461, 128
        %11545 = vxpose.xlu0.b32.cont [14/16] %v11463, 128
        %11546 = vxpose.xlu0.b32.cont [15/16] %v11465, 128
        %11547 = vxpose.xlu0.b32.end [16/16] %v11467, 128
        %v11548 = vpop.trf.xlu0
        %v11549 = vpop.trf.xlu0
        %v11550 = vpop.trf.xlu0
        %v11551 = vpop.trf.xlu0
        %v11552 = vpop.trf.xlu0
        %v11553 = vpop.trf.xlu0
        %v11554 = vpop.trf.xlu0
        %v11555 = vpop.trf.xlu0
        %v11556 = vpop.trf.xlu0
        %v11557 = vpop.trf.xlu0
        %v11558 = vpop.trf.xlu0
        %v11559 = vpop.trf.xlu0
        %v11560 = vpop.trf.xlu0
        %v11561 = vpop.trf.xlu0
        %v11562 = vpop.trf.xlu0
        %v11563 = vpop.trf.xlu0
        %11564 = vst [vmem:[%s650] sm:$0xff] %v11516
        %11565 = vst [vmem:[%s650 + $0x8] sm:$0xff] %v11548
        %11566 = vst [vmem:[%s650 + $0x10] sm:$0xff] %v11517
        %11567 = vst [vmem:[%s650 + $0x18] sm:$0xff] %v11549
        %11568 = vst [vmem:[%s650 + $0x20] sm:$0xff] %v11518
        %11569 = vst [vmem:[%s650 + $0x28] sm:$0xff] %v11550
        %v11570 = vld [vmem:[%s635] sm:$0x77]
        %v11571 = vmul.f32 %v11570, %v11570
        %v11572 = vsub.f32 %v11571, %v11570
        %v11574 = vcombine.high %v11572, %v11572
        %v11576 = vmul.f32 %v11516, %v11572
        %v11577 = vmul.f32 %v11548, %v11574
        %v11580 = vcombine.low %v11576, %v11577
        %v11582 = vadd.f32 %v11570, %v11580
        %v11583 = vmul.f32 %v11582, %v11582
        %v11584 = vsub.f32 %v11583, %v11582
        %v11586 = vcombine.high %v11584, %v11584
        %v11587 = vrot.slane %v11584, 5
        %v11588 = vrot.slane %v11586, 5
        %v11591 = vmul.f32 %v11516, %v11587
        %v11592 = vmul.f32 %v11548, %v11588
        %v11595 = vcombine.low %v11591, %v11592
        %v11596 = vcombine.high %v11591, %v11592
        %vm11597 = vcmask 1040384
        %vm11598 = vcmask 1044484
        %vm11599 = vmor %vm11597, %vm11598
        %v11600 = vrot.slane %v11595, 7
        %v11601 = vrot.slane %v11600, 4
        %v11602 = vrot.slane %v11596, 7
        %v11603 = vsel %vm11599, %v11601, %v11602
        %v11605 = vadd.f32 %v11582, %v11603
        %v11606 = vmul.f32 %v11605, %v11605
        %v11607 = vsub.f32 %v11606, %v11605
        %v11609 = vcombine.high %v11607, %v11607
        %v11610 = vrot.slane %v11607, 2
        %v11611 = vrot.slane %v11609, 2
        %v11614 = vmul.f32 %v11516, %v11610
        %v11615 = vmul.f32 %v11548, %v11611
        %v11616 = vmul.f32 %v11517, %v11610
        %v11617 = vmul.f32 %v11549, %v11611
        %v11622 = vcombine.high %v11614, %v11615
        %v11623 = vcombine.low %v11616, %v11617
        %vm11624 = vcmask 1041408
        %vm11625 = vcmask 1045508
        %vm11626 = vmor %vm11624, %vm11625
        %v11627 = vrot.slane %v11622, 6
        %v11628 = vrot.slane %v11627, 4
        %v11629 = vrot.slane %v11623, 6
        %v11630 = vsel %vm11626, %v11628, %v11629
        %v11632 = vadd.f32 %v11605, %v11630
        %v11633 = vmul.f32 %v11632, %v11632
        %v11634 = vsub.f32 %v11633, %v11632
        %v11636 = vcombine.high %v11634, %v11634
        %v11637 = vrot.slane %v11634, 7
        %v11638 = vrot.slane %v11636, 7
        %v11641 = vmul.f32 %v11517, %v11637
        %v11642 = vmul.f32 %v11549, %v11638
        %v11645 = vcombine.low %v11641, %v11642
        %v11646 = vrot.slane %v11645, 5
        %v11647 = vrot.slane %v11646, 4
        %v11649 = vadd.f32 %v11632, %v11647
        %11650 = vst [vmem:[%s640] sm:$0x77] %v11649
        %v11651 = vmul.f32 %v11649, %v11649
        %v11652 = vsub.f32 %v11651, %v11649
        %v11654 = vcombine.low %v11652, %v11652
        %v11656 = vmul.f32 %v11517, %v11654
        %v11657 = vmul.f32 %v11549, %v11652
        %v11660 = vcombine.high %v11656, %v11657
        %v11662 = vadd.f32 %v11649, %v11660
        %v11663 = vmul.f32 %v11662, %v11662
        %v11664 = vsub.f32 %v11663, %v11662
        %v11666 = vcombine.high %v11664, %v11664
        %v11667 = vrot.slane %v11664, 1
        %v11668 = vrot.slane %v11666, 1
        %v11671 = vmul.f32 %v11517, %v11667
        %v11672 = vmul.f32 %v11549, %v11668
        %v11673 = vmul.f32 %v11518, %v11667
        %v11674 = vmul.f32 %v11550, %v11668
        %v11679 = vcombine.high %v11671, %v11672
        %v11680 = vcombine.low %v11673, %v11674
        %v11681 = vrot.slane %v11679, 7
        %v11682 = vrot.slane %v11681, 4
        %v11683 = vrot.slane %v11680, 7
        %v11684 = vsel %vm11599, %v11682, %v11683
        %v11686 = vadd.f32 %v11662, %v11684
        %v11687 = vmul.f32 %v11686, %v11686
        %v11688 = vsub.f32 %v11687, %v11686
        %v11690 = vcombine.high %v11688, %v11688
        %v11691 = vrot.slane %v11688, 6
        %v11692 = vrot.slane %v11690, 6
        %v11695 = vmul.f32 %v11518, %v11691
        %v11696 = vmul.f32 %v11550, %v11692
        %v11699 = vcombine.low %v11695, %v11696
        %v11700 = vcombine.high %v11695, %v11696
        %v11701 = vrot.slane %v11699, 6
        %v11702 = vrot.slane %v11701, 4
        %v11703 = vrot.slane %v11700, 6
        %v11704 = vsel %vm11626, %v11702, %v11703
        %v11706 = vadd.f32 %v11686, %v11704
        %v11707 = vmul.f32 %v11706, %v11706
        %v11708 = vsub.f32 %v11707, %v11706
        %v11710 = vcombine.high %v11708, %v11708
        %v11711 = vrot.slane %v11708, 3
        %v11712 = vrot.slane %v11710, 3
        %v11715 = vmul.f32 %v11518, %v11711
        %v11716 = vmul.f32 %v11550, %v11712
        %v11719 = vcombine.high %v11715, %v11716
        %v11720 = vrot.slane %v11719, 5
        %v11721 = vrot.slane %v11720, 4
        %v11723 = vadd.f32 %v11706, %v11721
        %11724 = vst [vmem:[%s645] sm:$0x77] %v11723
        %p11725 = scmp.lt.s32.totalorder %s32, 1
        %s11726 = scalar_select %p11725, %s32, 1
        %s11727 = smul.addr %s11726, 2
        %s11728 = smul.addr %s11727, 4
        %s11729 = scalar_lea.vmem %s16, %s11728
        %p11730 = scmp.lt.s32.totalorder %s32, 1
        %s11731 = scalar_select %p11730, %s32, 1
        %s11732 = smul.addr %s11731, 2
        %s11733 = smul.addr %s11732, 4
        %s11734 = scalar_lea.vmem %s17, %s11733
        %p11735 = scmp.lt.s32.totalorder %s32, 1
        %s11736 = scalar_select %p11735, %s32, 1
        %s11737 = smul.addr %s11736, 6
        %s11738 = smul.addr %s11737, 8
        %s11739 = scalar_lea.vmem %s18, %s11738
        // Predicated region
        $region93: #{_lambda_.1} parent=83 // pred_check
          %p11740 = pneg %p396
        $region94: #{_lambda_.1} parent=83 // pred_check_branch
          %11742 = sbr.rel (%p11740) target = $region96
        $region95: #{_lambda_.1} parent=83 // pred_region
          _
        $region96: #{_lambda_.1} parent=83 // pred_fallthru
          _
        // Predicated region
        $region97: #{_lambda_.1} parent=83 // pred_check
          %p11743 = pneg %p422
        $region98: #{_lambda_.1} parent=83 // pred_check_branch
          %11745 = sbr.rel (%p11743) target = $region100
        $region99: #{_lambda_.1} parent=83 // pred_region
          _
        $region100: #{_lambda_.1} parent=83 // pred_fallthru
          _
        // Predicated region
        $region101: #{_lambda_.1} parent=83 // pred_check
          %p11746 = pneg %p448
        $region102: #{_lambda_.1} parent=83 // pred_check_branch
          %11748 = sbr.rel (%p11746) target = $region104
        $region103: #{_lambda_.1} parent=83 // pred_region
          _
        $region104: #{_lambda_.1} parent=83 // pred_fallthru
          _
      $region84: #{_lambda_.1} parent=5 // pred_fallthru
        _
      %p11749 = scmp.le.s32.totalorder 2, %s27
      // Predicated region
      $region105: #{_lambda_.1} parent=5 // pred_check
        %p11750 = pneg %p11749
      $region106: #{_lambda_.1} parent=5 // pred_check_branch
        %11752 = sbr.rel (%p11750) target = $region108
      $region107: #{_lambda_.1} parent=5 // pred_region
        %s11753 = ssub.s32 %s27, 2
        // Predicated region
        $region109: #{_lambda_.1} parent=107 // pred_check
          %p11754 = pneg %p402
        $region110: #{_lambda_.1} parent=107 // pred_check_branch
          %11756 = sbr.rel (%p11754) target = $region112
        $region111: #{_lambda_.1} parent=107 // pred_region
          %p11757 = scmp.lt.s32.totalorder %s33, 1
          %s11758 = scalar_select %p11757, %s33, 1
          %s11759 = smul.addr %s11758, 2
          %s11760 = smul.addr %s11759, 4
          %s11761 = scalar_lea.vmem %s16, %s11760
        $region112: #{_lambda_.1} parent=107 // pred_fallthru
          _
        // Predicated region
        $region113: #{_lambda_.1} parent=107 // pred_check
          %p11762 = pneg %p428
        $region114: #{_lambda_.1} parent=107 // pred_check_branch
          %11764 = sbr.rel (%p11762) target = $region116
        $region115: #{_lambda_.1} parent=107 // pred_region
          %p11765 = scmp.lt.s32.totalorder %s33, 1
          %s11766 = scalar_select %p11765, %s33, 1
          %s11767 = smul.addr %s11766, 2
          %s11768 = smul.addr %s11767, 4
          %s11769 = scalar_lea.vmem %s17, %s11768
        $region116: #{_lambda_.1} parent=107 // pred_fallthru
          _
        // Predicated region
        $region117: #{_lambda_.1} parent=107 // pred_check
          %p11770 = pneg %p454
        $region118: #{_lambda_.1} parent=107 // pred_check_branch
          %11772 = sbr.rel (%p11770) target = $region120
        $region119: #{_lambda_.1} parent=107 // pred_region
          %p11773 = scmp.lt.s32.totalorder %s33, 1
          %s11774 = scalar_select %p11773, %s33, 1
          %s11775 = smul.addr %s11774, 6
          %s11776 = smul.addr %s11775, 8
          %s11777 = scalar_lea.vmem %s18, %s11776
        $region120: #{_lambda_.1} parent=107 // pred_fallthru
          _
      $region108: #{_lambda_.1} parent=5 // pred_fallthru
        _
    $region6: #{_lambda_.1} parent=1 // loop_footer
      %s31 = sadd.s32 1, %s27
    $region7: #{_lambda_.1} parent=1 // loop_footer_branch
      %26 = sbr.rel target = $region3
    $region8: #{_lambda_.1} parent=1 // loop_exit
      _
    %11778 = vsyncpa [#allocation3], 1
    %s11779 = scalar_lea.sflag [#allocation3], 1
    %11780 = vsyncpa %s11779, 1
    %11781 = vsyncpa [#allocation5], 1

</llo_original>
